<compile_context>
chip_gen: v6e
topology: v6e:2x2x1
jax: 0.10.0
libtpu: 0.0.40
codegen_flags: <defaults>
</compile_context>

<pallas_src>
import jax
import jax.numpy as jnp
from jax.experimental import pallas as pl
from jax.experimental.pallas import tpu as pltpu

BN_EPS = 1e-5


# ----------------------------------------------------------------------------
# hardware-aware budgets
# ----------------------------------------------------------------------------
def _hw_budget():
    """(vmem_limit_bytes, tm_cap) picked per TPU generation."""
    try:
        phys = int(pltpu.get_tpu_info().vmem_capacity_bytes)
    except Exception:
        phys = 64 * 1024 * 1024  # conservative (v7x-sized) fallback
    if phys >= 100 * 1024 * 1024:          # v5e / v6e: 128 MiB physical VMEM
        return 100 * 1024 * 1024, 2048
    return 48 * 1024 * 1024, 1024          # v7x: 64 MiB physical, leave headroom


_VMEM_LIMIT, _TM_CAP = _hw_budget()


# ----------------------------------------------------------------------------
# small helpers
# ----------------------------------------------------------------------------
def _round_up(x, m):
    return ((x + m - 1) // m) * m


def _pick_tm(m, cap):
    """Row tile: big, multiple of 8, and >= 2 tiles when M is non-trivial
    so the 'parallel' grid axis shards across both TensorCores (v7x)."""
    mp8 = _round_up(m, 8)
    tm = min(cap, mp8)
    if mp8 > 256:
        tm = min(tm, _round_up((mp8 + 1) // 2, 8))
    return tm


def _k_tiling(k):
    """Return (Kp, TK). Large K -> 512-wide steps; small K -> single step."""
    if k >= 512:
        kp = _round_up(k, 512)
        return kp, 512
    kp = _round_up(k, 128)
    return kp, kp


# ----------------------------------------------------------------------------
# Pallas kernels
# ----------------------------------------------------------------------------
def _matmul_stats_kernel(p_ref, w_ref, y_ref, stats_ref, acc_ref):
    """Tiled matmul (bf16 in, f32 acc) + per-M-tile BN partial sums.

    p_ref:     (TM, TK)   bf16 im2col patch tile
    w_ref:     (TK, Cp)   bf16 weight tile
    y_ref:     (TM, Cp)   bf16 conv output (pre-BN)
    stats_ref: (1, 2, Cp) f32; row0 = sum(y), row1 = sum(y*y) over this M tile
    acc_ref:   (TM, Cp)   f32 VMEM accumulator (persists across K steps)
    """
    k = pl.program_id(1)

    @pl.when(k == 0)
    def _():
        acc_ref[...] = jnp.zeros_like(acc_ref)

    acc_ref[...] += jnp.dot(p_ref[...], w_ref[...],
                            preferred_element_type=jnp.float32)

    @pl.when(k == pl.num_programs(1) - 1)
    def _():
        y = acc_ref[...]
        y_ref[...] = y.astype(y_ref.dtype)             # bf16 writeback
        s = jnp.sum(y, axis=0, keepdims=True)          # (1, Cp), exact f32
        ss = jnp.sum(y * y, axis=0, keepdims=True)     # (1, Cp)
        stats_ref[0] = jnp.concatenate([s, ss], axis=0)


def _bn_relu_kernel(y_ref, scale_ref, shift_ref, o_ref):
    """relu(y*scale + shift); scale/shift are precomputed (1, Cp) rows."""
    y = y_ref[...].astype(jnp.float32)
    o_ref[...] = jnp.maximum(y * scale_ref[...] + shift_ref[...],
                             0.0).astype(o_ref.dtype)


def _matmul_bias_kernel(x_ref, w_ref, b_ref, o_ref):
    """1x1 conv tile: (TM,Cin)x(Cin,Cp) + bias, bf16 out."""
    o_ref[...] = (jnp.dot(x_ref[...], w_ref[...],
                          preferred_element_type=jnp.float32)
                  + b_ref[...]).astype(o_ref.dtype)


# ----------------------------------------------------------------------------
# Conv wrappers (JAX glue + Pallas hot path)
# ----------------------------------------------------------------------------
def conv3x3_bn_relu(x_nhwc, w, gamma, beta, stride):
    """3x3 conv (pad=1, no bias) + BatchNorm2d(train stats) + ReLU, NHWC.

    Returns bf16 activations of shape (N, Ho, Wo, Cout).
    """
    N, H, W, Cin = x_nhwc.shape
    Cout = w.shape[-1]
    Ho = (H - 1) // stride + 1
    Wo = (W - 1) // stride + 1
    M = N * Ho * Wo
    K = 9 * Cin

    TM = _pick_tm(M, _TM_CAP)
    Mp = _round_up(M, TM)
    Kp, TK = _k_tiling(K)
    Cp = _round_up(Cout, 128)
    num_m = Mp // TM
    num_k = Kp // TK

    # --- im2col (bf16); K padding fused into the tap concat ------------------
    xp = jnp.pad(x_nhwc.astype(jnp.bfloat16), ((0, 0), (1, 1), (1, 1), (0, 0)))
    taps = []
    for dy in range(3):
        for dx in range(3):
            taps.append(
                jax.lax.slice(
                    xp,
                    (0, dy, dx, 0),
                    (N, dy + (Ho - 1) * stride + 1,
                     dx + (Wo - 1) * stride + 1, Cin),
                    (1, stride, stride, 1),
                )
            )
    if Kp > K:
        taps.append(jnp.zeros((N, Ho, Wo, Kp - K), jnp.bfloat16))
    patches = jnp.concatenate(taps, axis=-1).reshape(M, Kp)
    if Mp > M:  # only when M is not a multiple of 8 (tiny pad)
        patches = jnp.pad(patches, ((0, Mp - M), (0, 0)))

    wm = jnp.pad(w.reshape(K, Cout).astype(jnp.bfloat16),
                 ((0, Kp - K), (0, Cp - Cout)))

    # --- pass 1: tiled matmul + BN partial sums ------------------------------
    y, stats = pl.pallas_call(
        _matmul_stats_kernel,
        out_shape=(jax.ShapeDtypeStruct((Mp, Cp), jnp.bfloat16),
                   jax.ShapeDtypeStruct((num_m, 2, Cp), jnp.float32)),
        grid=(num_m, num_k),
        in_specs=[pl.BlockSpec((TM, TK), lambda m, k: (m, k)),
                  pl.BlockSpec((TK, Cp), lambda m, k: (k, 0))],
        out_specs=(pl.BlockSpec((TM, Cp), lambda m, k: (m, 0)),
                   pl.BlockSpec((1, 2, Cp), lambda m, k: (m, 0, 0))),
        scratch_shapes=[pltpu.VMEM((TM, Cp), jnp.float32)],
        compiler_params=pltpu.CompilerParams(
            dimension_semantics=("parallel", "arbitrary"),
            vmem_limit_bytes=_VMEM_LIMIT),
    )(patches, wm)

    # --- BN finalize (tiny per-channel math in plain JAX) --------------------
    s = jnp.sum(stats[:, 0, :], axis=0)                  # (Cp,)
    ss = jnp.sum(stats[:, 1, :], axis=0)                 # (Cp,)
    mean = s / M                                         # padded rows are zero
    var = jnp.maximum(ss / M - mean * mean, 0.0)         # biased (train-mode)
    cmask = jnp.arange(Cp) < Cout
    inv = jnp.where(cmask, jax.lax.rsqrt(var + BN_EPS), 0.0)
    gamma_p = jnp.pad(gamma.reshape(-1), (0, Cp - Cout))
    beta_p = jnp.pad(beta.reshape(-1), (0, Cp - Cout))
    scale = (gamma_p * inv).reshape(1, Cp)
    shift = (beta_p - mean * gamma_p * inv).reshape(1, Cp)

    # --- pass 2: normalize + ReLU, tiled over M (bf16 in / bf16 out) ---------
    out = pl.pallas_call(
        _bn_relu_kernel,
        out_shape=jax.ShapeDtypeStruct((Mp, Cp), jnp.bfloat16),
        grid=(num_m,),
        in_specs=[pl.BlockSpec((TM, Cp), lambda m: (m, 0)),
                  pl.BlockSpec((1, Cp), lambda m: (0, 0)),
                  pl.BlockSpec((1, Cp), lambda m: (0, 0))],
        out_specs=pl.BlockSpec((TM, Cp), lambda m: (m, 0)),
        compiler_params=pltpu.CompilerParams(
            dimension_semantics=("parallel",),
            vmem_limit_bytes=_VMEM_LIMIT),
    )(y, scale, shift)

    return out[:M, :Cout].reshape(N, Ho, Wo, Cout)


def double_conv(p, x_nhwc, stride):
    x = conv3x3_bn_relu(x_nhwc, p["w1"], p["g1"], p["b1"], stride)
    x = conv3x3_bn_relu(x, p["w2"], p["g2"], p["b2"], 1)
    return x


def conv1x1_bias(x_nhwc, w, b):
    """1x1 conv + bias (the UNet head), tiled over rows, weight resident."""
    N, H, W, Cin = x_nhwc.shape
    Cout = w.shape[-1]
    M = N * H * W

    TM = _pick_tm(M, _TM_CAP)
    Mp = _round_up(M, TM)
    Cp = _round_up(Cout, 128)
    num_m = Mp // TM

    xm = x_nhwc.astype(jnp.bfloat16).reshape(M, Cin)
    if Mp > M:
        xm = jnp.pad(xm, ((0, Mp - M), (0, 0)))
    wp = jnp.pad(w.astype(jnp.bfloat16), ((0, 0), (0, Cp - Cout)))
    bp = jnp.pad(b.reshape(-1).astype(jnp.float32),
                 (0, Cp - Cout)).reshape(1, Cp)

    out = pl.pallas_call(
        _matmul_bias_kernel,
        out_shape=jax.ShapeDtypeStruct((Mp, Cp), jnp.bfloat16),
        grid=(num_m,),
        in_specs=[pl.BlockSpec((TM, Cin), lambda m: (m, 0)),
                  pl.BlockSpec((Cin, Cp), lambda m: (0, 0)),
                  pl.BlockSpec((1, Cp), lambda m: (0, 0))],
        out_specs=pl.BlockSpec((TM, Cp), lambda m: (m, 0)),
        compiler_params=pltpu.CompilerParams(
            dimension_semantics=("parallel",),
            vmem_limit_bytes=_VMEM_LIMIT),
    )(xm, wp, bp)

    return out[:M, :Cout].astype(jnp.float32).reshape(N, H, W, Cout)


def upsample_nearest(x_nhwc, size):
    """F.interpolate(mode='nearest') semantics: src = floor(dst*in/out)."""
    N, H, W, C = x_nhwc.shape
    Ho, Wo = size
    hi = (jnp.arange(Ho) * H) // Ho
    wi = (jnp.arange(Wo) * W) // Wo
    return x_nhwc[:, hi][:, :, wi]


# ----------------------------------------------------------------------------
# Parameters (deterministic, kaiming-style init; BN weight=1, bias=0)
# ----------------------------------------------------------------------------
def _dc_params(key, cin, cout):
    k1, k2 = jax.random.split(key)
    std1 = (2.0 / (cin * 9)) ** 0.5
    std2 = (2.0 / (cout * 9)) ** 0.5
    return {
        "w1": jax.random.normal(k1, (3, 3, cin, cout), jnp.float32) * std1,
        "g1": jnp.ones((cout,), jnp.float32),
        "b1": jnp.zeros((cout,), jnp.float32),
        "w2": jax.random.normal(k2, (3, 3, cout, cout), jnp.float32) * std2,
        "g2": jnp.ones((cout,), jnp.float32),
        "b2": jnp.zeros((cout,), jnp.float32),
    }


def make_unet_params(key, in_channels=3, n_classes=2, base_width=16):
    bw = base_width
    keys = jax.random.split(key, 17)
    return {
        "init": _dc_params(keys[0], in_channels, bw),
        "down": [
            _dc_params(keys[1], bw, 2 * bw),
            _dc_params(keys[2], 2 * bw, 4 * bw),
            _dc_params(keys[3], 4 * bw, 8 * bw),
            _dc_params(keys[4], 8 * bw, 16 * bw),
            _dc_params(keys[5], 16 * bw, 32 * bw),
        ],
        "upsample": [
            _dc_params(keys[6], 32 * bw, 32 * bw),
            _dc_params(keys[7], 16 * bw, 16 * bw),
            _dc_params(keys[8], 8 * bw, 8 * bw),
            _dc_params(keys[9], 4 * bw, 4 * bw),
            _dc_params(keys[10], 2 * bw, 2 * bw),
        ],
        "up": [
            _dc_params(keys[11], 48 * bw, 16 * bw),
            _dc_params(keys[12], 24 * bw, 8 * bw),
            _dc_params(keys[13], 12 * bw, 4 * bw),
            _dc_params(keys[14], 6 * bw, 2 * bw),
            _dc_params(keys[15], 3 * bw, bw),
        ],
        "end_w": jax.random.normal(keys[16], (bw, n_classes), jnp.float32)
        * (2.0 / bw) ** 0.5,
        "end_b": jnp.zeros((n_classes,), jnp.float32),
    }


# ----------------------------------------------------------------------------
# Forward pass (mirrors UNet.forward exactly)
# ----------------------------------------------------------------------------
@jax.jit
def unet_forward(params, x_nchw):
    x = jnp.transpose(x_nchw, (0, 2, 3, 1)).astype(jnp.float32)  # NCHW -> NHWC

    # down path
    down = [((x.shape[1], x.shape[2]), double_conv(params["init"], x, 1))]
    for i, p in enumerate(params["down"]):
        x = double_conv(p, down[i][1], 2)
        down.append(((x.shape[1], x.shape[2]), x))

    # up path
    for i, (p_up_samp, p_up) in enumerate(zip(params["upsample"], params["up"])):
        upsampled = upsample_nearest(
            double_conv(p_up_samp, x, 1), down[-(i + 2)][0]
        )
        # TODO(synk): fuse this concat into the up-conv by splitting the
        # weight along K; kept as JAX concat for clarity.
        x = double_conv(
            p_up, jnp.concatenate((upsampled, down[-(i + 2)][1]), axis=-1), 1
        )

    out = conv1x1_bias(x, params["end_w"], params["end_b"])
    return jnp.transpose(out, (0, 3, 1, 2))  # back to NCHW


# ----------------------------------------------------------------------------
if __name__ == "__main__":
    key = jax.random.PRNGKey(0)
    k_param, k_x = jax.random.split(key)

    IN_CHANNELS, N_CLASSES, BASE_WIDTH = 3, 2, 4   # small synthetic config
    params = make_unet_params(k_param, IN_CHANNELS, N_CLASSES, BASE_WIDTH)

    x = jax.random.normal(k_x, (2, IN_CHANNELS, 16, 16), jnp.float32)

    y = unet_forward(params, x)
    jax.block_until_ready(y)
    assert y.shape == (2, N_CLASSES, 16, 16), y.shape
    print("KERNEL_OK")
</pallas_src>

<mosaic_0001>
module attributes {stable_mosaic.version = 11 : i64} {
  func.func @_matmul_stats_kernel(%arg0: i32, %arg1: i32, %arg2: memref<256x128xbf16, #tpu.memory_space<vmem>>, %arg3: memref<128x128xbf16, #tpu.memory_space<vmem>>, %arg4: memref<256x128xbf16, #tpu.memory_space<vmem>>, %arg5: memref<1x2x128xf32, #tpu.memory_space<vmem>>, %arg6: memref<256x128xf32, #tpu.memory_space<vmem>>) attributes {dimension_semantics = [#tpu.dimension_semantics<parallel>, #tpu.dimension_semantics<arbitrary>], iteration_bounds = array<i64: 2, 1>, scalar_prefetch = 0 : i64, scratch_operands = 1 : i64, tpu.core_type = #tpu.core_type<tc>, window_params = [{transform_indices = @transform_0, window_bounds = array<i64: 256, 128>}, {transform_indices = @transform_1, window_bounds = array<i64: 128, 128>}, {transform_indices = @transform_2, window_bounds = array<i64: 256, 128>}, {transform_indices = @transform_3, window_bounds = array<i64: 1, 2, 128>}]} {
    %c0_i32 = arith.constant 0 : i32
    %0 = arith.cmpi eq, %arg1, %c0_i32 : i32
    %1 = arith.extui %0 : i1 to i32
    %c0_i32_0 = arith.constant 0 : i32
    %2 = arith.cmpi ne, %1, %c0_i32_0 : i32
    scf.if %2 {
      %cst_10 = arith.constant 0.000000e+00 : f32
      %12 = vector.broadcast %cst_10 : f32 to vector<256x128xf32>
      %c0_11 = arith.constant 0 : index
      %c0_12 = arith.constant 0 : index
      %13 = vector.load %arg6[%c0_11, %c0_12] : memref<256x128xf32, #tpu.memory_space<vmem>>, vector<256x128xf32>
      tpu.vector_store %arg6[%c0_11, %c0_12], %12 {strides = array<i32>} : memref<256x128xf32, #tpu.memory_space<vmem>>, vector<256x128xf32>,
    } else {
    }
    %c0 = arith.constant 0 : index
    %c0_1 = arith.constant 0 : index
    %3 = vector.load %arg6[%c0, %c0_1] : memref<256x128xf32, #tpu.memory_space<vmem>>, vector<256x128xf32>
    %c0_2 = arith.constant 0 : index
    %c0_3 = arith.constant 0 : index
    %4 = vector.load %arg2[%c0_2, %c0_3] : memref<256x128xbf16, #tpu.memory_space<vmem>>, vector<256x128xbf16>
    %c0_4 = arith.constant 0 : index
    %c0_5 = arith.constant 0 : index
    %5 = vector.load %arg3[%c0_4, %c0_5] : memref<128x128xbf16, #tpu.memory_space<vmem>>, vector<128x128xbf16>
    %cst = arith.constant dense<0.000000e+00> : vector<256x128xf32>
    %6 = tpu.matmul %4, %5, %cst {dimension_numbers = #tpu.dot_dimension_numbers<[1], [0], [0], [1], [0, 0, 1, 1], [], []>} : vector<256x128xbf16>, vector<128x128xbf16>, vector<256x128xf32> -> vector<256x128xf32>
    %7 = arith.addf %3, %6 : vector<256x128xf32>
    %c0_6 = arith.constant 0 : index
    %c0_7 = arith.constant 0 : index
    %8 = vector.load %arg6[%c0_6, %c0_7] : memref<256x128xf32, #tpu.memory_space<vmem>>, vector<256x128xf32>
    tpu.vector_store %arg6[%c0_6, %c0_7], %7 {strides = array<i32>} : memref<256x128xf32, #tpu.memory_space<vmem>>, vector<256x128xf32>,
    %c0_i32_8 = arith.constant 0 : i32
    %9 = arith.cmpi eq, %arg1, %c0_i32_8 : i32
    %10 = arith.extui %9 : i1 to i32
    %c0_i32_9 = arith.constant 0 : i32
    %11 = arith.cmpi ne, %10, %c0_i32_9 : i32
    scf.if %11 {
      %c0_10 = arith.constant 0 : index
      %c0_11 = arith.constant 0 : index
      %12 = vector.load %arg6[%c0_10, %c0_11] : memref<256x128xf32, #tpu.memory_space<vmem>>, vector<256x128xf32>
      %13 = arith.truncf %12 : vector<256x128xf32> to vector<256x128xbf16>
      %c0_12 = arith.constant 0 : index
      %c0_13 = arith.constant 0 : index
      %14 = vector.load %arg4[%c0_12, %c0_13] : memref<256x128xbf16, #tpu.memory_space<vmem>>, vector<256x128xbf16>
      tpu.vector_store %arg4[%c0_12, %c0_13], %13 {strides = array<i32>} : memref<256x128xbf16, #tpu.memory_space<vmem>>, vector<256x128xbf16>,
      %cst_14 = arith.constant dense<0.000000e+00> : vector<128xf32>
      %15 = vector.multi_reduction <add>, %12, %cst_14 [0] : vector<256x128xf32> to vector<128xf32>
      %16 = vector.shape_cast %15 : vector<128xf32> to vector<1x128xf32>
      %17 = arith.mulf %12, %12 : vector<256x128xf32>
      %cst_15 = arith.constant dense<0.000000e+00> : vector<128xf32>
      %18 = vector.multi_reduction <add>, %17, %cst_15 [0] : vector<256x128xf32> to vector<128xf32>
      %19 = vector.shape_cast %18 : vector<128xf32> to vector<1x128xf32>
      %20 = tpu.concatenate %16, %19 in 0 : vector<1x128xf32>, vector<1x128xf32> -> vector<2x128xf32>
      %c0_16 = arith.constant 0 : index
      %c0_17 = arith.constant 0 : index
      %c0_18 = arith.constant 0 : index
      %21 = vector.load %arg5[%c0_16, %c0_17, %c0_18] : memref<1x2x128xf32, #tpu.memory_space<vmem>>, vector<1x2x128xf32>
      %22 = vector.shape_cast %21 : vector<1x2x128xf32> to vector<2x128xf32>
      %23 = vector.shape_cast %20 : vector<2x128xf32> to vector<1x2x128xf32>
      tpu.vector_store %arg5[%c0_16, %c0_17, %c0_18], %23 {strides = array<i32>} : memref<1x2x128xf32, #tpu.memory_space<vmem>>, vector<1x2x128xf32>,
    } else {
    }
    return
  }
  func.func @transform_0(%arg0: i32, %arg1: i32) -> (i32, i32) {
    %c0_i32 = arith.constant 0 : i32
    return %arg0, %arg1 : i32, i32
  }
  func.func @transform_1(%arg0: i32, %arg1: i32) -> (i32, i32) {
    %c0_i32 = arith.constant 0 : i32
    %c0_i32_0 = arith.constant 0 : i32
    return %arg1, %c0_i32 : i32, i32
  }
  func.func @transform_2(%arg0: i32, %arg1: i32) -> (i32, i32) {
    %c0_i32 = arith.constant 0 : i32
    %c0_i32_0 = arith.constant 0 : i32
    return %arg0, %c0_i32 : i32, i32
  }
  func.func @transform_3(%arg0: i32, %arg1: i32) -> (i32, i32, i32) {
    %c0_i32 = arith.constant 0 : i32
    %c0_i32_0 = arith.constant 0 : i32
    %c0_i32_1 = arith.constant 0 : i32
    return %arg0, %c0_i32, %c0_i32_0 : i32, i32, i32
  }
}

module attributes {stable_mosaic.version = 11 : i64} {
  func.func @_bn_relu_kernel(%arg0: i32, %arg1: memref<256x128xbf16, #tpu.memory_space<vmem>>, %arg2: memref<1x128xf32, #tpu.memory_space<vmem>>, %arg3: memref<1x128xf32, #tpu.memory_space<vmem>>, %arg4: memref<256x128xbf16, #tpu.memory_space<vmem>>) attributes {dimension_semantics = [#tpu.dimension_semantics<parallel>], iteration_bounds = array<i64: 2>, scalar_prefetch = 0 : i64, scratch_operands = 0 : i64, tpu.core_type = #tpu.core_type<tc>, window_params = [{transform_indices = @transform_0, window_bounds = array<i64: 256, 128>}, {pipeline_mode = #tpu.pipeline_mode<synchronous>, transform_indices = @transform_1, window_bounds = array<i64: 1, 128>}, {pipeline_mode = #tpu.pipeline_mode<synchronous>, transform_indices = @transform_2, window_bounds = array<i64: 1, 128>}, {transform_indices = @transform_3, window_bounds = array<i64: 256, 128>}]} {
    %c0 = arith.constant 0 : index
    %c0_0 = arith.constant 0 : index
    %0 = vector.load %arg1[%c0, %c0_0] : memref<256x128xbf16, #tpu.memory_space<vmem>>, vector<256x128xbf16>
    %1 = arith.extf %0 : vector<256x128xbf16> to vector<256x128xf32>
    %c0_1 = arith.constant 0 : index
    %c0_2 = arith.constant 0 : index
    %2 = vector.load %arg2[%c0_1, %c0_2] : memref<1x128xf32, #tpu.memory_space<vmem>>, vector<1x128xf32>
    %3 = vector.broadcast %2 : vector<1x128xf32> to vector<256x128xf32>
    %4 = arith.mulf %1, %3 : vector<256x128xf32>
    %c0_3 = arith.constant 0 : index
    %c0_4 = arith.constant 0 : index
    %5 = vector.load %arg3[%c0_3, %c0_4] : memref<1x128xf32, #tpu.memory_space<vmem>>, vector<1x128xf32>
    %6 = vector.broadcast %5 : vector<1x128xf32> to vector<256x128xf32>
    %7 = arith.addf %4, %6 : vector<256x128xf32>
    %cst = arith.constant 0.000000e+00 : f32
    %8 = vector.broadcast %cst : f32 to vector<256x128xf32>
    %9 = arith.maximumf %7, %8 : vector<256x128xf32>
    %10 = arith.truncf %9 : vector<256x128xf32> to vector<256x128xbf16>
    %c0_5 = arith.constant 0 : index
    %c0_6 = arith.constant 0 : index
    %11 = vector.load %arg4[%c0_5, %c0_6] : memref<256x128xbf16, #tpu.memory_space<vmem>>, vector<256x128xbf16>
    tpu.vector_store %arg4[%c0_5, %c0_6], %10 {strides = array<i32>} : memref<256x128xbf16, #tpu.memory_space<vmem>>, vector<256x128xbf16>,
    return
  }
  func.func @transform_0(%arg0: i32) -> (i32, i32) {
    %c0_i32 = arith.constant 0 : i32
    %c0_i32_0 = arith.constant 0 : i32
    return %arg0, %c0_i32 : i32, i32
  }
  func.func @transform_1(%arg0: i32) -> (i32, i32) {
    %c0_i32 = arith.constant 0 : i32
    %c0_i32_0 = arith.constant 0 : i32
    %c0_i32_1 = arith.constant 0 : i32
    return %c0_i32, %c0_i32_0 : i32, i32
  }
  func.func @transform_2(%arg0: i32) -> (i32, i32) {
    %c0_i32 = arith.constant 0 : i32
    %c0_i32_0 = arith.constant 0 : i32
    %c0_i32_1 = arith.constant 0 : i32
    return %c0_i32, %c0_i32_0 : i32, i32
  }
  func.func @transform_3(%arg0: i32) -> (i32, i32) {
    %c0_i32 = arith.constant 0 : i32
    %c0_i32_0 = arith.constant 0 : i32
    return %arg0, %c0_i32 : i32, i32
  }
}

module attributes {stable_mosaic.version = 11 : i64} {
  func.func @_bn_relu_kernel(%arg0: i32, %arg1: memref<128x128xbf16, #tpu.memory_space<vmem>>, %arg2: memref<1x128xf32, #tpu.memory_space<vmem>>, %arg3: memref<1x128xf32, #tpu.memory_space<vmem>>, %arg4: memref<128x128xbf16, #tpu.memory_space<vmem>>) attributes {dimension_semantics = [#tpu.dimension_semantics<parallel>], iteration_bounds = array<i64: 1>, scalar_prefetch = 0 : i64, scratch_operands = 0 : i64, tpu.core_type = #tpu.core_type<tc>, window_params = [{transform_indices = @transform_0, window_bounds = array<i64: 128, 128>}, {pipeline_mode = #tpu.pipeline_mode<synchronous>, transform_indices = @transform_1, window_bounds = array<i64: 1, 128>}, {pipeline_mode = #tpu.pipeline_mode<synchronous>, transform_indices = @transform_2, window_bounds = array<i64: 1, 128>}, {transform_indices = @transform_3, window_bounds = array<i64: 128, 128>}]} {
    %c0 = arith.constant 0 : index
    %c0_0 = arith.constant 0 : index
    %0 = vector.load %arg1[%c0, %c0_0] : memref<128x128xbf16, #tpu.memory_space<vmem>>, vector<128x128xbf16>
    %1 = arith.extf %0 : vector<128x128xbf16> to vector<128x128xf32>
    %c0_1 = arith.constant 0 : index
    %c0_2 = arith.constant 0 : index
    %2 = vector.load %arg2[%c0_1, %c0_2] : memref<1x128xf32, #tpu.memory_space<vmem>>, vector<1x128xf32>
    %3 = vector.broadcast %2 : vector<1x128xf32> to vector<128x128xf32>
    %4 = arith.mulf %1, %3 : vector<128x128xf32>
    %c0_3 = arith.constant 0 : index
    %c0_4 = arith.constant 0 : index
    %5 = vector.load %arg3[%c0_3, %c0_4] : memref<1x128xf32, #tpu.memory_space<vmem>>, vector<1x128xf32>
    %6 = vector.broadcast %5 : vector<1x128xf32> to vector<128x128xf32>
    %7 = arith.addf %4, %6 : vector<128x128xf32>
    %cst = arith.constant 0.000000e+00 : f32
    %8 = vector.broadcast %cst : f32 to vector<128x128xf32>
    %9 = arith.maximumf %7, %8 : vector<128x128xf32>
    %10 = arith.truncf %9 : vector<128x128xf32> to vector<128x128xbf16>
    %c0_5 = arith.constant 0 : index
    %c0_6 = arith.constant 0 : index
    %11 = vector.load %arg4[%c0_5, %c0_6] : memref<128x128xbf16, #tpu.memory_space<vmem>>, vector<128x128xbf16>
    tpu.vector_store %arg4[%c0_5, %c0_6], %10 {strides = array<i32>} : memref<128x128xbf16, #tpu.memory_space<vmem>>, vector<128x128xbf16>,
    return
  }
  func.func @transform_0(%arg0: i32) -> (i32, i32) {
    %c0_i32 = arith.constant 0 : i32
    %c0_i32_0 = arith.constant 0 : i32
    return %arg0, %c0_i32 : i32, i32
  }
  func.func @transform_1(%arg0: i32) -> (i32, i32) {
    %c0_i32 = arith.constant 0 : i32
    %c0_i32_0 = arith.constant 0 : i32
    %c0_i32_1 = arith.constant 0 : i32
    return %c0_i32, %c0_i32_0 : i32, i32
  }
  func.func @transform_2(%arg0: i32) -> (i32, i32) {
    %c0_i32 = arith.constant 0 : i32
    %c0_i32_0 = arith.constant 0 : i32
    %c0_i32_1 = arith.constant 0 : i32
    return %c0_i32, %c0_i32_0 : i32, i32
  }
  func.func @transform_3(%arg0: i32) -> (i32, i32) {
    %c0_i32 = arith.constant 0 : i32
    %c0_i32_0 = arith.constant 0 : i32
    return %arg0, %c0_i32 : i32, i32
  }
}

module attributes {stable_mosaic.version = 11 : i64} {
  func.func @_matmul_stats_kernel(%arg0: i32, %arg1: i32, %arg2: memref<128x128xbf16, #tpu.memory_space<vmem>>, %arg3: memref<128x128xbf16, #tpu.memory_space<vmem>>, %arg4: memref<128x128xbf16, #tpu.memory_space<vmem>>, %arg5: memref<1x2x128xf32, #tpu.memory_space<vmem>>, %arg6: memref<128x128xf32, #tpu.memory_space<vmem>>) attributes {dimension_semantics = [#tpu.dimension_semantics<parallel>, #tpu.dimension_semantics<arbitrary>], iteration_bounds = array<i64: 1, 1>, scalar_prefetch = 0 : i64, scratch_operands = 1 : i64, tpu.core_type = #tpu.core_type<tc>, window_params = [{transform_indices = @transform_0, window_bounds = array<i64: 128, 128>}, {transform_indices = @transform_1, window_bounds = array<i64: 128, 128>}, {transform_indices = @transform_2, window_bounds = array<i64: 128, 128>}, {transform_indices = @transform_3, window_bounds = array<i64: 1, 2, 128>}]} {
    %c0_i32 = arith.constant 0 : i32
    %0 = arith.cmpi eq, %arg1, %c0_i32 : i32
    %1 = arith.extui %0 : i1 to i32
    %c0_i32_0 = arith.constant 0 : i32
    %2 = arith.cmpi ne, %1, %c0_i32_0 : i32
    scf.if %2 {
      %cst_10 = arith.constant 0.000000e+00 : f32
      %12 = vector.broadcast %cst_10 : f32 to vector<128x128xf32>
      %c0_11 = arith.constant 0 : index
      %c0_12 = arith.constant 0 : index
      %13 = vector.load %arg6[%c0_11, %c0_12] : memref<128x128xf32, #tpu.memory_space<vmem>>, vector<128x128xf32>
      tpu.vector_store %arg6[%c0_11, %c0_12], %12 {strides = array<i32>} : memref<128x128xf32, #tpu.memory_space<vmem>>, vector<128x128xf32>,
    } else {
    }
    %c0 = arith.constant 0 : index
    %c0_1 = arith.constant 0 : index
    %3 = vector.load %arg6[%c0, %c0_1] : memref<128x128xf32, #tpu.memory_space<vmem>>, vector<128x128xf32>
    %c0_2 = arith.constant 0 : index
    %c0_3 = arith.constant 0 : index
    %4 = vector.load %arg2[%c0_2, %c0_3] : memref<128x128xbf16, #tpu.memory_space<vmem>>, vector<128x128xbf16>
    %c0_4 = arith.constant 0 : index
    %c0_5 = arith.constant 0 : index
    %5 = vector.load %arg3[%c0_4, %c0_5] : memref<128x128xbf16, #tpu.memory_space<vmem>>, vector<128x128xbf16>
    %cst = arith.constant dense<0.000000e+00> : vector<128x128xf32>
    %6 = tpu.matmul %4, %5, %cst {dimension_numbers = #tpu.dot_dimension_numbers<[1], [0], [0], [1], [0, 0, 1, 1], [], []>} : vector<128x128xbf16>, vector<128x128xbf16>, vector<128x128xf32> -> vector<128x128xf32>
    %7 = arith.addf %3, %6 : vector<128x128xf32>
    %c0_6 = arith.constant 0 : index
    %c0_7 = arith.constant 0 : index
    %8 = vector.load %arg6[%c0_6, %c0_7] : memref<128x128xf32, #tpu.memory_space<vmem>>, vector<128x128xf32>
    tpu.vector_store %arg6[%c0_6, %c0_7], %7 {strides = array<i32>} : memref<128x128xf32, #tpu.memory_space<vmem>>, vector<128x128xf32>,
    %c0_i32_8 = arith.constant 0 : i32
    %9 = arith.cmpi eq, %arg1, %c0_i32_8 : i32
    %10 = arith.extui %9 : i1 to i32
    %c0_i32_9 = arith.constant 0 : i32
    %11 = arith.cmpi ne, %10, %c0_i32_9 : i32
    scf.if %11 {
      %c0_10 = arith.constant 0 : index
      %c0_11 = arith.constant 0 : index
      %12 = vector.load %arg6[%c0_10, %c0_11] : memref<128x128xf32, #tpu.memory_space<vmem>>, vector<128x128xf32>
      %13 = arith.truncf %12 : vector<128x128xf32> to vector<128x128xbf16>
      %c0_12 = arith.constant 0 : index
      %c0_13 = arith.constant 0 : index
      %14 = vector.load %arg4[%c0_12, %c0_13] : memref<128x128xbf16, #tpu.memory_space<vmem>>, vector<128x128xbf16>
      tpu.vector_store %arg4[%c0_12, %c0_13], %13 {strides = array<i32>} : memref<128x128xbf16, #tpu.memory_space<vmem>>, vector<128x128xbf16>,
      %cst_14 = arith.constant dense<0.000000e+00> : vector<128xf32>
      %15 = vector.multi_reduction <add>, %12, %cst_14 [0] : vector<128x128xf32> to vector<128xf32>
      %16 = vector.shape_cast %15 : vector<128xf32> to vector<1x128xf32>
      %17 = arith.mulf %12, %12 : vector<128x128xf32>
      %cst_15 = arith.constant dense<0.000000e+00> : vector<128xf32>
      %18 = vector.multi_reduction <add>, %17, %cst_15 [0] : vector<128x128xf32> to vector<128xf32>
      %19 = vector.shape_cast %18 : vector<128xf32> to vector<1x128xf32>
      %20 = tpu.concatenate %16, %19 in 0 : vector<1x128xf32>, vector<1x128xf32> -> vector<2x128xf32>
      %c0_16 = arith.constant 0 : index
      %c0_17 = arith.constant 0 : index
      %c0_18 = arith.constant 0 : index
      %21 = vector.load %arg5[%c0_16, %c0_17, %c0_18] : memref<1x2x128xf32, #tpu.memory_space<vmem>>, vector<1x2x128xf32>
      %22 = vector.shape_cast %21 : vector<1x2x128xf32> to vector<2x128xf32>
      %23 = vector.shape_cast %20 : vector<2x128xf32> to vector<1x2x128xf32>
      tpu.vector_store %arg5[%c0_16, %c0_17, %c0_18], %23 {strides = array<i32>} : memref<1x2x128xf32, #tpu.memory_space<vmem>>, vector<1x2x128xf32>,
    } else {
    }
    return
  }
  func.func @transform_0(%arg0: i32, %arg1: i32) -> (i32, i32) {
    %c0_i32 = arith.constant 0 : i32
    return %arg0, %arg1 : i32, i32
  }
  func.func @transform_1(%arg0: i32, %arg1: i32) -> (i32, i32) {
    %c0_i32 = arith.constant 0 : i32
    %c0_i32_0 = arith.constant 0 : i32
    return %arg1, %c0_i32 : i32, i32
  }
  func.func @transform_2(%arg0: i32, %arg1: i32) -> (i32, i32) {
    %c0_i32 = arith.constant 0 : i32
    %c0_i32_0 = arith.constant 0 : i32
    return %arg0, %c0_i32 : i32, i32
  }
  func.func @transform_3(%arg0: i32, %arg1: i32) -> (i32, i32, i32) {
    %c0_i32 = arith.constant 0 : i32
    %c0_i32_0 = arith.constant 0 : i32
    %c0_i32_1 = arith.constant 0 : i32
    return %arg0, %c0_i32, %c0_i32_0 : i32, i32, i32
  }
}

module attributes {stable_mosaic.version = 11 : i64} {
  func.func @_matmul_stats_kernel(%arg0: i32, %arg1: i32, %arg2: memref<32x128xbf16, #tpu.memory_space<vmem>>, %arg3: memref<128x128xbf16, #tpu.memory_space<vmem>>, %arg4: memref<32x128xbf16, #tpu.memory_space<vmem>>, %arg5: memref<1x2x128xf32, #tpu.memory_space<vmem>>, %arg6: memref<32x128xf32, #tpu.memory_space<vmem>>) attributes {dimension_semantics = [#tpu.dimension_semantics<parallel>, #tpu.dimension_semantics<arbitrary>], iteration_bounds = array<i64: 1, 1>, scalar_prefetch = 0 : i64, scratch_operands = 1 : i64, tpu.core_type = #tpu.core_type<tc>, window_params = [{transform_indices = @transform_0, window_bounds = array<i64: 32, 128>}, {transform_indices = @transform_1, window_bounds = array<i64: 128, 128>}, {transform_indices = @transform_2, window_bounds = array<i64: 32, 128>}, {transform_indices = @transform_3, window_bounds = array<i64: 1, 2, 128>}]} {
    %c0_i32 = arith.constant 0 : i32
    %0 = arith.cmpi eq, %arg1, %c0_i32 : i32
    %1 = arith.extui %0 : i1 to i32
    %c0_i32_0 = arith.constant 0 : i32
    %2 = arith.cmpi ne, %1, %c0_i32_0 : i32
    scf.if %2 {
      %cst_10 = arith.constant 0.000000e+00 : f32
      %12 = vector.broadcast %cst_10 : f32 to vector<32x128xf32>
      %c0_11 = arith.constant 0 : index
      %c0_12 = arith.constant 0 : index
      %13 = vector.load %arg6[%c0_11, %c0_12] : memref<32x128xf32, #tpu.memory_space<vmem>>, vector<32x128xf32>
      tpu.vector_store %arg6[%c0_11, %c0_12], %12 {strides = array<i32>} : memref<32x128xf32, #tpu.memory_space<vmem>>, vector<32x128xf32>,
    } else {
    }
    %c0 = arith.constant 0 : index
    %c0_1 = arith.constant 0 : index
    %3 = vector.load %arg6[%c0, %c0_1] : memref<32x128xf32, #tpu.memory_space<vmem>>, vector<32x128xf32>
    %c0_2 = arith.constant 0 : index
    %c0_3 = arith.constant 0 : index
    %4 = vector.load %arg2[%c0_2, %c0_3] : memref<32x128xbf16, #tpu.memory_space<vmem>>, vector<32x128xbf16>
    %c0_4 = arith.constant 0 : index
    %c0_5 = arith.constant 0 : index
    %5 = vector.load %arg3[%c0_4, %c0_5] : memref<128x128xbf16, #tpu.memory_space<vmem>>, vector<128x128xbf16>
    %cst = arith.constant dense<0.000000e+00> : vector<32x128xf32>
    %6 = tpu.matmul %4, %5, %cst {dimension_numbers = #tpu.dot_dimension_numbers<[1], [0], [0], [1], [0, 0, 1, 1], [], []>} : vector<32x128xbf16>, vector<128x128xbf16>, vector<32x128xf32> -> vector<32x128xf32>
    %7 = arith.addf %3, %6 : vector<32x128xf32>
    %c0_6 = arith.constant 0 : index
    %c0_7 = arith.constant 0 : index
    %8 = vector.load %arg6[%c0_6, %c0_7] : memref<32x128xf32, #tpu.memory_space<vmem>>, vector<32x128xf32>
    tpu.vector_store %arg6[%c0_6, %c0_7], %7 {strides = array<i32>} : memref<32x128xf32, #tpu.memory_space<vmem>>, vector<32x128xf32>,
    %c0_i32_8 = arith.constant 0 : i32
    %9 = arith.cmpi eq, %arg1, %c0_i32_8 : i32
    %10 = arith.extui %9 : i1 to i32
    %c0_i32_9 = arith.constant 0 : i32
    %11 = arith.cmpi ne, %10, %c0_i32_9 : i32
    scf.if %11 {
      %c0_10 = arith.constant 0 : index
      %c0_11 = arith.constant 0 : index
      %12 = vector.load %arg6[%c0_10, %c0_11] : memref<32x128xf32, #tpu.memory_space<vmem>>, vector<32x128xf32>
      %13 = arith.truncf %12 : vector<32x128xf32> to vector<32x128xbf16>
      %c0_12 = arith.constant 0 : index
      %c0_13 = arith.constant 0 : index
      %14 = vector.load %arg4[%c0_12, %c0_13] : memref<32x128xbf16, #tpu.memory_space<vmem>>, vector<32x128xbf16>
      tpu.vector_store %arg4[%c0_12, %c0_13], %13 {strides = array<i32>} : memref<32x128xbf16, #tpu.memory_space<vmem>>, vector<32x128xbf16>,
      %cst_14 = arith.constant dense<0.000000e+00> : vector<128xf32>
      %15 = vector.multi_reduction <add>, %12, %cst_14 [0] : vector<32x128xf32> to vector<128xf32>
      %16 = vector.shape_cast %15 : vector<128xf32> to vector<1x128xf32>
      %17 = arith.mulf %12, %12 : vector<32x128xf32>
      %cst_15 = arith.constant dense<0.000000e+00> : vector<128xf32>
      %18 = vector.multi_reduction <add>, %17, %cst_15 [0] : vector<32x128xf32> to vector<128xf32>
      %19 = vector.shape_cast %18 : vector<128xf32> to vector<1x128xf32>
      %20 = tpu.concatenate %16, %19 in 0 : vector<1x128xf32>, vector<1x128xf32> -> vector<2x128xf32>
      %c0_16 = arith.constant 0 : index
      %c0_17 = arith.constant 0 : index
      %c0_18 = arith.constant 0 : index
      %21 = vector.load %arg5[%c0_16, %c0_17, %c0_18] : memref<1x2x128xf32, #tpu.memory_space<vmem>>, vector<1x2x128xf32>
      %22 = vector.shape_cast %21 : vector<1x2x128xf32> to vector<2x128xf32>
      %23 = vector.shape_cast %20 : vector<2x128xf32> to vector<1x2x128xf32>
      tpu.vector_store %arg5[%c0_16, %c0_17, %c0_18], %23 {strides = array<i32>} : memref<1x2x128xf32, #tpu.memory_space<vmem>>, vector<1x2x128xf32>,
    } else {
    }
    return
  }
  func.func @transform_0(%arg0: i32, %arg1: i32) -> (i32, i32) {
    %c0_i32 = arith.constant 0 : i32
    return %arg0, %arg1 : i32, i32
  }
  func.func @transform_1(%arg0: i32, %arg1: i32) -> (i32, i32) {
    %c0_i32 = arith.constant 0 : i32
    %c0_i32_0 = arith.constant 0 : i32
    return %arg1, %c0_i32 : i32, i32
  }
  func.func @transform_2(%arg0: i32, %arg1: i32) -> (i32, i32) {
    %c0_i32 = arith.constant 0 : i32
    %c0_i32_0 = arith.constant 0 : i32
    return %arg0, %c0_i32 : i32, i32
  }
  func.func @transform_3(%arg0: i32, %arg1: i32) -> (i32, i32, i32) {
    %c0_i32 = arith.constant 0 : i32
    %c0_i32_0 = arith.constant 0 : i32
    %c0_i32_1 = arith.constant 0 : i32
    return %arg0, %c0_i32, %c0_i32_0 : i32, i32, i32
  }
}

module attributes {stable_mosaic.version = 11 : i64} {
  func.func @_bn_relu_kernel(%arg0: i32, %arg1: memref<32x128xbf16, #tpu.memory_space<vmem>>, %arg2: memref<1x128xf32, #tpu.memory_space<vmem>>, %arg3: memref<1x128xf32, #tpu.memory_space<vmem>>, %arg4: memref<32x128xbf16, #tpu.memory_space<vmem>>) attributes {dimension_semantics = [#tpu.dimension_semantics<parallel>], iteration_bounds = array<i64: 1>, scalar_prefetch = 0 : i64, scratch_operands = 0 : i64, tpu.core_type = #tpu.core_type<tc>, window_params = [{transform_indices = @transform_0, window_bounds = array<i64: 32, 128>}, {pipeline_mode = #tpu.pipeline_mode<synchronous>, transform_indices = @transform_1, window_bounds = array<i64: 1, 128>}, {pipeline_mode = #tpu.pipeline_mode<synchronous>, transform_indices = @transform_2, window_bounds = array<i64: 1, 128>}, {transform_indices = @transform_3, window_bounds = array<i64: 32, 128>}]} {
    %c0 = arith.constant 0 : index
    %c0_0 = arith.constant 0 : index
    %0 = vector.load %arg1[%c0, %c0_0] : memref<32x128xbf16, #tpu.memory_space<vmem>>, vector<32x128xbf16>
    %1 = arith.extf %0 : vector<32x128xbf16> to vector<32x128xf32>
    %c0_1 = arith.constant 0 : index
    %c0_2 = arith.constant 0 : index
    %2 = vector.load %arg2[%c0_1, %c0_2] : memref<1x128xf32, #tpu.memory_space<vmem>>, vector<1x128xf32>
    %3 = vector.broadcast %2 : vector<1x128xf32> to vector<32x128xf32>
    %4 = arith.mulf %1, %3 : vector<32x128xf32>
    %c0_3 = arith.constant 0 : index
    %c0_4 = arith.constant 0 : index
    %5 = vector.load %arg3[%c0_3, %c0_4] : memref<1x128xf32, #tpu.memory_space<vmem>>, vector<1x128xf32>
    %6 = vector.broadcast %5 : vector<1x128xf32> to vector<32x128xf32>
    %7 = arith.addf %4, %6 : vector<32x128xf32>
    %cst = arith.constant 0.000000e+00 : f32
    %8 = vector.broadcast %cst : f32 to vector<32x128xf32>
    %9 = arith.maximumf %7, %8 : vector<32x128xf32>
    %10 = arith.truncf %9 : vector<32x128xf32> to vector<32x128xbf16>
    %c0_5 = arith.constant 0 : index
    %c0_6 = arith.constant 0 : index
    %11 = vector.load %arg4[%c0_5, %c0_6] : memref<32x128xbf16, #tpu.memory_space<vmem>>, vector<32x128xbf16>
    tpu.vector_store %arg4[%c0_5, %c0_6], %10 {strides = array<i32>} : memref<32x128xbf16, #tpu.memory_space<vmem>>, vector<32x128xbf16>,
    return
  }
  func.func @transform_0(%arg0: i32) -> (i32, i32) {
    %c0_i32 = arith.constant 0 : i32
    %c0_i32_0 = arith.constant 0 : i32
    return %arg0, %c0_i32 : i32, i32
  }
  func.func @transform_1(%arg0: i32) -> (i32, i32) {
    %c0_i32 = arith.constant 0 : i32
    %c0_i32_0 = arith.constant 0 : i32
    %c0_i32_1 = arith.constant 0 : i32
    return %c0_i32, %c0_i32_0 : i32, i32
  }
  func.func @transform_2(%arg0: i32) -> (i32, i32) {
    %c0_i32 = arith.constant 0 : i32
    %c0_i32_0 = arith.constant 0 : i32
    %c0_i32_1 = arith.constant 0 : i32
    return %c0_i32, %c0_i32_0 : i32, i32
  }
  func.func @transform_3(%arg0: i32) -> (i32, i32) {
    %c0_i32 = arith.constant 0 : i32
    %c0_i32_0 = arith.constant 0 : i32
    return %arg0, %c0_i32 : i32, i32
  }
}

module attributes {stable_mosaic.version = 11 : i64} {
  func.func @_matmul_stats_kernel(%arg0: i32, %arg1: i32, %arg2: memref<32x256xbf16, #tpu.memory_space<vmem>>, %arg3: memref<256x128xbf16, #tpu.memory_space<vmem>>, %arg4: memref<32x128xbf16, #tpu.memory_space<vmem>>, %arg5: memref<1x2x128xf32, #tpu.memory_space<vmem>>, %arg6: memref<32x128xf32, #tpu.memory_space<vmem>>) attributes {dimension_semantics = [#tpu.dimension_semantics<parallel>, #tpu.dimension_semantics<arbitrary>], iteration_bounds = array<i64: 1, 1>, scalar_prefetch = 0 : i64, scratch_operands = 1 : i64, tpu.core_type = #tpu.core_type<tc>, window_params = [{transform_indices = @transform_0, window_bounds = array<i64: 32, 256>}, {transform_indices = @transform_1, window_bounds = array<i64: 256, 128>}, {transform_indices = @transform_2, window_bounds = array<i64: 32, 128>}, {transform_indices = @transform_3, window_bounds = array<i64: 1, 2, 128>}]} {
    %c0_i32 = arith.constant 0 : i32
    %0 = arith.cmpi eq, %arg1, %c0_i32 : i32
    %1 = arith.extui %0 : i1 to i32
    %c0_i32_0 = arith.constant 0 : i32
    %2 = arith.cmpi ne, %1, %c0_i32_0 : i32
    scf.if %2 {
      %cst_10 = arith.constant 0.000000e+00 : f32
      %12 = vector.broadcast %cst_10 : f32 to vector<32x128xf32>
      %c0_11 = arith.constant 0 : index
      %c0_12 = arith.constant 0 : index
      %13 = vector.load %arg6[%c0_11, %c0_12] : memref<32x128xf32, #tpu.memory_space<vmem>>, vector<32x128xf32>
      tpu.vector_store %arg6[%c0_11, %c0_12], %12 {strides = array<i32>} : memref<32x128xf32, #tpu.memory_space<vmem>>, vector<32x128xf32>,
    } else {
    }
    %c0 = arith.constant 0 : index
    %c0_1 = arith.constant 0 : index
    %3 = vector.load %arg6[%c0, %c0_1] : memref<32x128xf32, #tpu.memory_space<vmem>>, vector<32x128xf32>
    %c0_2 = arith.constant 0 : index
    %c0_3 = arith.constant 0 : index
    %4 = vector.load %arg2[%c0_2, %c0_3] : memref<32x256xbf16, #tpu.memory_space<vmem>>, vector<32x256xbf16>
    %c0_4 = arith.constant 0 : index
    %c0_5 = arith.constant 0 : index
    %5 = vector.load %arg3[%c0_4, %c0_5] : memref<256x128xbf16, #tpu.memory_space<vmem>>, vector<256x128xbf16>
    %cst = arith.constant dense<0.000000e+00> : vector<32x128xf32>
    %6 = tpu.matmul %4, %5, %cst {dimension_numbers = #tpu.dot_dimension_numbers<[1], [0], [0], [1], [0, 0, 1, 1], [], []>} : vector<32x256xbf16>, vector<256x128xbf16>, vector<32x128xf32> -> vector<32x128xf32>
    %7 = arith.addf %3, %6 : vector<32x128xf32>
    %c0_6 = arith.constant 0 : index
    %c0_7 = arith.constant 0 : index
    %8 = vector.load %arg6[%c0_6, %c0_7] : memref<32x128xf32, #tpu.memory_space<vmem>>, vector<32x128xf32>
    tpu.vector_store %arg6[%c0_6, %c0_7], %7 {strides = array<i32>} : memref<32x128xf32, #tpu.memory_space<vmem>>, vector<32x128xf32>,
    %c0_i32_8 = arith.constant 0 : i32
    %9 = arith.cmpi eq, %arg1, %c0_i32_8 : i32
    %10 = arith.extui %9 : i1 to i32
    %c0_i32_9 = arith.constant 0 : i32
    %11 = arith.cmpi ne, %10, %c0_i32_9 : i32
    scf.if %11 {
      %c0_10 = arith.constant 0 : index
      %c0_11 = arith.constant 0 : index
      %12 = vector.load %arg6[%c0_10, %c0_11] : memref<32x128xf32, #tpu.memory_space<vmem>>, vector<32x128xf32>
      %13 = arith.truncf %12 : vector<32x128xf32> to vector<32x128xbf16>
      %c0_12 = arith.constant 0 : index
      %c0_13 = arith.constant 0 : index
      %14 = vector.load %arg4[%c0_12, %c0_13] : memref<32x128xbf16, #tpu.memory_space<vmem>>, vector<32x128xbf16>
      tpu.vector_store %arg4[%c0_12, %c0_13], %13 {strides = array<i32>} : memref<32x128xbf16, #tpu.memory_space<vmem>>, vector<32x128xbf16>,
      %cst_14 = arith.constant dense<0.000000e+00> : vector<128xf32>
      %15 = vector.multi_reduction <add>, %12, %cst_14 [0] : vector<32x128xf32> to vector<128xf32>
      %16 = vector.shape_cast %15 : vector<128xf32> to vector<1x128xf32>
      %17 = arith.mulf %12, %12 : vector<32x128xf32>
      %cst_15 = arith.constant dense<0.000000e+00> : vector<128xf32>
      %18 = vector.multi_reduction <add>, %17, %cst_15 [0] : vector<32x128xf32> to vector<128xf32>
      %19 = vector.shape_cast %18 : vector<128xf32> to vector<1x128xf32>
      %20 = tpu.concatenate %16, %19 in 0 : vector<1x128xf32>, vector<1x128xf32> -> vector<2x128xf32>
      %c0_16 = arith.constant 0 : index
      %c0_17 = arith.constant 0 : index
      %c0_18 = arith.constant 0 : index
      %21 = vector.load %arg5[%c0_16, %c0_17, %c0_18] : memref<1x2x128xf32, #tpu.memory_space<vmem>>, vector<1x2x128xf32>
      %22 = vector.shape_cast %21 : vector<1x2x128xf32> to vector<2x128xf32>
      %23 = vector.shape_cast %20 : vector<2x128xf32> to vector<1x2x128xf32>
      tpu.vector_store %arg5[%c0_16, %c0_17, %c0_18], %23 {strides = array<i32>} : memref<1x2x128xf32, #tpu.memory_space<vmem>>, vector<1x2x128xf32>,
    } else {
    }
    return
  }
  func.func @transform_0(%arg0: i32, %arg1: i32) -> (i32, i32) {
    %c0_i32 = arith.constant 0 : i32
    return %arg0, %arg1 : i32, i32
  }
  func.func @transform_1(%arg0: i32, %arg1: i32) -> (i32, i32) {
    %c0_i32 = arith.constant 0 : i32
    %c0_i32_0 = arith.constant 0 : i32
    return %arg1, %c0_i32 : i32, i32
  }
  func.func @transform_2(%arg0: i32, %arg1: i32) -> (i32, i32) {
    %c0_i32 = arith.constant 0 : i32
    %c0_i32_0 = arith.constant 0 : i32
    return %arg0, %c0_i32 : i32, i32
  }
  func.func @transform_3(%arg0: i32, %arg1: i32) -> (i32, i32, i32) {
    %c0_i32 = arith.constant 0 : i32
    %c0_i32_0 = arith.constant 0 : i32
    %c0_i32_1 = arith.constant 0 : i32
    return %arg0, %c0_i32, %c0_i32_0 : i32, i32, i32
  }
}

module attributes {stable_mosaic.version = 11 : i64} {
  func.func @_bn_relu_kernel(%arg0: i32, %arg1: memref<8x128xbf16, #tpu.memory_space<vmem>>, %arg2: memref<1x128xf32, #tpu.memory_space<vmem>>, %arg3: memref<1x128xf32, #tpu.memory_space<vmem>>, %arg4: memref<8x128xbf16, #tpu.memory_space<vmem>>) attributes {dimension_semantics = [#tpu.dimension_semantics<parallel>], iteration_bounds = array<i64: 1>, scalar_prefetch = 0 : i64, scratch_operands = 0 : i64, tpu.core_type = #tpu.core_type<tc>, window_params = [{transform_indices = @transform_0, window_bounds = array<i64: 8, 128>}, {pipeline_mode = #tpu.pipeline_mode<synchronous>, transform_indices = @transform_1, window_bounds = array<i64: 1, 128>}, {pipeline_mode = #tpu.pipeline_mode<synchronous>, transform_indices = @transform_2, window_bounds = array<i64: 1, 128>}, {transform_indices = @transform_3, window_bounds = array<i64: 8, 128>}]} {
    %c0 = arith.constant 0 : index
    %c0_0 = arith.constant 0 : index
    %0 = vector.load %arg1[%c0, %c0_0] : memref<8x128xbf16, #tpu.memory_space<vmem>>, vector<8x128xbf16>
    %1 = arith.extf %0 : vector<8x128xbf16> to vector<8x128xf32>
    %c0_1 = arith.constant 0 : index
    %c0_2 = arith.constant 0 : index
    %2 = vector.load %arg2[%c0_1, %c0_2] : memref<1x128xf32, #tpu.memory_space<vmem>>, vector<1x128xf32>
    %3 = vector.broadcast %2 : vector<1x128xf32> to vector<8x128xf32>
    %4 = arith.mulf %1, %3 : vector<8x128xf32>
    %c0_3 = arith.constant 0 : index
    %c0_4 = arith.constant 0 : index
    %5 = vector.load %arg3[%c0_3, %c0_4] : memref<1x128xf32, #tpu.memory_space<vmem>>, vector<1x128xf32>
    %6 = vector.broadcast %5 : vector<1x128xf32> to vector<8x128xf32>
    %7 = arith.addf %4, %6 : vector<8x128xf32>
    %cst = arith.constant 0.000000e+00 : f32
    %8 = vector.broadcast %cst : f32 to vector<8x128xf32>
    %9 = arith.maximumf %7, %8 : vector<8x128xf32>
    %10 = arith.truncf %9 : vector<8x128xf32> to vector<8x128xbf16>
    %c0_5 = arith.constant 0 : index
    %c0_6 = arith.constant 0 : index
    %11 = vector.load %arg4[%c0_5, %c0_6] : memref<8x128xbf16, #tpu.memory_space<vmem>>, vector<8x128xbf16>
    tpu.vector_store %arg4[%c0_5, %c0_6], %10 {strides = array<i32>} : memref<8x128xbf16, #tpu.memory_space<vmem>>, vector<8x128xbf16>,
    return
  }
  func.func @transform_0(%arg0: i32) -> (i32, i32) {
    %c0_i32 = arith.constant 0 : i32
    %c0_i32_0 = arith.constant 0 : i32
    return %arg0, %c0_i32 : i32, i32
  }
  func.func @transform_1(%arg0: i32) -> (i32, i32) {
    %c0_i32 = arith.constant 0 : i32
    %c0_i32_0 = arith.constant 0 : i32
    %c0_i32_1 = arith.constant 0 : i32
    return %c0_i32, %c0_i32_0 : i32, i32
  }
  func.func @transform_2(%arg0: i32) -> (i32, i32) {
    %c0_i32 = arith.constant 0 : i32
    %c0_i32_0 = arith.constant 0 : i32
    %c0_i32_1 = arith.constant 0 : i32
    return %c0_i32, %c0_i32_0 : i32, i32
  }
  func.func @transform_3(%arg0: i32) -> (i32, i32) {
    %c0_i32 = arith.constant 0 : i32
    %c0_i32_0 = arith.constant 0 : i32
    return %arg0, %c0_i32 : i32, i32
  }
}

module attributes {stable_mosaic.version = 11 : i64} {
  func.func @_matmul_stats_kernel(%arg0: i32, %arg1: i32, %arg2: memref<8x256xbf16, #tpu.memory_space<vmem>>, %arg3: memref<256x128xbf16, #tpu.memory_space<vmem>>, %arg4: memref<8x128xbf16, #tpu.memory_space<vmem>>, %arg5: memref<1x2x128xf32, #tpu.memory_space<vmem>>, %arg6: memref<8x128xf32, #tpu.memory_space<vmem>>) attributes {dimension_semantics = [#tpu.dimension_semantics<parallel>, #tpu.dimension_semantics<arbitrary>], iteration_bounds = array<i64: 1, 1>, scalar_prefetch = 0 : i64, scratch_operands = 1 : i64, tpu.core_type = #tpu.core_type<tc>, window_params = [{transform_indices = @transform_0, window_bounds = array<i64: 8, 256>}, {transform_indices = @transform_1, window_bounds = array<i64: 256, 128>}, {transform_indices = @transform_2, window_bounds = array<i64: 8, 128>}, {transform_indices = @transform_3, window_bounds = array<i64: 1, 2, 128>}]} {
    %c0_i32 = arith.constant 0 : i32
    %0 = arith.cmpi eq, %arg1, %c0_i32 : i32
    %1 = arith.extui %0 : i1 to i32
    %c0_i32_0 = arith.constant 0 : i32
    %2 = arith.cmpi ne, %1, %c0_i32_0 : i32
    scf.if %2 {
      %cst_10 = arith.constant 0.000000e+00 : f32
      %12 = vector.broadcast %cst_10 : f32 to vector<8x128xf32>
      %c0_11 = arith.constant 0 : index
      %c0_12 = arith.constant 0 : index
      %13 = vector.load %arg6[%c0_11, %c0_12] : memref<8x128xf32, #tpu.memory_space<vmem>>, vector<8x128xf32>
      tpu.vector_store %arg6[%c0_11, %c0_12], %12 {strides = array<i32>} : memref<8x128xf32, #tpu.memory_space<vmem>>, vector<8x128xf32>,
    } else {
    }
    %c0 = arith.constant 0 : index
    %c0_1 = arith.constant 0 : index
    %3 = vector.load %arg6[%c0, %c0_1] : memref<8x128xf32, #tpu.memory_space<vmem>>, vector<8x128xf32>
    %c0_2 = arith.constant 0 : index
    %c0_3 = arith.constant 0 : index
    %4 = vector.load %arg2[%c0_2, %c0_3] : memref<8x256xbf16, #tpu.memory_space<vmem>>, vector<8x256xbf16>
    %c0_4 = arith.constant 0 : index
    %c0_5 = arith.constant 0 : index
    %5 = vector.load %arg3[%c0_4, %c0_5] : memref<256x128xbf16, #tpu.memory_space<vmem>>, vector<256x128xbf16>
    %cst = arith.constant dense<0.000000e+00> : vector<8x128xf32>
    %6 = tpu.matmul %4, %5, %cst {dimension_numbers = #tpu.dot_dimension_numbers<[1], [0], [0], [1], [0, 0, 1, 1], [], []>} : vector<8x256xbf16>, vector<256x128xbf16>, vector<8x128xf32> -> vector<8x128xf32>
    %7 = arith.addf %3, %6 : vector<8x128xf32>
    %c0_6 = arith.constant 0 : index
    %c0_7 = arith.constant 0 : index
    %8 = vector.load %arg6[%c0_6, %c0_7] : memref<8x128xf32, #tpu.memory_space<vmem>>, vector<8x128xf32>
    tpu.vector_store %arg6[%c0_6, %c0_7], %7 {strides = array<i32>} : memref<8x128xf32, #tpu.memory_space<vmem>>, vector<8x128xf32>,
    %c0_i32_8 = arith.constant 0 : i32
    %9 = arith.cmpi eq, %arg1, %c0_i32_8 : i32
    %10 = arith.extui %9 : i1 to i32
    %c0_i32_9 = arith.constant 0 : i32
    %11 = arith.cmpi ne, %10, %c0_i32_9 : i32
    scf.if %11 {
      %c0_10 = arith.constant 0 : index
      %c0_11 = arith.constant 0 : index
      %12 = vector.load %arg6[%c0_10, %c0_11] : memref<8x128xf32, #tpu.memory_space<vmem>>, vector<8x128xf32>
      %13 = arith.truncf %12 : vector<8x128xf32> to vector<8x128xbf16>
      %c0_12 = arith.constant 0 : index
      %c0_13 = arith.constant 0 : index
      %14 = vector.load %arg4[%c0_12, %c0_13] : memref<8x128xbf16, #tpu.memory_space<vmem>>, vector<8x128xbf16>
      tpu.vector_store %arg4[%c0_12, %c0_13], %13 {strides = array<i32>} : memref<8x128xbf16, #tpu.memory_space<vmem>>, vector<8x128xbf16>,
      %cst_14 = arith.constant dense<0.000000e+00> : vector<128xf32>
      %15 = vector.multi_reduction <add>, %12, %cst_14 [0] : vector<8x128xf32> to vector<128xf32>
      %16 = vector.shape_cast %15 : vector<128xf32> to vector<1x128xf32>
      %17 = arith.mulf %12, %12 : vector<8x128xf32>
      %cst_15 = arith.constant dense<0.000000e+00> : vector<128xf32>
      %18 = vector.multi_reduction <add>, %17, %cst_15 [0] : vector<8x128xf32> to vector<128xf32>
      %19 = vector.shape_cast %18 : vector<128xf32> to vector<1x128xf32>
      %20 = tpu.concatenate %16, %19 in 0 : vector<1x128xf32>, vector<1x128xf32> -> vector<2x128xf32>
      %c0_16 = arith.constant 0 : index
      %c0_17 = arith.constant 0 : index
      %c0_18 = arith.constant 0 : index
      %21 = vector.load %arg5[%c0_16, %c0_17, %c0_18] : memref<1x2x128xf32, #tpu.memory_space<vmem>>, vector<1x2x128xf32>
      %22 = vector.shape_cast %21 : vector<1x2x128xf32> to vector<2x128xf32>
      %23 = vector.shape_cast %20 : vector<2x128xf32> to vector<1x2x128xf32>
      tpu.vector_store %arg5[%c0_16, %c0_17, %c0_18], %23 {strides = array<i32>} : memref<1x2x128xf32, #tpu.memory_space<vmem>>, vector<1x2x128xf32>,
    } else {
    }
    return
  }
  func.func @transform_0(%arg0: i32, %arg1: i32) -> (i32, i32) {
    %c0_i32 = arith.constant 0 : i32
    return %arg0, %arg1 : i32, i32
  }
  func.func @transform_1(%arg0: i32, %arg1: i32) -> (i32, i32) {
    %c0_i32 = arith.constant 0 : i32
    %c0_i32_0 = arith.constant 0 : i32
    return %arg1, %c0_i32 : i32, i32
  }
  func.func @transform_2(%arg0: i32, %arg1: i32) -> (i32, i32) {
    %c0_i32 = arith.constant 0 : i32
    %c0_i32_0 = arith.constant 0 : i32
    return %arg0, %c0_i32 : i32, i32
  }
  func.func @transform_3(%arg0: i32, %arg1: i32) -> (i32, i32, i32) {
    %c0_i32 = arith.constant 0 : i32
    %c0_i32_0 = arith.constant 0 : i32
    %c0_i32_1 = arith.constant 0 : i32
    return %arg0, %c0_i32, %c0_i32_0 : i32, i32, i32
  }
}

module attributes {stable_mosaic.version = 11 : i64} {
  func.func @_matmul_stats_kernel(%arg0: i32, %arg1: i32, %arg2: memref<8x384xbf16, #tpu.memory_space<vmem>>, %arg3: memref<384x128xbf16, #tpu.memory_space<vmem>>, %arg4: memref<8x128xbf16, #tpu.memory_space<vmem>>, %arg5: memref<1x2x128xf32, #tpu.memory_space<vmem>>, %arg6: memref<8x128xf32, #tpu.memory_space<vmem>>) attributes {dimension_semantics = [#tpu.dimension_semantics<parallel>, #tpu.dimension_semantics<arbitrary>], iteration_bounds = array<i64: 1, 1>, scalar_prefetch = 0 : i64, scratch_operands = 1 : i64, tpu.core_type = #tpu.core_type<tc>, window_params = [{transform_indices = @transform_0, window_bounds = array<i64: 8, 384>}, {transform_indices = @transform_1, window_bounds = array<i64: 384, 128>}, {transform_indices = @transform_2, window_bounds = array<i64: 8, 128>}, {transform_indices = @transform_3, window_bounds = array<i64: 1, 2, 128>}]} {
    %c0_i32 = arith.constant 0 : i32
    %0 = arith.cmpi eq, %arg1, %c0_i32 : i32
    %1 = arith.extui %0 : i1 to i32
    %c0_i32_0 = arith.constant 0 : i32
    %2 = arith.cmpi ne, %1, %c0_i32_0 : i32
    scf.if %2 {
      %cst_10 = arith.constant 0.000000e+00 : f32
      %12 = vector.broadcast %cst_10 : f32 to vector<8x128xf32>
      %c0_11 = arith.constant 0 : index
      %c0_12 = arith.constant 0 : index
      %13 = vector.load %arg6[%c0_11, %c0_12] : memref<8x128xf32, #tpu.memory_space<vmem>>, vector<8x128xf32>
      tpu.vector_store %arg6[%c0_11, %c0_12], %12 {strides = array<i32>} : memref<8x128xf32, #tpu.memory_space<vmem>>, vector<8x128xf32>,
    } else {
    }
    %c0 = arith.constant 0 : index
    %c0_1 = arith.constant 0 : index
    %3 = vector.load %arg6[%c0, %c0_1] : memref<8x128xf32, #tpu.memory_space<vmem>>, vector<8x128xf32>
    %c0_2 = arith.constant 0 : index
    %c0_3 = arith.constant 0 : index
    %4 = vector.load %arg2[%c0_2, %c0_3] : memref<8x384xbf16, #tpu.memory_space<vmem>>, vector<8x384xbf16>
    %c0_4 = arith.constant 0 : index
    %c0_5 = arith.constant 0 : index
    %5 = vector.load %arg3[%c0_4, %c0_5] : memref<384x128xbf16, #tpu.memory_space<vmem>>, vector<384x128xbf16>
    %cst = arith.constant dense<0.000000e+00> : vector<8x128xf32>
    %6 = tpu.matmul %4, %5, %cst {dimension_numbers = #tpu.dot_dimension_numbers<[1], [0], [0], [1], [0, 0, 1, 1], [], []>} : vector<8x384xbf16>, vector<384x128xbf16>, vector<8x128xf32> -> vector<8x128xf32>
    %7 = arith.addf %3, %6 : vector<8x128xf32>
    %c0_6 = arith.constant 0 : index
    %c0_7 = arith.constant 0 : index
    %8 = vector.load %arg6[%c0_6, %c0_7] : memref<8x128xf32, #tpu.memory_space<vmem>>, vector<8x128xf32>
    tpu.vector_store %arg6[%c0_6, %c0_7], %7 {strides = array<i32>} : memref<8x128xf32, #tpu.memory_space<vmem>>, vector<8x128xf32>,
    %c0_i32_8 = arith.constant 0 : i32
    %9 = arith.cmpi eq, %arg1, %c0_i32_8 : i32
    %10 = arith.extui %9 : i1 to i32
    %c0_i32_9 = arith.constant 0 : i32
    %11 = arith.cmpi ne, %10, %c0_i32_9 : i32
    scf.if %11 {
      %c0_10 = arith.constant 0 : index
      %c0_11 = arith.constant 0 : index
      %12 = vector.load %arg6[%c0_10, %c0_11] : memref<8x128xf32, #tpu.memory_space<vmem>>, vector<8x128xf32>
      %13 = arith.truncf %12 : vector<8x128xf32> to vector<8x128xbf16>
      %c0_12 = arith.constant 0 : index
      %c0_13 = arith.constant 0 : index
      %14 = vector.load %arg4[%c0_12, %c0_13] : memref<8x128xbf16, #tpu.memory_space<vmem>>, vector<8x128xbf16>
      tpu.vector_store %arg4[%c0_12, %c0_13], %13 {strides = array<i32>} : memref<8x128xbf16, #tpu.memory_space<vmem>>, vector<8x128xbf16>,
      %cst_14 = arith.constant dense<0.000000e+00> : vector<128xf32>
      %15 = vector.multi_reduction <add>, %12, %cst_14 [0] : vector<8x128xf32> to vector<128xf32>
      %16 = vector.shape_cast %15 : vector<128xf32> to vector<1x128xf32>
      %17 = arith.mulf %12, %12 : vector<8x128xf32>
      %cst_15 = arith.constant dense<0.000000e+00> : vector<128xf32>
      %18 = vector.multi_reduction <add>, %17, %cst_15 [0] : vector<8x128xf32> to vector<128xf32>
      %19 = vector.shape_cast %18 : vector<128xf32> to vector<1x128xf32>
      %20 = tpu.concatenate %16, %19 in 0 : vector<1x128xf32>, vector<1x128xf32> -> vector<2x128xf32>
      %c0_16 = arith.constant 0 : index
      %c0_17 = arith.constant 0 : index
      %c0_18 = arith.constant 0 : index
      %21 = vector.load %arg5[%c0_16, %c0_17, %c0_18] : memref<1x2x128xf32, #tpu.memory_space<vmem>>, vector<1x2x128xf32>
      %22 = vector.shape_cast %21 : vector<1x2x128xf32> to vector<2x128xf32>
      %23 = vector.shape_cast %20 : vector<2x128xf32> to vector<1x2x128xf32>
      tpu.vector_store %arg5[%c0_16, %c0_17, %c0_18], %23 {strides = array<i32>} : memref<1x2x128xf32, #tpu.memory_space<vmem>>, vector<1x2x128xf32>,
    } else {
    }
    return
  }
  func.func @transform_0(%arg0: i32, %arg1: i32) -> (i32, i32) {
    %c0_i32 = arith.constant 0 : i32
    return %arg0, %arg1 : i32, i32
  }
  func.func @transform_1(%arg0: i32, %arg1: i32) -> (i32, i32) {
    %c0_i32 = arith.constant 0 : i32
    %c0_i32_0 = arith.constant 0 : i32
    return %arg1, %c0_i32 : i32, i32
  }
  func.func @transform_2(%arg0: i32, %arg1: i32) -> (i32, i32) {
    %c0_i32 = arith.constant 0 : i32
    %c0_i32_0 = arith.constant 0 : i32
    return %arg0, %c0_i32 : i32, i32
  }
  func.func @transform_3(%arg0: i32, %arg1: i32) -> (i32, i32, i32) {
    %c0_i32 = arith.constant 0 : i32
    %c0_i32_0 = arith.constant 0 : i32
    %c0_i32_1 = arith.constant 0 : i32
    return %arg0, %c0_i32, %c0_i32_0 : i32, i32, i32
  }
}

module attributes {stable_mosaic.version = 11 : i64} {
  func.func @_matmul_stats_kernel(%arg0: i32, %arg1: i32, %arg2: memref<8x512xbf16, #tpu.memory_space<vmem>>, %arg3: memref<512x128xbf16, #tpu.memory_space<vmem>>, %arg4: memref<8x128xbf16, #tpu.memory_space<vmem>>, %arg5: memref<1x2x128xf32, #tpu.memory_space<vmem>>, %arg6: memref<8x128xf32, #tpu.memory_space<vmem>>) attributes {dimension_semantics = [#tpu.dimension_semantics<parallel>, #tpu.dimension_semantics<arbitrary>], iteration_bounds = array<i64: 1, 2>, scalar_prefetch = 0 : i64, scratch_operands = 1 : i64, tpu.core_type = #tpu.core_type<tc>, window_params = [{transform_indices = @transform_0, window_bounds = array<i64: 8, 512>}, {transform_indices = @transform_1, window_bounds = array<i64: 512, 128>}, {transform_indices = @transform_2, window_bounds = array<i64: 8, 128>}, {transform_indices = @transform_3, window_bounds = array<i64: 1, 2, 128>}]} {
    %c0_i32 = arith.constant 0 : i32
    %0 = arith.cmpi eq, %arg1, %c0_i32 : i32
    %1 = arith.extui %0 : i1 to i32
    %c0_i32_0 = arith.constant 0 : i32
    %2 = arith.cmpi ne, %1, %c0_i32_0 : i32
    scf.if %2 {
      %cst_9 = arith.constant 0.000000e+00 : f32
      %12 = vector.broadcast %cst_9 : f32 to vector<8x128xf32>
      %c0_10 = arith.constant 0 : index
      %c0_11 = arith.constant 0 : index
      %13 = vector.load %arg6[%c0_10, %c0_11] : memref<8x128xf32, #tpu.memory_space<vmem>>, vector<8x128xf32>
      tpu.vector_store %arg6[%c0_10, %c0_11], %12 {strides = array<i32>} : memref<8x128xf32, #tpu.memory_space<vmem>>, vector<8x128xf32>,
    } else {
    }
    %c0 = arith.constant 0 : index
    %c0_1 = arith.constant 0 : index
    %3 = vector.load %arg6[%c0, %c0_1] : memref<8x128xf32, #tpu.memory_space<vmem>>, vector<8x128xf32>
    %c0_2 = arith.constant 0 : index
    %c0_3 = arith.constant 0 : index
    %4 = vector.load %arg2[%c0_2, %c0_3] : memref<8x512xbf16, #tpu.memory_space<vmem>>, vector<8x512xbf16>
    %c0_4 = arith.constant 0 : index
    %c0_5 = arith.constant 0 : index
    %5 = vector.load %arg3[%c0_4, %c0_5] : memref<512x128xbf16, #tpu.memory_space<vmem>>, vector<512x128xbf16>
    %cst = arith.constant dense<0.000000e+00> : vector<8x128xf32>
    %6 = tpu.matmul %4, %5, %cst {dimension_numbers = #tpu.dot_dimension_numbers<[1], [0], [0], [1], [0, 0, 1, 1], [], []>} : vector<8x512xbf16>, vector<512x128xbf16>, vector<8x128xf32> -> vector<8x128xf32>
    %7 = arith.addf %3, %6 : vector<8x128xf32>
    %c0_6 = arith.constant 0 : index
    %c0_7 = arith.constant 0 : index
    %8 = vector.load %arg6[%c0_6, %c0_7] : memref<8x128xf32, #tpu.memory_space<vmem>>, vector<8x128xf32>
    tpu.vector_store %arg6[%c0_6, %c0_7], %7 {strides = array<i32>} : memref<8x128xf32, #tpu.memory_space<vmem>>, vector<8x128xf32>,
    %c1_i32 = arith.constant 1 : i32
    %9 = arith.cmpi eq, %arg1, %c1_i32 : i32
    %10 = arith.extui %9 : i1 to i32
    %c0_i32_8 = arith.constant 0 : i32
    %11 = arith.cmpi ne, %10, %c0_i32_8 : i32
    scf.if %11 {
      %c0_9 = arith.constant 0 : index
      %c0_10 = arith.constant 0 : index
      %12 = vector.load %arg6[%c0_9, %c0_10] : memref<8x128xf32, #tpu.memory_space<vmem>>, vector<8x128xf32>
      %13 = arith.truncf %12 : vector<8x128xf32> to vector<8x128xbf16>
      %c0_11 = arith.constant 0 : index
      %c0_12 = arith.constant 0 : index
      %14 = vector.load %arg4[%c0_11, %c0_12] : memref<8x128xbf16, #tpu.memory_space<vmem>>, vector<8x128xbf16>
      tpu.vector_store %arg4[%c0_11, %c0_12], %13 {strides = array<i32>} : memref<8x128xbf16, #tpu.memory_space<vmem>>, vector<8x128xbf16>,
      %cst_13 = arith.constant dense<0.000000e+00> : vector<128xf32>
      %15 = vector.multi_reduction <add>, %12, %cst_13 [0] : vector<8x128xf32> to vector<128xf32>
      %16 = vector.shape_cast %15 : vector<128xf32> to vector<1x128xf32>
      %17 = arith.mulf %12, %12 : vector<8x128xf32>
      %cst_14 = arith.constant dense<0.000000e+00> : vector<128xf32>
      %18 = vector.multi_reduction <add>, %17, %cst_14 [0] : vector<8x128xf32> to vector<128xf32>
      %19 = vector.shape_cast %18 : vector<128xf32> to vector<1x128xf32>
      %20 = tpu.concatenate %16, %19 in 0 : vector<1x128xf32>, vector<1x128xf32> -> vector<2x128xf32>
      %c0_15 = arith.constant 0 : index
      %c0_16 = arith.constant 0 : index
      %c0_17 = arith.constant 0 : index
      %21 = vector.load %arg5[%c0_15, %c0_16, %c0_17] : memref<1x2x128xf32, #tpu.memory_space<vmem>>, vector<1x2x128xf32>
      %22 = vector.shape_cast %21 : vector<1x2x128xf32> to vector<2x128xf32>
      %23 = vector.shape_cast %20 : vector<2x128xf32> to vector<1x2x128xf32>
      tpu.vector_store %arg5[%c0_15, %c0_16, %c0_17], %23 {strides = array<i32>} : memref<1x2x128xf32, #tpu.memory_space<vmem>>, vector<1x2x128xf32>,
    } else {
    }
    return
  }
  func.func @transform_0(%arg0: i32, %arg1: i32) -> (i32, i32) {
    %c0_i32 = arith.constant 0 : i32
    return %arg0, %arg1 : i32, i32
  }
  func.func @transform_1(%arg0: i32, %arg1: i32) -> (i32, i32) {
    %c0_i32 = arith.constant 0 : i32
    %c0_i32_0 = arith.constant 0 : i32
    return %arg1, %c0_i32 : i32, i32
  }
  func.func @transform_2(%arg0: i32, %arg1: i32) -> (i32, i32) {
    %c0_i32 = arith.constant 0 : i32
    %c0_i32_0 = arith.constant 0 : i32
    return %arg0, %c0_i32 : i32, i32
  }
  func.func @transform_3(%arg0: i32, %arg1: i32) -> (i32, i32, i32) {
    %c0_i32 = arith.constant 0 : i32
    %c0_i32_0 = arith.constant 0 : i32
    %c0_i32_1 = arith.constant 0 : i32
    return %arg0, %c0_i32, %c0_i32_0 : i32, i32, i32
  }
}

module attributes {stable_mosaic.version = 11 : i64} {
  func.func @_matmul_stats_kernel(%arg0: i32, %arg1: i32, %arg2: memref<8x512xbf16, #tpu.memory_space<vmem>>, %arg3: memref<512x128xbf16, #tpu.memory_space<vmem>>, %arg4: memref<8x128xbf16, #tpu.memory_space<vmem>>, %arg5: memref<1x2x128xf32, #tpu.memory_space<vmem>>, %arg6: memref<8x128xf32, #tpu.memory_space<vmem>>) attributes {dimension_semantics = [#tpu.dimension_semantics<parallel>, #tpu.dimension_semantics<arbitrary>], iteration_bounds = array<i64: 1, 3>, scalar_prefetch = 0 : i64, scratch_operands = 1 : i64, tpu.core_type = #tpu.core_type<tc>, window_params = [{transform_indices = @transform_0, window_bounds = array<i64: 8, 512>}, {transform_indices = @transform_1, window_bounds = array<i64: 512, 128>}, {transform_indices = @transform_2, window_bounds = array<i64: 8, 128>}, {transform_indices = @transform_3, window_bounds = array<i64: 1, 2, 128>}]} {
    %c0_i32 = arith.constant 0 : i32
    %0 = arith.cmpi eq, %arg1, %c0_i32 : i32
    %1 = arith.extui %0 : i1 to i32
    %c0_i32_0 = arith.constant 0 : i32
    %2 = arith.cmpi ne, %1, %c0_i32_0 : i32
    scf.if %2 {
      %cst_9 = arith.constant 0.000000e+00 : f32
      %12 = vector.broadcast %cst_9 : f32 to vector<8x128xf32>
      %c0_10 = arith.constant 0 : index
      %c0_11 = arith.constant 0 : index
      %13 = vector.load %arg6[%c0_10, %c0_11] : memref<8x128xf32, #tpu.memory_space<vmem>>, vector<8x128xf32>
      tpu.vector_store %arg6[%c0_10, %c0_11], %12 {strides = array<i32>} : memref<8x128xf32, #tpu.memory_space<vmem>>, vector<8x128xf32>,
    } else {
    }
    %c0 = arith.constant 0 : index
    %c0_1 = arith.constant 0 : index
    %3 = vector.load %arg6[%c0, %c0_1] : memref<8x128xf32, #tpu.memory_space<vmem>>, vector<8x128xf32>
    %c0_2 = arith.constant 0 : index
    %c0_3 = arith.constant 0 : index
    %4 = vector.load %arg2[%c0_2, %c0_3] : memref<8x512xbf16, #tpu.memory_space<vmem>>, vector<8x512xbf16>
    %c0_4 = arith.constant 0 : index
    %c0_5 = arith.constant 0 : index
    %5 = vector.load %arg3[%c0_4, %c0_5] : memref<512x128xbf16, #tpu.memory_space<vmem>>, vector<512x128xbf16>
    %cst = arith.constant dense<0.000000e+00> : vector<8x128xf32>
    %6 = tpu.matmul %4, %5, %cst {dimension_numbers = #tpu.dot_dimension_numbers<[1], [0], [0], [1], [0, 0, 1, 1], [], []>} : vector<8x512xbf16>, vector<512x128xbf16>, vector<8x128xf32> -> vector<8x128xf32>
    %7 = arith.addf %3, %6 : vector<8x128xf32>
    %c0_6 = arith.constant 0 : index
    %c0_7 = arith.constant 0 : index
    %8 = vector.load %arg6[%c0_6, %c0_7] : memref<8x128xf32, #tpu.memory_space<vmem>>, vector<8x128xf32>
    tpu.vector_store %arg6[%c0_6, %c0_7], %7 {strides = array<i32>} : memref<8x128xf32, #tpu.memory_space<vmem>>, vector<8x128xf32>,
    %c2_i32 = arith.constant 2 : i32
    %9 = arith.cmpi eq, %arg1, %c2_i32 : i32
    %10 = arith.extui %9 : i1 to i32
    %c0_i32_8 = arith.constant 0 : i32
    %11 = arith.cmpi ne, %10, %c0_i32_8 : i32
    scf.if %11 {
      %c0_9 = arith.constant 0 : index
      %c0_10 = arith.constant 0 : index
      %12 = vector.load %arg6[%c0_9, %c0_10] : memref<8x128xf32, #tpu.memory_space<vmem>>, vector<8x128xf32>
      %13 = arith.truncf %12 : vector<8x128xf32> to vector<8x128xbf16>
      %c0_11 = arith.constant 0 : index
      %c0_12 = arith.constant 0 : index
      %14 = vector.load %arg4[%c0_11, %c0_12] : memref<8x128xbf16, #tpu.memory_space<vmem>>, vector<8x128xbf16>
      tpu.vector_store %arg4[%c0_11, %c0_12], %13 {strides = array<i32>} : memref<8x128xbf16, #tpu.memory_space<vmem>>, vector<8x128xbf16>,
      %cst_13 = arith.constant dense<0.000000e+00> : vector<128xf32>
      %15 = vector.multi_reduction <add>, %12, %cst_13 [0] : vector<8x128xf32> to vector<128xf32>
      %16 = vector.shape_cast %15 : vector<128xf32> to vector<1x128xf32>
      %17 = arith.mulf %12, %12 : vector<8x128xf32>
      %cst_14 = arith.constant dense<0.000000e+00> : vector<128xf32>
      %18 = vector.multi_reduction <add>, %17, %cst_14 [0] : vector<8x128xf32> to vector<128xf32>
      %19 = vector.shape_cast %18 : vector<128xf32> to vector<1x128xf32>
      %20 = tpu.concatenate %16, %19 in 0 : vector<1x128xf32>, vector<1x128xf32> -> vector<2x128xf32>
      %c0_15 = arith.constant 0 : index
      %c0_16 = arith.constant 0 : index
      %c0_17 = arith.constant 0 : index
      %21 = vector.load %arg5[%c0_15, %c0_16, %c0_17] : memref<1x2x128xf32, #tpu.memory_space<vmem>>, vector<1x2x128xf32>
      %22 = vector.shape_cast %21 : vector<1x2x128xf32> to vector<2x128xf32>
      %23 = vector.shape_cast %20 : vector<2x128xf32> to vector<1x2x128xf32>
      tpu.vector_store %arg5[%c0_15, %c0_16, %c0_17], %23 {strides = array<i32>} : memref<1x2x128xf32, #tpu.memory_space<vmem>>, vector<1x2x128xf32>,
    } else {
    }
    return
  }
  func.func @transform_0(%arg0: i32, %arg1: i32) -> (i32, i32) {
    %c0_i32 = arith.constant 0 : i32
    return %arg0, %arg1 : i32, i32
  }
  func.func @transform_1(%arg0: i32, %arg1: i32) -> (i32, i32) {
    %c0_i32 = arith.constant 0 : i32
    %c0_i32_0 = arith.constant 0 : i32
    return %arg1, %c0_i32 : i32, i32
  }
  func.func @transform_2(%arg0: i32, %arg1: i32) -> (i32, i32) {
    %c0_i32 = arith.constant 0 : i32
    %c0_i32_0 = arith.constant 0 : i32
    return %arg0, %c0_i32 : i32, i32
  }
  func.func @transform_3(%arg0: i32, %arg1: i32) -> (i32, i32, i32) {
    %c0_i32 = arith.constant 0 : i32
    %c0_i32_0 = arith.constant 0 : i32
    %c0_i32_1 = arith.constant 0 : i32
    return %arg0, %c0_i32, %c0_i32_0 : i32, i32, i32
  }
}

module attributes {stable_mosaic.version = 11 : i64} {
  func.func @_matmul_stats_kernel(%arg0: i32, %arg1: i32, %arg2: memref<8x512xbf16, #tpu.memory_space<vmem>>, %arg3: memref<512x128xbf16, #tpu.memory_space<vmem>>, %arg4: memref<8x128xbf16, #tpu.memory_space<vmem>>, %arg5: memref<1x2x128xf32, #tpu.memory_space<vmem>>, %arg6: memref<8x128xf32, #tpu.memory_space<vmem>>) attributes {dimension_semantics = [#tpu.dimension_semantics<parallel>, #tpu.dimension_semantics<arbitrary>], iteration_bounds = array<i64: 1, 4>, scalar_prefetch = 0 : i64, scratch_operands = 1 : i64, tpu.core_type = #tpu.core_type<tc>, window_params = [{transform_indices = @transform_0, window_bounds = array<i64: 8, 512>}, {transform_indices = @transform_1, window_bounds = array<i64: 512, 128>}, {transform_indices = @transform_2, window_bounds = array<i64: 8, 128>}, {transform_indices = @transform_3, window_bounds = array<i64: 1, 2, 128>}]} {
    %c0_i32 = arith.constant 0 : i32
    %0 = arith.cmpi eq, %arg1, %c0_i32 : i32
    %1 = arith.extui %0 : i1 to i32
    %c0_i32_0 = arith.constant 0 : i32
    %2 = arith.cmpi ne, %1, %c0_i32_0 : i32
    scf.if %2 {
      %cst_9 = arith.constant 0.000000e+00 : f32
      %12 = vector.broadcast %cst_9 : f32 to vector<8x128xf32>
      %c0_10 = arith.constant 0 : index
      %c0_11 = arith.constant 0 : index
      %13 = vector.load %arg6[%c0_10, %c0_11] : memref<8x128xf32, #tpu.memory_space<vmem>>, vector<8x128xf32>
      tpu.vector_store %arg6[%c0_10, %c0_11], %12 {strides = array<i32>} : memref<8x128xf32, #tpu.memory_space<vmem>>, vector<8x128xf32>,
    } else {
    }
    %c0 = arith.constant 0 : index
    %c0_1 = arith.constant 0 : index
    %3 = vector.load %arg6[%c0, %c0_1] : memref<8x128xf32, #tpu.memory_space<vmem>>, vector<8x128xf32>
    %c0_2 = arith.constant 0 : index
    %c0_3 = arith.constant 0 : index
    %4 = vector.load %arg2[%c0_2, %c0_3] : memref<8x512xbf16, #tpu.memory_space<vmem>>, vector<8x512xbf16>
    %c0_4 = arith.constant 0 : index
    %c0_5 = arith.constant 0 : index
    %5 = vector.load %arg3[%c0_4, %c0_5] : memref<512x128xbf16, #tpu.memory_space<vmem>>, vector<512x128xbf16>
    %cst = arith.constant dense<0.000000e+00> : vector<8x128xf32>
    %6 = tpu.matmul %4, %5, %cst {dimension_numbers = #tpu.dot_dimension_numbers<[1], [0], [0], [1], [0, 0, 1, 1], [], []>} : vector<8x512xbf16>, vector<512x128xbf16>, vector<8x128xf32> -> vector<8x128xf32>
    %7 = arith.addf %3, %6 : vector<8x128xf32>
    %c0_6 = arith.constant 0 : index
    %c0_7 = arith.constant 0 : index
    %8 = vector.load %arg6[%c0_6, %c0_7] : memref<8x128xf32, #tpu.memory_space<vmem>>, vector<8x128xf32>
    tpu.vector_store %arg6[%c0_6, %c0_7], %7 {strides = array<i32>} : memref<8x128xf32, #tpu.memory_space<vmem>>, vector<8x128xf32>,
    %c3_i32 = arith.constant 3 : i32
    %9 = arith.cmpi eq, %arg1, %c3_i32 : i32
    %10 = arith.extui %9 : i1 to i32
    %c0_i32_8 = arith.constant 0 : i32
    %11 = arith.cmpi ne, %10, %c0_i32_8 : i32
    scf.if %11 {
      %c0_9 = arith.constant 0 : index
      %c0_10 = arith.constant 0 : index
      %12 = vector.load %arg6[%c0_9, %c0_10] : memref<8x128xf32, #tpu.memory_space<vmem>>, vector<8x128xf32>
      %13 = arith.truncf %12 : vector<8x128xf32> to vector<8x128xbf16>
      %c0_11 = arith.constant 0 : index
      %c0_12 = arith.constant 0 : index
      %14 = vector.load %arg4[%c0_11, %c0_12] : memref<8x128xbf16, #tpu.memory_space<vmem>>, vector<8x128xbf16>
      tpu.vector_store %arg4[%c0_11, %c0_12], %13 {strides = array<i32>} : memref<8x128xbf16, #tpu.memory_space<vmem>>, vector<8x128xbf16>,
      %cst_13 = arith.constant dense<0.000000e+00> : vector<128xf32>
      %15 = vector.multi_reduction <add>, %12, %cst_13 [0] : vector<8x128xf32> to vector<128xf32>
      %16 = vector.shape_cast %15 : vector<128xf32> to vector<1x128xf32>
      %17 = arith.mulf %12, %12 : vector<8x128xf32>
      %cst_14 = arith.constant dense<0.000000e+00> : vector<128xf32>
      %18 = vector.multi_reduction <add>, %17, %cst_14 [0] : vector<8x128xf32> to vector<128xf32>
      %19 = vector.shape_cast %18 : vector<128xf32> to vector<1x128xf32>
      %20 = tpu.concatenate %16, %19 in 0 : vector<1x128xf32>, vector<1x128xf32> -> vector<2x128xf32>
      %c0_15 = arith.constant 0 : index
      %c0_16 = arith.constant 0 : index
      %c0_17 = arith.constant 0 : index
      %21 = vector.load %arg5[%c0_15, %c0_16, %c0_17] : memref<1x2x128xf32, #tpu.memory_space<vmem>>, vector<1x2x128xf32>
      %22 = vector.shape_cast %21 : vector<1x2x128xf32> to vector<2x128xf32>
      %23 = vector.shape_cast %20 : vector<2x128xf32> to vector<1x2x128xf32>
      tpu.vector_store %arg5[%c0_15, %c0_16, %c0_17], %23 {strides = array<i32>} : memref<1x2x128xf32, #tpu.memory_space<vmem>>, vector<1x2x128xf32>,
    } else {
    }
    return
  }
  func.func @transform_0(%arg0: i32, %arg1: i32) -> (i32, i32) {
    %c0_i32 = arith.constant 0 : i32
    return %arg0, %arg1 : i32, i32
  }
  func.func @transform_1(%arg0: i32, %arg1: i32) -> (i32, i32) {
    %c0_i32 = arith.constant 0 : i32
    %c0_i32_0 = arith.constant 0 : i32
    return %arg1, %c0_i32 : i32, i32
  }
  func.func @transform_2(%arg0: i32, %arg1: i32) -> (i32, i32) {
    %c0_i32 = arith.constant 0 : i32
    %c0_i32_0 = arith.constant 0 : i32
    return %arg0, %c0_i32 : i32, i32
  }
  func.func @transform_3(%arg0: i32, %arg1: i32) -> (i32, i32, i32) {
    %c0_i32 = arith.constant 0 : i32
    %c0_i32_0 = arith.constant 0 : i32
    %c0_i32_1 = arith.constant 0 : i32
    return %arg0, %c0_i32, %c0_i32_0 : i32, i32, i32
  }
}

module attributes {stable_mosaic.version = 11 : i64} {
  func.func @_matmul_stats_kernel(%arg0: i32, %arg1: i32, %arg2: memref<32x512xbf16, #tpu.memory_space<vmem>>, %arg3: memref<512x128xbf16, #tpu.memory_space<vmem>>, %arg4: memref<32x128xbf16, #tpu.memory_space<vmem>>, %arg5: memref<1x2x128xf32, #tpu.memory_space<vmem>>, %arg6: memref<32x128xf32, #tpu.memory_space<vmem>>) attributes {dimension_semantics = [#tpu.dimension_semantics<parallel>, #tpu.dimension_semantics<arbitrary>], iteration_bounds = array<i64: 1, 1>, scalar_prefetch = 0 : i64, scratch_operands = 1 : i64, tpu.core_type = #tpu.core_type<tc>, window_params = [{transform_indices = @transform_0, window_bounds = array<i64: 32, 512>}, {transform_indices = @transform_1, window_bounds = array<i64: 512, 128>}, {transform_indices = @transform_2, window_bounds = array<i64: 32, 128>}, {transform_indices = @transform_3, window_bounds = array<i64: 1, 2, 128>}]} {
    %c0_i32 = arith.constant 0 : i32
    %0 = arith.cmpi eq, %arg1, %c0_i32 : i32
    %1 = arith.extui %0 : i1 to i32
    %c0_i32_0 = arith.constant 0 : i32
    %2 = arith.cmpi ne, %1, %c0_i32_0 : i32
    scf.if %2 {
      %cst_10 = arith.constant 0.000000e+00 : f32
      %12 = vector.broadcast %cst_10 : f32 to vector<32x128xf32>
      %c0_11 = arith.constant 0 : index
      %c0_12 = arith.constant 0 : index
      %13 = vector.load %arg6[%c0_11, %c0_12] : memref<32x128xf32, #tpu.memory_space<vmem>>, vector<32x128xf32>
      tpu.vector_store %arg6[%c0_11, %c0_12], %12 {strides = array<i32>} : memref<32x128xf32, #tpu.memory_space<vmem>>, vector<32x128xf32>,
    } else {
    }
    %c0 = arith.constant 0 : index
    %c0_1 = arith.constant 0 : index
    %3 = vector.load %arg6[%c0, %c0_1] : memref<32x128xf32, #tpu.memory_space<vmem>>, vector<32x128xf32>
    %c0_2 = arith.constant 0 : index
    %c0_3 = arith.constant 0 : index
    %4 = vector.load %arg2[%c0_2, %c0_3] : memref<32x512xbf16, #tpu.memory_space<vmem>>, vector<32x512xbf16>
    %c0_4 = arith.constant 0 : index
    %c0_5 = arith.constant 0 : index
    %5 = vector.load %arg3[%c0_4, %c0_5] : memref<512x128xbf16, #tpu.memory_space<vmem>>, vector<512x128xbf16>
    %cst = arith.constant dense<0.000000e+00> : vector<32x128xf32>
    %6 = tpu.matmul %4, %5, %cst {dimension_numbers = #tpu.dot_dimension_numbers<[1], [0], [0], [1], [0, 0, 1, 1], [], []>} : vector<32x512xbf16>, vector<512x128xbf16>, vector<32x128xf32> -> vector<32x128xf32>
    %7 = arith.addf %3, %6 : vector<32x128xf32>
    %c0_6 = arith.constant 0 : index
    %c0_7 = arith.constant 0 : index
    %8 = vector.load %arg6[%c0_6, %c0_7] : memref<32x128xf32, #tpu.memory_space<vmem>>, vector<32x128xf32>
    tpu.vector_store %arg6[%c0_6, %c0_7], %7 {strides = array<i32>} : memref<32x128xf32, #tpu.memory_space<vmem>>, vector<32x128xf32>,
    %c0_i32_8 = arith.constant 0 : i32
    %9 = arith.cmpi eq, %arg1, %c0_i32_8 : i32
    %10 = arith.extui %9 : i1 to i32
    %c0_i32_9 = arith.constant 0 : i32
    %11 = arith.cmpi ne, %10, %c0_i32_9 : i32
    scf.if %11 {
      %c0_10 = arith.constant 0 : index
      %c0_11 = arith.constant 0 : index
      %12 = vector.load %arg6[%c0_10, %c0_11] : memref<32x128xf32, #tpu.memory_space<vmem>>, vector<32x128xf32>
      %13 = arith.truncf %12 : vector<32x128xf32> to vector<32x128xbf16>
      %c0_12 = arith.constant 0 : index
      %c0_13 = arith.constant 0 : index
      %14 = vector.load %arg4[%c0_12, %c0_13] : memref<32x128xbf16, #tpu.memory_space<vmem>>, vector<32x128xbf16>
      tpu.vector_store %arg4[%c0_12, %c0_13], %13 {strides = array<i32>} : memref<32x128xbf16, #tpu.memory_space<vmem>>, vector<32x128xbf16>,
      %cst_14 = arith.constant dense<0.000000e+00> : vector<128xf32>
      %15 = vector.multi_reduction <add>, %12, %cst_14 [0] : vector<32x128xf32> to vector<128xf32>
      %16 = vector.shape_cast %15 : vector<128xf32> to vector<1x128xf32>
      %17 = arith.mulf %12, %12 : vector<32x128xf32>
      %cst_15 = arith.constant dense<0.000000e+00> : vector<128xf32>
      %18 = vector.multi_reduction <add>, %17, %cst_15 [0] : vector<32x128xf32> to vector<128xf32>
      %19 = vector.shape_cast %18 : vector<128xf32> to vector<1x128xf32>
      %20 = tpu.concatenate %16, %19 in 0 : vector<1x128xf32>, vector<1x128xf32> -> vector<2x128xf32>
      %c0_16 = arith.constant 0 : index
      %c0_17 = arith.constant 0 : index
      %c0_18 = arith.constant 0 : index
      %21 = vector.load %arg5[%c0_16, %c0_17, %c0_18] : memref<1x2x128xf32, #tpu.memory_space<vmem>>, vector<1x2x128xf32>
      %22 = vector.shape_cast %21 : vector<1x2x128xf32> to vector<2x128xf32>
      %23 = vector.shape_cast %20 : vector<2x128xf32> to vector<1x2x128xf32>
      tpu.vector_store %arg5[%c0_16, %c0_17, %c0_18], %23 {strides = array<i32>} : memref<1x2x128xf32, #tpu.memory_space<vmem>>, vector<1x2x128xf32>,
    } else {
    }
    return
  }
  func.func @transform_0(%arg0: i32, %arg1: i32) -> (i32, i32) {
    %c0_i32 = arith.constant 0 : i32
    return %arg0, %arg1 : i32, i32
  }
  func.func @transform_1(%arg0: i32, %arg1: i32) -> (i32, i32) {
    %c0_i32 = arith.constant 0 : i32
    %c0_i32_0 = arith.constant 0 : i32
    return %arg1, %c0_i32 : i32, i32
  }
  func.func @transform_2(%arg0: i32, %arg1: i32) -> (i32, i32) {
    %c0_i32 = arith.constant 0 : i32
    %c0_i32_0 = arith.constant 0 : i32
    return %arg0, %c0_i32 : i32, i32
  }
  func.func @transform_3(%arg0: i32, %arg1: i32) -> (i32, i32, i32) {
    %c0_i32 = arith.constant 0 : i32
    %c0_i32_0 = arith.constant 0 : i32
    %c0_i32_1 = arith.constant 0 : i32
    return %arg0, %c0_i32, %c0_i32_0 : i32, i32, i32
  }
}

module attributes {stable_mosaic.version = 11 : i64} {
  func.func @_matmul_stats_kernel(%arg0: i32, %arg1: i32, %arg2: memref<128x256xbf16, #tpu.memory_space<vmem>>, %arg3: memref<256x128xbf16, #tpu.memory_space<vmem>>, %arg4: memref<128x128xbf16, #tpu.memory_space<vmem>>, %arg5: memref<1x2x128xf32, #tpu.memory_space<vmem>>, %arg6: memref<128x128xf32, #tpu.memory_space<vmem>>) attributes {dimension_semantics = [#tpu.dimension_semantics<parallel>, #tpu.dimension_semantics<arbitrary>], iteration_bounds = array<i64: 1, 1>, scalar_prefetch = 0 : i64, scratch_operands = 1 : i64, tpu.core_type = #tpu.core_type<tc>, window_params = [{transform_indices = @transform_0, window_bounds = array<i64: 128, 256>}, {transform_indices = @transform_1, window_bounds = array<i64: 256, 128>}, {transform_indices = @transform_2, window_bounds = array<i64: 128, 128>}, {transform_indices = @transform_3, window_bounds = array<i64: 1, 2, 128>}]} {
    %c0_i32 = arith.constant 0 : i32
    %0 = arith.cmpi eq, %arg1, %c0_i32 : i32
    %1 = arith.extui %0 : i1 to i32
    %c0_i32_0 = arith.constant 0 : i32
    %2 = arith.cmpi ne, %1, %c0_i32_0 : i32
    scf.if %2 {
      %cst_10 = arith.constant 0.000000e+00 : f32
      %12 = vector.broadcast %cst_10 : f32 to vector<128x128xf32>
      %c0_11 = arith.constant 0 : index
      %c0_12 = arith.constant 0 : index
      %13 = vector.load %arg6[%c0_11, %c0_12] : memref<128x128xf32, #tpu.memory_space<vmem>>, vector<128x128xf32>
      tpu.vector_store %arg6[%c0_11, %c0_12], %12 {strides = array<i32>} : memref<128x128xf32, #tpu.memory_space<vmem>>, vector<128x128xf32>,
    } else {
    }
    %c0 = arith.constant 0 : index
    %c0_1 = arith.constant 0 : index
    %3 = vector.load %arg6[%c0, %c0_1] : memref<128x128xf32, #tpu.memory_space<vmem>>, vector<128x128xf32>
    %c0_2 = arith.constant 0 : index
    %c0_3 = arith.constant 0 : index
    %4 = vector.load %arg2[%c0_2, %c0_3] : memref<128x256xbf16, #tpu.memory_space<vmem>>, vector<128x256xbf16>
    %c0_4 = arith.constant 0 : index
    %c0_5 = arith.constant 0 : index
    %5 = vector.load %arg3[%c0_4, %c0_5] : memref<256x128xbf16, #tpu.memory_space<vmem>>, vector<256x128xbf16>
    %cst = arith.constant dense<0.000000e+00> : vector<128x128xf32>
    %6 = tpu.matmul %4, %5, %cst {dimension_numbers = #tpu.dot_dimension_numbers<[1], [0], [0], [1], [0, 0, 1, 1], [], []>} : vector<128x256xbf16>, vector<256x128xbf16>, vector<128x128xf32> -> vector<128x128xf32>
    %7 = arith.addf %3, %6 : vector<128x128xf32>
    %c0_6 = arith.constant 0 : index
    %c0_7 = arith.constant 0 : index
    %8 = vector.load %arg6[%c0_6, %c0_7] : memref<128x128xf32, #tpu.memory_space<vmem>>, vector<128x128xf32>
    tpu.vector_store %arg6[%c0_6, %c0_7], %7 {strides = array<i32>} : memref<128x128xf32, #tpu.memory_space<vmem>>, vector<128x128xf32>,
    %c0_i32_8 = arith.constant 0 : i32
    %9 = arith.cmpi eq, %arg1, %c0_i32_8 : i32
    %10 = arith.extui %9 : i1 to i32
    %c0_i32_9 = arith.constant 0 : i32
    %11 = arith.cmpi ne, %10, %c0_i32_9 : i32
    scf.if %11 {
      %c0_10 = arith.constant 0 : index
      %c0_11 = arith.constant 0 : index
      %12 = vector.load %arg6[%c0_10, %c0_11] : memref<128x128xf32, #tpu.memory_space<vmem>>, vector<128x128xf32>
      %13 = arith.truncf %12 : vector<128x128xf32> to vector<128x128xbf16>
      %c0_12 = arith.constant 0 : index
      %c0_13 = arith.constant 0 : index
      %14 = vector.load %arg4[%c0_12, %c0_13] : memref<128x128xbf16, #tpu.memory_space<vmem>>, vector<128x128xbf16>
      tpu.vector_store %arg4[%c0_12, %c0_13], %13 {strides = array<i32>} : memref<128x128xbf16, #tpu.memory_space<vmem>>, vector<128x128xbf16>,
      %cst_14 = arith.constant dense<0.000000e+00> : vector<128xf32>
      %15 = vector.multi_reduction <add>, %12, %cst_14 [0] : vector<128x128xf32> to vector<128xf32>
      %16 = vector.shape_cast %15 : vector<128xf32> to vector<1x128xf32>
      %17 = arith.mulf %12, %12 : vector<128x128xf32>
      %cst_15 = arith.constant dense<0.000000e+00> : vector<128xf32>
      %18 = vector.multi_reduction <add>, %17, %cst_15 [0] : vector<128x128xf32> to vector<128xf32>
      %19 = vector.shape_cast %18 : vector<128xf32> to vector<1x128xf32>
      %20 = tpu.concatenate %16, %19 in 0 : vector<1x128xf32>, vector<1x128xf32> -> vector<2x128xf32>
      %c0_16 = arith.constant 0 : index
      %c0_17 = arith.constant 0 : index
      %c0_18 = arith.constant 0 : index
      %21 = vector.load %arg5[%c0_16, %c0_17, %c0_18] : memref<1x2x128xf32, #tpu.memory_space<vmem>>, vector<1x2x128xf32>
      %22 = vector.shape_cast %21 : vector<1x2x128xf32> to vector<2x128xf32>
      %23 = vector.shape_cast %20 : vector<2x128xf32> to vector<1x2x128xf32>
      tpu.vector_store %arg5[%c0_16, %c0_17, %c0_18], %23 {strides = array<i32>} : memref<1x2x128xf32, #tpu.memory_space<vmem>>, vector<1x2x128xf32>,
    } else {
    }
    return
  }
  func.func @transform_0(%arg0: i32, %arg1: i32) -> (i32, i32) {
    %c0_i32 = arith.constant 0 : i32
    return %arg0, %arg1 : i32, i32
  }
  func.func @transform_1(%arg0: i32, %arg1: i32) -> (i32, i32) {
    %c0_i32 = arith.constant 0 : i32
    %c0_i32_0 = arith.constant 0 : i32
    return %arg1, %c0_i32 : i32, i32
  }
  func.func @transform_2(%arg0: i32, %arg1: i32) -> (i32, i32) {
    %c0_i32 = arith.constant 0 : i32
    %c0_i32_0 = arith.constant 0 : i32
    return %arg0, %c0_i32 : i32, i32
  }
  func.func @transform_3(%arg0: i32, %arg1: i32) -> (i32, i32, i32) {
    %c0_i32 = arith.constant 0 : i32
    %c0_i32_0 = arith.constant 0 : i32
    %c0_i32_1 = arith.constant 0 : i32
    return %arg0, %c0_i32, %c0_i32_0 : i32, i32, i32
  }
}

module attributes {stable_mosaic.version = 11 : i64} {
  func.func @_matmul_bias_kernel(%arg0: i32, %arg1: memref<256x4xbf16, #tpu.memory_space<vmem>>, %arg2: memref<4x128xbf16, #tpu.memory_space<vmem>>, %arg3: memref<1x128xf32, #tpu.memory_space<vmem>>, %arg4: memref<256x128xbf16, #tpu.memory_space<vmem>>) attributes {dimension_semantics = [#tpu.dimension_semantics<parallel>], iteration_bounds = array<i64: 2>, scalar_prefetch = 0 : i64, scratch_operands = 0 : i64, tpu.core_type = #tpu.core_type<tc>, window_params = [{transform_indices = @transform_0, window_bounds = array<i64: 256, 4>}, {pipeline_mode = #tpu.pipeline_mode<synchronous>, transform_indices = @transform_1, window_bounds = array<i64: 4, 128>}, {pipeline_mode = #tpu.pipeline_mode<synchronous>, transform_indices = @transform_2, window_bounds = array<i64: 1, 128>}, {transform_indices = @transform_3, window_bounds = array<i64: 256, 128>}]} {
    %c0 = arith.constant 0 : index
    %c0_0 = arith.constant 0 : index
    %0 = vector.load %arg1[%c0, %c0_0] : memref<256x4xbf16, #tpu.memory_space<vmem>>, vector<256x4xbf16>
    %c0_1 = arith.constant 0 : index
    %c0_2 = arith.constant 0 : index
    %1 = vector.load %arg2[%c0_1, %c0_2] : memref<4x128xbf16, #tpu.memory_space<vmem>>, vector<4x128xbf16>
    %cst = arith.constant dense<0.000000e+00> : vector<256x128xf32>
    %2 = tpu.matmul %0, %1, %cst {dimension_numbers = #tpu.dot_dimension_numbers<[1], [0], [0], [1], [0, 0, 1, 1], [], []>} : vector<256x4xbf16>, vector<4x128xbf16>, vector<256x128xf32> -> vector<256x128xf32>
    %c0_3 = arith.constant 0 : index
    %c0_4 = arith.constant 0 : index
    %3 = vector.load %arg3[%c0_3, %c0_4] : memref<1x128xf32, #tpu.memory_space<vmem>>, vector<1x128xf32>
    %4 = vector.broadcast %3 : vector<1x128xf32> to vector<256x128xf32>
    %5 = arith.addf %2, %4 : vector<256x128xf32>
    %6 = arith.truncf %5 : vector<256x128xf32> to vector<256x128xbf16>
    %c0_5 = arith.constant 0 : index
    %c0_6 = arith.constant 0 : index
    %7 = vector.load %arg4[%c0_5, %c0_6] : memref<256x128xbf16, #tpu.memory_space<vmem>>, vector<256x128xbf16>
    tpu.vector_store %arg4[%c0_5, %c0_6], %6 {strides = array<i32>} : memref<256x128xbf16, #tpu.memory_space<vmem>>, vector<256x128xbf16>,
    return
  }
  func.func @transform_0(%arg0: i32) -> (i32, i32) {
    %c0_i32 = arith.constant 0 : i32
    %c0_i32_0 = arith.constant 0 : i32
    return %arg0, %c0_i32 : i32, i32
  }
  func.func @transform_1(%arg0: i32) -> (i32, i32) {
    %c0_i32 = arith.constant 0 : i32
    %c0_i32_0 = arith.constant 0 : i32
    %c0_i32_1 = arith.constant 0 : i32
    return %c0_i32, %c0_i32_0 : i32, i32
  }
  func.func @transform_2(%arg0: i32) -> (i32, i32) {
    %c0_i32 = arith.constant 0 : i32
    %c0_i32_0 = arith.constant 0 : i32
    %c0_i32_1 = arith.constant 0 : i32
    return %c0_i32, %c0_i32_0 : i32, i32
  }
  func.func @transform_3(%arg0: i32) -> (i32, i32) {
    %c0_i32 = arith.constant 0 : i32
    %c0_i32_0 = arith.constant 0 : i32
    return %arg0, %c0_i32 : i32, i32
  }
}

</mosaic_0001>

<llo_original>
// kernel: unet_forward.66
$region0: #{unet_forward.66}
  #allocation0 [shape = 'u32[]', space=smem, size = 0x4, offset = 0x4, fixed_abs, tag = 'smem constant byte address 0x4 - core index']
  #allocation1 [shape = 'u32[144,128]{1,0:T(1,128)}', space=vmem, size = 0x12000, scoped, tag = 'internal scratch']
  %s0 = inlined_call_operand.vmem [shape: bf16[512,128], index: 0, kind: input, shape index: {}]
  %s1 = inlined_call_operand.vmem [shape: f32[1,128], index: 1, kind: input, shape index: {}]
  %s2 = inlined_call_operand.vmem [shape: f32[1,128], index: 2, kind: input, shape index: {}]
  %s3 = inlined_call_operand.vmem [shape: bf16[512,128], index: 3, kind: output, shape index: {}]
  %s4 = sld [smem:[#allocation0]]
  $region45: #{unet_forward.66} parent=0
    _
  %s6 = ssub.s32 1, %s4
  %s7 = scalar_select 0, %s6, %s4
  loop: start=0, step=1, limit=4
  $region2: #{unet_forward.66} parent=0 // loop_pre_header
    _
  $region3: #{unet_forward.66} parent=0 // loop_header
    %s9 = sphi 0, %s13
    %p10 = scmp.ge.s32.totalorder %s9, 4
    %s19 = sphi 0, %s21
    %s22 = sphi 0, %s19
    %s23 = sphi 0, %s22
    %s39 = sphi 0, %s23
    %s43 = sphi 0, %s43
    %s45 = sphi 0, %s43
    %s46 = sphi 0, %s45
    %s60 = sphi 0, %s46
    %s64 = sphi 0, %s64
    %s66 = sphi 0, %s64
    %s67 = sphi 0, %s66
    %s81 = sphi 0, %s67
    %s87 = sphi 0, %s89
    %s90 = sphi 0, %s87
    %s91 = sphi 0, %s90
    %s107 = sphi 0, %s91
  $region4: #{unet_forward.66} parent=0 // loop_header_branch
    %12 = sbr.rel (%p10) target = $region8
  $region5: #{unet_forward.66} parent=0 // loop_body
    %s14 = ssub.s32 %s9, 1
    %s15 = ssub.s32 %s9, 2
    %s16 = sadd.s32 %s9, 1
    %s17 = ssub.s32 %s9, %s16
    %p18 = scmp.eq.s32.totalorder %s17, 0
    %s20 = sadd.s32 %s19, 1
    %s21 = scalar_select %p18, %s19, %s20
    %p24 = pneg %p18
    %p25 = scmp.eq.s32.totalorder %s9, 1
    %p26 = por %p24, %p25
    %p27 = scmp.ne.s32.totalorder %s19, %s22
    %p28 = scmp.eq.s32.totalorder %s9, 0
    %p29 = por %p27, %p28
    %p30 = scmp.ne.s32.totalorder %s19, %s22
    %p31 = scmp.eq.s32.totalorder %s14, 1
    %p32 = por %p30, %p31
    %p33 = scmp.ne.s32.totalorder %s22, %s23
    %p34 = scmp.eq.s32.totalorder %s14, 0
    %p35 = por %p33, %p34
    %p36 = scmp.ne.s32.totalorder %s22, %s23
    %p37 = scmp.eq.s32.totalorder %s15, 1
    %p38 = por %p36, %p37
    %p40 = scmp.ne.s32.totalorder %s23, %s39
    %p41 = scmp.eq.s32.totalorder %s15, 0
    %p42 = por %p40, %p41
    %s44 = sadd.s32 %s43, 1
    %p47 = scmp.eq.s32.totalorder %s9, 1
    %p48 = scmp.ne.s32.totalorder %s43, %s45
    %p49 = scmp.eq.s32.totalorder %s9, 0
    %p50 = por %p48, %p49
    %p51 = scmp.ne.s32.totalorder %s43, %s45
    %p52 = scmp.eq.s32.totalorder %s14, 1
    %p53 = por %p51, %p52
    %p54 = scmp.ne.s32.totalorder %s45, %s46
    %p55 = scmp.eq.s32.totalorder %s14, 0
    %p56 = por %p54, %p55
    %p57 = scmp.ne.s32.totalorder %s45, %s46
    %p58 = scmp.eq.s32.totalorder %s15, 1
    %p59 = por %p57, %p58
    %p61 = scmp.ne.s32.totalorder %s46, %s60
    %p62 = scmp.eq.s32.totalorder %s15, 0
    %p63 = por %p61, %p62
    %s65 = sadd.s32 %s64, 1
    %p68 = scmp.eq.s32.totalorder %s9, 1
    %p69 = scmp.ne.s32.totalorder %s64, %s66
    %p70 = scmp.eq.s32.totalorder %s9, 0
    %p71 = por %p69, %p70
    %p72 = scmp.ne.s32.totalorder %s64, %s66
    %p73 = scmp.eq.s32.totalorder %s14, 1
    %p74 = por %p72, %p73
    %p75 = scmp.ne.s32.totalorder %s66, %s67
    %p76 = scmp.eq.s32.totalorder %s14, 0
    %p77 = por %p75, %p76
    %p78 = scmp.ne.s32.totalorder %s66, %s67
    %p79 = scmp.eq.s32.totalorder %s15, 1
    %p80 = por %p78, %p79
    %p82 = scmp.ne.s32.totalorder %s67, %s81
    %p83 = scmp.eq.s32.totalorder %s15, 0
    %p84 = por %p82, %p83
    %s85 = ssub.s32 %s9, %s16
    %p86 = scmp.eq.s32.totalorder %s85, 0
    %s88 = sadd.s32 %s87, 1
    %s89 = scalar_select %p86, %s87, %s88
    %p92 = pneg %p86
    %p93 = scmp.eq.s32.totalorder %s9, 1
    %p94 = por %p92, %p93
    %p95 = scmp.ne.s32.totalorder %s87, %s90
    %p96 = scmp.eq.s32.totalorder %s9, 0
    %p97 = por %p95, %p96
    %p98 = scmp.ne.s32.totalorder %s87, %s90
    %p99 = scmp.eq.s32.totalorder %s14, 1
    %p100 = por %p98, %p99
    %p101 = scmp.ne.s32.totalorder %s90, %s91
    %p102 = scmp.eq.s32.totalorder %s14, 0
    %p103 = por %p101, %p102
    %p104 = scmp.ne.s32.totalorder %s90, %s91
    %p105 = scmp.eq.s32.totalorder %s15, 1
    %p106 = por %p104, %p105
    %p108 = scmp.ne.s32.totalorder %s91, %s107
    %p109 = scmp.eq.s32.totalorder %s15, 0
    %p110 = por %p108, %p109
    %p111 = scmp.le.s32.totalorder 1, %s9
    %p112 = scmp.lt.s32.totalorder %s9, 3
    %p113 = pnand %p111, %p112
    %p114 = pneg %p113
    // Predicated region
    $region9: #{unet_forward.66} parent=5 // pred_check
      _
    $region10: #{unet_forward.66} parent=5 // pred_check_branch
      %116 = sbr.rel (%p113) target = $region12
    $region11: #{unet_forward.66} parent=5 // pred_region
      %s117 = ssub.s32 %s9, 1
      // Predicated region
      $region13: #{unet_forward.66} parent=11 // pred_check
        %p118 = pneg %p56
      $region14: #{unet_forward.66} parent=11 // pred_check_branch
        %120 = sbr.rel (%p118) target = $region16
      $region15: #{unet_forward.66} parent=11 // pred_region
        _
      $region16: #{unet_forward.66} parent=11 // pred_fallthru
        _
      // Predicated region
      $region17: #{unet_forward.66} parent=11 // pred_check
        %p121 = pneg %p77
      $region18: #{unet_forward.66} parent=11 // pred_check_branch
        %123 = sbr.rel (%p121) target = $region20
      $region19: #{unet_forward.66} parent=11 // pred_region
        _
      $region20: #{unet_forward.66} parent=11 // pred_fallthru
        _
    $region12: #{unet_forward.66} parent=5 // pred_fallthru
      _
    %p124 = scmp.lt.s32.totalorder %s9, 2
    // Predicated region
    $region21: #{unet_forward.66} parent=5 // pred_check
      %p125 = pneg %p124
    $region22: #{unet_forward.66} parent=5 // pred_check_branch
      %127 = sbr.rel (%p125) target = $region24
    $region23: #{unet_forward.66} parent=5 // pred_region
      // Predicated region
      $region25: #{unet_forward.66} parent=23 // pred_check
        %p128 = pneg %p29
      $region26: #{unet_forward.66} parent=23 // pred_check_branch
        %130 = sbr.rel (%p128) target = $region28
      $region27: #{unet_forward.66} parent=23 // pred_region
        %s131 = smul.u32 32, %s9
        %p132 = scmp.lt.s32.totalorder %s131, 63
        %s133 = scalar_select %p132, %s131, 63
        %s134 = smul.addr %s133, 4
        %s135 = scalar_lea.vmem %s0, %s134
        %s136 = smul.u32 32, %s9
      $region28: #{unet_forward.66} parent=23 // pred_fallthru
        _
    $region24: #{unet_forward.66} parent=5 // pred_fallthru
      _
    %p137 = scmp.le.s32.totalorder 1, %s9
    %p138 = scmp.lt.s32.totalorder %s9, 3
    %p139 = pnand %p137, %p138
    %p140 = pneg %p139
    // Predicated region
    $region29: #{unet_forward.66} parent=5 // pred_check
      _
    $region30: #{unet_forward.66} parent=5 // pred_check_branch
      %142 = sbr.rel (%p139) target = $region32
    $region31: #{unet_forward.66} parent=5 // pred_region
      %s143 = ssub.s32 %s9, 1
      %s144 = smul.u32 32, %s14
      %p145 = scmp.lt.s32.totalorder %s144, 63
      %s146 = scalar_select %p145, %s144, 63
      %s147 = smul.addr %s146, 4
      %s148 = scalar_lea.vmem %s0, %s147
      %p149 = pneg %p35
      %p150 = pneg %p32
      %p151 = pneg %p56
      %p152 = pneg %p53
      %p153 = pneg %p77
      %p154 = pneg %p74
      %p155 = pneg %p103
      %p156 = pneg %p100
      %s157 = smul.u32 32, %s14
      %p158 = scmp.lt.s32.totalorder %s157, 63
      %s159 = scalar_select %p158, %s157, 63
      %s160 = smul.addr %s159, 4
      %s161 = scalar_lea.vmem %s3, %s160
      %s162 = smul.u32 32, %s14
      %p163 = scmp.lt.s32.totalorder %s162, 63
      %s164 = scalar_select %p163, %s162, 63
      %s165 = smul.addr %s164, 4
      %s166 = scalar_lea.vmem %s0, %s165
      %s167 = smul.u32 32, %s14
      %s168 = smul.u32 32, %s14
      %p169 = scmp.lt.s32.totalorder %s168, 63
      %s170 = scalar_select %p169, %s168, 63
      %s171 = smul.addr %s170, 4
      %s172 = scalar_lea.vmem %s3, %s171
      %s173 = smul.u32 32, %s14
      %v174 = vld [vmem:[%s166] sm:$0xf]
      %v175 = vld [vmem:[%s166 + $0x4] sm:$0xf]
      %v176 = vld [vmem:[%s166 + $0x8] sm:$0xf]
      %v177 = vld [vmem:[%s166 + $0xc] sm:$0xf]
      %v178 = vld [vmem:[%s166 + $0x10] sm:$0xf]
      %v179 = vld [vmem:[%s166 + $0x14] sm:$0xf]
      %v180 = vld [vmem:[%s166 + $0x18] sm:$0xf]
      %v181 = vld [vmem:[%s166 + $0x1c] sm:$0xf]
      %v182 = vld [vmem:[%s166 + $0x20] sm:$0xf]
      %v183 = vld [vmem:[%s166 + $0x24] sm:$0xf]
      %v184 = vld [vmem:[%s166 + $0x28] sm:$0xf]
      %v185 = vld [vmem:[%s166 + $0x2c] sm:$0xf]
      %v186 = vld [vmem:[%s166 + $0x30] sm:$0xf]
      %v187 = vld [vmem:[%s166 + $0x34] sm:$0xf]
      %v188 = vld [vmem:[%s166 + $0x38] sm:$0xf]
      %v189 = vld [vmem:[%s166 + $0x3c] sm:$0xf]
      %v190 = vld [vmem:[%s166 + $0x40] sm:$0xf]
      %v191 = vld [vmem:[%s166 + $0x44] sm:$0xf]
      %v192 = vld [vmem:[%s166 + $0x48] sm:$0xf]
      %v193 = vld [vmem:[%s166 + $0x4c] sm:$0xf]
      %v194 = vld [vmem:[%s166 + $0x50] sm:$0xf]
      %v195 = vld [vmem:[%s166 + $0x54] sm:$0xf]
      %v196 = vld [vmem:[%s166 + $0x58] sm:$0xf]
      %v197 = vld [vmem:[%s166 + $0x5c] sm:$0xf]
      %v198 = vld [vmem:[%s166 + $0x60] sm:$0xf]
      %v199 = vld [vmem:[%s166 + $0x64] sm:$0xf]
      %v200 = vld [vmem:[%s166 + $0x68] sm:$0xf]
      %v201 = vld [vmem:[%s166 + $0x6c] sm:$0xf]
      %v202 = vld [vmem:[%s166 + $0x70] sm:$0xf]
      %v203 = vld [vmem:[%s166 + $0x74] sm:$0xf]
      %v204 = vld [vmem:[%s166 + $0x78] sm:$0xf]
      %v205 = vld [vmem:[%s166 + $0x7c] sm:$0xf]
      %v206 = vunpack.c.l.bf16 %v174
      %v207 = vunpack.c.l.bf16 %v175
      %v208 = vunpack.c.l.bf16 %v176
      %v209 = vunpack.c.l.bf16 %v177
      %v210 = vunpack.c.l.bf16 %v178
      %v211 = vunpack.c.l.bf16 %v179
      %v212 = vunpack.c.l.bf16 %v180
      %v213 = vunpack.c.l.bf16 %v181
      %v214 = vunpack.c.l.bf16 %v182
      %v215 = vunpack.c.l.bf16 %v183
      %v216 = vunpack.c.l.bf16 %v184
      %v217 = vunpack.c.l.bf16 %v185
      %v218 = vunpack.c.l.bf16 %v186
      %v219 = vunpack.c.l.bf16 %v187
      %v220 = vunpack.c.l.bf16 %v188
      %v221 = vunpack.c.l.bf16 %v189
      %v222 = vunpack.c.l.bf16 %v190
      %v223 = vunpack.c.l.bf16 %v191
      %v224 = vunpack.c.l.bf16 %v192
      %v225 = vunpack.c.l.bf16 %v193
      %v226 = vunpack.c.l.bf16 %v194
      %v227 = vunpack.c.l.bf16 %v195
      %v228 = vunpack.c.l.bf16 %v196
      %v229 = vunpack.c.l.bf16 %v197
      %v230 = vunpack.c.l.bf16 %v198
      %v231 = vunpack.c.l.bf16 %v199
      %v232 = vunpack.c.l.bf16 %v200
      %v233 = vunpack.c.l.bf16 %v201
      %v234 = vunpack.c.l.bf16 %v202
      %v235 = vunpack.c.l.bf16 %v203
      %v236 = vunpack.c.l.bf16 %v204
      %v237 = vunpack.c.l.bf16 %v205
      %v238 = vld [vmem:[%s1] sm:$0x1]
      %v240 = vlaneseq
      %v241 = vshrl.u32 %v240, 7
      %v242 = vsub.s32 0, %v241
      %v243 = vrot.slane %v238, %v242
      %v245 = vmul.f32 %v206, %v243
      %v246 = vmul.f32 %v207, %v243
      %v247 = vmul.f32 %v208, %v243
      %v248 = vmul.f32 %v209, %v243
      %v249 = vmul.f32 %v210, %v243
      %v250 = vmul.f32 %v211, %v243
      %v251 = vmul.f32 %v212, %v243
      %v252 = vmul.f32 %v213, %v243
      %v253 = vmul.f32 %v214, %v243
      %v254 = vmul.f32 %v215, %v243
      %v255 = vmul.f32 %v216, %v243
      %v256 = vmul.f32 %v217, %v243
      %v257 = vmul.f32 %v218, %v243
      %v258 = vmul.f32 %v219, %v243
      %v259 = vmul.f32 %v220, %v243
      %v260 = vmul.f32 %v221, %v243
      %v261 = vmul.f32 %v222, %v243
      %v262 = vmul.f32 %v223, %v243
      %v263 = vmul.f32 %v224, %v243
      %v264 = vmul.f32 %v225, %v243
      %v265 = vmul.f32 %v226, %v243
      %v266 = vmul.f32 %v227, %v243
      %v267 = vmul.f32 %v228, %v243
      %v268 = vmul.f32 %v229, %v243
      %v269 = vmul.f32 %v230, %v243
      %v270 = vmul.f32 %v231, %v243
      %v271 = vmul.f32 %v232, %v243
      %v272 = vmul.f32 %v233, %v243
      %v273 = vmul.f32 %v234, %v243
      %v274 = vmul.f32 %v235, %v243
      %v275 = vmul.f32 %v236, %v243
      %v276 = vmul.f32 %v237, %v243
      %v277 = vld [vmem:[%s2] sm:$0x1]
      %v279 = vlaneseq
      %v280 = vshrl.u32 %v279, 7
      %v281 = vsub.s32 0, %v280
      %v282 = vrot.slane %v277, %v281
      %v284 = vadd.f32 %v245, %v282
      %v285 = vadd.f32 %v246, %v282
      %v286 = vadd.f32 %v247, %v282
      %v287 = vadd.f32 %v248, %v282
      %v288 = vadd.f32 %v249, %v282
      %v289 = vadd.f32 %v250, %v282
      %v290 = vadd.f32 %v251, %v282
      %v291 = vadd.f32 %v252, %v282
      %v292 = vadd.f32 %v253, %v282
      %v293 = vadd.f32 %v254, %v282
      %v294 = vadd.f32 %v255, %v282
      %v295 = vadd.f32 %v256, %v282
      %v296 = vadd.f32 %v257, %v282
      %v297 = vadd.f32 %v258, %v282
      %v298 = vadd.f32 %v259, %v282
      %v299 = vadd.f32 %v260, %v282
      %v300 = vadd.f32 %v261, %v282
      %v301 = vadd.f32 %v262, %v282
      %v302 = vadd.f32 %v263, %v282
      %v303 = vadd.f32 %v264, %v282
      %v304 = vadd.f32 %v265, %v282
      %v305 = vadd.f32 %v266, %v282
      %v306 = vadd.f32 %v267, %v282
      %v307 = vadd.f32 %v268, %v282
      %v308 = vadd.f32 %v269, %v282
      %v309 = vadd.f32 %v270, %v282
      %v310 = vadd.f32 %v271, %v282
      %v311 = vadd.f32 %v272, %v282
      %v312 = vadd.f32 %v273, %v282
      %v313 = vadd.f32 %v274, %v282
      %v314 = vadd.f32 %v275, %v282
      %v315 = vadd.f32 %v276, %v282
      %v316 = vmax.f32 %v284, 0.0
      %v317 = vmax.f32 %v285, 0.0
      %v318 = vmax.f32 %v286, 0.0
      %v319 = vmax.f32 %v287, 0.0
      %v320 = vmax.f32 %v288, 0.0
      %v321 = vmax.f32 %v289, 0.0
      %v322 = vmax.f32 %v290, 0.0
      %v323 = vmax.f32 %v291, 0.0
      %v324 = vmax.f32 %v292, 0.0
      %v325 = vmax.f32 %v293, 0.0
      %v326 = vmax.f32 %v294, 0.0
      %v327 = vmax.f32 %v295, 0.0
      %v328 = vmax.f32 %v296, 0.0
      %v329 = vmax.f32 %v297, 0.0
      %v330 = vmax.f32 %v298, 0.0
      %v331 = vmax.f32 %v299, 0.0
      %v332 = vmax.f32 %v300, 0.0
      %v333 = vmax.f32 %v301, 0.0
      %v334 = vmax.f32 %v302, 0.0
      %v335 = vmax.f32 %v303, 0.0
      %v336 = vmax.f32 %v304, 0.0
      %v337 = vmax.f32 %v305, 0.0
      %v338 = vmax.f32 %v306, 0.0
      %v339 = vmax.f32 %v307, 0.0
      %v340 = vmax.f32 %v308, 0.0
      %v341 = vmax.f32 %v309, 0.0
      %v342 = vmax.f32 %v310, 0.0
      %v343 = vmax.f32 %v311, 0.0
      %v344 = vmax.f32 %v312, 0.0
      %v345 = vmax.f32 %v313, 0.0
      %v346 = vmax.f32 %v314, 0.0
      %v347 = vmax.f32 %v315, 0.0
      %v348 = vpack.c.bf16 %v317, %v316
      %v349 = vpack.c.bf16 %v319, %v318
      %v350 = vpack.c.bf16 %v321, %v320
      %v351 = vpack.c.bf16 %v323, %v322
      %v352 = vpack.c.bf16 %v325, %v324
      %v353 = vpack.c.bf16 %v327, %v326
      %v354 = vpack.c.bf16 %v329, %v328
      %v355 = vpack.c.bf16 %v331, %v330
      %v356 = vpack.c.bf16 %v333, %v332
      %v357 = vpack.c.bf16 %v335, %v334
      %v358 = vpack.c.bf16 %v337, %v336
      %v359 = vpack.c.bf16 %v339, %v338
      %v360 = vpack.c.bf16 %v341, %v340
      %v361 = vpack.c.bf16 %v343, %v342
      %v362 = vpack.c.bf16 %v345, %v344
      %v363 = vpack.c.bf16 %v347, %v346
      %v380 = vunpack.c.l.b16 %v348
      %v381 = vunpack.c.h.b16 %v348
      %v382 = vunpack.c.l.b16 %v349
      %v383 = vunpack.c.h.b16 %v349
      %v384 = vunpack.c.l.b16 %v350
      %v385 = vunpack.c.h.b16 %v350
      %v386 = vunpack.c.l.b16 %v351
      %v387 = vunpack.c.h.b16 %v351
      %v388 = vunpack.c.l.b16 %v352
      %v389 = vunpack.c.h.b16 %v352
      %v390 = vunpack.c.l.b16 %v353
      %v391 = vunpack.c.h.b16 %v353
      %v392 = vunpack.c.l.b16 %v354
      %v393 = vunpack.c.h.b16 %v354
      %v394 = vunpack.c.l.b16 %v355
      %v395 = vunpack.c.h.b16 %v355
      %v396 = vunpack.c.l.b16 %v356
      %v397 = vunpack.c.h.b16 %v356
      %v398 = vunpack.c.l.b16 %v357
      %v399 = vunpack.c.h.b16 %v357
      %v400 = vunpack.c.l.b16 %v358
      %v401 = vunpack.c.h.b16 %v358
      %v402 = vunpack.c.l.b16 %v359
      %v403 = vunpack.c.h.b16 %v359
      %v404 = vunpack.c.l.b16 %v360
      %v405 = vunpack.c.h.b16 %v360
      %v406 = vunpack.c.l.b16 %v361
      %v407 = vunpack.c.h.b16 %v361
      %v408 = vunpack.c.l.b16 %v362
      %v409 = vunpack.c.h.b16 %v362
      %v410 = vunpack.c.l.b16 %v363
      %v411 = vunpack.c.h.b16 %v363
      %v412 = vpack.c.b16 %v380, %v380
      %v413 = vpack.c.b16 %v381, %v381
      %v414 = vpack.c.b16 %v382, %v382
      %v415 = vpack.c.b16 %v383, %v383
      %v416 = vpack.c.b16 %v384, %v384
      %v417 = vpack.c.b16 %v385, %v385
      %v418 = vpack.c.b16 %v386, %v386
      %v419 = vpack.c.b16 %v387, %v387
      %v420 = vpack.c.b16 %v388, %v388
      %v421 = vpack.c.b16 %v389, %v389
      %v422 = vpack.c.b16 %v390, %v390
      %v423 = vpack.c.b16 %v391, %v391
      %v424 = vpack.c.b16 %v392, %v392
      %v425 = vpack.c.b16 %v393, %v393
      %v426 = vpack.c.b16 %v394, %v394
      %v427 = vpack.c.b16 %v395, %v395
      %v428 = vpack.c.b16 %v396, %v396
      %v429 = vpack.c.b16 %v397, %v397
      %v430 = vpack.c.b16 %v398, %v398
      %v431 = vpack.c.b16 %v399, %v399
      %v432 = vpack.c.b16 %v400, %v400
      %v433 = vpack.c.b16 %v401, %v401
      %v434 = vpack.c.b16 %v402, %v402
      %v435 = vpack.c.b16 %v403, %v403
      %v436 = vpack.c.b16 %v404, %v404
      %v437 = vpack.c.b16 %v405, %v405
      %v438 = vpack.c.b16 %v406, %v406
      %v439 = vpack.c.b16 %v407, %v407
      %v440 = vpack.c.b16 %v408, %v408
      %v441 = vpack.c.b16 %v409, %v409
      %v442 = vpack.c.b16 %v410, %v410
      %v443 = vpack.c.b16 %v411, %v411
      %476 = vst [vmem:[%s172] sm:$0xf] %v412
      %477 = vst [vmem:[%s172 + $0x4] sm:$0xf] %v413
      %478 = vst [vmem:[%s172 + $0x8] sm:$0xf] %v414
      %479 = vst [vmem:[%s172 + $0xc] sm:$0xf] %v415
      %480 = vst [vmem:[%s172 + $0x10] sm:$0xf] %v416
      %481 = vst [vmem:[%s172 + $0x14] sm:$0xf] %v417
      %482 = vst [vmem:[%s172 + $0x18] sm:$0xf] %v418
      %483 = vst [vmem:[%s172 + $0x1c] sm:$0xf] %v419
      %484 = vst [vmem:[%s172 + $0x20] sm:$0xf] %v420
      %485 = vst [vmem:[%s172 + $0x24] sm:$0xf] %v421
      %486 = vst [vmem:[%s172 + $0x28] sm:$0xf] %v422
      %487 = vst [vmem:[%s172 + $0x2c] sm:$0xf] %v423
      %488 = vst [vmem:[%s172 + $0x30] sm:$0xf] %v424
      %489 = vst [vmem:[%s172 + $0x34] sm:$0xf] %v425
      %490 = vst [vmem:[%s172 + $0x38] sm:$0xf] %v426
      %491 = vst [vmem:[%s172 + $0x3c] sm:$0xf] %v427
      %492 = vst [vmem:[%s172 + $0x40] sm:$0xf] %v428
      %493 = vst [vmem:[%s172 + $0x44] sm:$0xf] %v429
      %494 = vst [vmem:[%s172 + $0x48] sm:$0xf] %v430
      %495 = vst [vmem:[%s172 + $0x4c] sm:$0xf] %v431
      %496 = vst [vmem:[%s172 + $0x50] sm:$0xf] %v432
      %497 = vst [vmem:[%s172 + $0x54] sm:$0xf] %v433
      %498 = vst [vmem:[%s172 + $0x58] sm:$0xf] %v434
      %499 = vst [vmem:[%s172 + $0x5c] sm:$0xf] %v435
      %500 = vst [vmem:[%s172 + $0x60] sm:$0xf] %v436
      %501 = vst [vmem:[%s172 + $0x64] sm:$0xf] %v437
      %502 = vst [vmem:[%s172 + $0x68] sm:$0xf] %v438
      %503 = vst [vmem:[%s172 + $0x6c] sm:$0xf] %v439
      %504 = vst [vmem:[%s172 + $0x70] sm:$0xf] %v440
      %505 = vst [vmem:[%s172 + $0x74] sm:$0xf] %v441
      %506 = vst [vmem:[%s172 + $0x78] sm:$0xf] %v442
      %507 = vst [vmem:[%s172 + $0x7c] sm:$0xf] %v443
      %s508 = smul.u32 32, %s14
      %p509 = scmp.lt.s32.totalorder %s508, 63
      %s510 = scalar_select %p509, %s508, 63
      %s511 = smul.addr %s510, 4
      %s512 = scalar_lea.vmem %s3, %s511
      // Predicated region
      $region33: #{unet_forward.66} parent=31 // pred_check
        %p513 = pneg %p100
      $region34: #{unet_forward.66} parent=31 // pred_check_branch
        %515 = sbr.rel (%p513) target = $region36
      $region35: #{unet_forward.66} parent=31 // pred_region
        %s516 = smul.u32 32, %s14
      $region36: #{unet_forward.66} parent=31 // pred_fallthru
        _
    $region32: #{unet_forward.66} parent=5 // pred_fallthru
      _
    %p517 = scmp.le.s32.totalorder 2, %s9
    // Predicated region
    $region37: #{unet_forward.66} parent=5 // pred_check
      %p518 = pneg %p517
    $region38: #{unet_forward.66} parent=5 // pred_check_branch
      %520 = sbr.rel (%p518) target = $region40
    $region39: #{unet_forward.66} parent=5 // pred_region
      %s521 = ssub.s32 %s9, 2
      // Predicated region
      $region41: #{unet_forward.66} parent=39 // pred_check
        %p522 = pneg %p106
      $region42: #{unet_forward.66} parent=39 // pred_check_branch
        %524 = sbr.rel (%p522) target = $region44
      $region43: #{unet_forward.66} parent=39 // pred_region
        %s525 = smul.u32 32, %s15
        %p526 = scmp.lt.s32.totalorder %s525, 63
        %s527 = scalar_select %p526, %s525, 63
        %s528 = smul.addr %s527, 4
        %s529 = scalar_lea.vmem %s3, %s528
      $region44: #{unet_forward.66} parent=39 // pred_fallthru
        _
    $region40: #{unet_forward.66} parent=5 // pred_fallthru
      _
  $region6: #{unet_forward.66} parent=0 // loop_footer
    %s13 = sadd.s32 1, %s9
  $region7: #{unet_forward.66} parent=0 // loop_footer_branch
    %8 = sbr.rel target = $region3
  $region8: #{unet_forward.66} parent=0 // loop_exit
    _

// kernel: unet_forward.65
$region0: #{unet_forward.65}
  #allocation0 [shape = 'u32[]', space=smem, size = 0x4, offset = 0x4, fixed_abs, tag = 'smem constant byte address 0x4 - core index']
  #allocation1 [shape = 'u32[144,128]{1,0:T(1,128)}', space=vmem, size = 0x12000, scoped, tag = 'internal scratch']
  #allocation2 [shape = 'f32[256,128]{1,0:T(8,128)}', space=vmem, size = 0x20000, scoped, tag = 'scratch operand']
  %s0 = inlined_call_operand.vmem [shape: bf16[512,128], index: 0, kind: input, shape index: {}]
  %s1 = inlined_call_operand.vmem [shape: bf16[128,128], index: 1, kind: input, shape index: {}]
  %s2 = inlined_call_operand.vmem [shape: bf16[512,128], index: 2, kind: output, shape index: {0}]
  %s3 = inlined_call_operand.vmem [shape: f32[2,2,128], index: 3, kind: output, shape index: {1}]
  %4 = xla_tuple %s2, %s3
  %s5 = sld [smem:[#allocation0]]
  $region57: #{unet_forward.65} parent=0
    _
  %s7 = ssub.s32 1, %s5
  %s8 = scalar_select 0, %s7, %s5
  loop: start=0, step=1, limit=4
  $region2: #{unet_forward.65} parent=0 // loop_pre_header
    _
  $region3: #{unet_forward.65} parent=0 // loop_header
    %s10 = sphi 0, %s14
    %p11 = scmp.ge.s32.totalorder %s10, 4
    %s17 = sphi 0, %s29
    %s18 = sphi 0, %s25
    %s19 = sphi 0, %s17
    %s20 = sphi 0, %s18
    %s21 = sphi 0, %s19
    %s22 = sphi 0, %s20
    %s34 = sphi 0, %s36
    %s37 = sphi 0, %s34
    %s38 = sphi 0, %s37
    %s54 = sphi 0, %s38
    %s60 = sphi 0, %s62
    %s63 = sphi 0, %s60
    %s64 = sphi 0, %s63
    %s80 = sphi 0, %s64
    %s86 = sphi 0, %s88
    %s89 = sphi 0, %s86
    %s90 = sphi 0, %s89
    %s106 = sphi 0, %s90
    %s112 = sphi 0, %s114
    %s115 = sphi 0, %s112
    %s116 = sphi 0, %s115
    %s132 = sphi 0, %s116
  $region4: #{unet_forward.65} parent=0 // loop_header_branch
    %13 = sbr.rel (%p11) target = $region8
  $region5: #{unet_forward.65} parent=0 // loop_body
    %s15 = ssub.s32 %s10, 1
    %s16 = ssub.s32 %s10, 2
    %s23 = sadd.s32 1, %s18
    %p24 = scmp.ge.s32.totalorder %s23, 1
    %s25 = scalar_select %p24, 0, %s23
    %s26 = sadd.s32 1, %s17
    %s27 = scalar_select %p24, %s26, %s17
    %p28 = scmp.ge.s32.totalorder %s27, 2
    %s29 = scalar_select %p28, 0, %s27
    %s30 = ssub.s32 %s17, %s29
    %s31 = ssub.s32 %s18, %s25
    %s32 = sor.u32 %s30, %s31
    %p33 = scmp.eq.s32.totalorder %s32, 0
    %s35 = sadd.s32 %s34, 1
    %s36 = scalar_select %p33, %s34, %s35
    %p39 = pneg %p33
    %p40 = scmp.eq.s32.totalorder %s10, 1
    %p41 = por %p39, %p40
    %p42 = scmp.ne.s32.totalorder %s34, %s37
    %p43 = scmp.eq.s32.totalorder %s10, 0
    %p44 = por %p42, %p43
    %p45 = scmp.ne.s32.totalorder %s34, %s37
    %p46 = scmp.eq.s32.totalorder %s15, 1
    %p47 = por %p45, %p46
    %p48 = scmp.ne.s32.totalorder %s37, %s38
    %p49 = scmp.eq.s32.totalorder %s15, 0
    %p50 = por %p48, %p49
    %p51 = scmp.ne.s32.totalorder %s37, %s38
    %p52 = scmp.eq.s32.totalorder %s16, 1
    %p53 = por %p51, %p52
    %p55 = scmp.ne.s32.totalorder %s38, %s54
    %p56 = scmp.eq.s32.totalorder %s16, 0
    %p57 = por %p55, %p56
    %s58 = ssub.s32 %s18, %s25
    %p59 = scmp.eq.s32.totalorder %s58, 0
    %s61 = sadd.s32 %s60, 1
    %s62 = scalar_select %p59, %s60, %s61
    %p65 = pneg %p59
    %p66 = scmp.eq.s32.totalorder %s10, 1
    %p67 = por %p65, %p66
    %p68 = scmp.ne.s32.totalorder %s60, %s63
    %p69 = scmp.eq.s32.totalorder %s10, 0
    %p70 = por %p68, %p69
    %p71 = scmp.ne.s32.totalorder %s60, %s63
    %p72 = scmp.eq.s32.totalorder %s15, 1
    %p73 = por %p71, %p72
    %p74 = scmp.ne.s32.totalorder %s63, %s64
    %p75 = scmp.eq.s32.totalorder %s15, 0
    %p76 = por %p74, %p75
    %p77 = scmp.ne.s32.totalorder %s63, %s64
    %p78 = scmp.eq.s32.totalorder %s16, 1
    %p79 = por %p77, %p78
    %p81 = scmp.ne.s32.totalorder %s64, %s80
    %p82 = scmp.eq.s32.totalorder %s16, 0
    %p83 = por %p81, %p82
    %s84 = ssub.s32 %s17, %s29
    %p85 = scmp.eq.s32.totalorder %s84, 0
    %s87 = sadd.s32 %s86, 1
    %s88 = scalar_select %p85, %s86, %s87
    %p91 = pneg %p85
    %p92 = scmp.eq.s32.totalorder %s10, 1
    %p93 = por %p91, %p92
    %p94 = scmp.ne.s32.totalorder %s86, %s89
    %p95 = scmp.eq.s32.totalorder %s10, 0
    %p96 = por %p94, %p95
    %p97 = scmp.ne.s32.totalorder %s86, %s89
    %p98 = scmp.eq.s32.totalorder %s15, 1
    %p99 = por %p97, %p98
    %p100 = scmp.ne.s32.totalorder %s89, %s90
    %p101 = scmp.eq.s32.totalorder %s15, 0
    %p102 = por %p100, %p101
    %p103 = scmp.ne.s32.totalorder %s89, %s90
    %p104 = scmp.eq.s32.totalorder %s16, 1
    %p105 = por %p103, %p104
    %p107 = scmp.ne.s32.totalorder %s90, %s106
    %p108 = scmp.eq.s32.totalorder %s16, 0
    %p109 = por %p107, %p108
    %s110 = ssub.s32 %s17, %s29
    %p111 = scmp.eq.s32.totalorder %s110, 0
    %s113 = sadd.s32 %s112, 1
    %s114 = scalar_select %p111, %s112, %s113
    %p117 = pneg %p111
    %p118 = scmp.eq.s32.totalorder %s10, 1
    %p119 = por %p117, %p118
    %p120 = scmp.ne.s32.totalorder %s112, %s115
    %p121 = scmp.eq.s32.totalorder %s10, 0
    %p122 = por %p120, %p121
    %p123 = scmp.ne.s32.totalorder %s112, %s115
    %p124 = scmp.eq.s32.totalorder %s15, 1
    %p125 = por %p123, %p124
    %p126 = scmp.ne.s32.totalorder %s115, %s116
    %p127 = scmp.eq.s32.totalorder %s15, 0
    %p128 = por %p126, %p127
    %p129 = scmp.ne.s32.totalorder %s115, %s116
    %p130 = scmp.eq.s32.totalorder %s16, 1
    %p131 = por %p129, %p130
    %p133 = scmp.ne.s32.totalorder %s116, %s132
    %p134 = scmp.eq.s32.totalorder %s16, 0
    %p135 = por %p133, %p134
    %p136 = scmp.le.s32.totalorder 1, %s10
    %p137 = scmp.lt.s32.totalorder %s10, 3
    %p138 = pnand %p136, %p137
    %p139 = pneg %p138
    // Predicated region
    $region9: #{unet_forward.65} parent=5 // pred_check
      _
    $region10: #{unet_forward.65} parent=5 // pred_check_branch
      %141 = sbr.rel (%p138) target = $region12
    $region11: #{unet_forward.65} parent=5 // pred_region
      %s142 = ssub.s32 %s10, 1
      // Predicated region
      $region13: #{unet_forward.65} parent=11 // pred_check
        %p143 = pneg %p76
      $region14: #{unet_forward.65} parent=11 // pred_check_branch
        %145 = sbr.rel (%p143) target = $region16
      $region15: #{unet_forward.65} parent=11 // pred_region
        %s146 = smul.u32 16, %s20
        %p147 = scmp.lt.s32.totalorder %s146, 15
        %s148 = scalar_select %p147, %s146, 15
        %s149 = smul.addr %s148, 4
        %s150 = scalar_lea.vmem %s1, %s149
        %s151 = smul.u32 16, %s20
      $region16: #{unet_forward.65} parent=11 // pred_fallthru
        _
    $region12: #{unet_forward.65} parent=5 // pred_fallthru
      _
    %p152 = scmp.lt.s32.totalorder %s10, 2
    // Predicated region
    $region17: #{unet_forward.65} parent=5 // pred_check
      %p153 = pneg %p152
    $region18: #{unet_forward.65} parent=5 // pred_check_branch
      %155 = sbr.rel (%p153) target = $region20
    $region19: #{unet_forward.65} parent=5 // pred_region
      // Predicated region
      $region21: #{unet_forward.65} parent=19 // pred_check
        %p156 = pneg %p44
      $region22: #{unet_forward.65} parent=19 // pred_check_branch
        %158 = sbr.rel (%p156) target = $region24
      $region23: #{unet_forward.65} parent=19 // pred_region
        %s159 = smul.u32 32, %s17
        %p160 = scmp.lt.s32.totalorder %s159, 63
        %s161 = scalar_select %p160, %s159, 63
        %p162 = scmp.lt.s32.totalorder %s18, 0
        %s163 = scalar_select %p162, %s18, 0
        %s164 = sadd.s32 %s163, %s161
        %s165 = smul.addr %s164, 4
        %s166 = scalar_lea.vmem %s0, %s165
        %s167 = smul.u32 32, %s17
      $region24: #{unet_forward.65} parent=19 // pred_fallthru
        _
    $region20: #{unet_forward.65} parent=5 // pred_fallthru
      _
    %p168 = scmp.le.s32.totalorder 1, %s10
    %p169 = scmp.lt.s32.totalorder %s10, 3
    %p170 = pnand %p168, %p169
    %p171 = pneg %p170
    // Predicated region
    $region25: #{unet_forward.65} parent=5 // pred_check
      _
    $region26: #{unet_forward.65} parent=5 // pred_check_branch
      %173 = sbr.rel (%p170) target = $region28
    $region27: #{unet_forward.65} parent=5 // pred_region
      %s174 = ssub.s32 %s10, 1
      %s175 = smul.u32 32, %s19
      %p176 = scmp.lt.s32.totalorder %s175, 63
      %s177 = scalar_select %p176, %s175, 63
      %p178 = scmp.lt.s32.totalorder %s20, 0
      %s179 = scalar_select %p178, %s20, 0
      %s180 = sadd.s32 %s179, %s177
      %s181 = smul.addr %s180, 4
      %s182 = scalar_lea.vmem %s0, %s181
      %p183 = pneg %p50
      %p184 = pneg %p47
      %s185 = smul.u32 16, %s20
      %p186 = scmp.lt.s32.totalorder %s185, 15
      %s187 = scalar_select %p186, %s185, 15
      %s188 = smul.addr %s187, 4
      %s189 = scalar_lea.vmem %s1, %s188
      %p190 = pneg %p76
      %p191 = pneg %p73
      %p192 = pneg %p102
      %p193 = pneg %p99
      %s194 = smul.u32 32, %s19
      %p195 = scmp.lt.s32.totalorder %s194, 63
      %s196 = scalar_select %p195, %s194, 63
      %s197 = smul.addr %s196, 4
      %s198 = scalar_lea.vmem %s2, %s197
      %p199 = pneg %p128
      %p200 = pneg %p125
      %p201 = scmp.lt.s32.totalorder %s19, 1
      %s202 = scalar_select %p201, %s19, 1
      %s203 = smul.addr %s202, 2
      %s204 = scalar_lea.vmem %s3, %s203
      %s205 = smul.u32 32, %s19
      %p206 = scmp.lt.s32.totalorder %s205, 63
      %s207 = scalar_select %p206, %s205, 63
      %p208 = scmp.lt.s32.totalorder %s20, 0
      %s209 = scalar_select %p208, %s20, 0
      %s210 = sadd.s32 %s209, %s207
      %s211 = smul.addr %s210, 4
      %s212 = scalar_lea.vmem %s0, %s211
      %s213 = smul.u32 32, %s19
      %s214 = smul.u32 16, %s20
      %p215 = scmp.lt.s32.totalorder %s214, 15
      %s216 = scalar_select %p215, %s214, 15
      %s217 = smul.addr %s216, 4
      %s218 = scalar_lea.vmem %s1, %s217
      %s219 = smul.u32 16, %s20
      %s220 = smul.u32 32, %s19
      %p221 = scmp.lt.s32.totalorder %s220, 63
      %s222 = scalar_select %p221, %s220, 63
      %s223 = smul.addr %s222, 4
      %s224 = scalar_lea.vmem %s2, %s223
      %s225 = smul.u32 32, %s19
      %p226 = scmp.lt.s32.totalorder %s19, 1
      %s227 = scalar_select %p226, %s19, 1
      %s228 = smul.addr %s227, 2
      %s229 = scalar_lea.vmem %s3, %s228
      %p231 = scmp.eq.s32.totalorder %s20, 0
      // Predicated region
      $region29: #{unet_forward.65} parent=27 // pred_check
        %p232 = pneg %p231
      $region30: #{unet_forward.65} parent=27 // pred_check_branch
        %234 = sbr.rel (%p232) target = $region32
      $region31: #{unet_forward.65} parent=27 // pred_region
        %235 = vst [vmem:[#allocation2] sm:$0xff] 0.0
        %236 = vst [vmem:[#allocation2 + $0x8] sm:$0xff] 0.0
        %237 = vst [vmem:[#allocation2 + $0x10] sm:$0xff] 0.0
        %238 = vst [vmem:[#allocation2 + $0x18] sm:$0xff] 0.0
        %239 = vst [vmem:[#allocation2 + $0x20] sm:$0xff] 0.0
        %240 = vst [vmem:[#allocation2 + $0x28] sm:$0xff] 0.0
        %241 = vst [vmem:[#allocation2 + $0x30] sm:$0xff] 0.0
        %242 = vst [vmem:[#allocation2 + $0x38] sm:$0xff] 0.0
        %243 = vst [vmem:[#allocation2 + $0x40] sm:$0xff] 0.0
        %244 = vst [vmem:[#allocation2 + $0x48] sm:$0xff] 0.0
        %245 = vst [vmem:[#allocation2 + $0x50] sm:$0xff] 0.0
        %246 = vst [vmem:[#allocation2 + $0x58] sm:$0xff] 0.0
        %247 = vst [vmem:[#allocation2 + $0x60] sm:$0xff] 0.0
        %248 = vst [vmem:[#allocation2 + $0x68] sm:$0xff] 0.0
        %249 = vst [vmem:[#allocation2 + $0x70] sm:$0xff] 0.0
        %250 = vst [vmem:[#allocation2 + $0x78] sm:$0xff] 0.0
        %251 = vst [vmem:[#allocation2 + $0x80] sm:$0xff] 0.0
        %252 = vst [vmem:[#allocation2 + $0x88] sm:$0xff] 0.0
        %253 = vst [vmem:[#allocation2 + $0x90] sm:$0xff] 0.0
        %254 = vst [vmem:[#allocation2 + $0x98] sm:$0xff] 0.0
        %255 = vst [vmem:[#allocation2 + $0xa0] sm:$0xff] 0.0
        %256 = vst [vmem:[#allocation2 + $0xa8] sm:$0xff] 0.0
        %257 = vst [vmem:[#allocation2 + $0xb0] sm:$0xff] 0.0
        %258 = vst [vmem:[#allocation2 + $0xb8] sm:$0xff] 0.0
        %259 = vst [vmem:[#allocation2 + $0xc0] sm:$0xff] 0.0
        %260 = vst [vmem:[#allocation2 + $0xc8] sm:$0xff] 0.0
        %261 = vst [vmem:[#allocation2 + $0xd0] sm:$0xff] 0.0
        %262 = vst [vmem:[#allocation2 + $0xd8] sm:$0xff] 0.0
        %263 = vst [vmem:[#allocation2 + $0xe0] sm:$0xff] 0.0
        %264 = vst [vmem:[#allocation2 + $0xe8] sm:$0xff] 0.0
        %265 = vst [vmem:[#allocation2 + $0xf0] sm:$0xff] 0.0
        %266 = vst [vmem:[#allocation2 + $0xf8] sm:$0xff] 0.0
      $region32: #{unet_forward.65} parent=27 // pred_fallthru
        _
      %v267 = vld [vmem:[#allocation2] sm:$0xff]
      %v268 = vld [vmem:[#allocation2 + $0x8] sm:$0xff]
      %v269 = vld [vmem:[#allocation2 + $0x10] sm:$0xff]
      %v270 = vld [vmem:[#allocation2 + $0x18] sm:$0xff]
      %v271 = vld [vmem:[#allocation2 + $0x20] sm:$0xff]
      %v272 = vld [vmem:[#allocation2 + $0x28] sm:$0xff]
      %v273 = vld [vmem:[#allocation2 + $0x30] sm:$0xff]
      %v274 = vld [vmem:[#allocation2 + $0x38] sm:$0xff]
      %v275 = vld [vmem:[#allocation2 + $0x40] sm:$0xff]
      %v276 = vld [vmem:[#allocation2 + $0x48] sm:$0xff]
      %v277 = vld [vmem:[#allocation2 + $0x50] sm:$0xff]
      %v278 = vld [vmem:[#allocation2 + $0x58] sm:$0xff]
      %v279 = vld [vmem:[#allocation2 + $0x60] sm:$0xff]
      %v280 = vld [vmem:[#allocation2 + $0x68] sm:$0xff]
      %v281 = vld [vmem:[#allocation2 + $0x70] sm:$0xff]
      %v282 = vld [vmem:[#allocation2 + $0x78] sm:$0xff]
      %v283 = vld [vmem:[#allocation2 + $0x80] sm:$0xff]
      %v284 = vld [vmem:[#allocation2 + $0x88] sm:$0xff]
      %v285 = vld [vmem:[#allocation2 + $0x90] sm:$0xff]
      %v286 = vld [vmem:[#allocation2 + $0x98] sm:$0xff]
      %v287 = vld [vmem:[#allocation2 + $0xa0] sm:$0xff]
      %v288 = vld [vmem:[#allocation2 + $0xa8] sm:$0xff]
      %v289 = vld [vmem:[#allocation2 + $0xb0] sm:$0xff]
      %v290 = vld [vmem:[#allocation2 + $0xb8] sm:$0xff]
      %v291 = vld [vmem:[#allocation2 + $0xc0] sm:$0xff]
      %v292 = vld [vmem:[#allocation2 + $0xc8] sm:$0xff]
      %v293 = vld [vmem:[#allocation2 + $0xd0] sm:$0xff]
      %v294 = vld [vmem:[#allocation2 + $0xd8] sm:$0xff]
      %v295 = vld [vmem:[#allocation2 + $0xe0] sm:$0xff]
      %v296 = vld [vmem:[#allocation2 + $0xe8] sm:$0xff]
      %v297 = vld [vmem:[#allocation2 + $0xf0] sm:$0xff]
      %v298 = vld [vmem:[#allocation2 + $0xf8] sm:$0xff]
      %v299 = vld [vmem:[%s212] sm:$0xf]
      %v300 = vld [vmem:[%s212 + $0x4] sm:$0xf]
      %v301 = vld [vmem:[%s212 + $0x8] sm:$0xf]
      %v302 = vld [vmem:[%s212 + $0xc] sm:$0xf]
      %v303 = vld [vmem:[%s212 + $0x10] sm:$0xf]
      %v304 = vld [vmem:[%s212 + $0x14] sm:$0xf]
      %v305 = vld [vmem:[%s212 + $0x18] sm:$0xf]
      %v306 = vld [vmem:[%s212 + $0x1c] sm:$0xf]
      %v307 = vld [vmem:[%s212 + $0x20] sm:$0xf]
      %v308 = vld [vmem:[%s212 + $0x24] sm:$0xf]
      %v309 = vld [vmem:[%s212 + $0x28] sm:$0xf]
      %v310 = vld [vmem:[%s212 + $0x2c] sm:$0xf]
      %v311 = vld [vmem:[%s212 + $0x30] sm:$0xf]
      %v312 = vld [vmem:[%s212 + $0x34] sm:$0xf]
      %v313 = vld [vmem:[%s212 + $0x38] sm:$0xf]
      %v314 = vld [vmem:[%s212 + $0x3c] sm:$0xf]
      %v315 = vld [vmem:[%s212 + $0x40] sm:$0xf]
      %v316 = vld [vmem:[%s212 + $0x44] sm:$0xf]
      %v317 = vld [vmem:[%s212 + $0x48] sm:$0xf]
      %v318 = vld [vmem:[%s212 + $0x4c] sm:$0xf]
      %v319 = vld [vmem:[%s212 + $0x50] sm:$0xf]
      %v320 = vld [vmem:[%s212 + $0x54] sm:$0xf]
      %v321 = vld [vmem:[%s212 + $0x58] sm:$0xf]
      %v322 = vld [vmem:[%s212 + $0x5c] sm:$0xf]
      %v323 = vld [vmem:[%s212 + $0x60] sm:$0xf]
      %v324 = vld [vmem:[%s212 + $0x64] sm:$0xf]
      %v325 = vld [vmem:[%s212 + $0x68] sm:$0xf]
      %v326 = vld [vmem:[%s212 + $0x6c] sm:$0xf]
      %v327 = vld [vmem:[%s212 + $0x70] sm:$0xf]
      %v328 = vld [vmem:[%s212 + $0x74] sm:$0xf]
      %v329 = vld [vmem:[%s212 + $0x78] sm:$0xf]
      %v330 = vld [vmem:[%s212 + $0x7c] sm:$0xf]
      %v331 = vld [vmem:[%s218] sm:$0xf]
      %v332 = vld [vmem:[%s218 + $0x4] sm:$0xf]
      %v333 = vld [vmem:[%s218 + $0x8] sm:$0xf]
      %v334 = vld [vmem:[%s218 + $0xc] sm:$0xf]
      %v335 = vld [vmem:[%s218 + $0x10] sm:$0xf]
      %v336 = vld [vmem:[%s218 + $0x14] sm:$0xf]
      %v337 = vld [vmem:[%s218 + $0x18] sm:$0xf]
      %v338 = vld [vmem:[%s218 + $0x1c] sm:$0xf]
      %v339 = vld [vmem:[%s218 + $0x20] sm:$0xf]
      %v340 = vld [vmem:[%s218 + $0x24] sm:$0xf]
      %v341 = vld [vmem:[%s218 + $0x28] sm:$0xf]
      %v342 = vld [vmem:[%s218 + $0x2c] sm:$0xf]
      %v343 = vld [vmem:[%s218 + $0x30] sm:$0xf]
      %v344 = vld [vmem:[%s218 + $0x34] sm:$0xf]
      %v345 = vld [vmem:[%s218 + $0x38] sm:$0xf]
      %v346 = vld [vmem:[%s218 + $0x3c] sm:$0xf]
      %v379 = vunpack.c.l.b16 %v299
      %v380 = vunpack.c.l.b16 %v300
      %v381 = vunpack.c.l.b16 %v301
      %v382 = vunpack.c.l.b16 %v302
      %v383 = vunpack.c.l.b16 %v303
      %v384 = vunpack.c.l.b16 %v304
      %v385 = vunpack.c.l.b16 %v305
      %v386 = vunpack.c.l.b16 %v306
      %v387 = vunpack.c.l.b16 %v307
      %v388 = vunpack.c.l.b16 %v308
      %v389 = vunpack.c.l.b16 %v309
      %v390 = vunpack.c.l.b16 %v310
      %v391 = vunpack.c.l.b16 %v311
      %v392 = vunpack.c.l.b16 %v312
      %v393 = vunpack.c.l.b16 %v313
      %v394 = vunpack.c.l.b16 %v314
      %v395 = vunpack.c.l.b16 %v315
      %v396 = vunpack.c.l.b16 %v316
      %v397 = vunpack.c.l.b16 %v317
      %v398 = vunpack.c.l.b16 %v318
      %v399 = vunpack.c.l.b16 %v319
      %v400 = vunpack.c.l.b16 %v320
      %v401 = vunpack.c.l.b16 %v321
      %v402 = vunpack.c.l.b16 %v322
      %v403 = vunpack.c.l.b16 %v323
      %v404 = vunpack.c.l.b16 %v324
      %v405 = vunpack.c.l.b16 %v325
      %v406 = vunpack.c.l.b16 %v326
      %v407 = vunpack.c.l.b16 %v327
      %v408 = vunpack.c.l.b16 %v328
      %v409 = vunpack.c.l.b16 %v329
      %v410 = vunpack.c.l.b16 %v330
      %v411 = vpack.c.b16 %v380, %v379
      %v412 = vpack.c.b16 %v382, %v381
      %v413 = vpack.c.b16 %v384, %v383
      %v414 = vpack.c.b16 %v386, %v385
      %v415 = vpack.c.b16 %v388, %v387
      %v416 = vpack.c.b16 %v390, %v389
      %v417 = vpack.c.b16 %v392, %v391
      %v418 = vpack.c.b16 %v394, %v393
      %v419 = vpack.c.b16 %v396, %v395
      %v420 = vpack.c.b16 %v398, %v397
      %v421 = vpack.c.b16 %v400, %v399
      %v422 = vpack.c.b16 %v402, %v401
      %v423 = vpack.c.b16 %v404, %v403
      %v424 = vpack.c.b16 %v406, %v405
      %v425 = vpack.c.b16 %v408, %v407
      %v426 = vpack.c.b16 %v410, %v409
      %v459 = vunpack.c.l.b16 %v331
      %v460 = vunpack.c.l.b16 %v332
      %v461 = vunpack.c.l.b16 %v333
      %v462 = vunpack.c.l.b16 %v334
      %v463 = vunpack.c.l.b16 %v335
      %v464 = vunpack.c.l.b16 %v336
      %v465 = vunpack.c.l.b16 %v337
      %v466 = vunpack.c.l.b16 %v338
      %v467 = vunpack.c.l.b16 %v339
      %v468 = vunpack.c.l.b16 %v340
      %v469 = vunpack.c.l.b16 %v341
      %v470 = vunpack.c.l.b16 %v342
      %v471 = vunpack.c.l.b16 %v343
      %v472 = vunpack.c.l.b16 %v344
      %v473 = vunpack.c.l.b16 %v345
      %v474 = vunpack.c.l.b16 %v346
      %v475 = vpack.c.b16 %v460, %v459
      %v476 = vpack.c.b16 %v462, %v461
      %v477 = vpack.c.b16 %v464, %v463
      %v478 = vpack.c.b16 %v466, %v465
      %v479 = vpack.c.b16 %v468, %v467
      %v480 = vpack.c.b16 %v470, %v469
      %v481 = vpack.c.b16 %v472, %v471
      %v482 = vpack.c.b16 %v474, %v473
      %491 = vmatprep.subr.bf16.mxu0 0
      %492 = vmatpush1.bf16.msra.mxu0 %v482
      %493 = vmatprep.subr.bf16.mxu0 0
      %494 = vmatpush1.bf16.msra.mxu0 %v481
      %495 = vmatprep.subr.bf16.mxu0 0
      %496 = vmatpush1.bf16.msra.mxu0 %v480
      %497 = vmatprep.subr.bf16.mxu0 0
      %498 = vmatpush1.bf16.msra.mxu0 %v479
      %499 = vmatprep.subr.bf16.mxu0 0
      %500 = vmatpush1.bf16.msra.mxu0 %v478
      %501 = vmatprep.subr.bf16.mxu0 0
      %502 = vmatpush1.bf16.msra.mxu0 %v477
      %503 = vmatprep.subr.bf16.mxu0 0
      %504 = vmatpush1.bf16.msra.mxu0 %v476
      %505 = vmatprep.subr.bf16.mxu0 0
      %506 = vmatpush1.bf16.msra.mxu0 %v475
      %507 = vmatprep.subr.bf16.mxu0 0
      %508 = vmatpush2.bf16.msra.mxu0 0
      %509 = vmatprep.subr.bf16.mxu0 0
      %510 = vmatpush2.bf16.msra.mxu0 0
      %511 = vmatprep.subr.bf16.mxu0 0
      %512 = vmatpush2.bf16.msra.mxu0 0
      %513 = vmatprep.subr.bf16.mxu0 0
      %514 = vmatpush2.bf16.msra.mxu0 0
      %515 = vmatprep.subr.bf16.mxu0 0
      %516 = vmatpush2.bf16.msra.mxu0 0
      %517 = vmatprep.subr.bf16.mxu0 0
      %518 = vmatpush2.bf16.msra.mxu0 0
      %519 = vmatprep.subr.bf16.mxu0 0
      %520 = vmatpush2.bf16.msra.mxu0 0
      %521 = vmatprep.subr.bf16.mxu0 0
      %522 = vmatpush2.bf16.msra.mxu0 0
      %523 = vmatprep.mubr.bf16.mxu0 0
      %524 = vmatmul.mubr.bf16.gmra.mxu0 %v411
      %v525 = vpop.f32.mrf.mxu0
      %v526 = vadd.f32 0.0, %v525
      %v527 = vpop.f32.mrf.mxu0
      %v528 = vpop.f32.mrf.mxu0
      %v529 = vadd.f32 0.0, %v528
      %v530 = vpop.f32.mrf.mxu0
      %531 = vmatprep.mubr.bf16.mxu0 0
      %532 = vmatmul.mubr.bf16.gmra.mxu0 %v412
      %v533 = vpop.f32.mrf.mxu0
      %v534 = vadd.f32 0.0, %v533
      %v535 = vpop.f32.mrf.mxu0
      %v536 = vpop.f32.mrf.mxu0
      %v537 = vadd.f32 0.0, %v536
      %v538 = vpop.f32.mrf.mxu0
      %539 = vmatprep.mubr.bf16.mxu0 0
      %540 = vmatmul.mubr.bf16.gmra.mxu0 %v413
      %v541 = vpop.f32.mrf.mxu0
      %v542 = vadd.f32 0.0, %v541
      %v543 = vpop.f32.mrf.mxu0
      %v544 = vpop.f32.mrf.mxu0
      %v545 = vadd.f32 0.0, %v544
      %v546 = vpop.f32.mrf.mxu0
      %547 = vmatprep.mubr.bf16.mxu0 0
      %548 = vmatmul.mubr.bf16.gmra.mxu0 %v414
      %v549 = vpop.f32.mrf.mxu0
      %v550 = vadd.f32 0.0, %v549
      %v551 = vpop.f32.mrf.mxu0
      %v552 = vpop.f32.mrf.mxu0
      %v553 = vadd.f32 0.0, %v552
      %v554 = vpop.f32.mrf.mxu0
      %555 = vmatprep.mubr.bf16.mxu0 0
      %556 = vmatmul.mubr.bf16.gmra.mxu0 %v415
      %v557 = vpop.f32.mrf.mxu0
      %v558 = vadd.f32 0.0, %v557
      %v559 = vpop.f32.mrf.mxu0
      %v560 = vpop.f32.mrf.mxu0
      %v561 = vadd.f32 0.0, %v560
      %v562 = vpop.f32.mrf.mxu0
      %563 = vmatprep.mubr.bf16.mxu0 0
      %564 = vmatmul.mubr.bf16.gmra.mxu0 %v416
      %v565 = vpop.f32.mrf.mxu0
      %v566 = vadd.f32 0.0, %v565
      %v567 = vpop.f32.mrf.mxu0
      %v568 = vpop.f32.mrf.mxu0
      %v569 = vadd.f32 0.0, %v568
      %v570 = vpop.f32.mrf.mxu0
      %571 = vmatprep.mubr.bf16.mxu0 0
      %572 = vmatmul.mubr.bf16.gmra.mxu0 %v417
      %v573 = vpop.f32.mrf.mxu0
      %v574 = vadd.f32 0.0, %v573
      %v575 = vpop.f32.mrf.mxu0
      %v576 = vpop.f32.mrf.mxu0
      %v577 = vadd.f32 0.0, %v576
      %v578 = vpop.f32.mrf.mxu0
      %579 = vmatprep.mubr.bf16.mxu0 0
      %580 = vmatmul.mubr.bf16.gmra.mxu0 %v418
      %v581 = vpop.f32.mrf.mxu0
      %v582 = vadd.f32 0.0, %v581
      %v583 = vpop.f32.mrf.mxu0
      %v584 = vpop.f32.mrf.mxu0
      %v585 = vadd.f32 0.0, %v584
      %v586 = vpop.f32.mrf.mxu0
      %587 = vmatprep.mubr.bf16.mxu0 0
      %588 = vmatmul.mubr.bf16.gmra.mxu0 %v419
      %v589 = vpop.f32.mrf.mxu0
      %v590 = vadd.f32 0.0, %v589
      %v591 = vpop.f32.mrf.mxu0
      %v592 = vpop.f32.mrf.mxu0
      %v593 = vadd.f32 0.0, %v592
      %v594 = vpop.f32.mrf.mxu0
      %595 = vmatprep.mubr.bf16.mxu0 0
      %596 = vmatmul.mubr.bf16.gmra.mxu0 %v420
      %v597 = vpop.f32.mrf.mxu0
      %v598 = vadd.f32 0.0, %v597
      %v599 = vpop.f32.mrf.mxu0
      %v600 = vpop.f32.mrf.mxu0
      %v601 = vadd.f32 0.0, %v600
      %v602 = vpop.f32.mrf.mxu0
      %603 = vmatprep.mubr.bf16.mxu0 0
      %604 = vmatmul.mubr.bf16.gmra.mxu0 %v421
      %v605 = vpop.f32.mrf.mxu0
      %v606 = vadd.f32 0.0, %v605
      %v607 = vpop.f32.mrf.mxu0
      %v608 = vpop.f32.mrf.mxu0
      %v609 = vadd.f32 0.0, %v608
      %v610 = vpop.f32.mrf.mxu0
      %611 = vmatprep.mubr.bf16.mxu0 0
      %612 = vmatmul.mubr.bf16.gmra.mxu0 %v422
      %v613 = vpop.f32.mrf.mxu0
      %v614 = vadd.f32 0.0, %v613
      %v615 = vpop.f32.mrf.mxu0
      %v616 = vpop.f32.mrf.mxu0
      %v617 = vadd.f32 0.0, %v616
      %v618 = vpop.f32.mrf.mxu0
      %619 = vmatprep.mubr.bf16.mxu0 0
      %620 = vmatmul.mubr.bf16.gmra.mxu0 %v423
      %v621 = vpop.f32.mrf.mxu0
      %v622 = vadd.f32 0.0, %v621
      %v623 = vpop.f32.mrf.mxu0
      %v624 = vpop.f32.mrf.mxu0
      %v625 = vadd.f32 0.0, %v624
      %v626 = vpop.f32.mrf.mxu0
      %627 = vmatprep.mubr.bf16.mxu0 0
      %628 = vmatmul.mubr.bf16.gmra.mxu0 %v424
      %v629 = vpop.f32.mrf.mxu0
      %v630 = vadd.f32 0.0, %v629
      %v631 = vpop.f32.mrf.mxu0
      %v632 = vpop.f32.mrf.mxu0
      %v633 = vadd.f32 0.0, %v632
      %v634 = vpop.f32.mrf.mxu0
      %635 = vmatprep.mubr.bf16.mxu0 0
      %636 = vmatmul.mubr.bf16.gmra.mxu0 %v425
      %v637 = vpop.f32.mrf.mxu0
      %v638 = vadd.f32 0.0, %v637
      %v639 = vpop.f32.mrf.mxu0
      %v640 = vpop.f32.mrf.mxu0
      %v641 = vadd.f32 0.0, %v640
      %v642 = vpop.f32.mrf.mxu0
      %643 = vmatprep.mubr.bf16.mxu0 0
      %644 = vmatmul.mubr.bf16.gmra.mxu0 %v426
      %v645 = vpop.f32.mrf.mxu0
      %v646 = vadd.f32 0.0, %v645
      %v647 = vpop.f32.mrf.mxu0
      %v648 = vpop.f32.mrf.mxu0
      %v649 = vadd.f32 0.0, %v648
      %v650 = vpop.f32.mrf.mxu0
      %651 = vdwg.mxu0
      %v652 = vadd.f32 %v267, %v526
      %v653 = vadd.f32 %v268, %v529
      %v654 = vadd.f32 %v269, %v534
      %v655 = vadd.f32 %v270, %v537
      %v656 = vadd.f32 %v271, %v542
      %v657 = vadd.f32 %v272, %v545
      %v658 = vadd.f32 %v273, %v550
      %v659 = vadd.f32 %v274, %v553
      %v660 = vadd.f32 %v275, %v558
      %v661 = vadd.f32 %v276, %v561
      %v662 = vadd.f32 %v277, %v566
      %v663 = vadd.f32 %v278, %v569
      %v664 = vadd.f32 %v279, %v574
      %v665 = vadd.f32 %v280, %v577
      %v666 = vadd.f32 %v281, %v582
      %v667 = vadd.f32 %v282, %v585
      %v668 = vadd.f32 %v283, %v590
      %v669 = vadd.f32 %v284, %v593
      %v670 = vadd.f32 %v285, %v598
      %v671 = vadd.f32 %v286, %v601
      %v672 = vadd.f32 %v287, %v606
      %v673 = vadd.f32 %v288, %v609
      %v674 = vadd.f32 %v289, %v614
      %v675 = vadd.f32 %v290, %v617
      %v676 = vadd.f32 %v291, %v622
      %v677 = vadd.f32 %v292, %v625
      %v678 = vadd.f32 %v293, %v630
      %v679 = vadd.f32 %v294, %v633
      %v680 = vadd.f32 %v295, %v638
      %v681 = vadd.f32 %v296, %v641
      %v682 = vadd.f32 %v297, %v646
      %v683 = vadd.f32 %v298, %v649
      %684 = vst [vmem:[#allocation2] sm:$0xff] %v652
      %685 = vst [vmem:[#allocation2 + $0x8] sm:$0xff] %v653
      %686 = vst [vmem:[#allocation2 + $0x10] sm:$0xff] %v654
      %687 = vst [vmem:[#allocation2 + $0x18] sm:$0xff] %v655
      %688 = vst [vmem:[#allocation2 + $0x20] sm:$0xff] %v656
      %689 = vst [vmem:[#allocation2 + $0x28] sm:$0xff] %v657
      %690 = vst [vmem:[#allocation2 + $0x30] sm:$0xff] %v658
      %691 = vst [vmem:[#allocation2 + $0x38] sm:$0xff] %v659
      %692 = vst [vmem:[#allocation2 + $0x40] sm:$0xff] %v660
      %693 = vst [vmem:[#allocation2 + $0x48] sm:$0xff] %v661
      %694 = vst [vmem:[#allocation2 + $0x50] sm:$0xff] %v662
      %695 = vst [vmem:[#allocation2 + $0x58] sm:$0xff] %v663
      %696 = vst [vmem:[#allocation2 + $0x60] sm:$0xff] %v664
      %697 = vst [vmem:[#allocation2 + $0x68] sm:$0xff] %v665
      %698 = vst [vmem:[#allocation2 + $0x70] sm:$0xff] %v666
      %699 = vst [vmem:[#allocation2 + $0x78] sm:$0xff] %v667
      %700 = vst [vmem:[#allocation2 + $0x80] sm:$0xff] %v668
      %701 = vst [vmem:[#allocation2 + $0x88] sm:$0xff] %v669
      %702 = vst [vmem:[#allocation2 + $0x90] sm:$0xff] %v670
      %703 = vst [vmem:[#allocation2 + $0x98] sm:$0xff] %v671
      %704 = vst [vmem:[#allocation2 + $0xa0] sm:$0xff] %v672
      %705 = vst [vmem:[#allocation2 + $0xa8] sm:$0xff] %v673
      %706 = vst [vmem:[#allocation2 + $0xb0] sm:$0xff] %v674
      %707 = vst [vmem:[#allocation2 + $0xb8] sm:$0xff] %v675
      %708 = vst [vmem:[#allocation2 + $0xc0] sm:$0xff] %v676
      %709 = vst [vmem:[#allocation2 + $0xc8] sm:$0xff] %v677
      %710 = vst [vmem:[#allocation2 + $0xd0] sm:$0xff] %v678
      %711 = vst [vmem:[#allocation2 + $0xd8] sm:$0xff] %v679
      %712 = vst [vmem:[#allocation2 + $0xe0] sm:$0xff] %v680
      %713 = vst [vmem:[#allocation2 + $0xe8] sm:$0xff] %v681
      %714 = vst [vmem:[#allocation2 + $0xf0] sm:$0xff] %v682
      %715 = vst [vmem:[#allocation2 + $0xf8] sm:$0xff] %v683
      // Predicated region
      $region33: #{unet_forward.65} parent=27 // pred_check
        %p716 = pneg %p231
      $region34: #{unet_forward.65} parent=27 // pred_check_branch
        %718 = sbr.rel (%p716) target = $region36
      $region35: #{unet_forward.65} parent=27 // pred_region
        %v719 = vld [vmem:[#allocation2] sm:$0xff]
        %v720 = vld [vmem:[#allocation2 + $0x8] sm:$0xff]
        %v721 = vld [vmem:[#allocation2 + $0x10] sm:$0xff]
        %v722 = vld [vmem:[#allocation2 + $0x18] sm:$0xff]
        %v723 = vld [vmem:[#allocation2 + $0x20] sm:$0xff]
        %v724 = vld [vmem:[#allocation2 + $0x28] sm:$0xff]
        %v725 = vld [vmem:[#allocation2 + $0x30] sm:$0xff]
        %v726 = vld [vmem:[#allocation2 + $0x38] sm:$0xff]
        %v727 = vld [vmem:[#allocation2 + $0x40] sm:$0xff]
        %v728 = vld [vmem:[#allocation2 + $0x48] sm:$0xff]
        %v729 = vld [vmem:[#allocation2 + $0x50] sm:$0xff]
        %v730 = vld [vmem:[#allocation2 + $0x58] sm:$0xff]
        %v731 = vld [vmem:[#allocation2 + $0x60] sm:$0xff]
        %v732 = vld [vmem:[#allocation2 + $0x68] sm:$0xff]
        %v733 = vld [vmem:[#allocation2 + $0x70] sm:$0xff]
        %v734 = vld [vmem:[#allocation2 + $0x78] sm:$0xff]
        %v735 = vld [vmem:[#allocation2 + $0x80] sm:$0xff]
        %v736 = vld [vmem:[#allocation2 + $0x88] sm:$0xff]
        %v737 = vld [vmem:[#allocation2 + $0x90] sm:$0xff]
        %v738 = vld [vmem:[#allocation2 + $0x98] sm:$0xff]
        %v739 = vld [vmem:[#allocation2 + $0xa0] sm:$0xff]
        %v740 = vld [vmem:[#allocation2 + $0xa8] sm:$0xff]
        %v741 = vld [vmem:[#allocation2 + $0xb0] sm:$0xff]
        %v742 = vld [vmem:[#allocation2 + $0xb8] sm:$0xff]
        %v743 = vld [vmem:[#allocation2 + $0xc0] sm:$0xff]
        %v744 = vld [vmem:[#allocation2 + $0xc8] sm:$0xff]
        %v745 = vld [vmem:[#allocation2 + $0xd0] sm:$0xff]
        %v746 = vld [vmem:[#allocation2 + $0xd8] sm:$0xff]
        %v747 = vld [vmem:[#allocation2 + $0xe0] sm:$0xff]
        %v748 = vld [vmem:[#allocation2 + $0xe8] sm:$0xff]
        %v749 = vld [vmem:[#allocation2 + $0xf0] sm:$0xff]
        %v750 = vld [vmem:[#allocation2 + $0xf8] sm:$0xff]
        %v751 = vpack.c.bf16 %v720, %v719
        %v752 = vpack.c.bf16 %v722, %v721
        %v753 = vpack.c.bf16 %v724, %v723
        %v754 = vpack.c.bf16 %v726, %v725
        %v755 = vpack.c.bf16 %v728, %v727
        %v756 = vpack.c.bf16 %v730, %v729
        %v757 = vpack.c.bf16 %v732, %v731
        %v758 = vpack.c.bf16 %v734, %v733
        %v759 = vpack.c.bf16 %v736, %v735
        %v760 = vpack.c.bf16 %v738, %v737
        %v761 = vpack.c.bf16 %v740, %v739
        %v762 = vpack.c.bf16 %v742, %v741
        %v763 = vpack.c.bf16 %v744, %v743
        %v764 = vpack.c.bf16 %v746, %v745
        %v765 = vpack.c.bf16 %v748, %v747
        %v766 = vpack.c.bf16 %v750, %v749
        %v783 = vunpack.c.l.b16 %v751
        %v784 = vunpack.c.h.b16 %v751
        %v785 = vunpack.c.l.b16 %v752
        %v786 = vunpack.c.h.b16 %v752
        %v787 = vunpack.c.l.b16 %v753
        %v788 = vunpack.c.h.b16 %v753
        %v789 = vunpack.c.l.b16 %v754
        %v790 = vunpack.c.h.b16 %v754
        %v791 = vunpack.c.l.b16 %v755
        %v792 = vunpack.c.h.b16 %v755
        %v793 = vunpack.c.l.b16 %v756
        %v794 = vunpack.c.h.b16 %v756
        %v795 = vunpack.c.l.b16 %v757
        %v796 = vunpack.c.h.b16 %v757
        %v797 = vunpack.c.l.b16 %v758
        %v798 = vunpack.c.h.b16 %v758
        %v799 = vunpack.c.l.b16 %v759
        %v800 = vunpack.c.h.b16 %v759
        %v801 = vunpack.c.l.b16 %v760
        %v802 = vunpack.c.h.b16 %v760
        %v803 = vunpack.c.l.b16 %v761
        %v804 = vunpack.c.h.b16 %v761
        %v805 = vunpack.c.l.b16 %v762
        %v806 = vunpack.c.h.b16 %v762
        %v807 = vunpack.c.l.b16 %v763
        %v808 = vunpack.c.h.b16 %v763
        %v809 = vunpack.c.l.b16 %v764
        %v810 = vunpack.c.h.b16 %v764
        %v811 = vunpack.c.l.b16 %v765
        %v812 = vunpack.c.h.b16 %v765
        %v813 = vunpack.c.l.b16 %v766
        %v814 = vunpack.c.h.b16 %v766
        %v815 = vpack.c.b16 %v783, %v783
        %v816 = vpack.c.b16 %v784, %v784
        %v817 = vpack.c.b16 %v785, %v785
        %v818 = vpack.c.b16 %v786, %v786
        %v819 = vpack.c.b16 %v787, %v787
        %v820 = vpack.c.b16 %v788, %v788
        %v821 = vpack.c.b16 %v789, %v789
        %v822 = vpack.c.b16 %v790, %v790
        %v823 = vpack.c.b16 %v791, %v791
        %v824 = vpack.c.b16 %v792, %v792
        %v825 = vpack.c.b16 %v793, %v793
        %v826 = vpack.c.b16 %v794, %v794
        %v827 = vpack.c.b16 %v795, %v795
        %v828 = vpack.c.b16 %v796, %v796
        %v829 = vpack.c.b16 %v797, %v797
        %v830 = vpack.c.b16 %v798, %v798
        %v831 = vpack.c.b16 %v799, %v799
        %v832 = vpack.c.b16 %v800, %v800
        %v833 = vpack.c.b16 %v801, %v801
        %v834 = vpack.c.b16 %v802, %v802
        %v835 = vpack.c.b16 %v803, %v803
        %v836 = vpack.c.b16 %v804, %v804
        %v837 = vpack.c.b16 %v805, %v805
        %v838 = vpack.c.b16 %v806, %v806
        %v839 = vpack.c.b16 %v807, %v807
        %v840 = vpack.c.b16 %v808, %v808
        %v841 = vpack.c.b16 %v809, %v809
        %v842 = vpack.c.b16 %v810, %v810
        %v843 = vpack.c.b16 %v811, %v811
        %v844 = vpack.c.b16 %v812, %v812
        %v845 = vpack.c.b16 %v813, %v813
        %v846 = vpack.c.b16 %v814, %v814
        %879 = vst [vmem:[%s224] sm:$0xf] %v815
        %880 = vst [vmem:[%s224 + $0x4] sm:$0xf] %v816
        %881 = vst [vmem:[%s224 + $0x8] sm:$0xf] %v817
        %882 = vst [vmem:[%s224 + $0xc] sm:$0xf] %v818
        %883 = vst [vmem:[%s224 + $0x10] sm:$0xf] %v819
        %884 = vst [vmem:[%s224 + $0x14] sm:$0xf] %v820
        %885 = vst [vmem:[%s224 + $0x18] sm:$0xf] %v821
        %886 = vst [vmem:[%s224 + $0x1c] sm:$0xf] %v822
        %887 = vst [vmem:[%s224 + $0x20] sm:$0xf] %v823
        %888 = vst [vmem:[%s224 + $0x24] sm:$0xf] %v824
        %889 = vst [vmem:[%s224 + $0x28] sm:$0xf] %v825
        %890 = vst [vmem:[%s224 + $0x2c] sm:$0xf] %v826
        %891 = vst [vmem:[%s224 + $0x30] sm:$0xf] %v827
        %892 = vst [vmem:[%s224 + $0x34] sm:$0xf] %v828
        %893 = vst [vmem:[%s224 + $0x38] sm:$0xf] %v829
        %894 = vst [vmem:[%s224 + $0x3c] sm:$0xf] %v830
        %895 = vst [vmem:[%s224 + $0x40] sm:$0xf] %v831
        %896 = vst [vmem:[%s224 + $0x44] sm:$0xf] %v832
        %897 = vst [vmem:[%s224 + $0x48] sm:$0xf] %v833
        %898 = vst [vmem:[%s224 + $0x4c] sm:$0xf] %v834
        %899 = vst [vmem:[%s224 + $0x50] sm:$0xf] %v835
        %900 = vst [vmem:[%s224 + $0x54] sm:$0xf] %v836
        %901 = vst [vmem:[%s224 + $0x58] sm:$0xf] %v837
        %902 = vst [vmem:[%s224 + $0x5c] sm:$0xf] %v838
        %903 = vst [vmem:[%s224 + $0x60] sm:$0xf] %v839
        %904 = vst [vmem:[%s224 + $0x64] sm:$0xf] %v840
        %905 = vst [vmem:[%s224 + $0x68] sm:$0xf] %v841
        %906 = vst [vmem:[%s224 + $0x6c] sm:$0xf] %v842
        %907 = vst [vmem:[%s224 + $0x70] sm:$0xf] %v843
        %908 = vst [vmem:[%s224 + $0x74] sm:$0xf] %v844
        %909 = vst [vmem:[%s224 + $0x78] sm:$0xf] %v845
        %910 = vst [vmem:[%s224 + $0x7c] sm:$0xf] %v846
        %v911 = vadd.f32 %v719, %v720
        %v912 = vadd.f32 %v911, %v721
        %v913 = vadd.f32 %v912, %v722
        %v914 = vadd.f32 %v913, %v723
        %v915 = vadd.f32 %v914, %v724
        %v916 = vadd.f32 %v915, %v725
        %v917 = vadd.f32 %v916, %v726
        %v918 = vadd.f32 %v917, %v727
        %v919 = vadd.f32 %v918, %v728
        %v920 = vadd.f32 %v919, %v729
        %v921 = vadd.f32 %v920, %v730
        %v922 = vadd.f32 %v921, %v731
        %v923 = vadd.f32 %v922, %v732
        %v924 = vadd.f32 %v923, %v733
        %v925 = vadd.f32 %v924, %v734
        %v926 = vadd.f32 %v925, %v735
        %v927 = vadd.f32 %v926, %v736
        %v928 = vadd.f32 %v927, %v737
        %v929 = vadd.f32 %v928, %v738
        %v930 = vadd.f32 %v929, %v739
        %v931 = vadd.f32 %v930, %v740
        %v932 = vadd.f32 %v931, %v741
        %v933 = vadd.f32 %v932, %v742
        %v934 = vadd.f32 %v933, %v743
        %v935 = vadd.f32 %v934, %v744
        %v936 = vadd.f32 %v935, %v745
        %v937 = vadd.f32 %v936, %v746
        %v938 = vadd.f32 %v937, %v747
        %v939 = vadd.f32 %v938, %v748
        %v940 = vadd.f32 %v939, %v749
        %v941 = vadd.f32 %v940, %v750
        %v942 = vrot.slane %v941, 4
        %v943 = vadd.f32 %v941, %v942
        %v944 = vrot.slane %v943, 2
        %v945 = vadd.f32 %v943, %v944
        %v946 = vrot.slane %v945, 1
        %v947 = vadd.f32 %v945, %v946
        %v948 = vmul.f32 %v719, %v719
        %v949 = vmul.f32 %v720, %v720
        %v950 = vmul.f32 %v721, %v721
        %v951 = vmul.f32 %v722, %v722
        %v952 = vmul.f32 %v723, %v723
        %v953 = vmul.f32 %v724, %v724
        %v954 = vmul.f32 %v725, %v725
        %v955 = vmul.f32 %v726, %v726
        %v956 = vmul.f32 %v727, %v727
        %v957 = vmul.f32 %v728, %v728
        %v958 = vmul.f32 %v729, %v729
        %v959 = vmul.f32 %v730, %v730
        %v960 = vmul.f32 %v731, %v731
        %v961 = vmul.f32 %v732, %v732
        %v962 = vmul.f32 %v733, %v733
        %v963 = vmul.f32 %v734, %v734
        %v964 = vmul.f32 %v735, %v735
        %v965 = vmul.f32 %v736, %v736
        %v966 = vmul.f32 %v737, %v737
        %v967 = vmul.f32 %v738, %v738
        %v968 = vmul.f32 %v739, %v739
        %v969 = vmul.f32 %v740, %v740
        %v970 = vmul.f32 %v741, %v741
        %v971 = vmul.f32 %v742, %v742
        %v972 = vmul.f32 %v743, %v743
        %v973 = vmul.f32 %v744, %v744
        %v974 = vmul.f32 %v745, %v745
        %v975 = vmul.f32 %v746, %v746
        %v976 = vmul.f32 %v747, %v747
        %v977 = vmul.f32 %v748, %v748
        %v978 = vmul.f32 %v749, %v749
        %v979 = vmul.f32 %v750, %v750
        %v980 = vadd.f32 %v948, %v949
        %v981 = vadd.f32 %v980, %v950
        %v982 = vadd.f32 %v981, %v951
        %v983 = vadd.f32 %v982, %v952
        %v984 = vadd.f32 %v983, %v953
        %v985 = vadd.f32 %v984, %v954
        %v986 = vadd.f32 %v985, %v955
        %v987 = vadd.f32 %v986, %v956
        %v988 = vadd.f32 %v987, %v957
        %v989 = vadd.f32 %v988, %v958
        %v990 = vadd.f32 %v989, %v959
        %v991 = vadd.f32 %v990, %v960
        %v992 = vadd.f32 %v991, %v961
        %v993 = vadd.f32 %v992, %v962
        %v994 = vadd.f32 %v993, %v963
        %v995 = vadd.f32 %v994, %v964
        %v996 = vadd.f32 %v995, %v965
        %v997 = vadd.f32 %v996, %v966
        %v998 = vadd.f32 %v997, %v967
        %v999 = vadd.f32 %v998, %v968
        %v1000 = vadd.f32 %v999, %v969
        %v1001 = vadd.f32 %v1000, %v970
        %v1002 = vadd.f32 %v1001, %v971
        %v1003 = vadd.f32 %v1002, %v972
        %v1004 = vadd.f32 %v1003, %v973
        %v1005 = vadd.f32 %v1004, %v974
        %v1006 = vadd.f32 %v1005, %v975
        %v1007 = vadd.f32 %v1006, %v976
        %v1008 = vadd.f32 %v1007, %v977
        %v1009 = vadd.f32 %v1008, %v978
        %v1010 = vadd.f32 %v1009, %v979
        %v1011 = vrot.slane %v1010, 4
        %v1012 = vadd.f32 %v1010, %v1011
        %v1013 = vrot.slane %v1012, 2
        %v1014 = vadd.f32 %v1012, %v1013
        %v1015 = vrot.slane %v1014, 1
        %v1016 = vadd.f32 %v1014, %v1015
        %vm1017 = vcmask 1040384
        %v1018 = vsel %vm1017, %v947, %v1016
        %1019 = vst [vmem:[%s229] sm:$0x3] %v1018
      $region36: #{unet_forward.65} parent=27 // pred_fallthru
        _
      %s1020 = smul.u32 32, %s19
      %p1021 = scmp.lt.s32.totalorder %s1020, 63
      %s1022 = scalar_select %p1021, %s1020, 63
      %s1023 = smul.addr %s1022, 4
      %s1024 = scalar_lea.vmem %s2, %s1023
      %p1025 = scmp.lt.s32.totalorder %s19, 1
      %s1026 = scalar_select %p1025, %s19, 1
      %s1027 = smul.addr %s1026, 2
      %s1028 = scalar_lea.vmem %s3, %s1027
      // Predicated region
      $region37: #{unet_forward.65} parent=27 // pred_check
        %p1029 = pneg %p99
      $region38: #{unet_forward.65} parent=27 // pred_check_branch
        %1031 = sbr.rel (%p1029) target = $region40
      $region39: #{unet_forward.65} parent=27 // pred_region
        %s1032 = smul.u32 32, %s19
      $region40: #{unet_forward.65} parent=27 // pred_fallthru
        _
      // Predicated region
      $region41: #{unet_forward.65} parent=27 // pred_check
        %p1033 = pneg %p125
      $region42: #{unet_forward.65} parent=27 // pred_check_branch
        %1035 = sbr.rel (%p1033) target = $region44
      $region43: #{unet_forward.65} parent=27 // pred_region
        _
      $region44: #{unet_forward.65} parent=27 // pred_fallthru
        _
    $region28: #{unet_forward.65} parent=5 // pred_fallthru
      _
    %p1036 = scmp.le.s32.totalorder 2, %s10
    // Predicated region
    $region45: #{unet_forward.65} parent=5 // pred_check
      %p1037 = pneg %p1036
    $region46: #{unet_forward.65} parent=5 // pred_check_branch
      %1039 = sbr.rel (%p1037) target = $region48
    $region47: #{unet_forward.65} parent=5 // pred_region
      %s1040 = ssub.s32 %s10, 2
      // Predicated region
      $region49: #{unet_forward.65} parent=47 // pred_check
        %p1041 = pneg %p105
      $region50: #{unet_forward.65} parent=47 // pred_check_branch
        %1043 = sbr.rel (%p1041) target = $region52
      $region51: #{unet_forward.65} parent=47 // pred_region
        %s1044 = smul.u32 32, %s21
        %p1045 = scmp.lt.s32.totalorder %s1044, 63
        %s1046 = scalar_select %p1045, %s1044, 63
        %s1047 = smul.addr %s1046, 4
        %s1048 = scalar_lea.vmem %s2, %s1047
      $region52: #{unet_forward.65} parent=47 // pred_fallthru
        _
      // Predicated region
      $region53: #{unet_forward.65} parent=47 // pred_check
        %p1049 = pneg %p131
      $region54: #{unet_forward.65} parent=47 // pred_check_branch
        %1051 = sbr.rel (%p1049) target = $region56
      $region55: #{unet_forward.65} parent=47 // pred_region
        %p1052 = scmp.lt.s32.totalorder %s21, 1
        %s1053 = scalar_select %p1052, %s21, 1
        %s1054 = smul.addr %s1053, 2
        %s1055 = scalar_lea.vmem %s3, %s1054
      $region56: #{unet_forward.65} parent=47 // pred_fallthru
        _
    $region48: #{unet_forward.65} parent=5 // pred_fallthru
      _
  $region6: #{unet_forward.65} parent=0 // loop_footer
    %s14 = sadd.s32 1, %s10
  $region7: #{unet_forward.65} parent=0 // loop_footer_branch
    %9 = sbr.rel target = $region3
  $region8: #{unet_forward.65} parent=0 // loop_exit
    _

// kernel: unet_forward.70
$region0: #{unet_forward.70}
  #allocation0 [shape = 'u32[]', space=smem, size = 0x4, offset = 0x4, fixed_abs, tag = 'smem constant byte address 0x4 - core index']
  #allocation1 [shape = 'u32[144,128]{1,0:T(1,128)}', space=vmem, size = 0x12000, scoped, tag = 'internal scratch']
  %s0 = inlined_call_operand.vmem [shape: bf16[128,128], index: 0, kind: input, shape index: {}]
  %s1 = inlined_call_operand.vmem [shape: f32[1,128], index: 1, kind: input, shape index: {}]
  %s2 = inlined_call_operand.vmem [shape: f32[1,128], index: 2, kind: input, shape index: {}]
  %s3 = inlined_call_operand.vmem [shape: bf16[128,128], index: 3, kind: output, shape index: {}]
  %s4 = sld [smem:[#allocation0]]
  $region22: #{unet_forward.70} parent=0
    _
  %s6 = ssub.s32 1, %s4
  %s7 = scalar_select 0, %s6, %s4
  // Predicated region
  $region2: #{unet_forward.70} parent=0 // pred_check
    _
  $region3: #{unet_forward.70} parent=0 // pred_check_branch
    %9 = sbr.rel (0) target = $region5
  $region4: #{unet_forward.70} parent=0 // pred_region
    _
  $region5: #{unet_forward.70} parent=0 // pred_fallthru
    _
  // Predicated region
  $region6: #{unet_forward.70} parent=0 // pred_check
    _
  $region7: #{unet_forward.70} parent=0 // pred_check_branch
    %11 = sbr.rel (0) target = $region9
  $region8: #{unet_forward.70} parent=0 // pred_region
    _
  $region9: #{unet_forward.70} parent=0 // pred_fallthru
    _
  // Predicated region
  $region10: #{unet_forward.70} parent=0 // pred_check
    _
  $region11: #{unet_forward.70} parent=0 // pred_check_branch
    %13 = sbr.rel (0) target = $region13
  $region12: #{unet_forward.70} parent=0 // pred_region
    _
  $region13: #{unet_forward.70} parent=0 // pred_fallthru
    _
  %v14 = vld [vmem:[%s0] sm:$0xf]
  %v15 = vld [vmem:[%s0 + $0x4] sm:$0xf]
  %v16 = vld [vmem:[%s0 + $0x8] sm:$0xf]
  %v17 = vld [vmem:[%s0 + $0xc] sm:$0xf]
  %v18 = vld [vmem:[%s0 + $0x10] sm:$0xf]
  %v19 = vld [vmem:[%s0 + $0x14] sm:$0xf]
  %v20 = vld [vmem:[%s0 + $0x18] sm:$0xf]
  %v21 = vld [vmem:[%s0 + $0x1c] sm:$0xf]
  %v22 = vld [vmem:[%s0 + $0x20] sm:$0xf]
  %v23 = vld [vmem:[%s0 + $0x24] sm:$0xf]
  %v24 = vld [vmem:[%s0 + $0x28] sm:$0xf]
  %v25 = vld [vmem:[%s0 + $0x2c] sm:$0xf]
  %v26 = vld [vmem:[%s0 + $0x30] sm:$0xf]
  %v27 = vld [vmem:[%s0 + $0x34] sm:$0xf]
  %v28 = vld [vmem:[%s0 + $0x38] sm:$0xf]
  %v29 = vld [vmem:[%s0 + $0x3c] sm:$0xf]
  %v30 = vunpack.c.l.bf16 %v14
  %v31 = vunpack.c.l.bf16 %v15
  %v32 = vunpack.c.l.bf16 %v16
  %v33 = vunpack.c.l.bf16 %v17
  %v34 = vunpack.c.l.bf16 %v18
  %v35 = vunpack.c.l.bf16 %v19
  %v36 = vunpack.c.l.bf16 %v20
  %v37 = vunpack.c.l.bf16 %v21
  %v38 = vunpack.c.l.bf16 %v22
  %v39 = vunpack.c.l.bf16 %v23
  %v40 = vunpack.c.l.bf16 %v24
  %v41 = vunpack.c.l.bf16 %v25
  %v42 = vunpack.c.l.bf16 %v26
  %v43 = vunpack.c.l.bf16 %v27
  %v44 = vunpack.c.l.bf16 %v28
  %v45 = vunpack.c.l.bf16 %v29
  %v46 = vld [vmem:[%s1] sm:$0x1]
  %v48 = vlaneseq
  %v49 = vshrl.u32 %v48, 7
  %v50 = vsub.s32 0, %v49
  %v51 = vrot.slane %v46, %v50
  %v53 = vmul.f32 %v30, %v51
  %v54 = vmul.f32 %v31, %v51
  %v55 = vmul.f32 %v32, %v51
  %v56 = vmul.f32 %v33, %v51
  %v57 = vmul.f32 %v34, %v51
  %v58 = vmul.f32 %v35, %v51
  %v59 = vmul.f32 %v36, %v51
  %v60 = vmul.f32 %v37, %v51
  %v61 = vmul.f32 %v38, %v51
  %v62 = vmul.f32 %v39, %v51
  %v63 = vmul.f32 %v40, %v51
  %v64 = vmul.f32 %v41, %v51
  %v65 = vmul.f32 %v42, %v51
  %v66 = vmul.f32 %v43, %v51
  %v67 = vmul.f32 %v44, %v51
  %v68 = vmul.f32 %v45, %v51
  %v69 = vld [vmem:[%s2] sm:$0x1]
  %v71 = vlaneseq
  %v72 = vshrl.u32 %v71, 7
  %v73 = vsub.s32 0, %v72
  %v74 = vrot.slane %v69, %v73
  %v76 = vadd.f32 %v53, %v74
  %v77 = vadd.f32 %v54, %v74
  %v78 = vadd.f32 %v55, %v74
  %v79 = vadd.f32 %v56, %v74
  %v80 = vadd.f32 %v57, %v74
  %v81 = vadd.f32 %v58, %v74
  %v82 = vadd.f32 %v59, %v74
  %v83 = vadd.f32 %v60, %v74
  %v84 = vadd.f32 %v61, %v74
  %v85 = vadd.f32 %v62, %v74
  %v86 = vadd.f32 %v63, %v74
  %v87 = vadd.f32 %v64, %v74
  %v88 = vadd.f32 %v65, %v74
  %v89 = vadd.f32 %v66, %v74
  %v90 = vadd.f32 %v67, %v74
  %v91 = vadd.f32 %v68, %v74
  %v92 = vmax.f32 %v76, 0.0
  %v93 = vmax.f32 %v77, 0.0
  %v94 = vmax.f32 %v78, 0.0
  %v95 = vmax.f32 %v79, 0.0
  %v96 = vmax.f32 %v80, 0.0
  %v97 = vmax.f32 %v81, 0.0
  %v98 = vmax.f32 %v82, 0.0
  %v99 = vmax.f32 %v83, 0.0
  %v100 = vmax.f32 %v84, 0.0
  %v101 = vmax.f32 %v85, 0.0
  %v102 = vmax.f32 %v86, 0.0
  %v103 = vmax.f32 %v87, 0.0
  %v104 = vmax.f32 %v88, 0.0
  %v105 = vmax.f32 %v89, 0.0
  %v106 = vmax.f32 %v90, 0.0
  %v107 = vmax.f32 %v91, 0.0
  %v108 = vpack.c.bf16 %v93, %v92
  %v109 = vpack.c.bf16 %v95, %v94
  %v110 = vpack.c.bf16 %v97, %v96
  %v111 = vpack.c.bf16 %v99, %v98
  %v112 = vpack.c.bf16 %v101, %v100
  %v113 = vpack.c.bf16 %v103, %v102
  %v114 = vpack.c.bf16 %v105, %v104
  %v115 = vpack.c.bf16 %v107, %v106
  %v124 = vunpack.c.l.b16 %v108
  %v125 = vunpack.c.h.b16 %v108
  %v126 = vunpack.c.l.b16 %v109
  %v127 = vunpack.c.h.b16 %v109
  %v128 = vunpack.c.l.b16 %v110
  %v129 = vunpack.c.h.b16 %v110
  %v130 = vunpack.c.l.b16 %v111
  %v131 = vunpack.c.h.b16 %v111
  %v132 = vunpack.c.l.b16 %v112
  %v133 = vunpack.c.h.b16 %v112
  %v134 = vunpack.c.l.b16 %v113
  %v135 = vunpack.c.h.b16 %v113
  %v136 = vunpack.c.l.b16 %v114
  %v137 = vunpack.c.h.b16 %v114
  %v138 = vunpack.c.l.b16 %v115
  %v139 = vunpack.c.h.b16 %v115
  %v140 = vpack.c.b16 %v124, %v124
  %v141 = vpack.c.b16 %v125, %v125
  %v142 = vpack.c.b16 %v126, %v126
  %v143 = vpack.c.b16 %v127, %v127
  %v144 = vpack.c.b16 %v128, %v128
  %v145 = vpack.c.b16 %v129, %v129
  %v146 = vpack.c.b16 %v130, %v130
  %v147 = vpack.c.b16 %v131, %v131
  %v148 = vpack.c.b16 %v132, %v132
  %v149 = vpack.c.b16 %v133, %v133
  %v150 = vpack.c.b16 %v134, %v134
  %v151 = vpack.c.b16 %v135, %v135
  %v152 = vpack.c.b16 %v136, %v136
  %v153 = vpack.c.b16 %v137, %v137
  %v154 = vpack.c.b16 %v138, %v138
  %v155 = vpack.c.b16 %v139, %v139
  %172 = vst [vmem:[%s3] sm:$0xf] %v140
  %173 = vst [vmem:[%s3 + $0x4] sm:$0xf] %v141
  %174 = vst [vmem:[%s3 + $0x8] sm:$0xf] %v142
  %175 = vst [vmem:[%s3 + $0xc] sm:$0xf] %v143
  %176 = vst [vmem:[%s3 + $0x10] sm:$0xf] %v144
  %177 = vst [vmem:[%s3 + $0x14] sm:$0xf] %v145
  %178 = vst [vmem:[%s3 + $0x18] sm:$0xf] %v146
  %179 = vst [vmem:[%s3 + $0x1c] sm:$0xf] %v147
  %180 = vst [vmem:[%s3 + $0x20] sm:$0xf] %v148
  %181 = vst [vmem:[%s3 + $0x24] sm:$0xf] %v149
  %182 = vst [vmem:[%s3 + $0x28] sm:$0xf] %v150
  %183 = vst [vmem:[%s3 + $0x2c] sm:$0xf] %v151
  %184 = vst [vmem:[%s3 + $0x30] sm:$0xf] %v152
  %185 = vst [vmem:[%s3 + $0x34] sm:$0xf] %v153
  %186 = vst [vmem:[%s3 + $0x38] sm:$0xf] %v154
  %187 = vst [vmem:[%s3 + $0x3c] sm:$0xf] %v155
  // Predicated region
  $region14: #{unet_forward.70} parent=0 // pred_check
    _
  $region15: #{unet_forward.70} parent=0 // pred_check_branch
    %189 = sbr.rel (0) target = $region17
  $region16: #{unet_forward.70} parent=0 // pred_region
    _
  $region17: #{unet_forward.70} parent=0 // pred_fallthru
    _
  // Predicated region
  $region18: #{unet_forward.70} parent=0 // pred_check
    _
  $region19: #{unet_forward.70} parent=0 // pred_check_branch
    %191 = sbr.rel (0) target = $region21
  $region20: #{unet_forward.70} parent=0 // pred_region
    _
  $region21: #{unet_forward.70} parent=0 // pred_fallthru
    _

// kernel: unet_forward.69
$region0: #{unet_forward.69}
  #allocation0 [shape = 'u32[]', space=smem, size = 0x4, offset = 0x4, fixed_abs, tag = 'smem constant byte address 0x4 - core index']
  #allocation1 [shape = 'u32[144,128]{1,0:T(1,128)}', space=vmem, size = 0x12000, scoped, tag = 'internal scratch']
  #allocation2 [shape = 'f32[128,128]{1,0:T(8,128)}', space=vmem, size = 0x10000, scoped, tag = 'scratch operand']
  %s0 = inlined_call_operand.vmem [shape: bf16[128,128], index: 0, kind: input, shape index: {}]
  %s1 = inlined_call_operand.vmem [shape: bf16[128,128], index: 1, kind: input, shape index: {}]
  %s2 = inlined_call_operand.vmem [shape: bf16[128,128], index: 2, kind: output, shape index: {0}]
  %s3 = inlined_call_operand.vmem [shape: f32[1,2,128], index: 3, kind: output, shape index: {1}]
  %4 = xla_tuple %s2, %s3
  %s5 = sld [smem:[#allocation0]]
  $region34: #{unet_forward.69} parent=0
    _
  %s7 = ssub.s32 1, %s5
  %s8 = scalar_select 0, %s7, %s5
  // Predicated region
  $region2: #{unet_forward.69} parent=0 // pred_check
    _
  $region3: #{unet_forward.69} parent=0 // pred_check_branch
    %10 = sbr.rel (0) target = $region5
  $region4: #{unet_forward.69} parent=0 // pred_region
    _
  $region5: #{unet_forward.69} parent=0 // pred_fallthru
    _
  // Predicated region
  $region6: #{unet_forward.69} parent=0 // pred_check
    _
  $region7: #{unet_forward.69} parent=0 // pred_check_branch
    %12 = sbr.rel (0) target = $region9
  $region8: #{unet_forward.69} parent=0 // pred_region
    _
  $region9: #{unet_forward.69} parent=0 // pred_fallthru
    _
  %p14 = scmp.eq.s32.totalorder 0, 0
  // Predicated region
  $region10: #{unet_forward.69} parent=0 // pred_check
    %p15 = pneg %p14
  $region11: #{unet_forward.69} parent=0 // pred_check_branch
    %17 = sbr.rel (%p15) target = $region13
  $region12: #{unet_forward.69} parent=0 // pred_region
    %18 = vst [vmem:[#allocation2] sm:$0xff] 0.0
    %19 = vst [vmem:[#allocation2 + $0x8] sm:$0xff] 0.0
    %20 = vst [vmem:[#allocation2 + $0x10] sm:$0xff] 0.0
    %21 = vst [vmem:[#allocation2 + $0x18] sm:$0xff] 0.0
    %22 = vst [vmem:[#allocation2 + $0x20] sm:$0xff] 0.0
    %23 = vst [vmem:[#allocation2 + $0x28] sm:$0xff] 0.0
    %24 = vst [vmem:[#allocation2 + $0x30] sm:$0xff] 0.0
    %25 = vst [vmem:[#allocation2 + $0x38] sm:$0xff] 0.0
    %26 = vst [vmem:[#allocation2 + $0x40] sm:$0xff] 0.0
    %27 = vst [vmem:[#allocation2 + $0x48] sm:$0xff] 0.0
    %28 = vst [vmem:[#allocation2 + $0x50] sm:$0xff] 0.0
    %29 = vst [vmem:[#allocation2 + $0x58] sm:$0xff] 0.0
    %30 = vst [vmem:[#allocation2 + $0x60] sm:$0xff] 0.0
    %31 = vst [vmem:[#allocation2 + $0x68] sm:$0xff] 0.0
    %32 = vst [vmem:[#allocation2 + $0x70] sm:$0xff] 0.0
    %33 = vst [vmem:[#allocation2 + $0x78] sm:$0xff] 0.0
  $region13: #{unet_forward.69} parent=0 // pred_fallthru
    _
  %v34 = vld [vmem:[#allocation2] sm:$0xff]
  %v35 = vld [vmem:[#allocation2 + $0x8] sm:$0xff]
  %v36 = vld [vmem:[#allocation2 + $0x10] sm:$0xff]
  %v37 = vld [vmem:[#allocation2 + $0x18] sm:$0xff]
  %v38 = vld [vmem:[#allocation2 + $0x20] sm:$0xff]
  %v39 = vld [vmem:[#allocation2 + $0x28] sm:$0xff]
  %v40 = vld [vmem:[#allocation2 + $0x30] sm:$0xff]
  %v41 = vld [vmem:[#allocation2 + $0x38] sm:$0xff]
  %v42 = vld [vmem:[#allocation2 + $0x40] sm:$0xff]
  %v43 = vld [vmem:[#allocation2 + $0x48] sm:$0xff]
  %v44 = vld [vmem:[#allocation2 + $0x50] sm:$0xff]
  %v45 = vld [vmem:[#allocation2 + $0x58] sm:$0xff]
  %v46 = vld [vmem:[#allocation2 + $0x60] sm:$0xff]
  %v47 = vld [vmem:[#allocation2 + $0x68] sm:$0xff]
  %v48 = vld [vmem:[#allocation2 + $0x70] sm:$0xff]
  %v49 = vld [vmem:[#allocation2 + $0x78] sm:$0xff]
  %v50 = vld [vmem:[%s0] sm:$0xf]
  %v51 = vld [vmem:[%s0 + $0x4] sm:$0xf]
  %v52 = vld [vmem:[%s0 + $0x8] sm:$0xf]
  %v53 = vld [vmem:[%s0 + $0xc] sm:$0xf]
  %v54 = vld [vmem:[%s0 + $0x10] sm:$0xf]
  %v55 = vld [vmem:[%s0 + $0x14] sm:$0xf]
  %v56 = vld [vmem:[%s0 + $0x18] sm:$0xf]
  %v57 = vld [vmem:[%s0 + $0x1c] sm:$0xf]
  %v58 = vld [vmem:[%s0 + $0x20] sm:$0xf]
  %v59 = vld [vmem:[%s0 + $0x24] sm:$0xf]
  %v60 = vld [vmem:[%s0 + $0x28] sm:$0xf]
  %v61 = vld [vmem:[%s0 + $0x2c] sm:$0xf]
  %v62 = vld [vmem:[%s0 + $0x30] sm:$0xf]
  %v63 = vld [vmem:[%s0 + $0x34] sm:$0xf]
  %v64 = vld [vmem:[%s0 + $0x38] sm:$0xf]
  %v65 = vld [vmem:[%s0 + $0x3c] sm:$0xf]
  %v66 = vld [vmem:[%s1] sm:$0xf]
  %v67 = vld [vmem:[%s1 + $0x4] sm:$0xf]
  %v68 = vld [vmem:[%s1 + $0x8] sm:$0xf]
  %v69 = vld [vmem:[%s1 + $0xc] sm:$0xf]
  %v70 = vld [vmem:[%s1 + $0x10] sm:$0xf]
  %v71 = vld [vmem:[%s1 + $0x14] sm:$0xf]
  %v72 = vld [vmem:[%s1 + $0x18] sm:$0xf]
  %v73 = vld [vmem:[%s1 + $0x1c] sm:$0xf]
  %v74 = vld [vmem:[%s1 + $0x20] sm:$0xf]
  %v75 = vld [vmem:[%s1 + $0x24] sm:$0xf]
  %v76 = vld [vmem:[%s1 + $0x28] sm:$0xf]
  %v77 = vld [vmem:[%s1 + $0x2c] sm:$0xf]
  %v78 = vld [vmem:[%s1 + $0x30] sm:$0xf]
  %v79 = vld [vmem:[%s1 + $0x34] sm:$0xf]
  %v80 = vld [vmem:[%s1 + $0x38] sm:$0xf]
  %v81 = vld [vmem:[%s1 + $0x3c] sm:$0xf]
  %v98 = vunpack.c.l.b16 %v50
  %v99 = vunpack.c.l.b16 %v51
  %v100 = vunpack.c.l.b16 %v52
  %v101 = vunpack.c.l.b16 %v53
  %v102 = vunpack.c.l.b16 %v54
  %v103 = vunpack.c.l.b16 %v55
  %v104 = vunpack.c.l.b16 %v56
  %v105 = vunpack.c.l.b16 %v57
  %v106 = vunpack.c.l.b16 %v58
  %v107 = vunpack.c.l.b16 %v59
  %v108 = vunpack.c.l.b16 %v60
  %v109 = vunpack.c.l.b16 %v61
  %v110 = vunpack.c.l.b16 %v62
  %v111 = vunpack.c.l.b16 %v63
  %v112 = vunpack.c.l.b16 %v64
  %v113 = vunpack.c.l.b16 %v65
  %v114 = vpack.c.b16 %v99, %v98
  %v115 = vpack.c.b16 %v101, %v100
  %v116 = vpack.c.b16 %v103, %v102
  %v117 = vpack.c.b16 %v105, %v104
  %v118 = vpack.c.b16 %v107, %v106
  %v119 = vpack.c.b16 %v109, %v108
  %v120 = vpack.c.b16 %v111, %v110
  %v121 = vpack.c.b16 %v113, %v112
  %v146 = vunpack.c.l.b16 %v66
  %v147 = vunpack.c.l.b16 %v67
  %v148 = vunpack.c.l.b16 %v68
  %v149 = vunpack.c.l.b16 %v69
  %v150 = vunpack.c.l.b16 %v70
  %v151 = vunpack.c.l.b16 %v71
  %v152 = vunpack.c.l.b16 %v72
  %v153 = vunpack.c.l.b16 %v73
  %v154 = vunpack.c.l.b16 %v74
  %v155 = vunpack.c.l.b16 %v75
  %v156 = vunpack.c.l.b16 %v76
  %v157 = vunpack.c.l.b16 %v77
  %v158 = vunpack.c.l.b16 %v78
  %v159 = vunpack.c.l.b16 %v79
  %v160 = vunpack.c.l.b16 %v80
  %v161 = vunpack.c.l.b16 %v81
  %v162 = vpack.c.b16 %v147, %v146
  %v163 = vpack.c.b16 %v149, %v148
  %v164 = vpack.c.b16 %v151, %v150
  %v165 = vpack.c.b16 %v153, %v152
  %v166 = vpack.c.b16 %v155, %v154
  %v167 = vpack.c.b16 %v157, %v156
  %v168 = vpack.c.b16 %v159, %v158
  %v169 = vpack.c.b16 %v161, %v160
  %178 = vmatprep.subr.bf16.mxu0 0
  %179 = vmatpush1.bf16.msra.mxu0 %v169
  %180 = vmatprep.subr.bf16.mxu0 0
  %181 = vmatpush1.bf16.msra.mxu0 %v168
  %182 = vmatprep.subr.bf16.mxu0 0
  %183 = vmatpush1.bf16.msra.mxu0 %v167
  %184 = vmatprep.subr.bf16.mxu0 0
  %185 = vmatpush1.bf16.msra.mxu0 %v166
  %186 = vmatprep.subr.bf16.mxu0 0
  %187 = vmatpush1.bf16.msra.mxu0 %v165
  %188 = vmatprep.subr.bf16.mxu0 0
  %189 = vmatpush1.bf16.msra.mxu0 %v164
  %190 = vmatprep.subr.bf16.mxu0 0
  %191 = vmatpush1.bf16.msra.mxu0 %v163
  %192 = vmatprep.subr.bf16.mxu0 0
  %193 = vmatpush1.bf16.msra.mxu0 %v162
  %194 = vmatprep.subr.bf16.mxu0 0
  %195 = vmatpush2.bf16.msra.mxu0 0
  %196 = vmatprep.subr.bf16.mxu0 0
  %197 = vmatpush2.bf16.msra.mxu0 0
  %198 = vmatprep.subr.bf16.mxu0 0
  %199 = vmatpush2.bf16.msra.mxu0 0
  %200 = vmatprep.subr.bf16.mxu0 0
  %201 = vmatpush2.bf16.msra.mxu0 0
  %202 = vmatprep.subr.bf16.mxu0 0
  %203 = vmatpush2.bf16.msra.mxu0 0
  %204 = vmatprep.subr.bf16.mxu0 0
  %205 = vmatpush2.bf16.msra.mxu0 0
  %206 = vmatprep.subr.bf16.mxu0 0
  %207 = vmatpush2.bf16.msra.mxu0 0
  %208 = vmatprep.subr.bf16.mxu0 0
  %209 = vmatpush2.bf16.msra.mxu0 0
  %210 = vmatprep.mubr.bf16.mxu0 0
  %211 = vmatmul.mubr.bf16.gmra.mxu0 %v114
  %v212 = vpop.f32.mrf.mxu0
  %v213 = vadd.f32 0.0, %v212
  %v214 = vpop.f32.mrf.mxu0
  %v215 = vpop.f32.mrf.mxu0
  %v216 = vadd.f32 0.0, %v215
  %v217 = vpop.f32.mrf.mxu0
  %218 = vmatprep.mubr.bf16.mxu0 0
  %219 = vmatmul.mubr.bf16.gmra.mxu0 %v115
  %v220 = vpop.f32.mrf.mxu0
  %v221 = vadd.f32 0.0, %v220
  %v222 = vpop.f32.mrf.mxu0
  %v223 = vpop.f32.mrf.mxu0
  %v224 = vadd.f32 0.0, %v223
  %v225 = vpop.f32.mrf.mxu0
  %226 = vmatprep.mubr.bf16.mxu0 0
  %227 = vmatmul.mubr.bf16.gmra.mxu0 %v116
  %v228 = vpop.f32.mrf.mxu0
  %v229 = vadd.f32 0.0, %v228
  %v230 = vpop.f32.mrf.mxu0
  %v231 = vpop.f32.mrf.mxu0
  %v232 = vadd.f32 0.0, %v231
  %v233 = vpop.f32.mrf.mxu0
  %234 = vmatprep.mubr.bf16.mxu0 0
  %235 = vmatmul.mubr.bf16.gmra.mxu0 %v117
  %v236 = vpop.f32.mrf.mxu0
  %v237 = vadd.f32 0.0, %v236
  %v238 = vpop.f32.mrf.mxu0
  %v239 = vpop.f32.mrf.mxu0
  %v240 = vadd.f32 0.0, %v239
  %v241 = vpop.f32.mrf.mxu0
  %242 = vmatprep.mubr.bf16.mxu0 0
  %243 = vmatmul.mubr.bf16.gmra.mxu0 %v118
  %v244 = vpop.f32.mrf.mxu0
  %v245 = vadd.f32 0.0, %v244
  %v246 = vpop.f32.mrf.mxu0
  %v247 = vpop.f32.mrf.mxu0
  %v248 = vadd.f32 0.0, %v247
  %v249 = vpop.f32.mrf.mxu0
  %250 = vmatprep.mubr.bf16.mxu0 0
  %251 = vmatmul.mubr.bf16.gmra.mxu0 %v119
  %v252 = vpop.f32.mrf.mxu0
  %v253 = vadd.f32 0.0, %v252
  %v254 = vpop.f32.mrf.mxu0
  %v255 = vpop.f32.mrf.mxu0
  %v256 = vadd.f32 0.0, %v255
  %v257 = vpop.f32.mrf.mxu0
  %258 = vmatprep.mubr.bf16.mxu0 0
  %259 = vmatmul.mubr.bf16.gmra.mxu0 %v120
  %v260 = vpop.f32.mrf.mxu0
  %v261 = vadd.f32 0.0, %v260
  %v262 = vpop.f32.mrf.mxu0
  %v263 = vpop.f32.mrf.mxu0
  %v264 = vadd.f32 0.0, %v263
  %v265 = vpop.f32.mrf.mxu0
  %266 = vmatprep.mubr.bf16.mxu0 0
  %267 = vmatmul.mubr.bf16.gmra.mxu0 %v121
  %v268 = vpop.f32.mrf.mxu0
  %v269 = vadd.f32 0.0, %v268
  %v270 = vpop.f32.mrf.mxu0
  %v271 = vpop.f32.mrf.mxu0
  %v272 = vadd.f32 0.0, %v271
  %v273 = vpop.f32.mrf.mxu0
  %274 = vdwg.mxu0
  %v275 = vadd.f32 %v34, %v213
  %v276 = vadd.f32 %v35, %v216
  %v277 = vadd.f32 %v36, %v221
  %v278 = vadd.f32 %v37, %v224
  %v279 = vadd.f32 %v38, %v229
  %v280 = vadd.f32 %v39, %v232
  %v281 = vadd.f32 %v40, %v237
  %v282 = vadd.f32 %v41, %v240
  %v283 = vadd.f32 %v42, %v245
  %v284 = vadd.f32 %v43, %v248
  %v285 = vadd.f32 %v44, %v253
  %v286 = vadd.f32 %v45, %v256
  %v287 = vadd.f32 %v46, %v261
  %v288 = vadd.f32 %v47, %v264
  %v289 = vadd.f32 %v48, %v269
  %v290 = vadd.f32 %v49, %v272
  %291 = vst [vmem:[#allocation2] sm:$0xff] %v275
  %292 = vst [vmem:[#allocation2 + $0x8] sm:$0xff] %v276
  %293 = vst [vmem:[#allocation2 + $0x10] sm:$0xff] %v277
  %294 = vst [vmem:[#allocation2 + $0x18] sm:$0xff] %v278
  %295 = vst [vmem:[#allocation2 + $0x20] sm:$0xff] %v279
  %296 = vst [vmem:[#allocation2 + $0x28] sm:$0xff] %v280
  %297 = vst [vmem:[#allocation2 + $0x30] sm:$0xff] %v281
  %298 = vst [vmem:[#allocation2 + $0x38] sm:$0xff] %v282
  %299 = vst [vmem:[#allocation2 + $0x40] sm:$0xff] %v283
  %300 = vst [vmem:[#allocation2 + $0x48] sm:$0xff] %v284
  %301 = vst [vmem:[#allocation2 + $0x50] sm:$0xff] %v285
  %302 = vst [vmem:[#allocation2 + $0x58] sm:$0xff] %v286
  %303 = vst [vmem:[#allocation2 + $0x60] sm:$0xff] %v287
  %304 = vst [vmem:[#allocation2 + $0x68] sm:$0xff] %v288
  %305 = vst [vmem:[#allocation2 + $0x70] sm:$0xff] %v289
  %306 = vst [vmem:[#allocation2 + $0x78] sm:$0xff] %v290
  // Predicated region
  $region14: #{unet_forward.69} parent=0 // pred_check
    %p307 = pneg %p14
  $region15: #{unet_forward.69} parent=0 // pred_check_branch
    %309 = sbr.rel (%p307) target = $region17
  $region16: #{unet_forward.69} parent=0 // pred_region
    %v310 = vld [vmem:[#allocation2] sm:$0xff]
    %v311 = vld [vmem:[#allocation2 + $0x8] sm:$0xff]
    %v312 = vld [vmem:[#allocation2 + $0x10] sm:$0xff]
    %v313 = vld [vmem:[#allocation2 + $0x18] sm:$0xff]
    %v314 = vld [vmem:[#allocation2 + $0x20] sm:$0xff]
    %v315 = vld [vmem:[#allocation2 + $0x28] sm:$0xff]
    %v316 = vld [vmem:[#allocation2 + $0x30] sm:$0xff]
    %v317 = vld [vmem:[#allocation2 + $0x38] sm:$0xff]
    %v318 = vld [vmem:[#allocation2 + $0x40] sm:$0xff]
    %v319 = vld [vmem:[#allocation2 + $0x48] sm:$0xff]
    %v320 = vld [vmem:[#allocation2 + $0x50] sm:$0xff]
    %v321 = vld [vmem:[#allocation2 + $0x58] sm:$0xff]
    %v322 = vld [vmem:[#allocation2 + $0x60] sm:$0xff]
    %v323 = vld [vmem:[#allocation2 + $0x68] sm:$0xff]
    %v324 = vld [vmem:[#allocation2 + $0x70] sm:$0xff]
    %v325 = vld [vmem:[#allocation2 + $0x78] sm:$0xff]
    %v326 = vpack.c.bf16 %v311, %v310
    %v327 = vpack.c.bf16 %v313, %v312
    %v328 = vpack.c.bf16 %v315, %v314
    %v329 = vpack.c.bf16 %v317, %v316
    %v330 = vpack.c.bf16 %v319, %v318
    %v331 = vpack.c.bf16 %v321, %v320
    %v332 = vpack.c.bf16 %v323, %v322
    %v333 = vpack.c.bf16 %v325, %v324
    %v342 = vunpack.c.l.b16 %v326
    %v343 = vunpack.c.h.b16 %v326
    %v344 = vunpack.c.l.b16 %v327
    %v345 = vunpack.c.h.b16 %v327
    %v346 = vunpack.c.l.b16 %v328
    %v347 = vunpack.c.h.b16 %v328
    %v348 = vunpack.c.l.b16 %v329
    %v349 = vunpack.c.h.b16 %v329
    %v350 = vunpack.c.l.b16 %v330
    %v351 = vunpack.c.h.b16 %v330
    %v352 = vunpack.c.l.b16 %v331
    %v353 = vunpack.c.h.b16 %v331
    %v354 = vunpack.c.l.b16 %v332
    %v355 = vunpack.c.h.b16 %v332
    %v356 = vunpack.c.l.b16 %v333
    %v357 = vunpack.c.h.b16 %v333
    %v358 = vpack.c.b16 %v342, %v342
    %v359 = vpack.c.b16 %v343, %v343
    %v360 = vpack.c.b16 %v344, %v344
    %v361 = vpack.c.b16 %v345, %v345
    %v362 = vpack.c.b16 %v346, %v346
    %v363 = vpack.c.b16 %v347, %v347
    %v364 = vpack.c.b16 %v348, %v348
    %v365 = vpack.c.b16 %v349, %v349
    %v366 = vpack.c.b16 %v350, %v350
    %v367 = vpack.c.b16 %v351, %v351
    %v368 = vpack.c.b16 %v352, %v352
    %v369 = vpack.c.b16 %v353, %v353
    %v370 = vpack.c.b16 %v354, %v354
    %v371 = vpack.c.b16 %v355, %v355
    %v372 = vpack.c.b16 %v356, %v356
    %v373 = vpack.c.b16 %v357, %v357
    %390 = vst [vmem:[%s2] sm:$0xf] %v358
    %391 = vst [vmem:[%s2 + $0x4] sm:$0xf] %v359
    %392 = vst [vmem:[%s2 + $0x8] sm:$0xf] %v360
    %393 = vst [vmem:[%s2 + $0xc] sm:$0xf] %v361
    %394 = vst [vmem:[%s2 + $0x10] sm:$0xf] %v362
    %395 = vst [vmem:[%s2 + $0x14] sm:$0xf] %v363
    %396 = vst [vmem:[%s2 + $0x18] sm:$0xf] %v364
    %397 = vst [vmem:[%s2 + $0x1c] sm:$0xf] %v365
    %398 = vst [vmem:[%s2 + $0x20] sm:$0xf] %v366
    %399 = vst [vmem:[%s2 + $0x24] sm:$0xf] %v367
    %400 = vst [vmem:[%s2 + $0x28] sm:$0xf] %v368
    %401 = vst [vmem:[%s2 + $0x2c] sm:$0xf] %v369
    %402 = vst [vmem:[%s2 + $0x30] sm:$0xf] %v370
    %403 = vst [vmem:[%s2 + $0x34] sm:$0xf] %v371
    %404 = vst [vmem:[%s2 + $0x38] sm:$0xf] %v372
    %405 = vst [vmem:[%s2 + $0x3c] sm:$0xf] %v373
    %v406 = vadd.f32 %v310, %v311
    %v407 = vadd.f32 %v406, %v312
    %v408 = vadd.f32 %v407, %v313
    %v409 = vadd.f32 %v408, %v314
    %v410 = vadd.f32 %v409, %v315
    %v411 = vadd.f32 %v410, %v316
    %v412 = vadd.f32 %v411, %v317
    %v413 = vadd.f32 %v412, %v318
    %v414 = vadd.f32 %v413, %v319
    %v415 = vadd.f32 %v414, %v320
    %v416 = vadd.f32 %v415, %v321
    %v417 = vadd.f32 %v416, %v322
    %v418 = vadd.f32 %v417, %v323
    %v419 = vadd.f32 %v418, %v324
    %v420 = vadd.f32 %v419, %v325
    %v421 = vrot.slane %v420, 4
    %v422 = vadd.f32 %v420, %v421
    %v423 = vrot.slane %v422, 2
    %v424 = vadd.f32 %v422, %v423
    %v425 = vrot.slane %v424, 1
    %v426 = vadd.f32 %v424, %v425
    %v427 = vmul.f32 %v310, %v310
    %v428 = vmul.f32 %v311, %v311
    %v429 = vmul.f32 %v312, %v312
    %v430 = vmul.f32 %v313, %v313
    %v431 = vmul.f32 %v314, %v314
    %v432 = vmul.f32 %v315, %v315
    %v433 = vmul.f32 %v316, %v316
    %v434 = vmul.f32 %v317, %v317
    %v435 = vmul.f32 %v318, %v318
    %v436 = vmul.f32 %v319, %v319
    %v437 = vmul.f32 %v320, %v320
    %v438 = vmul.f32 %v321, %v321
    %v439 = vmul.f32 %v322, %v322
    %v440 = vmul.f32 %v323, %v323
    %v441 = vmul.f32 %v324, %v324
    %v442 = vmul.f32 %v325, %v325
    %v443 = vadd.f32 %v427, %v428
    %v444 = vadd.f32 %v443, %v429
    %v445 = vadd.f32 %v444, %v430
    %v446 = vadd.f32 %v445, %v431
    %v447 = vadd.f32 %v446, %v432
    %v448 = vadd.f32 %v447, %v433
    %v449 = vadd.f32 %v448, %v434
    %v450 = vadd.f32 %v449, %v435
    %v451 = vadd.f32 %v450, %v436
    %v452 = vadd.f32 %v451, %v437
    %v453 = vadd.f32 %v452, %v438
    %v454 = vadd.f32 %v453, %v439
    %v455 = vadd.f32 %v454, %v440
    %v456 = vadd.f32 %v455, %v441
    %v457 = vadd.f32 %v456, %v442
    %v458 = vrot.slane %v457, 4
    %v459 = vadd.f32 %v457, %v458
    %v460 = vrot.slane %v459, 2
    %v461 = vadd.f32 %v459, %v460
    %v462 = vrot.slane %v461, 1
    %v463 = vadd.f32 %v461, %v462
    %vm464 = vcmask 1040384
    %v465 = vsel %vm464, %v426, %v463
    %466 = vst [vmem:[%s3] sm:$0x3] %v465
  $region17: #{unet_forward.69} parent=0 // pred_fallthru
    _
  // Predicated region
  $region18: #{unet_forward.69} parent=0 // pred_check
    _
  $region19: #{unet_forward.69} parent=0 // pred_check_branch
    %468 = sbr.rel (0) target = $region21
  $region20: #{unet_forward.69} parent=0 // pred_region
    _
  $region21: #{unet_forward.69} parent=0 // pred_fallthru
    _
  // Predicated region
  $region22: #{unet_forward.69} parent=0 // pred_check
    _
  $region23: #{unet_forward.69} parent=0 // pred_check_branch
    %470 = sbr.rel (0) target = $region25
  $region24: #{unet_forward.69} parent=0 // pred_region
    _
  $region25: #{unet_forward.69} parent=0 // pred_fallthru
    _
  // Predicated region
  $region26: #{unet_forward.69} parent=0 // pred_check
    _
  $region27: #{unet_forward.69} parent=0 // pred_check_branch
    %472 = sbr.rel (0) target = $region29
  $region28: #{unet_forward.69} parent=0 // pred_region
    _
  $region29: #{unet_forward.69} parent=0 // pred_fallthru
    _
  // Predicated region
  $region30: #{unet_forward.69} parent=0 // pred_check
    _
  $region31: #{unet_forward.69} parent=0 // pred_check_branch
    %474 = sbr.rel (0) target = $region33
  $region32: #{unet_forward.69} parent=0 // pred_region
    _
  $region33: #{unet_forward.69} parent=0 // pred_fallthru
    _

// kernel: unet_forward.74
$region0: #{unet_forward.74}
  #allocation0 [shape = 'u32[]', space=smem, size = 0x4, offset = 0x4, fixed_abs, tag = 'smem constant byte address 0x4 - core index']
  #allocation1 [shape = 'u32[144,128]{1,0:T(1,128)}', space=vmem, size = 0x12000, scoped, tag = 'internal scratch']
  %s0 = inlined_call_operand.vmem [shape: bf16[32,128], index: 0, kind: input, shape index: {}]
  %s1 = inlined_call_operand.vmem [shape: f32[1,128], index: 1, kind: input, shape index: {}]
  %s2 = inlined_call_operand.vmem [shape: f32[1,128], index: 2, kind: input, shape index: {}]
  %s3 = inlined_call_operand.vmem [shape: bf16[32,128], index: 3, kind: output, shape index: {}]
  %s4 = sld [smem:[#allocation0]]
  $region22: #{unet_forward.74} parent=0
    _
  %s6 = ssub.s32 1, %s4
  %s7 = scalar_select 0, %s6, %s4
  // Predicated region
  $region2: #{unet_forward.74} parent=0 // pred_check
    _
  $region3: #{unet_forward.74} parent=0 // pred_check_branch
    %9 = sbr.rel (0) target = $region5
  $region4: #{unet_forward.74} parent=0 // pred_region
    _
  $region5: #{unet_forward.74} parent=0 // pred_fallthru
    _
  // Predicated region
  $region6: #{unet_forward.74} parent=0 // pred_check
    _
  $region7: #{unet_forward.74} parent=0 // pred_check_branch
    %11 = sbr.rel (0) target = $region9
  $region8: #{unet_forward.74} parent=0 // pred_region
    _
  $region9: #{unet_forward.74} parent=0 // pred_fallthru
    _
  // Predicated region
  $region10: #{unet_forward.74} parent=0 // pred_check
    _
  $region11: #{unet_forward.74} parent=0 // pred_check_branch
    %13 = sbr.rel (0) target = $region13
  $region12: #{unet_forward.74} parent=0 // pred_region
    _
  $region13: #{unet_forward.74} parent=0 // pred_fallthru
    _
  %v14 = vld [vmem:[%s0] sm:$0xf]
  %v15 = vld [vmem:[%s0 + $0x4] sm:$0xf]
  %v16 = vld [vmem:[%s0 + $0x8] sm:$0xf]
  %v17 = vld [vmem:[%s0 + $0xc] sm:$0xf]
  %v18 = vunpack.c.l.bf16 %v14
  %v19 = vunpack.c.l.bf16 %v15
  %v20 = vunpack.c.l.bf16 %v16
  %v21 = vunpack.c.l.bf16 %v17
  %v22 = vld [vmem:[%s1] sm:$0x1]
  %v24 = vlaneseq
  %v25 = vshrl.u32 %v24, 7
  %v26 = vsub.s32 0, %v25
  %v27 = vrot.slane %v22, %v26
  %v29 = vmul.f32 %v18, %v27
  %v30 = vmul.f32 %v19, %v27
  %v31 = vmul.f32 %v20, %v27
  %v32 = vmul.f32 %v21, %v27
  %v33 = vld [vmem:[%s2] sm:$0x1]
  %v35 = vlaneseq
  %v36 = vshrl.u32 %v35, 7
  %v37 = vsub.s32 0, %v36
  %v38 = vrot.slane %v33, %v37
  %v40 = vadd.f32 %v29, %v38
  %v41 = vadd.f32 %v30, %v38
  %v42 = vadd.f32 %v31, %v38
  %v43 = vadd.f32 %v32, %v38
  %v44 = vmax.f32 %v40, 0.0
  %v45 = vmax.f32 %v41, 0.0
  %v46 = vmax.f32 %v42, 0.0
  %v47 = vmax.f32 %v43, 0.0
  %v48 = vpack.c.bf16 %v45, %v44
  %v49 = vpack.c.bf16 %v47, %v46
  %v52 = vunpack.c.l.b16 %v48
  %v53 = vunpack.c.h.b16 %v48
  %v54 = vunpack.c.l.b16 %v49
  %v55 = vunpack.c.h.b16 %v49
  %v56 = vpack.c.b16 %v52, %v52
  %v57 = vpack.c.b16 %v53, %v53
  %v58 = vpack.c.b16 %v54, %v54
  %v59 = vpack.c.b16 %v55, %v55
  %64 = vst [vmem:[%s3] sm:$0xf] %v56
  %65 = vst [vmem:[%s3 + $0x4] sm:$0xf] %v57
  %66 = vst [vmem:[%s3 + $0x8] sm:$0xf] %v58
  %67 = vst [vmem:[%s3 + $0xc] sm:$0xf] %v59
  // Predicated region
  $region14: #{unet_forward.74} parent=0 // pred_check
    _
  $region15: #{unet_forward.74} parent=0 // pred_check_branch
    %69 = sbr.rel (0) target = $region17
  $region16: #{unet_forward.74} parent=0 // pred_region
    _
  $region17: #{unet_forward.74} parent=0 // pred_fallthru
    _
  // Predicated region
  $region18: #{unet_forward.74} parent=0 // pred_check
    _
  $region19: #{unet_forward.74} parent=0 // pred_check_branch
    %71 = sbr.rel (0) target = $region21
  $region20: #{unet_forward.74} parent=0 // pred_region
    _
  $region21: #{unet_forward.74} parent=0 // pred_fallthru
    _

// kernel: unet_forward.73
$region0: #{unet_forward.73}
  #allocation0 [shape = 'u32[]', space=smem, size = 0x4, offset = 0x4, fixed_abs, tag = 'smem constant byte address 0x4 - core index']
  #allocation1 [shape = 'u32[144,128]{1,0:T(1,128)}', space=vmem, size = 0x12000, scoped, tag = 'internal scratch']
  #allocation2 [shape = 'f32[32,128]{1,0:T(8,128)}', space=vmem, size = 0x4000, scoped, tag = 'scratch operand']
  %s0 = inlined_call_operand.vmem [shape: bf16[32,128], index: 0, kind: input, shape index: {}]
  %s1 = inlined_call_operand.vmem [shape: bf16[128,128], index: 1, kind: input, shape index: {}]
  %s2 = inlined_call_operand.vmem [shape: bf16[32,128], index: 2, kind: output, shape index: {0}]
  %s3 = inlined_call_operand.vmem [shape: f32[1,2,128], index: 3, kind: output, shape index: {1}]
  %4 = xla_tuple %s2, %s3
  %s5 = sld [smem:[#allocation0]]
  $region34: #{unet_forward.73} parent=0
    _
  %s7 = ssub.s32 1, %s5
  %s8 = scalar_select 0, %s7, %s5
  // Predicated region
  $region2: #{unet_forward.73} parent=0 // pred_check
    _
  $region3: #{unet_forward.73} parent=0 // pred_check_branch
    %10 = sbr.rel (0) target = $region5
  $region4: #{unet_forward.73} parent=0 // pred_region
    _
  $region5: #{unet_forward.73} parent=0 // pred_fallthru
    _
  // Predicated region
  $region6: #{unet_forward.73} parent=0 // pred_check
    _
  $region7: #{unet_forward.73} parent=0 // pred_check_branch
    %12 = sbr.rel (0) target = $region9
  $region8: #{unet_forward.73} parent=0 // pred_region
    _
  $region9: #{unet_forward.73} parent=0 // pred_fallthru
    _
  %p14 = scmp.eq.s32.totalorder 0, 0
  // Predicated region
  $region10: #{unet_forward.73} parent=0 // pred_check
    %p15 = pneg %p14
  $region11: #{unet_forward.73} parent=0 // pred_check_branch
    %17 = sbr.rel (%p15) target = $region13
  $region12: #{unet_forward.73} parent=0 // pred_region
    %18 = vst [vmem:[#allocation2] sm:$0xff] 0.0
    %19 = vst [vmem:[#allocation2 + $0x8] sm:$0xff] 0.0
    %20 = vst [vmem:[#allocation2 + $0x10] sm:$0xff] 0.0
    %21 = vst [vmem:[#allocation2 + $0x18] sm:$0xff] 0.0
  $region13: #{unet_forward.73} parent=0 // pred_fallthru
    _
  %v22 = vld [vmem:[#allocation2] sm:$0xff]
  %v23 = vld [vmem:[#allocation2 + $0x8] sm:$0xff]
  %v24 = vld [vmem:[#allocation2 + $0x10] sm:$0xff]
  %v25 = vld [vmem:[#allocation2 + $0x18] sm:$0xff]
  %v26 = vld [vmem:[%s0] sm:$0xf]
  %v27 = vld [vmem:[%s0 + $0x4] sm:$0xf]
  %v28 = vld [vmem:[%s0 + $0x8] sm:$0xf]
  %v29 = vld [vmem:[%s0 + $0xc] sm:$0xf]
  %v30 = vld [vmem:[%s1] sm:$0xf]
  %v31 = vld [vmem:[%s1 + $0x4] sm:$0xf]
  %v32 = vld [vmem:[%s1 + $0x8] sm:$0xf]
  %v33 = vld [vmem:[%s1 + $0xc] sm:$0xf]
  %v34 = vld [vmem:[%s1 + $0x10] sm:$0xf]
  %v35 = vld [vmem:[%s1 + $0x14] sm:$0xf]
  %v36 = vld [vmem:[%s1 + $0x18] sm:$0xf]
  %v37 = vld [vmem:[%s1 + $0x1c] sm:$0xf]
  %v38 = vld [vmem:[%s1 + $0x20] sm:$0xf]
  %v39 = vld [vmem:[%s1 + $0x24] sm:$0xf]
  %v40 = vld [vmem:[%s1 + $0x28] sm:$0xf]
  %v41 = vld [vmem:[%s1 + $0x2c] sm:$0xf]
  %v42 = vld [vmem:[%s1 + $0x30] sm:$0xf]
  %v43 = vld [vmem:[%s1 + $0x34] sm:$0xf]
  %v44 = vld [vmem:[%s1 + $0x38] sm:$0xf]
  %v45 = vld [vmem:[%s1 + $0x3c] sm:$0xf]
  %v50 = vunpack.c.l.b16 %v26
  %v51 = vunpack.c.l.b16 %v27
  %v52 = vunpack.c.l.b16 %v28
  %v53 = vunpack.c.l.b16 %v29
  %v54 = vpack.c.b16 %v51, %v50
  %v55 = vpack.c.b16 %v53, %v52
  %v74 = vunpack.c.l.b16 %v30
  %v75 = vunpack.c.l.b16 %v31
  %v76 = vunpack.c.l.b16 %v32
  %v77 = vunpack.c.l.b16 %v33
  %v78 = vunpack.c.l.b16 %v34
  %v79 = vunpack.c.l.b16 %v35
  %v80 = vunpack.c.l.b16 %v36
  %v81 = vunpack.c.l.b16 %v37
  %v82 = vunpack.c.l.b16 %v38
  %v83 = vunpack.c.l.b16 %v39
  %v84 = vunpack.c.l.b16 %v40
  %v85 = vunpack.c.l.b16 %v41
  %v86 = vunpack.c.l.b16 %v42
  %v87 = vunpack.c.l.b16 %v43
  %v88 = vunpack.c.l.b16 %v44
  %v89 = vunpack.c.l.b16 %v45
  %v90 = vpack.c.b16 %v75, %v74
  %v91 = vpack.c.b16 %v77, %v76
  %v92 = vpack.c.b16 %v79, %v78
  %v93 = vpack.c.b16 %v81, %v80
  %v94 = vpack.c.b16 %v83, %v82
  %v95 = vpack.c.b16 %v85, %v84
  %v96 = vpack.c.b16 %v87, %v86
  %v97 = vpack.c.b16 %v89, %v88
  %106 = vmatprep.subr.bf16.mxu0 0
  %107 = vmatpush1.bf16.msra.mxu0 %v97
  %108 = vmatprep.subr.bf16.mxu0 0
  %109 = vmatpush1.bf16.msra.mxu0 %v96
  %110 = vmatprep.subr.bf16.mxu0 0
  %111 = vmatpush1.bf16.msra.mxu0 %v95
  %112 = vmatprep.subr.bf16.mxu0 0
  %113 = vmatpush1.bf16.msra.mxu0 %v94
  %114 = vmatprep.subr.bf16.mxu0 0
  %115 = vmatpush1.bf16.msra.mxu0 %v93
  %116 = vmatprep.subr.bf16.mxu0 0
  %117 = vmatpush1.bf16.msra.mxu0 %v92
  %118 = vmatprep.subr.bf16.mxu0 0
  %119 = vmatpush1.bf16.msra.mxu0 %v91
  %120 = vmatprep.subr.bf16.mxu0 0
  %121 = vmatpush1.bf16.msra.mxu0 %v90
  %122 = vmatprep.subr.bf16.mxu0 0
  %123 = vmatpush2.bf16.msra.mxu0 0
  %124 = vmatprep.subr.bf16.mxu0 0
  %125 = vmatpush2.bf16.msra.mxu0 0
  %126 = vmatprep.subr.bf16.mxu0 0
  %127 = vmatpush2.bf16.msra.mxu0 0
  %128 = vmatprep.subr.bf16.mxu0 0
  %129 = vmatpush2.bf16.msra.mxu0 0
  %130 = vmatprep.subr.bf16.mxu0 0
  %131 = vmatpush2.bf16.msra.mxu0 0
  %132 = vmatprep.subr.bf16.mxu0 0
  %133 = vmatpush2.bf16.msra.mxu0 0
  %134 = vmatprep.subr.bf16.mxu0 0
  %135 = vmatpush2.bf16.msra.mxu0 0
  %136 = vmatprep.subr.bf16.mxu0 0
  %137 = vmatpush2.bf16.msra.mxu0 0
  %138 = vmatprep.mubr.bf16.mxu0 0
  %139 = vmatmul.mubr.bf16.gmra.mxu0 %v54
  %v140 = vpop.f32.mrf.mxu0
  %v141 = vadd.f32 0.0, %v140
  %v142 = vpop.f32.mrf.mxu0
  %v143 = vpop.f32.mrf.mxu0
  %v144 = vadd.f32 0.0, %v143
  %v145 = vpop.f32.mrf.mxu0
  %146 = vmatprep.mubr.bf16.mxu0 0
  %147 = vmatmul.mubr.bf16.gmra.mxu0 %v55
  %v148 = vpop.f32.mrf.mxu0
  %v149 = vadd.f32 0.0, %v148
  %v150 = vpop.f32.mrf.mxu0
  %v151 = vpop.f32.mrf.mxu0
  %v152 = vadd.f32 0.0, %v151
  %v153 = vpop.f32.mrf.mxu0
  %154 = vdwg.mxu0
  %v155 = vadd.f32 %v22, %v141
  %v156 = vadd.f32 %v23, %v144
  %v157 = vadd.f32 %v24, %v149
  %v158 = vadd.f32 %v25, %v152
  %159 = vst [vmem:[#allocation2] sm:$0xff] %v155
  %160 = vst [vmem:[#allocation2 + $0x8] sm:$0xff] %v156
  %161 = vst [vmem:[#allocation2 + $0x10] sm:$0xff] %v157
  %162 = vst [vmem:[#allocation2 + $0x18] sm:$0xff] %v158
  // Predicated region
  $region14: #{unet_forward.73} parent=0 // pred_check
    %p163 = pneg %p14
  $region15: #{unet_forward.73} parent=0 // pred_check_branch
    %165 = sbr.rel (%p163) target = $region17
  $region16: #{unet_forward.73} parent=0 // pred_region
    %v166 = vld [vmem:[#allocation2] sm:$0xff]
    %v167 = vld [vmem:[#allocation2 + $0x8] sm:$0xff]
    %v168 = vld [vmem:[#allocation2 + $0x10] sm:$0xff]
    %v169 = vld [vmem:[#allocation2 + $0x18] sm:$0xff]
    %v170 = vpack.c.bf16 %v167, %v166
    %v171 = vpack.c.bf16 %v169, %v168
    %v174 = vunpack.c.l.b16 %v170
    %v175 = vunpack.c.h.b16 %v170
    %v176 = vunpack.c.l.b16 %v171
    %v177 = vunpack.c.h.b16 %v171
    %v178 = vpack.c.b16 %v174, %v174
    %v179 = vpack.c.b16 %v175, %v175
    %v180 = vpack.c.b16 %v176, %v176
    %v181 = vpack.c.b16 %v177, %v177
    %186 = vst [vmem:[%s2] sm:$0xf] %v178
    %187 = vst [vmem:[%s2 + $0x4] sm:$0xf] %v179
    %188 = vst [vmem:[%s2 + $0x8] sm:$0xf] %v180
    %189 = vst [vmem:[%s2 + $0xc] sm:$0xf] %v181
    %v190 = vadd.f32 %v166, %v167
    %v191 = vadd.f32 %v190, %v168
    %v192 = vadd.f32 %v191, %v169
    %v193 = vrot.slane %v192, 4
    %v194 = vadd.f32 %v192, %v193
    %v195 = vrot.slane %v194, 2
    %v196 = vadd.f32 %v194, %v195
    %v197 = vrot.slane %v196, 1
    %v198 = vadd.f32 %v196, %v197
    %v199 = vmul.f32 %v166, %v166
    %v200 = vmul.f32 %v167, %v167
    %v201 = vmul.f32 %v168, %v168
    %v202 = vmul.f32 %v169, %v169
    %v203 = vadd.f32 %v199, %v200
    %v204 = vadd.f32 %v203, %v201
    %v205 = vadd.f32 %v204, %v202
    %v206 = vrot.slane %v205, 4
    %v207 = vadd.f32 %v205, %v206
    %v208 = vrot.slane %v207, 2
    %v209 = vadd.f32 %v207, %v208
    %v210 = vrot.slane %v209, 1
    %v211 = vadd.f32 %v209, %v210
    %vm212 = vcmask 1040384
    %v213 = vsel %vm212, %v198, %v211
    %214 = vst [vmem:[%s3] sm:$0x3] %v213
  $region17: #{unet_forward.73} parent=0 // pred_fallthru
    _
  // Predicated region
  $region18: #{unet_forward.73} parent=0 // pred_check
    _
  $region19: #{unet_forward.73} parent=0 // pred_check_branch
    %216 = sbr.rel (0) target = $region21
  $region20: #{unet_forward.73} parent=0 // pred_region
    _
  $region21: #{unet_forward.73} parent=0 // pred_fallthru
    _
  // Predicated region
  $region22: #{unet_forward.73} parent=0 // pred_check
    _
  $region23: #{unet_forward.73} parent=0 // pred_check_branch
    %218 = sbr.rel (0) target = $region25
  $region24: #{unet_forward.73} parent=0 // pred_region
    _
  $region25: #{unet_forward.73} parent=0 // pred_fallthru
    _
  // Predicated region
  $region26: #{unet_forward.73} parent=0 // pred_check
    _
  $region27: #{unet_forward.73} parent=0 // pred_check_branch
    %220 = sbr.rel (0) target = $region29
  $region28: #{unet_forward.73} parent=0 // pred_region
    _
  $region29: #{unet_forward.73} parent=0 // pred_fallthru
    _
  // Predicated region
  $region30: #{unet_forward.73} parent=0 // pred_check
    _
  $region31: #{unet_forward.73} parent=0 // pred_check_branch
    %222 = sbr.rel (0) target = $region33
  $region32: #{unet_forward.73} parent=0 // pred_region
    _
  $region33: #{unet_forward.73} parent=0 // pred_fallthru
    _

// kernel: unet_forward.75
$region0: #{unet_forward.75}
  #allocation0 [shape = 'u32[]', space=smem, size = 0x4, offset = 0x4, fixed_abs, tag = 'smem constant byte address 0x4 - core index']
  #allocation1 [shape = 'u32[144,128]{1,0:T(1,128)}', space=vmem, size = 0x12000, scoped, tag = 'internal scratch']
  #allocation2 [shape = 'f32[32,128]{1,0:T(8,128)}', space=vmem, size = 0x4000, scoped, tag = 'scratch operand']
  %s0 = inlined_call_operand.vmem [shape: bf16[32,256], index: 0, kind: input, shape index: {}]
  %s1 = inlined_call_operand.vmem [shape: bf16[256,128], index: 1, kind: input, shape index: {}]
  %s2 = inlined_call_operand.vmem [shape: bf16[32,128], index: 2, kind: output, shape index: {0}]
  %s3 = inlined_call_operand.vmem [shape: f32[1,2,128], index: 3, kind: output, shape index: {1}]
  %4 = xla_tuple %s2, %s3
  %s5 = sld [smem:[#allocation0]]
  $region34: #{unet_forward.75} parent=0
    _
  %s7 = ssub.s32 1, %s5
  %s8 = scalar_select 0, %s7, %s5
  // Predicated region
  $region2: #{unet_forward.75} parent=0 // pred_check
    _
  $region3: #{unet_forward.75} parent=0 // pred_check_branch
    %10 = sbr.rel (0) target = $region5
  $region4: #{unet_forward.75} parent=0 // pred_region
    _
  $region5: #{unet_forward.75} parent=0 // pred_fallthru
    _
  // Predicated region
  $region6: #{unet_forward.75} parent=0 // pred_check
    _
  $region7: #{unet_forward.75} parent=0 // pred_check_branch
    %12 = sbr.rel (0) target = $region9
  $region8: #{unet_forward.75} parent=0 // pred_region
    _
  $region9: #{unet_forward.75} parent=0 // pred_fallthru
    _
  %p14 = scmp.eq.s32.totalorder 0, 0
  // Predicated region
  $region10: #{unet_forward.75} parent=0 // pred_check
    %p15 = pneg %p14
  $region11: #{unet_forward.75} parent=0 // pred_check_branch
    %17 = sbr.rel (%p15) target = $region13
  $region12: #{unet_forward.75} parent=0 // pred_region
    %18 = vst [vmem:[#allocation2] sm:$0xff] 0.0
    %19 = vst [vmem:[#allocation2 + $0x8] sm:$0xff] 0.0
    %20 = vst [vmem:[#allocation2 + $0x10] sm:$0xff] 0.0
    %21 = vst [vmem:[#allocation2 + $0x18] sm:$0xff] 0.0
  $region13: #{unet_forward.75} parent=0 // pred_fallthru
    _
  %v22 = vld [vmem:[#allocation2] sm:$0xff]
  %v23 = vld [vmem:[#allocation2 + $0x8] sm:$0xff]
  %v24 = vld [vmem:[#allocation2 + $0x10] sm:$0xff]
  %v25 = vld [vmem:[#allocation2 + $0x18] sm:$0xff]
  %v26 = vld [vmem:[%s0] sm:$0xff]
  %v27 = vld [vmem:[%s0 + $0x8] sm:$0xff]
  %v28 = vld [vmem:[%s0 + $0x10] sm:$0xff]
  %v29 = vld [vmem:[%s0 + $0x18] sm:$0xff]
  %v30 = vld [vmem:[%s1] sm:$0xf]
  %v31 = vld [vmem:[%s1 + $0x4] sm:$0xf]
  %v32 = vld [vmem:[%s1 + $0x8] sm:$0xf]
  %v33 = vld [vmem:[%s1 + $0xc] sm:$0xf]
  %v34 = vld [vmem:[%s1 + $0x10] sm:$0xf]
  %v35 = vld [vmem:[%s1 + $0x14] sm:$0xf]
  %v36 = vld [vmem:[%s1 + $0x18] sm:$0xf]
  %v37 = vld [vmem:[%s1 + $0x1c] sm:$0xf]
  %v38 = vld [vmem:[%s1 + $0x20] sm:$0xf]
  %v39 = vld [vmem:[%s1 + $0x24] sm:$0xf]
  %v40 = vld [vmem:[%s1 + $0x28] sm:$0xf]
  %v41 = vld [vmem:[%s1 + $0x2c] sm:$0xf]
  %v42 = vld [vmem:[%s1 + $0x30] sm:$0xf]
  %v43 = vld [vmem:[%s1 + $0x34] sm:$0xf]
  %v44 = vld [vmem:[%s1 + $0x38] sm:$0xf]
  %v45 = vld [vmem:[%s1 + $0x3c] sm:$0xf]
  %v46 = vld [vmem:[%s1 + $0x40] sm:$0xf]
  %v47 = vld [vmem:[%s1 + $0x44] sm:$0xf]
  %v48 = vld [vmem:[%s1 + $0x48] sm:$0xf]
  %v49 = vld [vmem:[%s1 + $0x4c] sm:$0xf]
  %v50 = vld [vmem:[%s1 + $0x50] sm:$0xf]
  %v51 = vld [vmem:[%s1 + $0x54] sm:$0xf]
  %v52 = vld [vmem:[%s1 + $0x58] sm:$0xf]
  %v53 = vld [vmem:[%s1 + $0x5c] sm:$0xf]
  %v54 = vld [vmem:[%s1 + $0x60] sm:$0xf]
  %v55 = vld [vmem:[%s1 + $0x64] sm:$0xf]
  %v56 = vld [vmem:[%s1 + $0x68] sm:$0xf]
  %v57 = vld [vmem:[%s1 + $0x6c] sm:$0xf]
  %v58 = vld [vmem:[%s1 + $0x70] sm:$0xf]
  %v59 = vld [vmem:[%s1 + $0x74] sm:$0xf]
  %v60 = vld [vmem:[%s1 + $0x78] sm:$0xf]
  %v61 = vld [vmem:[%s1 + $0x7c] sm:$0xf]
  %v66 = vunpack.c.l.b16 %v26
  %v67 = vunpack.c.h.b16 %v26
  %v68 = vunpack.c.l.b16 %v27
  %v69 = vunpack.c.h.b16 %v27
  %v70 = vunpack.c.l.b16 %v28
  %v71 = vunpack.c.h.b16 %v28
  %v72 = vunpack.c.l.b16 %v29
  %v73 = vunpack.c.h.b16 %v29
  %v74 = vpack.c.b16 %v68, %v66
  %v75 = vpack.c.b16 %v69, %v67
  %v76 = vpack.c.b16 %v72, %v70
  %v77 = vpack.c.b16 %v73, %v71
  %v114 = vunpack.c.l.b16 %v30
  %v115 = vunpack.c.l.b16 %v31
  %v116 = vunpack.c.l.b16 %v32
  %v117 = vunpack.c.l.b16 %v33
  %v118 = vunpack.c.l.b16 %v34
  %v119 = vunpack.c.l.b16 %v35
  %v120 = vunpack.c.l.b16 %v36
  %v121 = vunpack.c.l.b16 %v37
  %v122 = vunpack.c.l.b16 %v38
  %v123 = vunpack.c.l.b16 %v39
  %v124 = vunpack.c.l.b16 %v40
  %v125 = vunpack.c.l.b16 %v41
  %v126 = vunpack.c.l.b16 %v42
  %v127 = vunpack.c.l.b16 %v43
  %v128 = vunpack.c.l.b16 %v44
  %v129 = vunpack.c.l.b16 %v45
  %v130 = vunpack.c.l.b16 %v46
  %v131 = vunpack.c.l.b16 %v47
  %v132 = vunpack.c.l.b16 %v48
  %v133 = vunpack.c.l.b16 %v49
  %v134 = vunpack.c.l.b16 %v50
  %v135 = vunpack.c.l.b16 %v51
  %v136 = vunpack.c.l.b16 %v52
  %v137 = vunpack.c.l.b16 %v53
  %v138 = vunpack.c.l.b16 %v54
  %v139 = vunpack.c.l.b16 %v55
  %v140 = vunpack.c.l.b16 %v56
  %v141 = vunpack.c.l.b16 %v57
  %v142 = vunpack.c.l.b16 %v58
  %v143 = vunpack.c.l.b16 %v59
  %v144 = vunpack.c.l.b16 %v60
  %v145 = vunpack.c.l.b16 %v61
  %v146 = vpack.c.b16 %v115, %v114
  %v147 = vpack.c.b16 %v117, %v116
  %v148 = vpack.c.b16 %v119, %v118
  %v149 = vpack.c.b16 %v121, %v120
  %v150 = vpack.c.b16 %v123, %v122
  %v151 = vpack.c.b16 %v125, %v124
  %v152 = vpack.c.b16 %v127, %v126
  %v153 = vpack.c.b16 %v129, %v128
  %v154 = vpack.c.b16 %v131, %v130
  %v155 = vpack.c.b16 %v133, %v132
  %v156 = vpack.c.b16 %v135, %v134
  %v157 = vpack.c.b16 %v137, %v136
  %v158 = vpack.c.b16 %v139, %v138
  %v159 = vpack.c.b16 %v141, %v140
  %v160 = vpack.c.b16 %v143, %v142
  %v161 = vpack.c.b16 %v145, %v144
  %178 = vmatprep.subr.bf16.mxu0 0
  %179 = vmatpush1.bf16.msra.mxu0 %v153
  %180 = vmatprep.subr.bf16.mxu0 0
  %181 = vmatpush1.bf16.msra.mxu0 %v152
  %182 = vmatprep.subr.bf16.mxu0 0
  %183 = vmatpush1.bf16.msra.mxu0 %v151
  %184 = vmatprep.subr.bf16.mxu0 0
  %185 = vmatpush1.bf16.msra.mxu0 %v150
  %186 = vmatprep.subr.bf16.mxu0 0
  %187 = vmatpush1.bf16.msra.mxu0 %v149
  %188 = vmatprep.subr.bf16.mxu0 0
  %189 = vmatpush1.bf16.msra.mxu0 %v148
  %190 = vmatprep.subr.bf16.mxu0 0
  %191 = vmatpush1.bf16.msra.mxu0 %v147
  %192 = vmatprep.subr.bf16.mxu0 0
  %193 = vmatpush1.bf16.msra.mxu0 %v146
  %194 = vmatprep.subr.bf16.mxu0 0
  %195 = vmatpush2.bf16.msra.mxu0 %v161
  %196 = vmatprep.subr.bf16.mxu0 0
  %197 = vmatpush2.bf16.msra.mxu0 %v160
  %198 = vmatprep.subr.bf16.mxu0 0
  %199 = vmatpush2.bf16.msra.mxu0 %v159
  %200 = vmatprep.subr.bf16.mxu0 0
  %201 = vmatpush2.bf16.msra.mxu0 %v158
  %202 = vmatprep.subr.bf16.mxu0 0
  %203 = vmatpush2.bf16.msra.mxu0 %v157
  %204 = vmatprep.subr.bf16.mxu0 0
  %205 = vmatpush2.bf16.msra.mxu0 %v156
  %206 = vmatprep.subr.bf16.mxu0 0
  %207 = vmatpush2.bf16.msra.mxu0 %v155
  %208 = vmatprep.subr.bf16.mxu0 0
  %209 = vmatpush2.bf16.msra.mxu0 %v154
  %210 = vmatprep.mubr.bf16.mxu0 %v75
  %211 = vmatmul.mubr.bf16.gmra.mxu0 %v74
  %v212 = vpop.f32.mrf.mxu0
  %v213 = vadd.f32 0.0, %v212
  %v214 = vpop.f32.mrf.mxu0
  %v215 = vpop.f32.mrf.mxu0
  %v216 = vadd.f32 0.0, %v215
  %v217 = vpop.f32.mrf.mxu0
  %218 = vmatprep.mubr.bf16.mxu0 %v77
  %219 = vmatmul.mubr.bf16.gmra.mxu0 %v76
  %v220 = vpop.f32.mrf.mxu0
  %v221 = vadd.f32 0.0, %v220
  %v222 = vpop.f32.mrf.mxu0
  %v223 = vpop.f32.mrf.mxu0
  %v224 = vadd.f32 0.0, %v223
  %v225 = vpop.f32.mrf.mxu0
  %226 = vdwg.mxu0
  %v227 = vadd.f32 %v22, %v213
  %v228 = vadd.f32 %v23, %v216
  %v229 = vadd.f32 %v24, %v221
  %v230 = vadd.f32 %v25, %v224
  %231 = vst [vmem:[#allocation2] sm:$0xff] %v227
  %232 = vst [vmem:[#allocation2 + $0x8] sm:$0xff] %v228
  %233 = vst [vmem:[#allocation2 + $0x10] sm:$0xff] %v229
  %234 = vst [vmem:[#allocation2 + $0x18] sm:$0xff] %v230
  // Predicated region
  $region14: #{unet_forward.75} parent=0 // pred_check
    %p235 = pneg %p14
  $region15: #{unet_forward.75} parent=0 // pred_check_branch
    %237 = sbr.rel (%p235) target = $region17
  $region16: #{unet_forward.75} parent=0 // pred_region
    %v238 = vld [vmem:[#allocation2] sm:$0xff]
    %v239 = vld [vmem:[#allocation2 + $0x8] sm:$0xff]
    %v240 = vld [vmem:[#allocation2 + $0x10] sm:$0xff]
    %v241 = vld [vmem:[#allocation2 + $0x18] sm:$0xff]
    %v242 = vpack.c.bf16 %v239, %v238
    %v243 = vpack.c.bf16 %v241, %v240
    %v246 = vunpack.c.l.b16 %v242
    %v247 = vunpack.c.h.b16 %v242
    %v248 = vunpack.c.l.b16 %v243
    %v249 = vunpack.c.h.b16 %v243
    %v250 = vpack.c.b16 %v246, %v246
    %v251 = vpack.c.b16 %v247, %v247
    %v252 = vpack.c.b16 %v248, %v248
    %v253 = vpack.c.b16 %v249, %v249
    %258 = vst [vmem:[%s2] sm:$0xf] %v250
    %259 = vst [vmem:[%s2 + $0x4] sm:$0xf] %v251
    %260 = vst [vmem:[%s2 + $0x8] sm:$0xf] %v252
    %261 = vst [vmem:[%s2 + $0xc] sm:$0xf] %v253
    %v262 = vadd.f32 %v238, %v239
    %v263 = vadd.f32 %v262, %v240
    %v264 = vadd.f32 %v263, %v241
    %v265 = vrot.slane %v264, 4
    %v266 = vadd.f32 %v264, %v265
    %v267 = vrot.slane %v266, 2
    %v268 = vadd.f32 %v266, %v267
    %v269 = vrot.slane %v268, 1
    %v270 = vadd.f32 %v268, %v269
    %v271 = vmul.f32 %v238, %v238
    %v272 = vmul.f32 %v239, %v239
    %v273 = vmul.f32 %v240, %v240
    %v274 = vmul.f32 %v241, %v241
    %v275 = vadd.f32 %v271, %v272
    %v276 = vadd.f32 %v275, %v273
    %v277 = vadd.f32 %v276, %v274
    %v278 = vrot.slane %v277, 4
    %v279 = vadd.f32 %v277, %v278
    %v280 = vrot.slane %v279, 2
    %v281 = vadd.f32 %v279, %v280
    %v282 = vrot.slane %v281, 1
    %v283 = vadd.f32 %v281, %v282
    %vm284 = vcmask 1040384
    %v285 = vsel %vm284, %v270, %v283
    %286 = vst [vmem:[%s3] sm:$0x3] %v285
  $region17: #{unet_forward.75} parent=0 // pred_fallthru
    _
  // Predicated region
  $region18: #{unet_forward.75} parent=0 // pred_check
    _
  $region19: #{unet_forward.75} parent=0 // pred_check_branch
    %288 = sbr.rel (0) target = $region21
  $region20: #{unet_forward.75} parent=0 // pred_region
    _
  $region21: #{unet_forward.75} parent=0 // pred_fallthru
    _
  // Predicated region
  $region22: #{unet_forward.75} parent=0 // pred_check
    _
  $region23: #{unet_forward.75} parent=0 // pred_check_branch
    %290 = sbr.rel (0) target = $region25
  $region24: #{unet_forward.75} parent=0 // pred_region
    _
  $region25: #{unet_forward.75} parent=0 // pred_fallthru
    _
  // Predicated region
  $region26: #{unet_forward.75} parent=0 // pred_check
    _
  $region27: #{unet_forward.75} parent=0 // pred_check_branch
    %292 = sbr.rel (0) target = $region29
  $region28: #{unet_forward.75} parent=0 // pred_region
    _
  $region29: #{unet_forward.75} parent=0 // pred_fallthru
    _
  // Predicated region
  $region30: #{unet_forward.75} parent=0 // pred_check
    _
  $region31: #{unet_forward.75} parent=0 // pred_check_branch
    %294 = sbr.rel (0) target = $region33
  $region32: #{unet_forward.75} parent=0 // pred_region
    _
  $region33: #{unet_forward.75} parent=0 // pred_fallthru
    _

// kernel: unet_forward.78
$region0: #{unet_forward.78}
  #allocation0 [shape = 'u32[]', space=smem, size = 0x4, offset = 0x4, fixed_abs, tag = 'smem constant byte address 0x4 - core index']
  #allocation1 [shape = 'u32[144,128]{1,0:T(1,128)}', space=vmem, size = 0x12000, scoped, tag = 'internal scratch']
  %s0 = inlined_call_operand.vmem [shape: bf16[8,128], index: 0, kind: input, shape index: {}]
  %s1 = inlined_call_operand.vmem [shape: f32[1,128], index: 1, kind: input, shape index: {}]
  %s2 = inlined_call_operand.vmem [shape: f32[1,128], index: 2, kind: input, shape index: {}]
  %s3 = inlined_call_operand.vmem [shape: bf16[8,128], index: 3, kind: output, shape index: {}]
  %s4 = sld [smem:[#allocation0]]
  $region22: #{unet_forward.78} parent=0
    _
  %s6 = ssub.s32 1, %s4
  %s7 = scalar_select 0, %s6, %s4
  // Predicated region
  $region2: #{unet_forward.78} parent=0 // pred_check
    _
  $region3: #{unet_forward.78} parent=0 // pred_check_branch
    %9 = sbr.rel (0) target = $region5
  $region4: #{unet_forward.78} parent=0 // pred_region
    _
  $region5: #{unet_forward.78} parent=0 // pred_fallthru
    _
  // Predicated region
  $region6: #{unet_forward.78} parent=0 // pred_check
    _
  $region7: #{unet_forward.78} parent=0 // pred_check_branch
    %11 = sbr.rel (0) target = $region9
  $region8: #{unet_forward.78} parent=0 // pred_region
    _
  $region9: #{unet_forward.78} parent=0 // pred_fallthru
    _
  // Predicated region
  $region10: #{unet_forward.78} parent=0 // pred_check
    _
  $region11: #{unet_forward.78} parent=0 // pred_check_branch
    %13 = sbr.rel (0) target = $region13
  $region12: #{unet_forward.78} parent=0 // pred_region
    _
  $region13: #{unet_forward.78} parent=0 // pred_fallthru
    _
  %v14 = vld [vmem:[%s0] sm:$0xf]
  %v15 = vunpack.c.l.bf16 %v14
  %v16 = vld [vmem:[%s1] sm:$0x1]
  %v18 = vlaneseq
  %v19 = vshrl.u32 %v18, 7
  %v20 = vsub.s32 0, %v19
  %v21 = vrot.slane %v16, %v20
  %v23 = vmul.f32 %v15, %v21
  %v24 = vld [vmem:[%s2] sm:$0x1]
  %v26 = vlaneseq
  %v27 = vshrl.u32 %v26, 7
  %v28 = vsub.s32 0, %v27
  %v29 = vrot.slane %v24, %v28
  %v31 = vadd.f32 %v23, %v29
  %v32 = vmax.f32 %v31, 0.0
  %v33 = vpack.c.bf16 %v32, %v32
  %34 = vst [vmem:[%s3] sm:$0xf] %v33
  // Predicated region
  $region14: #{unet_forward.78} parent=0 // pred_check
    _
  $region15: #{unet_forward.78} parent=0 // pred_check_branch
    %36 = sbr.rel (0) target = $region17
  $region16: #{unet_forward.78} parent=0 // pred_region
    _
  $region17: #{unet_forward.78} parent=0 // pred_fallthru
    _
  // Predicated region
  $region18: #{unet_forward.78} parent=0 // pred_check
    _
  $region19: #{unet_forward.78} parent=0 // pred_check_branch
    %38 = sbr.rel (0) target = $region21
  $region20: #{unet_forward.78} parent=0 // pred_region
    _
  $region21: #{unet_forward.78} parent=0 // pred_fallthru
    _

// kernel: unet_forward.77
$region0: #{unet_forward.77}
  #allocation0 [shape = 'u32[]', space=smem, size = 0x4, offset = 0x4, fixed_abs, tag = 'smem constant byte address 0x4 - core index']
  #allocation1 [shape = 'u32[144,128]{1,0:T(1,128)}', space=vmem, size = 0x12000, scoped, tag = 'internal scratch']
  #allocation2 [shape = 'f32[8,128]{1,0:T(8,128)}', space=vmem, size = 0x1000, scoped, tag = 'scratch operand']
  %s0 = inlined_call_operand.vmem [shape: bf16[8,256], index: 0, kind: input, shape index: {}]
  %s1 = inlined_call_operand.vmem [shape: bf16[256,128], index: 1, kind: input, shape index: {}]
  %s2 = inlined_call_operand.vmem [shape: bf16[8,128], index: 2, kind: output, shape index: {0}]
  %s3 = inlined_call_operand.vmem [shape: f32[1,2,128], index: 3, kind: output, shape index: {1}]
  %4 = xla_tuple %s2, %s3
  %s5 = sld [smem:[#allocation0]]
  $region34: #{unet_forward.77} parent=0
    _
  %s7 = ssub.s32 1, %s5
  %s8 = scalar_select 0, %s7, %s5
  // Predicated region
  $region2: #{unet_forward.77} parent=0 // pred_check
    _
  $region3: #{unet_forward.77} parent=0 // pred_check_branch
    %10 = sbr.rel (0) target = $region5
  $region4: #{unet_forward.77} parent=0 // pred_region
    _
  $region5: #{unet_forward.77} parent=0 // pred_fallthru
    _
  // Predicated region
  $region6: #{unet_forward.77} parent=0 // pred_check
    _
  $region7: #{unet_forward.77} parent=0 // pred_check_branch
    %12 = sbr.rel (0) target = $region9
  $region8: #{unet_forward.77} parent=0 // pred_region
    _
  $region9: #{unet_forward.77} parent=0 // pred_fallthru
    _
  %p14 = scmp.eq.s32.totalorder 0, 0
  // Predicated region
  $region10: #{unet_forward.77} parent=0 // pred_check
    %p15 = pneg %p14
  $region11: #{unet_forward.77} parent=0 // pred_check_branch
    %17 = sbr.rel (%p15) target = $region13
  $region12: #{unet_forward.77} parent=0 // pred_region
    %18 = vst [vmem:[#allocation2] sm:$0xff] 0.0
  $region13: #{unet_forward.77} parent=0 // pred_fallthru
    _
  %v19 = vld [vmem:[#allocation2] sm:$0xff]
  %v20 = vld [vmem:[%s0] sm:$0xff]
  %v21 = vld [vmem:[%s1] sm:$0xf]
  %v22 = vld [vmem:[%s1 + $0x4] sm:$0xf]
  %v23 = vld [vmem:[%s1 + $0x8] sm:$0xf]
  %v24 = vld [vmem:[%s1 + $0xc] sm:$0xf]
  %v25 = vld [vmem:[%s1 + $0x10] sm:$0xf]
  %v26 = vld [vmem:[%s1 + $0x14] sm:$0xf]
  %v27 = vld [vmem:[%s1 + $0x18] sm:$0xf]
  %v28 = vld [vmem:[%s1 + $0x1c] sm:$0xf]
  %v29 = vld [vmem:[%s1 + $0x20] sm:$0xf]
  %v30 = vld [vmem:[%s1 + $0x24] sm:$0xf]
  %v31 = vld [vmem:[%s1 + $0x28] sm:$0xf]
  %v32 = vld [vmem:[%s1 + $0x2c] sm:$0xf]
  %v33 = vld [vmem:[%s1 + $0x30] sm:$0xf]
  %v34 = vld [vmem:[%s1 + $0x34] sm:$0xf]
  %v35 = vld [vmem:[%s1 + $0x38] sm:$0xf]
  %v36 = vld [vmem:[%s1 + $0x3c] sm:$0xf]
  %v37 = vld [vmem:[%s1 + $0x40] sm:$0xf]
  %v38 = vld [vmem:[%s1 + $0x44] sm:$0xf]
  %v39 = vld [vmem:[%s1 + $0x48] sm:$0xf]
  %v40 = vld [vmem:[%s1 + $0x4c] sm:$0xf]
  %v41 = vld [vmem:[%s1 + $0x50] sm:$0xf]
  %v42 = vld [vmem:[%s1 + $0x54] sm:$0xf]
  %v43 = vld [vmem:[%s1 + $0x58] sm:$0xf]
  %v44 = vld [vmem:[%s1 + $0x5c] sm:$0xf]
  %v45 = vld [vmem:[%s1 + $0x60] sm:$0xf]
  %v46 = vld [vmem:[%s1 + $0x64] sm:$0xf]
  %v47 = vld [vmem:[%s1 + $0x68] sm:$0xf]
  %v48 = vld [vmem:[%s1 + $0x6c] sm:$0xf]
  %v49 = vld [vmem:[%s1 + $0x70] sm:$0xf]
  %v50 = vld [vmem:[%s1 + $0x74] sm:$0xf]
  %v51 = vld [vmem:[%s1 + $0x78] sm:$0xf]
  %v52 = vld [vmem:[%s1 + $0x7c] sm:$0xf]
  %v54 = vunpack.c.l.b16 %v20
  %v55 = vunpack.c.h.b16 %v20
  %v56 = vpack.c.b16 %v54, %v54
  %v57 = vpack.c.b16 %v55, %v55
  %v92 = vunpack.c.l.b16 %v21
  %v93 = vunpack.c.l.b16 %v22
  %v94 = vunpack.c.l.b16 %v23
  %v95 = vunpack.c.l.b16 %v24
  %v96 = vunpack.c.l.b16 %v25
  %v97 = vunpack.c.l.b16 %v26
  %v98 = vunpack.c.l.b16 %v27
  %v99 = vunpack.c.l.b16 %v28
  %v100 = vunpack.c.l.b16 %v29
  %v101 = vunpack.c.l.b16 %v30
  %v102 = vunpack.c.l.b16 %v31
  %v103 = vunpack.c.l.b16 %v32
  %v104 = vunpack.c.l.b16 %v33
  %v105 = vunpack.c.l.b16 %v34
  %v106 = vunpack.c.l.b16 %v35
  %v107 = vunpack.c.l.b16 %v36
  %v108 = vunpack.c.l.b16 %v37
  %v109 = vunpack.c.l.b16 %v38
  %v110 = vunpack.c.l.b16 %v39
  %v111 = vunpack.c.l.b16 %v40
  %v112 = vunpack.c.l.b16 %v41
  %v113 = vunpack.c.l.b16 %v42
  %v114 = vunpack.c.l.b16 %v43
  %v115 = vunpack.c.l.b16 %v44
  %v116 = vunpack.c.l.b16 %v45
  %v117 = vunpack.c.l.b16 %v46
  %v118 = vunpack.c.l.b16 %v47
  %v119 = vunpack.c.l.b16 %v48
  %v120 = vunpack.c.l.b16 %v49
  %v121 = vunpack.c.l.b16 %v50
  %v122 = vunpack.c.l.b16 %v51
  %v123 = vunpack.c.l.b16 %v52
  %v124 = vpack.c.b16 %v93, %v92
  %v125 = vpack.c.b16 %v95, %v94
  %v126 = vpack.c.b16 %v97, %v96
  %v127 = vpack.c.b16 %v99, %v98
  %v128 = vpack.c.b16 %v101, %v100
  %v129 = vpack.c.b16 %v103, %v102
  %v130 = vpack.c.b16 %v105, %v104
  %v131 = vpack.c.b16 %v107, %v106
  %v132 = vpack.c.b16 %v109, %v108
  %v133 = vpack.c.b16 %v111, %v110
  %v134 = vpack.c.b16 %v113, %v112
  %v135 = vpack.c.b16 %v115, %v114
  %v136 = vpack.c.b16 %v117, %v116
  %v137 = vpack.c.b16 %v119, %v118
  %v138 = vpack.c.b16 %v121, %v120
  %v139 = vpack.c.b16 %v123, %v122
  %156 = vmatprep.subr.bf16.mxu0 0
  %157 = vmatpush1.bf16.msra.mxu0 %v131
  %158 = vmatprep.subr.bf16.mxu0 0
  %159 = vmatpush1.bf16.msra.mxu0 %v130
  %160 = vmatprep.subr.bf16.mxu0 0
  %161 = vmatpush1.bf16.msra.mxu0 %v129
  %162 = vmatprep.subr.bf16.mxu0 0
  %163 = vmatpush1.bf16.msra.mxu0 %v128
  %164 = vmatprep.subr.bf16.mxu0 0
  %165 = vmatpush1.bf16.msra.mxu0 %v127
  %166 = vmatprep.subr.bf16.mxu0 0
  %167 = vmatpush1.bf16.msra.mxu0 %v126
  %168 = vmatprep.subr.bf16.mxu0 0
  %169 = vmatpush1.bf16.msra.mxu0 %v125
  %170 = vmatprep.subr.bf16.mxu0 0
  %171 = vmatpush1.bf16.msra.mxu0 %v124
  %172 = vmatprep.subr.bf16.mxu0 0
  %173 = vmatpush2.bf16.msra.mxu0 %v139
  %174 = vmatprep.subr.bf16.mxu0 0
  %175 = vmatpush2.bf16.msra.mxu0 %v138
  %176 = vmatprep.subr.bf16.mxu0 0
  %177 = vmatpush2.bf16.msra.mxu0 %v137
  %178 = vmatprep.subr.bf16.mxu0 0
  %179 = vmatpush2.bf16.msra.mxu0 %v136
  %180 = vmatprep.subr.bf16.mxu0 0
  %181 = vmatpush2.bf16.msra.mxu0 %v135
  %182 = vmatprep.subr.bf16.mxu0 0
  %183 = vmatpush2.bf16.msra.mxu0 %v134
  %184 = vmatprep.subr.bf16.mxu0 0
  %185 = vmatpush2.bf16.msra.mxu0 %v133
  %186 = vmatprep.subr.bf16.mxu0 0
  %187 = vmatpush2.bf16.msra.mxu0 %v132
  %188 = vmatprep.mubr.bf16.mxu0 %v57
  %189 = vmatmul.mubr.bf16.gmra.mxu0 %v56
  %v190 = vpop.f32.mrf.mxu0
  %v191 = vadd.f32 0.0, %v190
  %v192 = vpop.f32.mrf.mxu0
  %v193 = vpop.f32.mrf.mxu0
  %v194 = vpop.f32.mrf.mxu0
  %195 = vdwg.mxu0
  %v196 = vadd.f32 %v19, %v191
  %197 = vst [vmem:[#allocation2] sm:$0xff] %v196
  // Predicated region
  $region14: #{unet_forward.77} parent=0 // pred_check
    %p198 = pneg %p14
  $region15: #{unet_forward.77} parent=0 // pred_check_branch
    %200 = sbr.rel (%p198) target = $region17
  $region16: #{unet_forward.77} parent=0 // pred_region
    %v201 = vld [vmem:[#allocation2] sm:$0xff]
    %v202 = vpack.c.bf16 %v201, %v201
    %203 = vst [vmem:[%s2] sm:$0xf] %v202
    %v204 = vrot.slane %v201, 4
    %v205 = vadd.f32 %v201, %v204
    %v206 = vrot.slane %v205, 2
    %v207 = vadd.f32 %v205, %v206
    %v208 = vrot.slane %v207, 1
    %v209 = vadd.f32 %v207, %v208
    %v210 = vmul.f32 %v201, %v201
    %v211 = vrot.slane %v210, 4
    %v212 = vadd.f32 %v210, %v211
    %v213 = vrot.slane %v212, 2
    %v214 = vadd.f32 %v212, %v213
    %v215 = vrot.slane %v214, 1
    %v216 = vadd.f32 %v214, %v215
    %vm217 = vcmask 1040384
    %v218 = vsel %vm217, %v209, %v216
    %219 = vst [vmem:[%s3] sm:$0x3] %v218
  $region17: #{unet_forward.77} parent=0 // pred_fallthru
    _
  // Predicated region
  $region18: #{unet_forward.77} parent=0 // pred_check
    _
  $region19: #{unet_forward.77} parent=0 // pred_check_branch
    %221 = sbr.rel (0) target = $region21
  $region20: #{unet_forward.77} parent=0 // pred_region
    _
  $region21: #{unet_forward.77} parent=0 // pred_fallthru
    _
  // Predicated region
  $region22: #{unet_forward.77} parent=0 // pred_check
    _
  $region23: #{unet_forward.77} parent=0 // pred_check_branch
    %223 = sbr.rel (0) target = $region25
  $region24: #{unet_forward.77} parent=0 // pred_region
    _
  $region25: #{unet_forward.77} parent=0 // pred_fallthru
    _
  // Predicated region
  $region26: #{unet_forward.77} parent=0 // pred_check
    _
  $region27: #{unet_forward.77} parent=0 // pred_check_branch
    %225 = sbr.rel (0) target = $region29
  $region28: #{unet_forward.77} parent=0 // pred_region
    _
  $region29: #{unet_forward.77} parent=0 // pred_fallthru
    _
  // Predicated region
  $region30: #{unet_forward.77} parent=0 // pred_check
    _
  $region31: #{unet_forward.77} parent=0 // pred_check_branch
    %227 = sbr.rel (0) target = $region33
  $region32: #{unet_forward.77} parent=0 // pred_region
    _
  $region33: #{unet_forward.77} parent=0 // pred_fallthru
    _

// kernel: unet_forward.79
$region0: #{unet_forward.79}
  #allocation0 [shape = 'u32[]', space=smem, size = 0x4, offset = 0x4, fixed_abs, tag = 'smem constant byte address 0x4 - core index']
  #allocation1 [shape = 'u32[144,128]{1,0:T(1,128)}', space=vmem, size = 0x12000, scoped, tag = 'internal scratch']
  #allocation2 [shape = 'f32[8,128]{1,0:T(8,128)}', space=vmem, size = 0x1000, scoped, tag = 'scratch operand']
  %s0 = inlined_call_operand.vmem [shape: bf16[8,384], index: 0, kind: input, shape index: {}]
  %s1 = inlined_call_operand.vmem [shape: bf16[384,128], index: 1, kind: input, shape index: {}]
  %s2 = inlined_call_operand.vmem [shape: bf16[8,128], index: 2, kind: output, shape index: {0}]
  %s3 = inlined_call_operand.vmem [shape: f32[1,2,128], index: 3, kind: output, shape index: {1}]
  %4 = xla_tuple %s2, %s3
  %s5 = sld [smem:[#allocation0]]
  $region34: #{unet_forward.79} parent=0
    _
  %s7 = ssub.s32 1, %s5
  %s8 = scalar_select 0, %s7, %s5
  // Predicated region
  $region2: #{unet_forward.79} parent=0 // pred_check
    _
  $region3: #{unet_forward.79} parent=0 // pred_check_branch
    %10 = sbr.rel (0) target = $region5
  $region4: #{unet_forward.79} parent=0 // pred_region
    _
  $region5: #{unet_forward.79} parent=0 // pred_fallthru
    _
  // Predicated region
  $region6: #{unet_forward.79} parent=0 // pred_check
    _
  $region7: #{unet_forward.79} parent=0 // pred_check_branch
    %12 = sbr.rel (0) target = $region9
  $region8: #{unet_forward.79} parent=0 // pred_region
    _
  $region9: #{unet_forward.79} parent=0 // pred_fallthru
    _
  %p14 = scmp.eq.s32.totalorder 0, 0
  // Predicated region
  $region10: #{unet_forward.79} parent=0 // pred_check
    %p15 = pneg %p14
  $region11: #{unet_forward.79} parent=0 // pred_check_branch
    %17 = sbr.rel (%p15) target = $region13
  $region12: #{unet_forward.79} parent=0 // pred_region
    %18 = vst [vmem:[#allocation2] sm:$0xff] 0.0
  $region13: #{unet_forward.79} parent=0 // pred_fallthru
    _
  %v19 = vld [vmem:[#allocation2] sm:$0xff]
  %v20 = vld [vmem:[%s0] sm:$0xff]
  %v21 = vld [vmem:[%s0 + $0x8] sm:$0xf]
  %v22 = vld [vmem:[%s1] sm:$0xf]
  %v23 = vld [vmem:[%s1 + $0x4] sm:$0xf]
  %v24 = vld [vmem:[%s1 + $0x8] sm:$0xf]
  %v25 = vld [vmem:[%s1 + $0xc] sm:$0xf]
  %v26 = vld [vmem:[%s1 + $0x10] sm:$0xf]
  %v27 = vld [vmem:[%s1 + $0x14] sm:$0xf]
  %v28 = vld [vmem:[%s1 + $0x18] sm:$0xf]
  %v29 = vld [vmem:[%s1 + $0x1c] sm:$0xf]
  %v30 = vld [vmem:[%s1 + $0x20] sm:$0xf]
  %v31 = vld [vmem:[%s1 + $0x24] sm:$0xf]
  %v32 = vld [vmem:[%s1 + $0x28] sm:$0xf]
  %v33 = vld [vmem:[%s1 + $0x2c] sm:$0xf]
  %v34 = vld [vmem:[%s1 + $0x30] sm:$0xf]
  %v35 = vld [vmem:[%s1 + $0x34] sm:$0xf]
  %v36 = vld [vmem:[%s1 + $0x38] sm:$0xf]
  %v37 = vld [vmem:[%s1 + $0x3c] sm:$0xf]
  %v38 = vld [vmem:[%s1 + $0x40] sm:$0xf]
  %v39 = vld [vmem:[%s1 + $0x44] sm:$0xf]
  %v40 = vld [vmem:[%s1 + $0x48] sm:$0xf]
  %v41 = vld [vmem:[%s1 + $0x4c] sm:$0xf]
  %v42 = vld [vmem:[%s1 + $0x50] sm:$0xf]
  %v43 = vld [vmem:[%s1 + $0x54] sm:$0xf]
  %v44 = vld [vmem:[%s1 + $0x58] sm:$0xf]
  %v45 = vld [vmem:[%s1 + $0x5c] sm:$0xf]
  %v46 = vld [vmem:[%s1 + $0x60] sm:$0xf]
  %v47 = vld [vmem:[%s1 + $0x64] sm:$0xf]
  %v48 = vld [vmem:[%s1 + $0x68] sm:$0xf]
  %v49 = vld [vmem:[%s1 + $0x6c] sm:$0xf]
  %v50 = vld [vmem:[%s1 + $0x70] sm:$0xf]
  %v51 = vld [vmem:[%s1 + $0x74] sm:$0xf]
  %v52 = vld [vmem:[%s1 + $0x78] sm:$0xf]
  %v53 = vld [vmem:[%s1 + $0x7c] sm:$0xf]
  %v54 = vld [vmem:[%s1 + $0x80] sm:$0xf]
  %v55 = vld [vmem:[%s1 + $0x84] sm:$0xf]
  %v56 = vld [vmem:[%s1 + $0x88] sm:$0xf]
  %v57 = vld [vmem:[%s1 + $0x8c] sm:$0xf]
  %v58 = vld [vmem:[%s1 + $0x90] sm:$0xf]
  %v59 = vld [vmem:[%s1 + $0x94] sm:$0xf]
  %v60 = vld [vmem:[%s1 + $0x98] sm:$0xf]
  %v61 = vld [vmem:[%s1 + $0x9c] sm:$0xf]
  %v62 = vld [vmem:[%s1 + $0xa0] sm:$0xf]
  %v63 = vld [vmem:[%s1 + $0xa4] sm:$0xf]
  %v64 = vld [vmem:[%s1 + $0xa8] sm:$0xf]
  %v65 = vld [vmem:[%s1 + $0xac] sm:$0xf]
  %v66 = vld [vmem:[%s1 + $0xb0] sm:$0xf]
  %v67 = vld [vmem:[%s1 + $0xb4] sm:$0xf]
  %v68 = vld [vmem:[%s1 + $0xb8] sm:$0xf]
  %v69 = vld [vmem:[%s1 + $0xbc] sm:$0xf]
  %v72 = vunpack.c.l.b16 %v20
  %v73 = vunpack.c.h.b16 %v20
  %v74 = vunpack.c.l.b16 %v21
  %v75 = vpack.c.b16 %v72, %v72
  %v76 = vpack.c.b16 %v73, %v73
  %v77 = vpack.c.b16 %v74, %v74
  %v129 = vunpack.c.l.b16 %v22
  %v130 = vunpack.c.l.b16 %v23
  %v131 = vunpack.c.l.b16 %v24
  %v132 = vunpack.c.l.b16 %v25
  %v133 = vunpack.c.l.b16 %v26
  %v134 = vunpack.c.l.b16 %v27
  %v135 = vunpack.c.l.b16 %v28
  %v136 = vunpack.c.l.b16 %v29
  %v137 = vunpack.c.l.b16 %v30
  %v138 = vunpack.c.l.b16 %v31
  %v139 = vunpack.c.l.b16 %v32
  %v140 = vunpack.c.l.b16 %v33
  %v141 = vunpack.c.l.b16 %v34
  %v142 = vunpack.c.l.b16 %v35
  %v143 = vunpack.c.l.b16 %v36
  %v144 = vunpack.c.l.b16 %v37
  %v145 = vunpack.c.l.b16 %v38
  %v146 = vunpack.c.l.b16 %v39
  %v147 = vunpack.c.l.b16 %v40
  %v148 = vunpack.c.l.b16 %v41
  %v149 = vunpack.c.l.b16 %v42
  %v150 = vunpack.c.l.b16 %v43
  %v151 = vunpack.c.l.b16 %v44
  %v152 = vunpack.c.l.b16 %v45
  %v153 = vunpack.c.l.b16 %v46
  %v154 = vunpack.c.l.b16 %v47
  %v155 = vunpack.c.l.b16 %v48
  %v156 = vunpack.c.l.b16 %v49
  %v157 = vunpack.c.l.b16 %v50
  %v158 = vunpack.c.l.b16 %v51
  %v159 = vunpack.c.l.b16 %v52
  %v160 = vunpack.c.l.b16 %v53
  %v161 = vunpack.c.l.b16 %v54
  %v162 = vunpack.c.l.b16 %v55
  %v163 = vunpack.c.l.b16 %v56
  %v164 = vunpack.c.l.b16 %v57
  %v165 = vunpack.c.l.b16 %v58
  %v166 = vunpack.c.l.b16 %v59
  %v167 = vunpack.c.l.b16 %v60
  %v168 = vunpack.c.l.b16 %v61
  %v169 = vunpack.c.l.b16 %v62
  %v170 = vunpack.c.l.b16 %v63
  %v171 = vunpack.c.l.b16 %v64
  %v172 = vunpack.c.l.b16 %v65
  %v173 = vunpack.c.l.b16 %v66
  %v174 = vunpack.c.l.b16 %v67
  %v175 = vunpack.c.l.b16 %v68
  %v176 = vunpack.c.l.b16 %v69
  %v177 = vpack.c.b16 %v130, %v129
  %v178 = vpack.c.b16 %v132, %v131
  %v179 = vpack.c.b16 %v134, %v133
  %v180 = vpack.c.b16 %v136, %v135
  %v181 = vpack.c.b16 %v138, %v137
  %v182 = vpack.c.b16 %v140, %v139
  %v183 = vpack.c.b16 %v142, %v141
  %v184 = vpack.c.b16 %v144, %v143
  %v185 = vpack.c.b16 %v146, %v145
  %v186 = vpack.c.b16 %v148, %v147
  %v187 = vpack.c.b16 %v150, %v149
  %v188 = vpack.c.b16 %v152, %v151
  %v189 = vpack.c.b16 %v154, %v153
  %v190 = vpack.c.b16 %v156, %v155
  %v191 = vpack.c.b16 %v158, %v157
  %v192 = vpack.c.b16 %v160, %v159
  %v193 = vpack.c.b16 %v162, %v161
  %v194 = vpack.c.b16 %v164, %v163
  %v195 = vpack.c.b16 %v166, %v165
  %v196 = vpack.c.b16 %v168, %v167
  %v197 = vpack.c.b16 %v170, %v169
  %v198 = vpack.c.b16 %v172, %v171
  %v199 = vpack.c.b16 %v174, %v173
  %v200 = vpack.c.b16 %v176, %v175
  %225 = vmatprep.subr.bf16.mxu0 0
  %226 = vmatpush1.bf16.msra.mxu0 %v184
  %227 = vmatprep.subr.bf16.mxu0 0
  %228 = vmatpush1.bf16.msra.mxu0 %v183
  %229 = vmatprep.subr.bf16.mxu0 0
  %230 = vmatpush1.bf16.msra.mxu0 %v182
  %231 = vmatprep.subr.bf16.mxu0 0
  %232 = vmatpush1.bf16.msra.mxu0 %v181
  %233 = vmatprep.subr.bf16.mxu0 0
  %234 = vmatpush1.bf16.msra.mxu0 %v180
  %235 = vmatprep.subr.bf16.mxu0 0
  %236 = vmatpush1.bf16.msra.mxu0 %v179
  %237 = vmatprep.subr.bf16.mxu0 0
  %238 = vmatpush1.bf16.msra.mxu0 %v178
  %239 = vmatprep.subr.bf16.mxu0 0
  %240 = vmatpush1.bf16.msra.mxu0 %v177
  %241 = vmatprep.subr.bf16.mxu0 0
  %242 = vmatpush2.bf16.msra.mxu0 %v192
  %243 = vmatprep.subr.bf16.mxu0 0
  %244 = vmatpush2.bf16.msra.mxu0 %v191
  %245 = vmatprep.subr.bf16.mxu0 0
  %246 = vmatpush2.bf16.msra.mxu0 %v190
  %247 = vmatprep.subr.bf16.mxu0 0
  %248 = vmatpush2.bf16.msra.mxu0 %v189
  %249 = vmatprep.subr.bf16.mxu0 0
  %250 = vmatpush2.bf16.msra.mxu0 %v188
  %251 = vmatprep.subr.bf16.mxu0 0
  %252 = vmatpush2.bf16.msra.mxu0 %v187
  %253 = vmatprep.subr.bf16.mxu0 0
  %254 = vmatpush2.bf16.msra.mxu0 %v186
  %255 = vmatprep.subr.bf16.mxu0 0
  %256 = vmatpush2.bf16.msra.mxu0 %v185
  %257 = vmatprep.mubr.bf16.mxu0 %v76
  %258 = vmatmul.mubr.bf16.gmra.mxu0 %v75
  %v259 = vpop.f32.mrf.mxu0
  %v260 = vadd.f32 0.0, %v259
  %v261 = vpop.f32.mrf.mxu0
  %v262 = vpop.f32.mrf.mxu0
  %v263 = vpop.f32.mrf.mxu0
  %264 = vdwg.mxu0
  %265 = vmatprep.subr.bf16.mxu0 0
  %266 = vmatpush1.bf16.msra.mxu0 %v200
  %267 = vmatprep.subr.bf16.mxu0 0
  %268 = vmatpush1.bf16.msra.mxu0 %v199
  %269 = vmatprep.subr.bf16.mxu0 0
  %270 = vmatpush1.bf16.msra.mxu0 %v198
  %271 = vmatprep.subr.bf16.mxu0 0
  %272 = vmatpush1.bf16.msra.mxu0 %v197
  %273 = vmatprep.subr.bf16.mxu0 0
  %274 = vmatpush1.bf16.msra.mxu0 %v196
  %275 = vmatprep.subr.bf16.mxu0 0
  %276 = vmatpush1.bf16.msra.mxu0 %v195
  %277 = vmatprep.subr.bf16.mxu0 0
  %278 = vmatpush1.bf16.msra.mxu0 %v194
  %279 = vmatprep.subr.bf16.mxu0 0
  %280 = vmatpush1.bf16.msra.mxu0 %v193
  %281 = vmatprep.subr.bf16.mxu0 0
  %282 = vmatpush2.bf16.msra.mxu0 0
  %283 = vmatprep.subr.bf16.mxu0 0
  %284 = vmatpush2.bf16.msra.mxu0 0
  %285 = vmatprep.subr.bf16.mxu0 0
  %286 = vmatpush2.bf16.msra.mxu0 0
  %287 = vmatprep.subr.bf16.mxu0 0
  %288 = vmatpush2.bf16.msra.mxu0 0
  %289 = vmatprep.subr.bf16.mxu0 0
  %290 = vmatpush2.bf16.msra.mxu0 0
  %291 = vmatprep.subr.bf16.mxu0 0
  %292 = vmatpush2.bf16.msra.mxu0 0
  %293 = vmatprep.subr.bf16.mxu0 0
  %294 = vmatpush2.bf16.msra.mxu0 0
  %295 = vmatprep.subr.bf16.mxu0 0
  %296 = vmatpush2.bf16.msra.mxu0 0
  %297 = vmatprep.mubr.bf16.mxu0 0
  %298 = vmatmul.mubr.bf16.gmra.mxu0 %v77
  %v299 = vpop.f32.mrf.mxu0
  %v300 = vadd.f32 %v260, %v299
  %v301 = vpop.f32.mrf.mxu0
  %v302 = vpop.f32.mrf.mxu0
  %v303 = vpop.f32.mrf.mxu0
  %304 = vdwg.mxu0
  %v305 = vadd.f32 %v19, %v300
  %306 = vst [vmem:[#allocation2] sm:$0xff] %v305
  // Predicated region
  $region14: #{unet_forward.79} parent=0 // pred_check
    %p307 = pneg %p14
  $region15: #{unet_forward.79} parent=0 // pred_check_branch
    %309 = sbr.rel (%p307) target = $region17
  $region16: #{unet_forward.79} parent=0 // pred_region
    %v310 = vld [vmem:[#allocation2] sm:$0xff]
    %v311 = vpack.c.bf16 %v310, %v310
    %312 = vst [vmem:[%s2] sm:$0xf] %v311
    %v313 = vrot.slane %v310, 4
    %v314 = vadd.f32 %v310, %v313
    %v315 = vrot.slane %v314, 2
    %v316 = vadd.f32 %v314, %v315
    %v317 = vrot.slane %v316, 1
    %v318 = vadd.f32 %v316, %v317
    %v319 = vmul.f32 %v310, %v310
    %v320 = vrot.slane %v319, 4
    %v321 = vadd.f32 %v319, %v320
    %v322 = vrot.slane %v321, 2
    %v323 = vadd.f32 %v321, %v322
    %v324 = vrot.slane %v323, 1
    %v325 = vadd.f32 %v323, %v324
    %vm326 = vcmask 1040384
    %v327 = vsel %vm326, %v318, %v325
    %328 = vst [vmem:[%s3] sm:$0x3] %v327
  $region17: #{unet_forward.79} parent=0 // pred_fallthru
    _
  // Predicated region
  $region18: #{unet_forward.79} parent=0 // pred_check
    _
  $region19: #{unet_forward.79} parent=0 // pred_check_branch
    %330 = sbr.rel (0) target = $region21
  $region20: #{unet_forward.79} parent=0 // pred_region
    _
  $region21: #{unet_forward.79} parent=0 // pred_fallthru
    _
  // Predicated region
  $region22: #{unet_forward.79} parent=0 // pred_check
    _
  $region23: #{unet_forward.79} parent=0 // pred_check_branch
    %332 = sbr.rel (0) target = $region25
  $region24: #{unet_forward.79} parent=0 // pred_region
    _
  $region25: #{unet_forward.79} parent=0 // pred_fallthru
    _
  // Predicated region
  $region26: #{unet_forward.79} parent=0 // pred_check
    _
  $region27: #{unet_forward.79} parent=0 // pred_check_branch
    %334 = sbr.rel (0) target = $region29
  $region28: #{unet_forward.79} parent=0 // pred_region
    _
  $region29: #{unet_forward.79} parent=0 // pred_fallthru
    _
  // Predicated region
  $region30: #{unet_forward.79} parent=0 // pred_check
    _
  $region31: #{unet_forward.79} parent=0 // pred_check_branch
    %336 = sbr.rel (0) target = $region33
  $region32: #{unet_forward.79} parent=0 // pred_region
    _
  $region33: #{unet_forward.79} parent=0 // pred_fallthru
    _

// kernel: unet_forward.83
$region0: #{unet_forward.83}
  #allocation0 [shape = 'u32[]', space=smem, size = 0x4, offset = 0x4, fixed_abs, tag = 'smem constant byte address 0x4 - core index']
  #allocation1 [shape = 'u32[144,128]{1,0:T(1,128)}', space=vmem, size = 0x12000, scoped, tag = 'internal scratch']
  #allocation2 [shape = 'f32[8,128]{1,0:T(8,128)}', space=vmem, size = 0x1000, scoped, tag = 'scratch operand']
  %s0 = inlined_call_operand.vmem [shape: bf16[8,1024], index: 0, kind: input, shape index: {}]
  %s1 = inlined_call_operand.vmem [shape: bf16[1024,128], index: 1, kind: input, shape index: {}]
  %s2 = inlined_call_operand.vmem [shape: bf16[8,128], index: 2, kind: output, shape index: {0}]
  %s3 = inlined_call_operand.vmem [shape: f32[1,2,128], index: 3, kind: output, shape index: {1}]
  %4 = xla_tuple %s2, %s3
  %s5 = sld [smem:[#allocation0]]
  $region57: #{unet_forward.83} parent=0
    _
  %s7 = ssub.s32 1, %s5
  %s8 = scalar_select 0, %s7, %s5
  loop: start=0, step=1, limit=4
  $region2: #{unet_forward.83} parent=0 // loop_pre_header
    _
  $region3: #{unet_forward.83} parent=0 // loop_header
    %s10 = sphi 0, %s14
    %p11 = scmp.ge.s32.totalorder %s10, 4
    %s17 = sphi 0, %s29
    %s18 = sphi 0, %s25
    %s19 = sphi 0, %s17
    %s20 = sphi 0, %s18
    %s21 = sphi 0, %s19
    %s22 = sphi 0, %s20
    %s34 = sphi 0, %s36
    %s37 = sphi 0, %s34
    %s38 = sphi 0, %s37
    %s54 = sphi 0, %s38
    %s60 = sphi 0, %s62
    %s63 = sphi 0, %s60
    %s64 = sphi 0, %s63
    %s80 = sphi 0, %s64
    %s86 = sphi 0, %s88
    %s89 = sphi 0, %s86
    %s90 = sphi 0, %s89
    %s106 = sphi 0, %s90
    %s112 = sphi 0, %s114
    %s115 = sphi 0, %s112
    %s116 = sphi 0, %s115
    %s132 = sphi 0, %s116
  $region4: #{unet_forward.83} parent=0 // loop_header_branch
    %13 = sbr.rel (%p11) target = $region8
  $region5: #{unet_forward.83} parent=0 // loop_body
    %s15 = ssub.s32 %s10, 1
    %s16 = ssub.s32 %s10, 2
    %s23 = sadd.s32 1, %s18
    %p24 = scmp.ge.s32.totalorder %s23, 2
    %s25 = scalar_select %p24, 0, %s23
    %s26 = sadd.s32 1, %s17
    %s27 = scalar_select %p24, %s26, %s17
    %p28 = scmp.ge.s32.totalorder %s27, 1
    %s29 = scalar_select %p28, 0, %s27
    %s30 = ssub.s32 %s17, %s29
    %s31 = ssub.s32 %s18, %s25
    %s32 = sor.u32 %s30, %s31
    %p33 = scmp.eq.s32.totalorder %s32, 0
    %s35 = sadd.s32 %s34, 1
    %s36 = scalar_select %p33, %s34, %s35
    %p39 = pneg %p33
    %p40 = scmp.eq.s32.totalorder %s10, 1
    %p41 = por %p39, %p40
    %p42 = scmp.ne.s32.totalorder %s34, %s37
    %p43 = scmp.eq.s32.totalorder %s10, 0
    %p44 = por %p42, %p43
    %p45 = scmp.ne.s32.totalorder %s34, %s37
    %p46 = scmp.eq.s32.totalorder %s15, 1
    %p47 = por %p45, %p46
    %p48 = scmp.ne.s32.totalorder %s37, %s38
    %p49 = scmp.eq.s32.totalorder %s15, 0
    %p50 = por %p48, %p49
    %p51 = scmp.ne.s32.totalorder %s37, %s38
    %p52 = scmp.eq.s32.totalorder %s16, 1
    %p53 = por %p51, %p52
    %p55 = scmp.ne.s32.totalorder %s38, %s54
    %p56 = scmp.eq.s32.totalorder %s16, 0
    %p57 = por %p55, %p56
    %s58 = ssub.s32 %s18, %s25
    %p59 = scmp.eq.s32.totalorder %s58, 0
    %s61 = sadd.s32 %s60, 1
    %s62 = scalar_select %p59, %s60, %s61
    %p65 = pneg %p59
    %p66 = scmp.eq.s32.totalorder %s10, 1
    %p67 = por %p65, %p66
    %p68 = scmp.ne.s32.totalorder %s60, %s63
    %p69 = scmp.eq.s32.totalorder %s10, 0
    %p70 = por %p68, %p69
    %p71 = scmp.ne.s32.totalorder %s60, %s63
    %p72 = scmp.eq.s32.totalorder %s15, 1
    %p73 = por %p71, %p72
    %p74 = scmp.ne.s32.totalorder %s63, %s64
    %p75 = scmp.eq.s32.totalorder %s15, 0
    %p76 = por %p74, %p75
    %p77 = scmp.ne.s32.totalorder %s63, %s64
    %p78 = scmp.eq.s32.totalorder %s16, 1
    %p79 = por %p77, %p78
    %p81 = scmp.ne.s32.totalorder %s64, %s80
    %p82 = scmp.eq.s32.totalorder %s16, 0
    %p83 = por %p81, %p82
    %s84 = ssub.s32 %s17, %s29
    %p85 = scmp.eq.s32.totalorder %s84, 0
    %s87 = sadd.s32 %s86, 1
    %s88 = scalar_select %p85, %s86, %s87
    %p91 = pneg %p85
    %p92 = scmp.eq.s32.totalorder %s10, 1
    %p93 = por %p91, %p92
    %p94 = scmp.ne.s32.totalorder %s86, %s89
    %p95 = scmp.eq.s32.totalorder %s10, 0
    %p96 = por %p94, %p95
    %p97 = scmp.ne.s32.totalorder %s86, %s89
    %p98 = scmp.eq.s32.totalorder %s15, 1
    %p99 = por %p97, %p98
    %p100 = scmp.ne.s32.totalorder %s89, %s90
    %p101 = scmp.eq.s32.totalorder %s15, 0
    %p102 = por %p100, %p101
    %p103 = scmp.ne.s32.totalorder %s89, %s90
    %p104 = scmp.eq.s32.totalorder %s16, 1
    %p105 = por %p103, %p104
    %p107 = scmp.ne.s32.totalorder %s90, %s106
    %p108 = scmp.eq.s32.totalorder %s16, 0
    %p109 = por %p107, %p108
    %s110 = ssub.s32 %s17, %s29
    %p111 = scmp.eq.s32.totalorder %s110, 0
    %s113 = sadd.s32 %s112, 1
    %s114 = scalar_select %p111, %s112, %s113
    %p117 = pneg %p111
    %p118 = scmp.eq.s32.totalorder %s10, 1
    %p119 = por %p117, %p118
    %p120 = scmp.ne.s32.totalorder %s112, %s115
    %p121 = scmp.eq.s32.totalorder %s10, 0
    %p122 = por %p120, %p121
    %p123 = scmp.ne.s32.totalorder %s112, %s115
    %p124 = scmp.eq.s32.totalorder %s15, 1
    %p125 = por %p123, %p124
    %p126 = scmp.ne.s32.totalorder %s115, %s116
    %p127 = scmp.eq.s32.totalorder %s15, 0
    %p128 = por %p126, %p127
    %p129 = scmp.ne.s32.totalorder %s115, %s116
    %p130 = scmp.eq.s32.totalorder %s16, 1
    %p131 = por %p129, %p130
    %p133 = scmp.ne.s32.totalorder %s116, %s132
    %p134 = scmp.eq.s32.totalorder %s16, 0
    %p135 = por %p133, %p134
    %p136 = scmp.le.s32.totalorder 1, %s10
    %p137 = scmp.lt.s32.totalorder %s10, 3
    %p138 = pnand %p136, %p137
    %p139 = pneg %p138
    // Predicated region
    $region9: #{unet_forward.83} parent=5 // pred_check
      _
    $region10: #{unet_forward.83} parent=5 // pred_check_branch
      %141 = sbr.rel (%p138) target = $region12
    $region11: #{unet_forward.83} parent=5 // pred_region
      %s142 = ssub.s32 %s10, 1
    $region12: #{unet_forward.83} parent=5 // pred_fallthru
      _
    %p143 = scmp.lt.s32.totalorder %s10, 2
    // Predicated region
    $region13: #{unet_forward.83} parent=5 // pred_check
      %p144 = pneg %p143
    $region14: #{unet_forward.83} parent=5 // pred_check_branch
      %146 = sbr.rel (%p144) target = $region16
    $region15: #{unet_forward.83} parent=5 // pred_region
      // Predicated region
      $region17: #{unet_forward.83} parent=15 // pred_check
        %p147 = pneg %p44
      $region18: #{unet_forward.83} parent=15 // pred_check_branch
        %149 = sbr.rel (%p147) target = $region20
      $region19: #{unet_forward.83} parent=15 // pred_region
        %s150 = smul.u32 4, %s18
        %p151 = scmp.lt.s32.totalorder %s17, 0
        %s152 = scalar_select %p151, %s17, 0
        %p153 = scmp.lt.s32.totalorder %s150, 7
        %s154 = scalar_select %p153, %s150, 7
        %s155 = smul.addr %s152, 8
        %s156 = sadd.s32 %s154, %s155
        %s157 = smul.addr %s156, 4
        %s158 = scalar_lea.vmem %s0, %s157
        %s159 = smul.u32 4, %s18
      $region20: #{unet_forward.83} parent=15 // pred_fallthru
        _
      // Predicated region
      $region21: #{unet_forward.83} parent=15 // pred_check
        %p160 = pneg %p70
      $region22: #{unet_forward.83} parent=15 // pred_check_branch
        %162 = sbr.rel (%p160) target = $region24
      $region23: #{unet_forward.83} parent=15 // pred_region
        %s163 = smul.u32 64, %s18
        %p164 = scmp.lt.s32.totalorder %s163, 127
        %s165 = scalar_select %p164, %s163, 127
        %s166 = smul.addr %s165, 4
        %s167 = scalar_lea.vmem %s1, %s166
        %s168 = smul.u32 64, %s18
      $region24: #{unet_forward.83} parent=15 // pred_fallthru
        _
    $region16: #{unet_forward.83} parent=5 // pred_fallthru
      _
    %p169 = scmp.le.s32.totalorder 1, %s10
    %p170 = scmp.lt.s32.totalorder %s10, 3
    %p171 = pnand %p169, %p170
    %p172 = pneg %p171
    // Predicated region
    $region25: #{unet_forward.83} parent=5 // pred_check
      _
    $region26: #{unet_forward.83} parent=5 // pred_check_branch
      %174 = sbr.rel (%p171) target = $region28
    $region27: #{unet_forward.83} parent=5 // pred_region
      %s175 = ssub.s32 %s10, 1
      %s176 = smul.u32 4, %s20
      %p177 = scmp.lt.s32.totalorder %s19, 0
      %s178 = scalar_select %p177, %s19, 0
      %p179 = scmp.lt.s32.totalorder %s176, 7
      %s180 = scalar_select %p179, %s176, 7
      %s181 = smul.addr %s178, 8
      %s182 = sadd.s32 %s180, %s181
      %s183 = smul.addr %s182, 4
      %s184 = scalar_lea.vmem %s0, %s183
      %p185 = pneg %p50
      %p186 = pneg %p47
      %s187 = smul.u32 64, %s20
      %p188 = scmp.lt.s32.totalorder %s187, 127
      %s189 = scalar_select %p188, %s187, 127
      %s190 = smul.addr %s189, 4
      %s191 = scalar_lea.vmem %s1, %s190
      %p192 = pneg %p76
      %p193 = pneg %p73
      %p194 = pneg %p102
      %p195 = pneg %p99
      %p196 = scmp.lt.s32.totalorder %s19, 0
      %s197 = scalar_select %p196, %s19, 0
      %s198 = smul.addr %s197, 4
      %s199 = scalar_lea.vmem %s2, %s198
      %p200 = pneg %p128
      %p201 = pneg %p125
      %p202 = scmp.lt.s32.totalorder %s19, 0
      %s203 = scalar_select %p202, %s19, 0
      %s204 = smul.addr %s203, 2
      %s205 = scalar_lea.vmem %s3, %s204
      %s206 = smul.u32 4, %s20
      %p207 = scmp.lt.s32.totalorder %s19, 0
      %s208 = scalar_select %p207, %s19, 0
      %p209 = scmp.lt.s32.totalorder %s206, 7
      %s210 = scalar_select %p209, %s206, 7
      %s211 = smul.addr %s208, 8
      %s212 = sadd.s32 %s210, %s211
      %s213 = smul.addr %s212, 4
      %s214 = scalar_lea.vmem %s0, %s213
      %s215 = smul.u32 4, %s20
      %s216 = smul.u32 64, %s20
      %p217 = scmp.lt.s32.totalorder %s216, 127
      %s218 = scalar_select %p217, %s216, 127
      %s219 = smul.addr %s218, 4
      %s220 = scalar_lea.vmem %s1, %s219
      %s221 = smul.u32 64, %s20
      %p222 = scmp.lt.s32.totalorder %s19, 0
      %s223 = scalar_select %p222, %s19, 0
      %s224 = smul.addr %s223, 4
      %s225 = scalar_lea.vmem %s2, %s224
      %p226 = scmp.lt.s32.totalorder %s19, 0
      %s227 = scalar_select %p226, %s19, 0
      %s228 = smul.addr %s227, 2
      %s229 = scalar_lea.vmem %s3, %s228
      %p231 = scmp.eq.s32.totalorder %s20, 0
      // Predicated region
      $region29: #{unet_forward.83} parent=27 // pred_check
        %p232 = pneg %p231
      $region30: #{unet_forward.83} parent=27 // pred_check_branch
        %234 = sbr.rel (%p232) target = $region32
      $region31: #{unet_forward.83} parent=27 // pred_region
        %235 = vst [vmem:[#allocation2] sm:$0xff] 0.0
      $region32: #{unet_forward.83} parent=27 // pred_fallthru
        _
      %v236 = vld [vmem:[#allocation2] sm:$0xff]
      %v237 = vld [vmem:[%s214] sm:$0xff]
      %v238 = vld [vmem:[%s214 + $0x8] sm:$0xff]
      %v239 = vld [vmem:[%s220] sm:$0xf]
      %v240 = vld [vmem:[%s220 + $0x4] sm:$0xf]
      %v241 = vld [vmem:[%s220 + $0x8] sm:$0xf]
      %v242 = vld [vmem:[%s220 + $0xc] sm:$0xf]
      %v243 = vld [vmem:[%s220 + $0x10] sm:$0xf]
      %v244 = vld [vmem:[%s220 + $0x14] sm:$0xf]
      %v245 = vld [vmem:[%s220 + $0x18] sm:$0xf]
      %v246 = vld [vmem:[%s220 + $0x1c] sm:$0xf]
      %v247 = vld [vmem:[%s220 + $0x20] sm:$0xf]
      %v248 = vld [vmem:[%s220 + $0x24] sm:$0xf]
      %v249 = vld [vmem:[%s220 + $0x28] sm:$0xf]
      %v250 = vld [vmem:[%s220 + $0x2c] sm:$0xf]
      %v251 = vld [vmem:[%s220 + $0x30] sm:$0xf]
      %v252 = vld [vmem:[%s220 + $0x34] sm:$0xf]
      %v253 = vld [vmem:[%s220 + $0x38] sm:$0xf]
      %v254 = vld [vmem:[%s220 + $0x3c] sm:$0xf]
      %v255 = vld [vmem:[%s220 + $0x40] sm:$0xf]
      %v256 = vld [vmem:[%s220 + $0x44] sm:$0xf]
      %v257 = vld [vmem:[%s220 + $0x48] sm:$0xf]
      %v258 = vld [vmem:[%s220 + $0x4c] sm:$0xf]
      %v259 = vld [vmem:[%s220 + $0x50] sm:$0xf]
      %v260 = vld [vmem:[%s220 + $0x54] sm:$0xf]
      %v261 = vld [vmem:[%s220 + $0x58] sm:$0xf]
      %v262 = vld [vmem:[%s220 + $0x5c] sm:$0xf]
      %v263 = vld [vmem:[%s220 + $0x60] sm:$0xf]
      %v264 = vld [vmem:[%s220 + $0x64] sm:$0xf]
      %v265 = vld [vmem:[%s220 + $0x68] sm:$0xf]
      %v266 = vld [vmem:[%s220 + $0x6c] sm:$0xf]
      %v267 = vld [vmem:[%s220 + $0x70] sm:$0xf]
      %v268 = vld [vmem:[%s220 + $0x74] sm:$0xf]
      %v269 = vld [vmem:[%s220 + $0x78] sm:$0xf]
      %v270 = vld [vmem:[%s220 + $0x7c] sm:$0xf]
      %v271 = vld [vmem:[%s220 + $0x80] sm:$0xf]
      %v272 = vld [vmem:[%s220 + $0x84] sm:$0xf]
      %v273 = vld [vmem:[%s220 + $0x88] sm:$0xf]
      %v274 = vld [vmem:[%s220 + $0x8c] sm:$0xf]
      %v275 = vld [vmem:[%s220 + $0x90] sm:$0xf]
      %v276 = vld [vmem:[%s220 + $0x94] sm:$0xf]
      %v277 = vld [vmem:[%s220 + $0x98] sm:$0xf]
      %v278 = vld [vmem:[%s220 + $0x9c] sm:$0xf]
      %v279 = vld [vmem:[%s220 + $0xa0] sm:$0xf]
      %v280 = vld [vmem:[%s220 + $0xa4] sm:$0xf]
      %v281 = vld [vmem:[%s220 + $0xa8] sm:$0xf]
      %v282 = vld [vmem:[%s220 + $0xac] sm:$0xf]
      %v283 = vld [vmem:[%s220 + $0xb0] sm:$0xf]
      %v284 = vld [vmem:[%s220 + $0xb4] sm:$0xf]
      %v285 = vld [vmem:[%s220 + $0xb8] sm:$0xf]
      %v286 = vld [vmem:[%s220 + $0xbc] sm:$0xf]
      %v287 = vld [vmem:[%s220 + $0xc0] sm:$0xf]
      %v288 = vld [vmem:[%s220 + $0xc4] sm:$0xf]
      %v289 = vld [vmem:[%s220 + $0xc8] sm:$0xf]
      %v290 = vld [vmem:[%s220 + $0xcc] sm:$0xf]
      %v291 = vld [vmem:[%s220 + $0xd0] sm:$0xf]
      %v292 = vld [vmem:[%s220 + $0xd4] sm:$0xf]
      %v293 = vld [vmem:[%s220 + $0xd8] sm:$0xf]
      %v294 = vld [vmem:[%s220 + $0xdc] sm:$0xf]
      %v295 = vld [vmem:[%s220 + $0xe0] sm:$0xf]
      %v296 = vld [vmem:[%s220 + $0xe4] sm:$0xf]
      %v297 = vld [vmem:[%s220 + $0xe8] sm:$0xf]
      %v298 = vld [vmem:[%s220 + $0xec] sm:$0xf]
      %v299 = vld [vmem:[%s220 + $0xf0] sm:$0xf]
      %v300 = vld [vmem:[%s220 + $0xf4] sm:$0xf]
      %v301 = vld [vmem:[%s220 + $0xf8] sm:$0xf]
      %v302 = vld [vmem:[%s220 + $0xfc] sm:$0xf]
      %v305 = vunpack.c.l.b16 %v237
      %v306 = vunpack.c.h.b16 %v237
      %v307 = vunpack.c.l.b16 %v238
      %v308 = vunpack.c.h.b16 %v238
      %v309 = vpack.c.b16 %v305, %v305
      %v310 = vpack.c.b16 %v306, %v306
      %v311 = vpack.c.b16 %v307, %v307
      %v312 = vpack.c.b16 %v308, %v308
      %v381 = vunpack.c.l.b16 %v239
      %v382 = vunpack.c.l.b16 %v240
      %v383 = vunpack.c.l.b16 %v241
      %v384 = vunpack.c.l.b16 %v242
      %v385 = vunpack.c.l.b16 %v243
      %v386 = vunpack.c.l.b16 %v244
      %v387 = vunpack.c.l.b16 %v245
      %v388 = vunpack.c.l.b16 %v246
      %v389 = vunpack.c.l.b16 %v247
      %v390 = vunpack.c.l.b16 %v248
      %v391 = vunpack.c.l.b16 %v249
      %v392 = vunpack.c.l.b16 %v250
      %v393 = vunpack.c.l.b16 %v251
      %v394 = vunpack.c.l.b16 %v252
      %v395 = vunpack.c.l.b16 %v253
      %v396 = vunpack.c.l.b16 %v254
      %v397 = vunpack.c.l.b16 %v255
      %v398 = vunpack.c.l.b16 %v256
      %v399 = vunpack.c.l.b16 %v257
      %v400 = vunpack.c.l.b16 %v258
      %v401 = vunpack.c.l.b16 %v259
      %v402 = vunpack.c.l.b16 %v260
      %v403 = vunpack.c.l.b16 %v261
      %v404 = vunpack.c.l.b16 %v262
      %v405 = vunpack.c.l.b16 %v263
      %v406 = vunpack.c.l.b16 %v264
      %v407 = vunpack.c.l.b16 %v265
      %v408 = vunpack.c.l.b16 %v266
      %v409 = vunpack.c.l.b16 %v267
      %v410 = vunpack.c.l.b16 %v268
      %v411 = vunpack.c.l.b16 %v269
      %v412 = vunpack.c.l.b16 %v270
      %v413 = vunpack.c.l.b16 %v271
      %v414 = vunpack.c.l.b16 %v272
      %v415 = vunpack.c.l.b16 %v273
      %v416 = vunpack.c.l.b16 %v274
      %v417 = vunpack.c.l.b16 %v275
      %v418 = vunpack.c.l.b16 %v276
      %v419 = vunpack.c.l.b16 %v277
      %v420 = vunpack.c.l.b16 %v278
      %v421 = vunpack.c.l.b16 %v279
      %v422 = vunpack.c.l.b16 %v280
      %v423 = vunpack.c.l.b16 %v281
      %v424 = vunpack.c.l.b16 %v282
      %v425 = vunpack.c.l.b16 %v283
      %v426 = vunpack.c.l.b16 %v284
      %v427 = vunpack.c.l.b16 %v285
      %v428 = vunpack.c.l.b16 %v286
      %v429 = vunpack.c.l.b16 %v287
      %v430 = vunpack.c.l.b16 %v288
      %v431 = vunpack.c.l.b16 %v289
      %v432 = vunpack.c.l.b16 %v290
      %v433 = vunpack.c.l.b16 %v291
      %v434 = vunpack.c.l.b16 %v292
      %v435 = vunpack.c.l.b16 %v293
      %v436 = vunpack.c.l.b16 %v294
      %v437 = vunpack.c.l.b16 %v295
      %v438 = vunpack.c.l.b16 %v296
      %v439 = vunpack.c.l.b16 %v297
      %v440 = vunpack.c.l.b16 %v298
      %v441 = vunpack.c.l.b16 %v299
      %v442 = vunpack.c.l.b16 %v300
      %v443 = vunpack.c.l.b16 %v301
      %v444 = vunpack.c.l.b16 %v302
      %v445 = vpack.c.b16 %v382, %v381
      %v446 = vpack.c.b16 %v384, %v383
      %v447 = vpack.c.b16 %v386, %v385
      %v448 = vpack.c.b16 %v388, %v387
      %v449 = vpack.c.b16 %v390, %v389
      %v450 = vpack.c.b16 %v392, %v391
      %v451 = vpack.c.b16 %v394, %v393
      %v452 = vpack.c.b16 %v396, %v395
      %v453 = vpack.c.b16 %v398, %v397
      %v454 = vpack.c.b16 %v400, %v399
      %v455 = vpack.c.b16 %v402, %v401
      %v456 = vpack.c.b16 %v404, %v403
      %v457 = vpack.c.b16 %v406, %v405
      %v458 = vpack.c.b16 %v408, %v407
      %v459 = vpack.c.b16 %v410, %v409
      %v460 = vpack.c.b16 %v412, %v411
      %v461 = vpack.c.b16 %v414, %v413
      %v462 = vpack.c.b16 %v416, %v415
      %v463 = vpack.c.b16 %v418, %v417
      %v464 = vpack.c.b16 %v420, %v419
      %v465 = vpack.c.b16 %v422, %v421
      %v466 = vpack.c.b16 %v424, %v423
      %v467 = vpack.c.b16 %v426, %v425
      %v468 = vpack.c.b16 %v428, %v427
      %v469 = vpack.c.b16 %v430, %v429
      %v470 = vpack.c.b16 %v432, %v431
      %v471 = vpack.c.b16 %v434, %v433
      %v472 = vpack.c.b16 %v436, %v435
      %v473 = vpack.c.b16 %v438, %v437
      %v474 = vpack.c.b16 %v440, %v439
      %v475 = vpack.c.b16 %v442, %v441
      %v476 = vpack.c.b16 %v444, %v443
      %509 = vmatprep.subr.bf16.mxu0 0
      %510 = vmatpush1.bf16.msra.mxu0 %v452
      %511 = vmatprep.subr.bf16.mxu0 0
      %512 = vmatpush1.bf16.msra.mxu0 %v451
      %513 = vmatprep.subr.bf16.mxu0 0
      %514 = vmatpush1.bf16.msra.mxu0 %v450
      %515 = vmatprep.subr.bf16.mxu0 0
      %516 = vmatpush1.bf16.msra.mxu0 %v449
      %517 = vmatprep.subr.bf16.mxu0 0
      %518 = vmatpush1.bf16.msra.mxu0 %v448
      %519 = vmatprep.subr.bf16.mxu0 0
      %520 = vmatpush1.bf16.msra.mxu0 %v447
      %521 = vmatprep.subr.bf16.mxu0 0
      %522 = vmatpush1.bf16.msra.mxu0 %v446
      %523 = vmatprep.subr.bf16.mxu0 0
      %524 = vmatpush1.bf16.msra.mxu0 %v445
      %525 = vmatprep.subr.bf16.mxu0 0
      %526 = vmatpush2.bf16.msra.mxu0 %v460
      %527 = vmatprep.subr.bf16.mxu0 0
      %528 = vmatpush2.bf16.msra.mxu0 %v459
      %529 = vmatprep.subr.bf16.mxu0 0
      %530 = vmatpush2.bf16.msra.mxu0 %v458
      %531 = vmatprep.subr.bf16.mxu0 0
      %532 = vmatpush2.bf16.msra.mxu0 %v457
      %533 = vmatprep.subr.bf16.mxu0 0
      %534 = vmatpush2.bf16.msra.mxu0 %v456
      %535 = vmatprep.subr.bf16.mxu0 0
      %536 = vmatpush2.bf16.msra.mxu0 %v455
      %537 = vmatprep.subr.bf16.mxu0 0
      %538 = vmatpush2.bf16.msra.mxu0 %v454
      %539 = vmatprep.subr.bf16.mxu0 0
      %540 = vmatpush2.bf16.msra.mxu0 %v453
      %541 = vmatprep.mubr.bf16.mxu0 %v310
      %542 = vmatmul.mubr.bf16.gmra.mxu0 %v309
      %v543 = vpop.f32.mrf.mxu0
      %v544 = vadd.f32 0.0, %v543
      %v545 = vpop.f32.mrf.mxu0
      %v546 = vpop.f32.mrf.mxu0
      %v547 = vpop.f32.mrf.mxu0
      %548 = vdwg.mxu0
      %549 = vmatprep.subr.bf16.mxu0 0
      %550 = vmatpush1.bf16.msra.mxu0 %v468
      %551 = vmatprep.subr.bf16.mxu0 0
      %552 = vmatpush1.bf16.msra.mxu0 %v467
      %553 = vmatprep.subr.bf16.mxu0 0
      %554 = vmatpush1.bf16.msra.mxu0 %v466
      %555 = vmatprep.subr.bf16.mxu0 0
      %556 = vmatpush1.bf16.msra.mxu0 %v465
      %557 = vmatprep.subr.bf16.mxu0 0
      %558 = vmatpush1.bf16.msra.mxu0 %v464
      %559 = vmatprep.subr.bf16.mxu0 0
      %560 = vmatpush1.bf16.msra.mxu0 %v463
      %561 = vmatprep.subr.bf16.mxu0 0
      %562 = vmatpush1.bf16.msra.mxu0 %v462
      %563 = vmatprep.subr.bf16.mxu0 0
      %564 = vmatpush1.bf16.msra.mxu0 %v461
      %565 = vmatprep.subr.bf16.mxu0 0
      %566 = vmatpush2.bf16.msra.mxu0 %v476
      %567 = vmatprep.subr.bf16.mxu0 0
      %568 = vmatpush2.bf16.msra.mxu0 %v475
      %569 = vmatprep.subr.bf16.mxu0 0
      %570 = vmatpush2.bf16.msra.mxu0 %v474
      %571 = vmatprep.subr.bf16.mxu0 0
      %572 = vmatpush2.bf16.msra.mxu0 %v473
      %573 = vmatprep.subr.bf16.mxu0 0
      %574 = vmatpush2.bf16.msra.mxu0 %v472
      %575 = vmatprep.subr.bf16.mxu0 0
      %576 = vmatpush2.bf16.msra.mxu0 %v471
      %577 = vmatprep.subr.bf16.mxu0 0
      %578 = vmatpush2.bf16.msra.mxu0 %v470
      %579 = vmatprep.subr.bf16.mxu0 0
      %580 = vmatpush2.bf16.msra.mxu0 %v469
      %581 = vmatprep.mubr.bf16.mxu0 %v312
      %582 = vmatmul.mubr.bf16.gmra.mxu0 %v311
      %v583 = vpop.f32.mrf.mxu0
      %v584 = vadd.f32 %v544, %v583
      %v585 = vpop.f32.mrf.mxu0
      %v586 = vpop.f32.mrf.mxu0
      %v587 = vpop.f32.mrf.mxu0
      %588 = vdwg.mxu0
      %v589 = vadd.f32 %v236, %v584
      %590 = vst [vmem:[#allocation2] sm:$0xff] %v589
      %p591 = scmp.eq.s32.totalorder %s20, 1
      // Predicated region
      $region33: #{unet_forward.83} parent=27 // pred_check
        %p592 = pneg %p591
      $region34: #{unet_forward.83} parent=27 // pred_check_branch
        %594 = sbr.rel (%p592) target = $region36
      $region35: #{unet_forward.83} parent=27 // pred_region
        %v595 = vld [vmem:[#allocation2] sm:$0xff]
        %v596 = vpack.c.bf16 %v595, %v595
        %597 = vst [vmem:[%s225] sm:$0xf] %v596
        %v598 = vrot.slane %v595, 4
        %v599 = vadd.f32 %v595, %v598
        %v600 = vrot.slane %v599, 2
        %v601 = vadd.f32 %v599, %v600
        %v602 = vrot.slane %v601, 1
        %v603 = vadd.f32 %v601, %v602
        %v604 = vmul.f32 %v595, %v595
        %v605 = vrot.slane %v604, 4
        %v606 = vadd.f32 %v604, %v605
        %v607 = vrot.slane %v606, 2
        %v608 = vadd.f32 %v606, %v607
        %v609 = vrot.slane %v608, 1
        %v610 = vadd.f32 %v608, %v609
        %vm611 = vcmask 1040384
        %v612 = vsel %vm611, %v603, %v610
        %613 = vst [vmem:[%s229] sm:$0x3] %v612
      $region36: #{unet_forward.83} parent=27 // pred_fallthru
        _
      %p614 = scmp.lt.s32.totalorder %s19, 0
      %s615 = scalar_select %p614, %s19, 0
      %s616 = smul.addr %s615, 4
      %s617 = scalar_lea.vmem %s2, %s616
      %p618 = scmp.lt.s32.totalorder %s19, 0
      %s619 = scalar_select %p618, %s19, 0
      %s620 = smul.addr %s619, 2
      %s621 = scalar_lea.vmem %s3, %s620
      // Predicated region
      $region37: #{unet_forward.83} parent=27 // pred_check
        %p622 = pneg %p99
      $region38: #{unet_forward.83} parent=27 // pred_check_branch
        %624 = sbr.rel (%p622) target = $region40
      $region39: #{unet_forward.83} parent=27 // pred_region
        _
      $region40: #{unet_forward.83} parent=27 // pred_fallthru
        _
      // Predicated region
      $region41: #{unet_forward.83} parent=27 // pred_check
        %p625 = pneg %p125
      $region42: #{unet_forward.83} parent=27 // pred_check_branch
        %627 = sbr.rel (%p625) target = $region44
      $region43: #{unet_forward.83} parent=27 // pred_region
        _
      $region44: #{unet_forward.83} parent=27 // pred_fallthru
        _
      // Predicated region
      $region45: #{unet_forward.83} parent=27 // pred_check
        %p628 = pneg %p99
      $region46: #{unet_forward.83} parent=27 // pred_check_branch
        %630 = sbr.rel (%p628) target = $region48
      $region47: #{unet_forward.83} parent=27 // pred_region
        %p631 = scmp.lt.s32.totalorder %s19, 0
        %s632 = scalar_select %p631, %s19, 0
        %s633 = smul.addr %s632, 4
        %s634 = scalar_lea.vmem %s2, %s633
      $region48: #{unet_forward.83} parent=27 // pred_fallthru
        _
      // Predicated region
      $region49: #{unet_forward.83} parent=27 // pred_check
        %p635 = pneg %p125
      $region50: #{unet_forward.83} parent=27 // pred_check_branch
        %637 = sbr.rel (%p635) target = $region52
      $region51: #{unet_forward.83} parent=27 // pred_region
        %p638 = scmp.lt.s32.totalorder %s19, 0
        %s639 = scalar_select %p638, %s19, 0
        %s640 = smul.addr %s639, 2
        %s641 = scalar_lea.vmem %s3, %s640
      $region52: #{unet_forward.83} parent=27 // pred_fallthru
        _
    $region28: #{unet_forward.83} parent=5 // pred_fallthru
      _
    %p642 = scmp.le.s32.totalorder 2, %s10
    // Predicated region
    $region53: #{unet_forward.83} parent=5 // pred_check
      %p643 = pneg %p642
    $region54: #{unet_forward.83} parent=5 // pred_check_branch
      %645 = sbr.rel (%p643) target = $region56
    $region55: #{unet_forward.83} parent=5 // pred_region
      %s646 = ssub.s32 %s10, 2
    $region56: #{unet_forward.83} parent=5 // pred_fallthru
      _
  $region6: #{unet_forward.83} parent=0 // loop_footer
    %s14 = sadd.s32 1, %s10
  $region7: #{unet_forward.83} parent=0 // loop_footer_branch
    %9 = sbr.rel target = $region3
  $region8: #{unet_forward.83} parent=0 // loop_exit
    _

// kernel: unet_forward.87
$region0: #{unet_forward.87}
  #allocation0 [shape = 'u32[]', space=smem, size = 0x4, offset = 0x4, fixed_abs, tag = 'smem constant byte address 0x4 - core index']
  #allocation1 [shape = 'u32[144,128]{1,0:T(1,128)}', space=vmem, size = 0x12000, scoped, tag = 'internal scratch']
  #allocation2 [shape = 'f32[8,128]{1,0:T(8,128)}', space=vmem, size = 0x1000, scoped, tag = 'scratch operand']
  %s0 = inlined_call_operand.vmem [shape: bf16[8,1536], index: 0, kind: input, shape index: {}]
  %s1 = inlined_call_operand.vmem [shape: bf16[1536,128], index: 1, kind: input, shape index: {}]
  %s2 = inlined_call_operand.vmem [shape: bf16[8,128], index: 2, kind: output, shape index: {0}]
  %s3 = inlined_call_operand.vmem [shape: f32[1,2,128], index: 3, kind: output, shape index: {1}]
  %4 = xla_tuple %s2, %s3
  %s5 = sld [smem:[#allocation0]]
  $region57: #{unet_forward.87} parent=0
    _
  %s7 = ssub.s32 1, %s5
  %s8 = scalar_select 0, %s7, %s5
  loop: start=0, step=1, limit=5
  $region2: #{unet_forward.87} parent=0 // loop_pre_header
    _
  $region3: #{unet_forward.87} parent=0 // loop_header
    %s10 = sphi 0, %s14
    %p11 = scmp.ge.s32.totalorder %s10, 5
    %s17 = sphi 0, %s29
    %s18 = sphi 0, %s25
    %s19 = sphi 0, %s17
    %s20 = sphi 0, %s18
    %s21 = sphi 0, %s19
    %s22 = sphi 0, %s20
    %s34 = sphi 0, %s36
    %s37 = sphi 0, %s34
    %s38 = sphi 0, %s37
    %s54 = sphi 0, %s38
    %s60 = sphi 0, %s62
    %s63 = sphi 0, %s60
    %s64 = sphi 0, %s63
    %s80 = sphi 0, %s64
    %s86 = sphi 0, %s88
    %s89 = sphi 0, %s86
    %s90 = sphi 0, %s89
    %s106 = sphi 0, %s90
    %s112 = sphi 0, %s114
    %s115 = sphi 0, %s112
    %s116 = sphi 0, %s115
    %s132 = sphi 0, %s116
  $region4: #{unet_forward.87} parent=0 // loop_header_branch
    %13 = sbr.rel (%p11) target = $region8
  $region5: #{unet_forward.87} parent=0 // loop_body
    %s15 = ssub.s32 %s10, 1
    %s16 = ssub.s32 %s10, 2
    %s23 = sadd.s32 1, %s18
    %p24 = scmp.ge.s32.totalorder %s23, 3
    %s25 = scalar_select %p24, 0, %s23
    %s26 = sadd.s32 1, %s17
    %s27 = scalar_select %p24, %s26, %s17
    %p28 = scmp.ge.s32.totalorder %s27, 1
    %s29 = scalar_select %p28, 0, %s27
    %s30 = ssub.s32 %s17, %s29
    %s31 = ssub.s32 %s18, %s25
    %s32 = sor.u32 %s30, %s31
    %p33 = scmp.eq.s32.totalorder %s32, 0
    %s35 = sadd.s32 %s34, 1
    %s36 = scalar_select %p33, %s34, %s35
    %p39 = pneg %p33
    %p40 = scmp.eq.s32.totalorder %s10, 2
    %p41 = por %p39, %p40
    %p42 = scmp.ne.s32.totalorder %s34, %s37
    %p43 = scmp.eq.s32.totalorder %s10, 0
    %p44 = por %p42, %p43
    %p45 = scmp.ne.s32.totalorder %s34, %s37
    %p46 = scmp.eq.s32.totalorder %s15, 2
    %p47 = por %p45, %p46
    %p48 = scmp.ne.s32.totalorder %s37, %s38
    %p49 = scmp.eq.s32.totalorder %s15, 0
    %p50 = por %p48, %p49
    %p51 = scmp.ne.s32.totalorder %s37, %s38
    %p52 = scmp.eq.s32.totalorder %s16, 2
    %p53 = por %p51, %p52
    %p55 = scmp.ne.s32.totalorder %s38, %s54
    %p56 = scmp.eq.s32.totalorder %s16, 0
    %p57 = por %p55, %p56
    %s58 = ssub.s32 %s18, %s25
    %p59 = scmp.eq.s32.totalorder %s58, 0
    %s61 = sadd.s32 %s60, 1
    %s62 = scalar_select %p59, %s60, %s61
    %p65 = pneg %p59
    %p66 = scmp.eq.s32.totalorder %s10, 2
    %p67 = por %p65, %p66
    %p68 = scmp.ne.s32.totalorder %s60, %s63
    %p69 = scmp.eq.s32.totalorder %s10, 0
    %p70 = por %p68, %p69
    %p71 = scmp.ne.s32.totalorder %s60, %s63
    %p72 = scmp.eq.s32.totalorder %s15, 2
    %p73 = por %p71, %p72
    %p74 = scmp.ne.s32.totalorder %s63, %s64
    %p75 = scmp.eq.s32.totalorder %s15, 0
    %p76 = por %p74, %p75
    %p77 = scmp.ne.s32.totalorder %s63, %s64
    %p78 = scmp.eq.s32.totalorder %s16, 2
    %p79 = por %p77, %p78
    %p81 = scmp.ne.s32.totalorder %s64, %s80
    %p82 = scmp.eq.s32.totalorder %s16, 0
    %p83 = por %p81, %p82
    %s84 = ssub.s32 %s17, %s29
    %p85 = scmp.eq.s32.totalorder %s84, 0
    %s87 = sadd.s32 %s86, 1
    %s88 = scalar_select %p85, %s86, %s87
    %p91 = pneg %p85
    %p92 = scmp.eq.s32.totalorder %s10, 2
    %p93 = por %p91, %p92
    %p94 = scmp.ne.s32.totalorder %s86, %s89
    %p95 = scmp.eq.s32.totalorder %s10, 0
    %p96 = por %p94, %p95
    %p97 = scmp.ne.s32.totalorder %s86, %s89
    %p98 = scmp.eq.s32.totalorder %s15, 2
    %p99 = por %p97, %p98
    %p100 = scmp.ne.s32.totalorder %s89, %s90
    %p101 = scmp.eq.s32.totalorder %s15, 0
    %p102 = por %p100, %p101
    %p103 = scmp.ne.s32.totalorder %s89, %s90
    %p104 = scmp.eq.s32.totalorder %s16, 2
    %p105 = por %p103, %p104
    %p107 = scmp.ne.s32.totalorder %s90, %s106
    %p108 = scmp.eq.s32.totalorder %s16, 0
    %p109 = por %p107, %p108
    %s110 = ssub.s32 %s17, %s29
    %p111 = scmp.eq.s32.totalorder %s110, 0
    %s113 = sadd.s32 %s112, 1
    %s114 = scalar_select %p111, %s112, %s113
    %p117 = pneg %p111
    %p118 = scmp.eq.s32.totalorder %s10, 2
    %p119 = por %p117, %p118
    %p120 = scmp.ne.s32.totalorder %s112, %s115
    %p121 = scmp.eq.s32.totalorder %s10, 0
    %p122 = por %p120, %p121
    %p123 = scmp.ne.s32.totalorder %s112, %s115
    %p124 = scmp.eq.s32.totalorder %s15, 2
    %p125 = por %p123, %p124
    %p126 = scmp.ne.s32.totalorder %s115, %s116
    %p127 = scmp.eq.s32.totalorder %s15, 0
    %p128 = por %p126, %p127
    %p129 = scmp.ne.s32.totalorder %s115, %s116
    %p130 = scmp.eq.s32.totalorder %s16, 2
    %p131 = por %p129, %p130
    %p133 = scmp.ne.s32.totalorder %s116, %s132
    %p134 = scmp.eq.s32.totalorder %s16, 0
    %p135 = por %p133, %p134
    %p136 = scmp.le.s32.totalorder 1, %s10
    %p137 = scmp.lt.s32.totalorder %s10, 4
    %p138 = pnand %p136, %p137
    %p139 = pneg %p138
    // Predicated region
    $region9: #{unet_forward.87} parent=5 // pred_check
      _
    $region10: #{unet_forward.87} parent=5 // pred_check_branch
      %141 = sbr.rel (%p138) target = $region12
    $region11: #{unet_forward.87} parent=5 // pred_region
      %s142 = ssub.s32 %s10, 1
    $region12: #{unet_forward.87} parent=5 // pred_fallthru
      _
    %p143 = scmp.lt.s32.totalorder %s10, 3
    // Predicated region
    $region13: #{unet_forward.87} parent=5 // pred_check
      %p144 = pneg %p143
    $region14: #{unet_forward.87} parent=5 // pred_check_branch
      %146 = sbr.rel (%p144) target = $region16
    $region15: #{unet_forward.87} parent=5 // pred_region
      // Predicated region
      $region17: #{unet_forward.87} parent=15 // pred_check
        %p147 = pneg %p44
      $region18: #{unet_forward.87} parent=15 // pred_check_branch
        %149 = sbr.rel (%p147) target = $region20
      $region19: #{unet_forward.87} parent=15 // pred_region
        %s150 = smul.u32 4, %s18
        %p151 = scmp.lt.s32.totalorder %s17, 0
        %s152 = scalar_select %p151, %s17, 0
        %p153 = scmp.lt.s32.totalorder %s150, 11
        %s154 = scalar_select %p153, %s150, 11
        %s155 = smul.addr %s152, 12
        %s156 = sadd.s32 %s154, %s155
        %s157 = smul.addr %s156, 4
        %s158 = scalar_lea.vmem %s0, %s157
        %s159 = smul.u32 4, %s18
      $region20: #{unet_forward.87} parent=15 // pred_fallthru
        _
      // Predicated region
      $region21: #{unet_forward.87} parent=15 // pred_check
        %p160 = pneg %p70
      $region22: #{unet_forward.87} parent=15 // pred_check_branch
        %162 = sbr.rel (%p160) target = $region24
      $region23: #{unet_forward.87} parent=15 // pred_region
        %s163 = smul.u32 64, %s18
        %p164 = scmp.lt.s32.totalorder %s163, 191
        %s165 = scalar_select %p164, %s163, 191
        %s166 = smul.addr %s165, 4
        %s167 = scalar_lea.vmem %s1, %s166
        %s168 = smul.u32 64, %s18
      $region24: #{unet_forward.87} parent=15 // pred_fallthru
        _
    $region16: #{unet_forward.87} parent=5 // pred_fallthru
      _
    %p169 = scmp.le.s32.totalorder 1, %s10
    %p170 = scmp.lt.s32.totalorder %s10, 4
    %p171 = pnand %p169, %p170
    %p172 = pneg %p171
    // Predicated region
    $region25: #{unet_forward.87} parent=5 // pred_check
      _
    $region26: #{unet_forward.87} parent=5 // pred_check_branch
      %174 = sbr.rel (%p171) target = $region28
    $region27: #{unet_forward.87} parent=5 // pred_region
      %s175 = ssub.s32 %s10, 1
      %s176 = smul.u32 4, %s20
      %p177 = scmp.lt.s32.totalorder %s19, 0
      %s178 = scalar_select %p177, %s19, 0
      %p179 = scmp.lt.s32.totalorder %s176, 11
      %s180 = scalar_select %p179, %s176, 11
      %s181 = smul.addr %s178, 12
      %s182 = sadd.s32 %s180, %s181
      %s183 = smul.addr %s182, 4
      %s184 = scalar_lea.vmem %s0, %s183
      %p185 = pneg %p50
      %p186 = pneg %p47
      %s187 = smul.u32 64, %s20
      %p188 = scmp.lt.s32.totalorder %s187, 191
      %s189 = scalar_select %p188, %s187, 191
      %s190 = smul.addr %s189, 4
      %s191 = scalar_lea.vmem %s1, %s190
      %p192 = pneg %p76
      %p193 = pneg %p73
      %p194 = pneg %p102
      %p195 = pneg %p99
      %p196 = scmp.lt.s32.totalorder %s19, 0
      %s197 = scalar_select %p196, %s19, 0
      %s198 = smul.addr %s197, 4
      %s199 = scalar_lea.vmem %s2, %s198
      %p200 = pneg %p128
      %p201 = pneg %p125
      %p202 = scmp.lt.s32.totalorder %s19, 0
      %s203 = scalar_select %p202, %s19, 0
      %s204 = smul.addr %s203, 2
      %s205 = scalar_lea.vmem %s3, %s204
      %s206 = smul.u32 4, %s20
      %p207 = scmp.lt.s32.totalorder %s19, 0
      %s208 = scalar_select %p207, %s19, 0
      %p209 = scmp.lt.s32.totalorder %s206, 11
      %s210 = scalar_select %p209, %s206, 11
      %s211 = smul.addr %s208, 12
      %s212 = sadd.s32 %s210, %s211
      %s213 = smul.addr %s212, 4
      %s214 = scalar_lea.vmem %s0, %s213
      %s215 = smul.u32 4, %s20
      %s216 = smul.u32 64, %s20
      %p217 = scmp.lt.s32.totalorder %s216, 191
      %s218 = scalar_select %p217, %s216, 191
      %s219 = smul.addr %s218, 4
      %s220 = scalar_lea.vmem %s1, %s219
      %s221 = smul.u32 64, %s20
      %p222 = scmp.lt.s32.totalorder %s19, 0
      %s223 = scalar_select %p222, %s19, 0
      %s224 = smul.addr %s223, 4
      %s225 = scalar_lea.vmem %s2, %s224
      %p226 = scmp.lt.s32.totalorder %s19, 0
      %s227 = scalar_select %p226, %s19, 0
      %s228 = smul.addr %s227, 2
      %s229 = scalar_lea.vmem %s3, %s228
      %p231 = scmp.eq.s32.totalorder %s20, 0
      // Predicated region
      $region29: #{unet_forward.87} parent=27 // pred_check
        %p232 = pneg %p231
      $region30: #{unet_forward.87} parent=27 // pred_check_branch
        %234 = sbr.rel (%p232) target = $region32
      $region31: #{unet_forward.87} parent=27 // pred_region
        %235 = vst [vmem:[#allocation2] sm:$0xff] 0.0
      $region32: #{unet_forward.87} parent=27 // pred_fallthru
        _
      %v236 = vld [vmem:[#allocation2] sm:$0xff]
      %v237 = vld [vmem:[%s214] sm:$0xff]
      %v238 = vld [vmem:[%s214 + $0x8] sm:$0xff]
      %v239 = vld [vmem:[%s220] sm:$0xf]
      %v240 = vld [vmem:[%s220 + $0x4] sm:$0xf]
      %v241 = vld [vmem:[%s220 + $0x8] sm:$0xf]
      %v242 = vld [vmem:[%s220 + $0xc] sm:$0xf]
      %v243 = vld [vmem:[%s220 + $0x10] sm:$0xf]
      %v244 = vld [vmem:[%s220 + $0x14] sm:$0xf]
      %v245 = vld [vmem:[%s220 + $0x18] sm:$0xf]
      %v246 = vld [vmem:[%s220 + $0x1c] sm:$0xf]
      %v247 = vld [vmem:[%s220 + $0x20] sm:$0xf]
      %v248 = vld [vmem:[%s220 + $0x24] sm:$0xf]
      %v249 = vld [vmem:[%s220 + $0x28] sm:$0xf]
      %v250 = vld [vmem:[%s220 + $0x2c] sm:$0xf]
      %v251 = vld [vmem:[%s220 + $0x30] sm:$0xf]
      %v252 = vld [vmem:[%s220 + $0x34] sm:$0xf]
      %v253 = vld [vmem:[%s220 + $0x38] sm:$0xf]
      %v254 = vld [vmem:[%s220 + $0x3c] sm:$0xf]
      %v255 = vld [vmem:[%s220 + $0x40] sm:$0xf]
      %v256 = vld [vmem:[%s220 + $0x44] sm:$0xf]
      %v257 = vld [vmem:[%s220 + $0x48] sm:$0xf]
      %v258 = vld [vmem:[%s220 + $0x4c] sm:$0xf]
      %v259 = vld [vmem:[%s220 + $0x50] sm:$0xf]
      %v260 = vld [vmem:[%s220 + $0x54] sm:$0xf]
      %v261 = vld [vmem:[%s220 + $0x58] sm:$0xf]
      %v262 = vld [vmem:[%s220 + $0x5c] sm:$0xf]
      %v263 = vld [vmem:[%s220 + $0x60] sm:$0xf]
      %v264 = vld [vmem:[%s220 + $0x64] sm:$0xf]
      %v265 = vld [vmem:[%s220 + $0x68] sm:$0xf]
      %v266 = vld [vmem:[%s220 + $0x6c] sm:$0xf]
      %v267 = vld [vmem:[%s220 + $0x70] sm:$0xf]
      %v268 = vld [vmem:[%s220 + $0x74] sm:$0xf]
      %v269 = vld [vmem:[%s220 + $0x78] sm:$0xf]
      %v270 = vld [vmem:[%s220 + $0x7c] sm:$0xf]
      %v271 = vld [vmem:[%s220 + $0x80] sm:$0xf]
      %v272 = vld [vmem:[%s220 + $0x84] sm:$0xf]
      %v273 = vld [vmem:[%s220 + $0x88] sm:$0xf]
      %v274 = vld [vmem:[%s220 + $0x8c] sm:$0xf]
      %v275 = vld [vmem:[%s220 + $0x90] sm:$0xf]
      %v276 = vld [vmem:[%s220 + $0x94] sm:$0xf]
      %v277 = vld [vmem:[%s220 + $0x98] sm:$0xf]
      %v278 = vld [vmem:[%s220 + $0x9c] sm:$0xf]
      %v279 = vld [vmem:[%s220 + $0xa0] sm:$0xf]
      %v280 = vld [vmem:[%s220 + $0xa4] sm:$0xf]
      %v281 = vld [vmem:[%s220 + $0xa8] sm:$0xf]
      %v282 = vld [vmem:[%s220 + $0xac] sm:$0xf]
      %v283 = vld [vmem:[%s220 + $0xb0] sm:$0xf]
      %v284 = vld [vmem:[%s220 + $0xb4] sm:$0xf]
      %v285 = vld [vmem:[%s220 + $0xb8] sm:$0xf]
      %v286 = vld [vmem:[%s220 + $0xbc] sm:$0xf]
      %v287 = vld [vmem:[%s220 + $0xc0] sm:$0xf]
      %v288 = vld [vmem:[%s220 + $0xc4] sm:$0xf]
      %v289 = vld [vmem:[%s220 + $0xc8] sm:$0xf]
      %v290 = vld [vmem:[%s220 + $0xcc] sm:$0xf]
      %v291 = vld [vmem:[%s220 + $0xd0] sm:$0xf]
      %v292 = vld [vmem:[%s220 + $0xd4] sm:$0xf]
      %v293 = vld [vmem:[%s220 + $0xd8] sm:$0xf]
      %v294 = vld [vmem:[%s220 + $0xdc] sm:$0xf]
      %v295 = vld [vmem:[%s220 + $0xe0] sm:$0xf]
      %v296 = vld [vmem:[%s220 + $0xe4] sm:$0xf]
      %v297 = vld [vmem:[%s220 + $0xe8] sm:$0xf]
      %v298 = vld [vmem:[%s220 + $0xec] sm:$0xf]
      %v299 = vld [vmem:[%s220 + $0xf0] sm:$0xf]
      %v300 = vld [vmem:[%s220 + $0xf4] sm:$0xf]
      %v301 = vld [vmem:[%s220 + $0xf8] sm:$0xf]
      %v302 = vld [vmem:[%s220 + $0xfc] sm:$0xf]
      %v305 = vunpack.c.l.b16 %v237
      %v306 = vunpack.c.h.b16 %v237
      %v307 = vunpack.c.l.b16 %v238
      %v308 = vunpack.c.h.b16 %v238
      %v309 = vpack.c.b16 %v305, %v305
      %v310 = vpack.c.b16 %v306, %v306
      %v311 = vpack.c.b16 %v307, %v307
      %v312 = vpack.c.b16 %v308, %v308
      %v381 = vunpack.c.l.b16 %v239
      %v382 = vunpack.c.l.b16 %v240
      %v383 = vunpack.c.l.b16 %v241
      %v384 = vunpack.c.l.b16 %v242
      %v385 = vunpack.c.l.b16 %v243
      %v386 = vunpack.c.l.b16 %v244
      %v387 = vunpack.c.l.b16 %v245
      %v388 = vunpack.c.l.b16 %v246
      %v389 = vunpack.c.l.b16 %v247
      %v390 = vunpack.c.l.b16 %v248
      %v391 = vunpack.c.l.b16 %v249
      %v392 = vunpack.c.l.b16 %v250
      %v393 = vunpack.c.l.b16 %v251
      %v394 = vunpack.c.l.b16 %v252
      %v395 = vunpack.c.l.b16 %v253
      %v396 = vunpack.c.l.b16 %v254
      %v397 = vunpack.c.l.b16 %v255
      %v398 = vunpack.c.l.b16 %v256
      %v399 = vunpack.c.l.b16 %v257
      %v400 = vunpack.c.l.b16 %v258
      %v401 = vunpack.c.l.b16 %v259
      %v402 = vunpack.c.l.b16 %v260
      %v403 = vunpack.c.l.b16 %v261
      %v404 = vunpack.c.l.b16 %v262
      %v405 = vunpack.c.l.b16 %v263
      %v406 = vunpack.c.l.b16 %v264
      %v407 = vunpack.c.l.b16 %v265
      %v408 = vunpack.c.l.b16 %v266
      %v409 = vunpack.c.l.b16 %v267
      %v410 = vunpack.c.l.b16 %v268
      %v411 = vunpack.c.l.b16 %v269
      %v412 = vunpack.c.l.b16 %v270
      %v413 = vunpack.c.l.b16 %v271
      %v414 = vunpack.c.l.b16 %v272
      %v415 = vunpack.c.l.b16 %v273
      %v416 = vunpack.c.l.b16 %v274
      %v417 = vunpack.c.l.b16 %v275
      %v418 = vunpack.c.l.b16 %v276
      %v419 = vunpack.c.l.b16 %v277
      %v420 = vunpack.c.l.b16 %v278
      %v421 = vunpack.c.l.b16 %v279
      %v422 = vunpack.c.l.b16 %v280
      %v423 = vunpack.c.l.b16 %v281
      %v424 = vunpack.c.l.b16 %v282
      %v425 = vunpack.c.l.b16 %v283
      %v426 = vunpack.c.l.b16 %v284
      %v427 = vunpack.c.l.b16 %v285
      %v428 = vunpack.c.l.b16 %v286
      %v429 = vunpack.c.l.b16 %v287
      %v430 = vunpack.c.l.b16 %v288
      %v431 = vunpack.c.l.b16 %v289
      %v432 = vunpack.c.l.b16 %v290
      %v433 = vunpack.c.l.b16 %v291
      %v434 = vunpack.c.l.b16 %v292
      %v435 = vunpack.c.l.b16 %v293
      %v436 = vunpack.c.l.b16 %v294
      %v437 = vunpack.c.l.b16 %v295
      %v438 = vunpack.c.l.b16 %v296
      %v439 = vunpack.c.l.b16 %v297
      %v440 = vunpack.c.l.b16 %v298
      %v441 = vunpack.c.l.b16 %v299
      %v442 = vunpack.c.l.b16 %v300
      %v443 = vunpack.c.l.b16 %v301
      %v444 = vunpack.c.l.b16 %v302
      %v445 = vpack.c.b16 %v382, %v381
      %v446 = vpack.c.b16 %v384, %v383
      %v447 = vpack.c.b16 %v386, %v385
      %v448 = vpack.c.b16 %v388, %v387
      %v449 = vpack.c.b16 %v390, %v389
      %v450 = vpack.c.b16 %v392, %v391
      %v451 = vpack.c.b16 %v394, %v393
      %v452 = vpack.c.b16 %v396, %v395
      %v453 = vpack.c.b16 %v398, %v397
      %v454 = vpack.c.b16 %v400, %v399
      %v455 = vpack.c.b16 %v402, %v401
      %v456 = vpack.c.b16 %v404, %v403
      %v457 = vpack.c.b16 %v406, %v405
      %v458 = vpack.c.b16 %v408, %v407
      %v459 = vpack.c.b16 %v410, %v409
      %v460 = vpack.c.b16 %v412, %v411
      %v461 = vpack.c.b16 %v414, %v413
      %v462 = vpack.c.b16 %v416, %v415
      %v463 = vpack.c.b16 %v418, %v417
      %v464 = vpack.c.b16 %v420, %v419
      %v465 = vpack.c.b16 %v422, %v421
      %v466 = vpack.c.b16 %v424, %v423
      %v467 = vpack.c.b16 %v426, %v425
      %v468 = vpack.c.b16 %v428, %v427
      %v469 = vpack.c.b16 %v430, %v429
      %v470 = vpack.c.b16 %v432, %v431
      %v471 = vpack.c.b16 %v434, %v433
      %v472 = vpack.c.b16 %v436, %v435
      %v473 = vpack.c.b16 %v438, %v437
      %v474 = vpack.c.b16 %v440, %v439
      %v475 = vpack.c.b16 %v442, %v441
      %v476 = vpack.c.b16 %v444, %v443
      %509 = vmatprep.subr.bf16.mxu0 0
      %510 = vmatpush1.bf16.msra.mxu0 %v452
      %511 = vmatprep.subr.bf16.mxu0 0
      %512 = vmatpush1.bf16.msra.mxu0 %v451
      %513 = vmatprep.subr.bf16.mxu0 0
      %514 = vmatpush1.bf16.msra.mxu0 %v450
      %515 = vmatprep.subr.bf16.mxu0 0
      %516 = vmatpush1.bf16.msra.mxu0 %v449
      %517 = vmatprep.subr.bf16.mxu0 0
      %518 = vmatpush1.bf16.msra.mxu0 %v448
      %519 = vmatprep.subr.bf16.mxu0 0
      %520 = vmatpush1.bf16.msra.mxu0 %v447
      %521 = vmatprep.subr.bf16.mxu0 0
      %522 = vmatpush1.bf16.msra.mxu0 %v446
      %523 = vmatprep.subr.bf16.mxu0 0
      %524 = vmatpush1.bf16.msra.mxu0 %v445
      %525 = vmatprep.subr.bf16.mxu0 0
      %526 = vmatpush2.bf16.msra.mxu0 %v460
      %527 = vmatprep.subr.bf16.mxu0 0
      %528 = vmatpush2.bf16.msra.mxu0 %v459
      %529 = vmatprep.subr.bf16.mxu0 0
      %530 = vmatpush2.bf16.msra.mxu0 %v458
      %531 = vmatprep.subr.bf16.mxu0 0
      %532 = vmatpush2.bf16.msra.mxu0 %v457
      %533 = vmatprep.subr.bf16.mxu0 0
      %534 = vmatpush2.bf16.msra.mxu0 %v456
      %535 = vmatprep.subr.bf16.mxu0 0
      %536 = vmatpush2.bf16.msra.mxu0 %v455
      %537 = vmatprep.subr.bf16.mxu0 0
      %538 = vmatpush2.bf16.msra.mxu0 %v454
      %539 = vmatprep.subr.bf16.mxu0 0
      %540 = vmatpush2.bf16.msra.mxu0 %v453
      %541 = vmatprep.mubr.bf16.mxu0 %v310
      %542 = vmatmul.mubr.bf16.gmra.mxu0 %v309
      %v543 = vpop.f32.mrf.mxu0
      %v544 = vadd.f32 0.0, %v543
      %v545 = vpop.f32.mrf.mxu0
      %v546 = vpop.f32.mrf.mxu0
      %v547 = vpop.f32.mrf.mxu0
      %548 = vdwg.mxu0
      %549 = vmatprep.subr.bf16.mxu0 0
      %550 = vmatpush1.bf16.msra.mxu0 %v468
      %551 = vmatprep.subr.bf16.mxu0 0
      %552 = vmatpush1.bf16.msra.mxu0 %v467
      %553 = vmatprep.subr.bf16.mxu0 0
      %554 = vmatpush1.bf16.msra.mxu0 %v466
      %555 = vmatprep.subr.bf16.mxu0 0
      %556 = vmatpush1.bf16.msra.mxu0 %v465
      %557 = vmatprep.subr.bf16.mxu0 0
      %558 = vmatpush1.bf16.msra.mxu0 %v464
      %559 = vmatprep.subr.bf16.mxu0 0
      %560 = vmatpush1.bf16.msra.mxu0 %v463
      %561 = vmatprep.subr.bf16.mxu0 0
      %562 = vmatpush1.bf16.msra.mxu0 %v462
      %563 = vmatprep.subr.bf16.mxu0 0
      %564 = vmatpush1.bf16.msra.mxu0 %v461
      %565 = vmatprep.subr.bf16.mxu0 0
      %566 = vmatpush2.bf16.msra.mxu0 %v476
      %567 = vmatprep.subr.bf16.mxu0 0
      %568 = vmatpush2.bf16.msra.mxu0 %v475
      %569 = vmatprep.subr.bf16.mxu0 0
      %570 = vmatpush2.bf16.msra.mxu0 %v474
      %571 = vmatprep.subr.bf16.mxu0 0
      %572 = vmatpush2.bf16.msra.mxu0 %v473
      %573 = vmatprep.subr.bf16.mxu0 0
      %574 = vmatpush2.bf16.msra.mxu0 %v472
      %575 = vmatprep.subr.bf16.mxu0 0
      %576 = vmatpush2.bf16.msra.mxu0 %v471
      %577 = vmatprep.subr.bf16.mxu0 0
      %578 = vmatpush2.bf16.msra.mxu0 %v470
      %579 = vmatprep.subr.bf16.mxu0 0
      %580 = vmatpush2.bf16.msra.mxu0 %v469
      %581 = vmatprep.mubr.bf16.mxu0 %v312
      %582 = vmatmul.mubr.bf16.gmra.mxu0 %v311
      %v583 = vpop.f32.mrf.mxu0
      %v584 = vadd.f32 %v544, %v583
      %v585 = vpop.f32.mrf.mxu0
      %v586 = vpop.f32.mrf.mxu0
      %v587 = vpop.f32.mrf.mxu0
      %588 = vdwg.mxu0
      %v589 = vadd.f32 %v236, %v584
      %590 = vst [vmem:[#allocation2] sm:$0xff] %v589
      %p591 = scmp.eq.s32.totalorder %s20, 2
      // Predicated region
      $region33: #{unet_forward.87} parent=27 // pred_check
        %p592 = pneg %p591
      $region34: #{unet_forward.87} parent=27 // pred_check_branch
        %594 = sbr.rel (%p592) target = $region36
      $region35: #{unet_forward.87} parent=27 // pred_region
        %v595 = vld [vmem:[#allocation2] sm:$0xff]
        %v596 = vpack.c.bf16 %v595, %v595
        %597 = vst [vmem:[%s225] sm:$0xf] %v596
        %v598 = vrot.slane %v595, 4
        %v599 = vadd.f32 %v595, %v598
        %v600 = vrot.slane %v599, 2
        %v601 = vadd.f32 %v599, %v600
        %v602 = vrot.slane %v601, 1
        %v603 = vadd.f32 %v601, %v602
        %v604 = vmul.f32 %v595, %v595
        %v605 = vrot.slane %v604, 4
        %v606 = vadd.f32 %v604, %v605
        %v607 = vrot.slane %v606, 2
        %v608 = vadd.f32 %v606, %v607
        %v609 = vrot.slane %v608, 1
        %v610 = vadd.f32 %v608, %v609
        %vm611 = vcmask 1040384
        %v612 = vsel %vm611, %v603, %v610
        %613 = vst [vmem:[%s229] sm:$0x3] %v612
      $region36: #{unet_forward.87} parent=27 // pred_fallthru
        _
      %p614 = scmp.lt.s32.totalorder %s19, 0
      %s615 = scalar_select %p614, %s19, 0
      %s616 = smul.addr %s615, 4
      %s617 = scalar_lea.vmem %s2, %s616
      %p618 = scmp.lt.s32.totalorder %s19, 0
      %s619 = scalar_select %p618, %s19, 0
      %s620 = smul.addr %s619, 2
      %s621 = scalar_lea.vmem %s3, %s620
      // Predicated region
      $region37: #{unet_forward.87} parent=27 // pred_check
        %p622 = pneg %p99
      $region38: #{unet_forward.87} parent=27 // pred_check_branch
        %624 = sbr.rel (%p622) target = $region40
      $region39: #{unet_forward.87} parent=27 // pred_region
        _
      $region40: #{unet_forward.87} parent=27 // pred_fallthru
        _
      // Predicated region
      $region41: #{unet_forward.87} parent=27 // pred_check
        %p625 = pneg %p125
      $region42: #{unet_forward.87} parent=27 // pred_check_branch
        %627 = sbr.rel (%p625) target = $region44
      $region43: #{unet_forward.87} parent=27 // pred_region
        _
      $region44: #{unet_forward.87} parent=27 // pred_fallthru
        _
      // Predicated region
      $region45: #{unet_forward.87} parent=27 // pred_check
        %p628 = pneg %p99
      $region46: #{unet_forward.87} parent=27 // pred_check_branch
        %630 = sbr.rel (%p628) target = $region48
      $region47: #{unet_forward.87} parent=27 // pred_region
        %p631 = scmp.lt.s32.totalorder %s19, 0
        %s632 = scalar_select %p631, %s19, 0
        %s633 = smul.addr %s632, 4
        %s634 = scalar_lea.vmem %s2, %s633
      $region48: #{unet_forward.87} parent=27 // pred_fallthru
        _
      // Predicated region
      $region49: #{unet_forward.87} parent=27 // pred_check
        %p635 = pneg %p125
      $region50: #{unet_forward.87} parent=27 // pred_check_branch
        %637 = sbr.rel (%p635) target = $region52
      $region51: #{unet_forward.87} parent=27 // pred_region
        %p638 = scmp.lt.s32.totalorder %s19, 0
        %s639 = scalar_select %p638, %s19, 0
        %s640 = smul.addr %s639, 2
        %s641 = scalar_lea.vmem %s3, %s640
      $region52: #{unet_forward.87} parent=27 // pred_fallthru
        _
    $region28: #{unet_forward.87} parent=5 // pred_fallthru
      _
    %p642 = scmp.le.s32.totalorder 2, %s10
    // Predicated region
    $region53: #{unet_forward.87} parent=5 // pred_check
      %p643 = pneg %p642
    $region54: #{unet_forward.87} parent=5 // pred_check_branch
      %645 = sbr.rel (%p643) target = $region56
    $region55: #{unet_forward.87} parent=5 // pred_region
      %s646 = ssub.s32 %s10, 2
    $region56: #{unet_forward.87} parent=5 // pred_fallthru
      _
  $region6: #{unet_forward.87} parent=0 // loop_footer
    %s14 = sadd.s32 1, %s10
  $region7: #{unet_forward.87} parent=0 // loop_footer_branch
    %9 = sbr.rel target = $region3
  $region8: #{unet_forward.87} parent=0 // loop_exit
    _

// kernel: unet_forward.93
$region0: #{unet_forward.93}
  #allocation0 [shape = 'u32[]', space=smem, size = 0x4, offset = 0x4, fixed_abs, tag = 'smem constant byte address 0x4 - core index']
  #allocation1 [shape = 'u32[144,128]{1,0:T(1,128)}', space=vmem, size = 0x12000, scoped, tag = 'internal scratch']
  #allocation2 [shape = 'f32[8,128]{1,0:T(8,128)}', space=vmem, size = 0x1000, scoped, tag = 'scratch operand']
  %s0 = inlined_call_operand.vmem [shape: bf16[8,2048], index: 0, kind: input, shape index: {}]
  %s1 = inlined_call_operand.vmem [shape: bf16[2048,128], index: 1, kind: input, shape index: {}]
  %s2 = inlined_call_operand.vmem [shape: bf16[8,128], index: 2, kind: output, shape index: {0}]
  %s3 = inlined_call_operand.vmem [shape: f32[1,2,128], index: 3, kind: output, shape index: {1}]
  %4 = xla_tuple %s2, %s3
  %s5 = sld [smem:[#allocation0]]
  $region57: #{unet_forward.93} parent=0
    _
  %s7 = ssub.s32 1, %s5
  %s8 = scalar_select 0, %s7, %s5
  loop: start=0, step=1, limit=6
  $region2: #{unet_forward.93} parent=0 // loop_pre_header
    _
  $region3: #{unet_forward.93} parent=0 // loop_header
    %s10 = sphi 0, %s14
    %p11 = scmp.ge.s32.totalorder %s10, 6
    %s17 = sphi 0, %s29
    %s18 = sphi 0, %s25
    %s19 = sphi 0, %s17
    %s20 = sphi 0, %s18
    %s21 = sphi 0, %s19
    %s22 = sphi 0, %s20
    %s34 = sphi 0, %s36
    %s37 = sphi 0, %s34
    %s38 = sphi 0, %s37
    %s54 = sphi 0, %s38
    %s60 = sphi 0, %s62
    %s63 = sphi 0, %s60
    %s64 = sphi 0, %s63
    %s80 = sphi 0, %s64
    %s86 = sphi 0, %s88
    %s89 = sphi 0, %s86
    %s90 = sphi 0, %s89
    %s106 = sphi 0, %s90
    %s112 = sphi 0, %s114
    %s115 = sphi 0, %s112
    %s116 = sphi 0, %s115
    %s132 = sphi 0, %s116
  $region4: #{unet_forward.93} parent=0 // loop_header_branch
    %13 = sbr.rel (%p11) target = $region8
  $region5: #{unet_forward.93} parent=0 // loop_body
    %s15 = ssub.s32 %s10, 1
    %s16 = ssub.s32 %s10, 2
    %s23 = sadd.s32 1, %s18
    %p24 = scmp.ge.s32.totalorder %s23, 4
    %s25 = scalar_select %p24, 0, %s23
    %s26 = sadd.s32 1, %s17
    %s27 = scalar_select %p24, %s26, %s17
    %p28 = scmp.ge.s32.totalorder %s27, 1
    %s29 = scalar_select %p28, 0, %s27
    %s30 = ssub.s32 %s17, %s29
    %s31 = ssub.s32 %s18, %s25
    %s32 = sor.u32 %s30, %s31
    %p33 = scmp.eq.s32.totalorder %s32, 0
    %s35 = sadd.s32 %s34, 1
    %s36 = scalar_select %p33, %s34, %s35
    %p39 = pneg %p33
    %p40 = scmp.eq.s32.totalorder %s10, 3
    %p41 = por %p39, %p40
    %p42 = scmp.ne.s32.totalorder %s34, %s37
    %p43 = scmp.eq.s32.totalorder %s10, 0
    %p44 = por %p42, %p43
    %p45 = scmp.ne.s32.totalorder %s34, %s37
    %p46 = scmp.eq.s32.totalorder %s15, 3
    %p47 = por %p45, %p46
    %p48 = scmp.ne.s32.totalorder %s37, %s38
    %p49 = scmp.eq.s32.totalorder %s15, 0
    %p50 = por %p48, %p49
    %p51 = scmp.ne.s32.totalorder %s37, %s38
    %p52 = scmp.eq.s32.totalorder %s16, 3
    %p53 = por %p51, %p52
    %p55 = scmp.ne.s32.totalorder %s38, %s54
    %p56 = scmp.eq.s32.totalorder %s16, 0
    %p57 = por %p55, %p56
    %s58 = ssub.s32 %s18, %s25
    %p59 = scmp.eq.s32.totalorder %s58, 0
    %s61 = sadd.s32 %s60, 1
    %s62 = scalar_select %p59, %s60, %s61
    %p65 = pneg %p59
    %p66 = scmp.eq.s32.totalorder %s10, 3
    %p67 = por %p65, %p66
    %p68 = scmp.ne.s32.totalorder %s60, %s63
    %p69 = scmp.eq.s32.totalorder %s10, 0
    %p70 = por %p68, %p69
    %p71 = scmp.ne.s32.totalorder %s60, %s63
    %p72 = scmp.eq.s32.totalorder %s15, 3
    %p73 = por %p71, %p72
    %p74 = scmp.ne.s32.totalorder %s63, %s64
    %p75 = scmp.eq.s32.totalorder %s15, 0
    %p76 = por %p74, %p75
    %p77 = scmp.ne.s32.totalorder %s63, %s64
    %p78 = scmp.eq.s32.totalorder %s16, 3
    %p79 = por %p77, %p78
    %p81 = scmp.ne.s32.totalorder %s64, %s80
    %p82 = scmp.eq.s32.totalorder %s16, 0
    %p83 = por %p81, %p82
    %s84 = ssub.s32 %s17, %s29
    %p85 = scmp.eq.s32.totalorder %s84, 0
    %s87 = sadd.s32 %s86, 1
    %s88 = scalar_select %p85, %s86, %s87
    %p91 = pneg %p85
    %p92 = scmp.eq.s32.totalorder %s10, 3
    %p93 = por %p91, %p92
    %p94 = scmp.ne.s32.totalorder %s86, %s89
    %p95 = scmp.eq.s32.totalorder %s10, 0
    %p96 = por %p94, %p95
    %p97 = scmp.ne.s32.totalorder %s86, %s89
    %p98 = scmp.eq.s32.totalorder %s15, 3
    %p99 = por %p97, %p98
    %p100 = scmp.ne.s32.totalorder %s89, %s90
    %p101 = scmp.eq.s32.totalorder %s15, 0
    %p102 = por %p100, %p101
    %p103 = scmp.ne.s32.totalorder %s89, %s90
    %p104 = scmp.eq.s32.totalorder %s16, 3
    %p105 = por %p103, %p104
    %p107 = scmp.ne.s32.totalorder %s90, %s106
    %p108 = scmp.eq.s32.totalorder %s16, 0
    %p109 = por %p107, %p108
    %s110 = ssub.s32 %s17, %s29
    %p111 = scmp.eq.s32.totalorder %s110, 0
    %s113 = sadd.s32 %s112, 1
    %s114 = scalar_select %p111, %s112, %s113
    %p117 = pneg %p111
    %p118 = scmp.eq.s32.totalorder %s10, 3
    %p119 = por %p117, %p118
    %p120 = scmp.ne.s32.totalorder %s112, %s115
    %p121 = scmp.eq.s32.totalorder %s10, 0
    %p122 = por %p120, %p121
    %p123 = scmp.ne.s32.totalorder %s112, %s115
    %p124 = scmp.eq.s32.totalorder %s15, 3
    %p125 = por %p123, %p124
    %p126 = scmp.ne.s32.totalorder %s115, %s116
    %p127 = scmp.eq.s32.totalorder %s15, 0
    %p128 = por %p126, %p127
    %p129 = scmp.ne.s32.totalorder %s115, %s116
    %p130 = scmp.eq.s32.totalorder %s16, 3
    %p131 = por %p129, %p130
    %p133 = scmp.ne.s32.totalorder %s116, %s132
    %p134 = scmp.eq.s32.totalorder %s16, 0
    %p135 = por %p133, %p134
    %p136 = scmp.le.s32.totalorder 1, %s10
    %p137 = scmp.lt.s32.totalorder %s10, 5
    %p138 = pnand %p136, %p137
    %p139 = pneg %p138
    // Predicated region
    $region9: #{unet_forward.93} parent=5 // pred_check
      _
    $region10: #{unet_forward.93} parent=5 // pred_check_branch
      %141 = sbr.rel (%p138) target = $region12
    $region11: #{unet_forward.93} parent=5 // pred_region
      %s142 = ssub.s32 %s10, 1
    $region12: #{unet_forward.93} parent=5 // pred_fallthru
      _
    %p143 = scmp.lt.s32.totalorder %s10, 4
    // Predicated region
    $region13: #{unet_forward.93} parent=5 // pred_check
      %p144 = pneg %p143
    $region14: #{unet_forward.93} parent=5 // pred_check_branch
      %146 = sbr.rel (%p144) target = $region16
    $region15: #{unet_forward.93} parent=5 // pred_region
      // Predicated region
      $region17: #{unet_forward.93} parent=15 // pred_check
        %p147 = pneg %p44
      $region18: #{unet_forward.93} parent=15 // pred_check_branch
        %149 = sbr.rel (%p147) target = $region20
      $region19: #{unet_forward.93} parent=15 // pred_region
        %s150 = smul.u32 4, %s18
        %p151 = scmp.lt.s32.totalorder %s17, 0
        %s152 = scalar_select %p151, %s17, 0
        %p153 = scmp.lt.s32.totalorder %s150, 15
        %s154 = scalar_select %p153, %s150, 15
        %s155 = smul.addr %s152, 16
        %s156 = sadd.s32 %s154, %s155
        %s157 = smul.addr %s156, 4
        %s158 = scalar_lea.vmem %s0, %s157
        %s159 = smul.u32 4, %s18
      $region20: #{unet_forward.93} parent=15 // pred_fallthru
        _
      // Predicated region
      $region21: #{unet_forward.93} parent=15 // pred_check
        %p160 = pneg %p70
      $region22: #{unet_forward.93} parent=15 // pred_check_branch
        %162 = sbr.rel (%p160) target = $region24
      $region23: #{unet_forward.93} parent=15 // pred_region
        %s163 = smul.u32 64, %s18
        %p164 = scmp.lt.s32.totalorder %s163, 255
        %s165 = scalar_select %p164, %s163, 255
        %s166 = smul.addr %s165, 4
        %s167 = scalar_lea.vmem %s1, %s166
        %s168 = smul.u32 64, %s18
      $region24: #{unet_forward.93} parent=15 // pred_fallthru
        _
    $region16: #{unet_forward.93} parent=5 // pred_fallthru
      _
    %p169 = scmp.le.s32.totalorder 1, %s10
    %p170 = scmp.lt.s32.totalorder %s10, 5
    %p171 = pnand %p169, %p170
    %p172 = pneg %p171
    // Predicated region
    $region25: #{unet_forward.93} parent=5 // pred_check
      _
    $region26: #{unet_forward.93} parent=5 // pred_check_branch
      %174 = sbr.rel (%p171) target = $region28
    $region27: #{unet_forward.93} parent=5 // pred_region
      %s175 = ssub.s32 %s10, 1
      %s176 = smul.u32 4, %s20
      %p177 = scmp.lt.s32.totalorder %s19, 0
      %s178 = scalar_select %p177, %s19, 0
      %p179 = scmp.lt.s32.totalorder %s176, 15
      %s180 = scalar_select %p179, %s176, 15
      %s181 = smul.addr %s178, 16
      %s182 = sadd.s32 %s180, %s181
      %s183 = smul.addr %s182, 4
      %s184 = scalar_lea.vmem %s0, %s183
      %p185 = pneg %p50
      %p186 = pneg %p47
      %s187 = smul.u32 64, %s20
      %p188 = scmp.lt.s32.totalorder %s187, 255
      %s189 = scalar_select %p188, %s187, 255
      %s190 = smul.addr %s189, 4
      %s191 = scalar_lea.vmem %s1, %s190
      %p192 = pneg %p76
      %p193 = pneg %p73
      %p194 = pneg %p102
      %p195 = pneg %p99
      %p196 = scmp.lt.s32.totalorder %s19, 0
      %s197 = scalar_select %p196, %s19, 0
      %s198 = smul.addr %s197, 4
      %s199 = scalar_lea.vmem %s2, %s198
      %p200 = pneg %p128
      %p201 = pneg %p125
      %p202 = scmp.lt.s32.totalorder %s19, 0
      %s203 = scalar_select %p202, %s19, 0
      %s204 = smul.addr %s203, 2
      %s205 = scalar_lea.vmem %s3, %s204
      %s206 = smul.u32 4, %s20
      %p207 = scmp.lt.s32.totalorder %s19, 0
      %s208 = scalar_select %p207, %s19, 0
      %p209 = scmp.lt.s32.totalorder %s206, 15
      %s210 = scalar_select %p209, %s206, 15
      %s211 = smul.addr %s208, 16
      %s212 = sadd.s32 %s210, %s211
      %s213 = smul.addr %s212, 4
      %s214 = scalar_lea.vmem %s0, %s213
      %s215 = smul.u32 4, %s20
      %s216 = smul.u32 64, %s20
      %p217 = scmp.lt.s32.totalorder %s216, 255
      %s218 = scalar_select %p217, %s216, 255
      %s219 = smul.addr %s218, 4
      %s220 = scalar_lea.vmem %s1, %s219
      %s221 = smul.u32 64, %s20
      %p222 = scmp.lt.s32.totalorder %s19, 0
      %s223 = scalar_select %p222, %s19, 0
      %s224 = smul.addr %s223, 4
      %s225 = scalar_lea.vmem %s2, %s224
      %p226 = scmp.lt.s32.totalorder %s19, 0
      %s227 = scalar_select %p226, %s19, 0
      %s228 = smul.addr %s227, 2
      %s229 = scalar_lea.vmem %s3, %s228
      %p231 = scmp.eq.s32.totalorder %s20, 0
      // Predicated region
      $region29: #{unet_forward.93} parent=27 // pred_check
        %p232 = pneg %p231
      $region30: #{unet_forward.93} parent=27 // pred_check_branch
        %234 = sbr.rel (%p232) target = $region32
      $region31: #{unet_forward.93} parent=27 // pred_region
        %235 = vst [vmem:[#allocation2] sm:$0xff] 0.0
      $region32: #{unet_forward.93} parent=27 // pred_fallthru
        _
      %v236 = vld [vmem:[#allocation2] sm:$0xff]
      %v237 = vld [vmem:[%s214] sm:$0xff]
      %v238 = vld [vmem:[%s214 + $0x8] sm:$0xff]
      %v239 = vld [vmem:[%s220] sm:$0xf]
      %v240 = vld [vmem:[%s220 + $0x4] sm:$0xf]
      %v241 = vld [vmem:[%s220 + $0x8] sm:$0xf]
      %v242 = vld [vmem:[%s220 + $0xc] sm:$0xf]
      %v243 = vld [vmem:[%s220 + $0x10] sm:$0xf]
      %v244 = vld [vmem:[%s220 + $0x14] sm:$0xf]
      %v245 = vld [vmem:[%s220 + $0x18] sm:$0xf]
      %v246 = vld [vmem:[%s220 + $0x1c] sm:$0xf]
      %v247 = vld [vmem:[%s220 + $0x20] sm:$0xf]
      %v248 = vld [vmem:[%s220 + $0x24] sm:$0xf]
      %v249 = vld [vmem:[%s220 + $0x28] sm:$0xf]
      %v250 = vld [vmem:[%s220 + $0x2c] sm:$0xf]
      %v251 = vld [vmem:[%s220 + $0x30] sm:$0xf]
      %v252 = vld [vmem:[%s220 + $0x34] sm:$0xf]
      %v253 = vld [vmem:[%s220 + $0x38] sm:$0xf]
      %v254 = vld [vmem:[%s220 + $0x3c] sm:$0xf]
      %v255 = vld [vmem:[%s220 + $0x40] sm:$0xf]
      %v256 = vld [vmem:[%s220 + $0x44] sm:$0xf]
      %v257 = vld [vmem:[%s220 + $0x48] sm:$0xf]
      %v258 = vld [vmem:[%s220 + $0x4c] sm:$0xf]
      %v259 = vld [vmem:[%s220 + $0x50] sm:$0xf]
      %v260 = vld [vmem:[%s220 + $0x54] sm:$0xf]
      %v261 = vld [vmem:[%s220 + $0x58] sm:$0xf]
      %v262 = vld [vmem:[%s220 + $0x5c] sm:$0xf]
      %v263 = vld [vmem:[%s220 + $0x60] sm:$0xf]
      %v264 = vld [vmem:[%s220 + $0x64] sm:$0xf]
      %v265 = vld [vmem:[%s220 + $0x68] sm:$0xf]
      %v266 = vld [vmem:[%s220 + $0x6c] sm:$0xf]
      %v267 = vld [vmem:[%s220 + $0x70] sm:$0xf]
      %v268 = vld [vmem:[%s220 + $0x74] sm:$0xf]
      %v269 = vld [vmem:[%s220 + $0x78] sm:$0xf]
      %v270 = vld [vmem:[%s220 + $0x7c] sm:$0xf]
      %v271 = vld [vmem:[%s220 + $0x80] sm:$0xf]
      %v272 = vld [vmem:[%s220 + $0x84] sm:$0xf]
      %v273 = vld [vmem:[%s220 + $0x88] sm:$0xf]
      %v274 = vld [vmem:[%s220 + $0x8c] sm:$0xf]
      %v275 = vld [vmem:[%s220 + $0x90] sm:$0xf]
      %v276 = vld [vmem:[%s220 + $0x94] sm:$0xf]
      %v277 = vld [vmem:[%s220 + $0x98] sm:$0xf]
      %v278 = vld [vmem:[%s220 + $0x9c] sm:$0xf]
      %v279 = vld [vmem:[%s220 + $0xa0] sm:$0xf]
      %v280 = vld [vmem:[%s220 + $0xa4] sm:$0xf]
      %v281 = vld [vmem:[%s220 + $0xa8] sm:$0xf]
      %v282 = vld [vmem:[%s220 + $0xac] sm:$0xf]
      %v283 = vld [vmem:[%s220 + $0xb0] sm:$0xf]
      %v284 = vld [vmem:[%s220 + $0xb4] sm:$0xf]
      %v285 = vld [vmem:[%s220 + $0xb8] sm:$0xf]
      %v286 = vld [vmem:[%s220 + $0xbc] sm:$0xf]
      %v287 = vld [vmem:[%s220 + $0xc0] sm:$0xf]
      %v288 = vld [vmem:[%s220 + $0xc4] sm:$0xf]
      %v289 = vld [vmem:[%s220 + $0xc8] sm:$0xf]
      %v290 = vld [vmem:[%s220 + $0xcc] sm:$0xf]
      %v291 = vld [vmem:[%s220 + $0xd0] sm:$0xf]
      %v292 = vld [vmem:[%s220 + $0xd4] sm:$0xf]
      %v293 = vld [vmem:[%s220 + $0xd8] sm:$0xf]
      %v294 = vld [vmem:[%s220 + $0xdc] sm:$0xf]
      %v295 = vld [vmem:[%s220 + $0xe0] sm:$0xf]
      %v296 = vld [vmem:[%s220 + $0xe4] sm:$0xf]
      %v297 = vld [vmem:[%s220 + $0xe8] sm:$0xf]
      %v298 = vld [vmem:[%s220 + $0xec] sm:$0xf]
      %v299 = vld [vmem:[%s220 + $0xf0] sm:$0xf]
      %v300 = vld [vmem:[%s220 + $0xf4] sm:$0xf]
      %v301 = vld [vmem:[%s220 + $0xf8] sm:$0xf]
      %v302 = vld [vmem:[%s220 + $0xfc] sm:$0xf]
      %v305 = vunpack.c.l.b16 %v237
      %v306 = vunpack.c.h.b16 %v237
      %v307 = vunpack.c.l.b16 %v238
      %v308 = vunpack.c.h.b16 %v238
      %v309 = vpack.c.b16 %v305, %v305
      %v310 = vpack.c.b16 %v306, %v306
      %v311 = vpack.c.b16 %v307, %v307
      %v312 = vpack.c.b16 %v308, %v308
      %v381 = vunpack.c.l.b16 %v239
      %v382 = vunpack.c.l.b16 %v240
      %v383 = vunpack.c.l.b16 %v241
      %v384 = vunpack.c.l.b16 %v242
      %v385 = vunpack.c.l.b16 %v243
      %v386 = vunpack.c.l.b16 %v244
      %v387 = vunpack.c.l.b16 %v245
      %v388 = vunpack.c.l.b16 %v246
      %v389 = vunpack.c.l.b16 %v247
      %v390 = vunpack.c.l.b16 %v248
      %v391 = vunpack.c.l.b16 %v249
      %v392 = vunpack.c.l.b16 %v250
      %v393 = vunpack.c.l.b16 %v251
      %v394 = vunpack.c.l.b16 %v252
      %v395 = vunpack.c.l.b16 %v253
      %v396 = vunpack.c.l.b16 %v254
      %v397 = vunpack.c.l.b16 %v255
      %v398 = vunpack.c.l.b16 %v256
      %v399 = vunpack.c.l.b16 %v257
      %v400 = vunpack.c.l.b16 %v258
      %v401 = vunpack.c.l.b16 %v259
      %v402 = vunpack.c.l.b16 %v260
      %v403 = vunpack.c.l.b16 %v261
      %v404 = vunpack.c.l.b16 %v262
      %v405 = vunpack.c.l.b16 %v263
      %v406 = vunpack.c.l.b16 %v264
      %v407 = vunpack.c.l.b16 %v265
      %v408 = vunpack.c.l.b16 %v266
      %v409 = vunpack.c.l.b16 %v267
      %v410 = vunpack.c.l.b16 %v268
      %v411 = vunpack.c.l.b16 %v269
      %v412 = vunpack.c.l.b16 %v270
      %v413 = vunpack.c.l.b16 %v271
      %v414 = vunpack.c.l.b16 %v272
      %v415 = vunpack.c.l.b16 %v273
      %v416 = vunpack.c.l.b16 %v274
      %v417 = vunpack.c.l.b16 %v275
      %v418 = vunpack.c.l.b16 %v276
      %v419 = vunpack.c.l.b16 %v277
      %v420 = vunpack.c.l.b16 %v278
      %v421 = vunpack.c.l.b16 %v279
      %v422 = vunpack.c.l.b16 %v280
      %v423 = vunpack.c.l.b16 %v281
      %v424 = vunpack.c.l.b16 %v282
      %v425 = vunpack.c.l.b16 %v283
      %v426 = vunpack.c.l.b16 %v284
      %v427 = vunpack.c.l.b16 %v285
      %v428 = vunpack.c.l.b16 %v286
      %v429 = vunpack.c.l.b16 %v287
      %v430 = vunpack.c.l.b16 %v288
      %v431 = vunpack.c.l.b16 %v289
      %v432 = vunpack.c.l.b16 %v290
      %v433 = vunpack.c.l.b16 %v291
      %v434 = vunpack.c.l.b16 %v292
      %v435 = vunpack.c.l.b16 %v293
      %v436 = vunpack.c.l.b16 %v294
      %v437 = vunpack.c.l.b16 %v295
      %v438 = vunpack.c.l.b16 %v296
      %v439 = vunpack.c.l.b16 %v297
      %v440 = vunpack.c.l.b16 %v298
      %v441 = vunpack.c.l.b16 %v299
      %v442 = vunpack.c.l.b16 %v300
      %v443 = vunpack.c.l.b16 %v301
      %v444 = vunpack.c.l.b16 %v302
      %v445 = vpack.c.b16 %v382, %v381
      %v446 = vpack.c.b16 %v384, %v383
      %v447 = vpack.c.b16 %v386, %v385
      %v448 = vpack.c.b16 %v388, %v387
      %v449 = vpack.c.b16 %v390, %v389
      %v450 = vpack.c.b16 %v392, %v391
      %v451 = vpack.c.b16 %v394, %v393
      %v452 = vpack.c.b16 %v396, %v395
      %v453 = vpack.c.b16 %v398, %v397
      %v454 = vpack.c.b16 %v400, %v399
      %v455 = vpack.c.b16 %v402, %v401
      %v456 = vpack.c.b16 %v404, %v403
      %v457 = vpack.c.b16 %v406, %v405
      %v458 = vpack.c.b16 %v408, %v407
      %v459 = vpack.c.b16 %v410, %v409
      %v460 = vpack.c.b16 %v412, %v411
      %v461 = vpack.c.b16 %v414, %v413
      %v462 = vpack.c.b16 %v416, %v415
      %v463 = vpack.c.b16 %v418, %v417
      %v464 = vpack.c.b16 %v420, %v419
      %v465 = vpack.c.b16 %v422, %v421
      %v466 = vpack.c.b16 %v424, %v423
      %v467 = vpack.c.b16 %v426, %v425
      %v468 = vpack.c.b16 %v428, %v427
      %v469 = vpack.c.b16 %v430, %v429
      %v470 = vpack.c.b16 %v432, %v431
      %v471 = vpack.c.b16 %v434, %v433
      %v472 = vpack.c.b16 %v436, %v435
      %v473 = vpack.c.b16 %v438, %v437
      %v474 = vpack.c.b16 %v440, %v439
      %v475 = vpack.c.b16 %v442, %v441
      %v476 = vpack.c.b16 %v444, %v443
      %509 = vmatprep.subr.bf16.mxu0 0
      %510 = vmatpush1.bf16.msra.mxu0 %v452
      %511 = vmatprep.subr.bf16.mxu0 0
      %512 = vmatpush1.bf16.msra.mxu0 %v451
      %513 = vmatprep.subr.bf16.mxu0 0
      %514 = vmatpush1.bf16.msra.mxu0 %v450
      %515 = vmatprep.subr.bf16.mxu0 0
      %516 = vmatpush1.bf16.msra.mxu0 %v449
      %517 = vmatprep.subr.bf16.mxu0 0
      %518 = vmatpush1.bf16.msra.mxu0 %v448
      %519 = vmatprep.subr.bf16.mxu0 0
      %520 = vmatpush1.bf16.msra.mxu0 %v447
      %521 = vmatprep.subr.bf16.mxu0 0
      %522 = vmatpush1.bf16.msra.mxu0 %v446
      %523 = vmatprep.subr.bf16.mxu0 0
      %524 = vmatpush1.bf16.msra.mxu0 %v445
      %525 = vmatprep.subr.bf16.mxu0 0
      %526 = vmatpush2.bf16.msra.mxu0 %v460
      %527 = vmatprep.subr.bf16.mxu0 0
      %528 = vmatpush2.bf16.msra.mxu0 %v459
      %529 = vmatprep.subr.bf16.mxu0 0
      %530 = vmatpush2.bf16.msra.mxu0 %v458
      %531 = vmatprep.subr.bf16.mxu0 0
      %532 = vmatpush2.bf16.msra.mxu0 %v457
      %533 = vmatprep.subr.bf16.mxu0 0
      %534 = vmatpush2.bf16.msra.mxu0 %v456
      %535 = vmatprep.subr.bf16.mxu0 0
      %536 = vmatpush2.bf16.msra.mxu0 %v455
      %537 = vmatprep.subr.bf16.mxu0 0
      %538 = vmatpush2.bf16.msra.mxu0 %v454
      %539 = vmatprep.subr.bf16.mxu0 0
      %540 = vmatpush2.bf16.msra.mxu0 %v453
      %541 = vmatprep.mubr.bf16.mxu0 %v310
      %542 = vmatmul.mubr.bf16.gmra.mxu0 %v309
      %v543 = vpop.f32.mrf.mxu0
      %v544 = vadd.f32 0.0, %v543
      %v545 = vpop.f32.mrf.mxu0
      %v546 = vpop.f32.mrf.mxu0
      %v547 = vpop.f32.mrf.mxu0
      %548 = vdwg.mxu0
      %549 = vmatprep.subr.bf16.mxu0 0
      %550 = vmatpush1.bf16.msra.mxu0 %v468
      %551 = vmatprep.subr.bf16.mxu0 0
      %552 = vmatpush1.bf16.msra.mxu0 %v467
      %553 = vmatprep.subr.bf16.mxu0 0
      %554 = vmatpush1.bf16.msra.mxu0 %v466
      %555 = vmatprep.subr.bf16.mxu0 0
      %556 = vmatpush1.bf16.msra.mxu0 %v465
      %557 = vmatprep.subr.bf16.mxu0 0
      %558 = vmatpush1.bf16.msra.mxu0 %v464
      %559 = vmatprep.subr.bf16.mxu0 0
      %560 = vmatpush1.bf16.msra.mxu0 %v463
      %561 = vmatprep.subr.bf16.mxu0 0
      %562 = vmatpush1.bf16.msra.mxu0 %v462
      %563 = vmatprep.subr.bf16.mxu0 0
      %564 = vmatpush1.bf16.msra.mxu0 %v461
      %565 = vmatprep.subr.bf16.mxu0 0
      %566 = vmatpush2.bf16.msra.mxu0 %v476
      %567 = vmatprep.subr.bf16.mxu0 0
      %568 = vmatpush2.bf16.msra.mxu0 %v475
      %569 = vmatprep.subr.bf16.mxu0 0
      %570 = vmatpush2.bf16.msra.mxu0 %v474
      %571 = vmatprep.subr.bf16.mxu0 0
      %572 = vmatpush2.bf16.msra.mxu0 %v473
      %573 = vmatprep.subr.bf16.mxu0 0
      %574 = vmatpush2.bf16.msra.mxu0 %v472
      %575 = vmatprep.subr.bf16.mxu0 0
      %576 = vmatpush2.bf16.msra.mxu0 %v471
      %577 = vmatprep.subr.bf16.mxu0 0
      %578 = vmatpush2.bf16.msra.mxu0 %v470
      %579 = vmatprep.subr.bf16.mxu0 0
      %580 = vmatpush2.bf16.msra.mxu0 %v469
      %581 = vmatprep.mubr.bf16.mxu0 %v312
      %582 = vmatmul.mubr.bf16.gmra.mxu0 %v311
      %v583 = vpop.f32.mrf.mxu0
      %v584 = vadd.f32 %v544, %v583
      %v585 = vpop.f32.mrf.mxu0
      %v586 = vpop.f32.mrf.mxu0
      %v587 = vpop.f32.mrf.mxu0
      %588 = vdwg.mxu0
      %v589 = vadd.f32 %v236, %v584
      %590 = vst [vmem:[#allocation2] sm:$0xff] %v589
      %p591 = scmp.eq.s32.totalorder %s20, 3
      // Predicated region
      $region33: #{unet_forward.93} parent=27 // pred_check
        %p592 = pneg %p591
      $region34: #{unet_forward.93} parent=27 // pred_check_branch
        %594 = sbr.rel (%p592) target = $region36
      $region35: #{unet_forward.93} parent=27 // pred_region
        %v595 = vld [vmem:[#allocation2] sm:$0xff]
        %v596 = vpack.c.bf16 %v595, %v595
        %597 = vst [vmem:[%s225] sm:$0xf] %v596
        %v598 = vrot.slane %v595, 4
        %v599 = vadd.f32 %v595, %v598
        %v600 = vrot.slane %v599, 2
        %v601 = vadd.f32 %v599, %v600
        %v602 = vrot.slane %v601, 1
        %v603 = vadd.f32 %v601, %v602
        %v604 = vmul.f32 %v595, %v595
        %v605 = vrot.slane %v604, 4
        %v606 = vadd.f32 %v604, %v605
        %v607 = vrot.slane %v606, 2
        %v608 = vadd.f32 %v606, %v607
        %v609 = vrot.slane %v608, 1
        %v610 = vadd.f32 %v608, %v609
        %vm611 = vcmask 1040384
        %v612 = vsel %vm611, %v603, %v610
        %613 = vst [vmem:[%s229] sm:$0x3] %v612
      $region36: #{unet_forward.93} parent=27 // pred_fallthru
        _
      %p614 = scmp.lt.s32.totalorder %s19, 0
      %s615 = scalar_select %p614, %s19, 0
      %s616 = smul.addr %s615, 4
      %s617 = scalar_lea.vmem %s2, %s616
      %p618 = scmp.lt.s32.totalorder %s19, 0
      %s619 = scalar_select %p618, %s19, 0
      %s620 = smul.addr %s619, 2
      %s621 = scalar_lea.vmem %s3, %s620
      // Predicated region
      $region37: #{unet_forward.93} parent=27 // pred_check
        %p622 = pneg %p99
      $region38: #{unet_forward.93} parent=27 // pred_check_branch
        %624 = sbr.rel (%p622) target = $region40
      $region39: #{unet_forward.93} parent=27 // pred_region
        _
      $region40: #{unet_forward.93} parent=27 // pred_fallthru
        _
      // Predicated region
      $region41: #{unet_forward.93} parent=27 // pred_check
        %p625 = pneg %p125
      $region42: #{unet_forward.93} parent=27 // pred_check_branch
        %627 = sbr.rel (%p625) target = $region44
      $region43: #{unet_forward.93} parent=27 // pred_region
        _
      $region44: #{unet_forward.93} parent=27 // pred_fallthru
        _
      // Predicated region
      $region45: #{unet_forward.93} parent=27 // pred_check
        %p628 = pneg %p99
      $region46: #{unet_forward.93} parent=27 // pred_check_branch
        %630 = sbr.rel (%p628) target = $region48
      $region47: #{unet_forward.93} parent=27 // pred_region
        %p631 = scmp.lt.s32.totalorder %s19, 0
        %s632 = scalar_select %p631, %s19, 0
        %s633 = smul.addr %s632, 4
        %s634 = scalar_lea.vmem %s2, %s633
      $region48: #{unet_forward.93} parent=27 // pred_fallthru
        _
      // Predicated region
      $region49: #{unet_forward.93} parent=27 // pred_check
        %p635 = pneg %p125
      $region50: #{unet_forward.93} parent=27 // pred_check_branch
        %637 = sbr.rel (%p635) target = $region52
      $region51: #{unet_forward.93} parent=27 // pred_region
        %p638 = scmp.lt.s32.totalorder %s19, 0
        %s639 = scalar_select %p638, %s19, 0
        %s640 = smul.addr %s639, 2
        %s641 = scalar_lea.vmem %s3, %s640
      $region52: #{unet_forward.93} parent=27 // pred_fallthru
        _
    $region28: #{unet_forward.93} parent=5 // pred_fallthru
      _
    %p642 = scmp.le.s32.totalorder 2, %s10
    // Predicated region
    $region53: #{unet_forward.93} parent=5 // pred_check
      %p643 = pneg %p642
    $region54: #{unet_forward.93} parent=5 // pred_check_branch
      %645 = sbr.rel (%p643) target = $region56
    $region55: #{unet_forward.93} parent=5 // pred_region
      %s646 = ssub.s32 %s10, 2
    $region56: #{unet_forward.93} parent=5 // pred_fallthru
      _
  $region6: #{unet_forward.93} parent=0 // loop_footer
    %s14 = sadd.s32 1, %s10
  $region7: #{unet_forward.93} parent=0 // loop_footer_branch
    %9 = sbr.rel target = $region3
  $region8: #{unet_forward.93} parent=0 // loop_exit
    _

// kernel: unet_forward.109
$region0: #{unet_forward.109}
  #allocation0 [shape = 'u32[]', space=smem, size = 0x4, offset = 0x4, fixed_abs, tag = 'smem constant byte address 0x4 - core index']
  #allocation1 [shape = 'u32[144,128]{1,0:T(1,128)}', space=vmem, size = 0x12000, scoped, tag = 'internal scratch']
  #allocation2 [shape = 'f32[32,128]{1,0:T(8,128)}', space=vmem, size = 0x4000, scoped, tag = 'scratch operand']
  %s0 = inlined_call_operand.vmem [shape: bf16[32,512], index: 0, kind: input, shape index: {}]
  %s1 = inlined_call_operand.vmem [shape: bf16[512,128], index: 1, kind: input, shape index: {}]
  %s2 = inlined_call_operand.vmem [shape: bf16[32,128], index: 2, kind: output, shape index: {0}]
  %s3 = inlined_call_operand.vmem [shape: f32[1,2,128], index: 3, kind: output, shape index: {1}]
  %4 = xla_tuple %s2, %s3
  %s5 = sld [smem:[#allocation0]]
  $region34: #{unet_forward.109} parent=0
    _
  %s7 = ssub.s32 1, %s5
  %s8 = scalar_select 0, %s7, %s5
  // Predicated region
  $region2: #{unet_forward.109} parent=0 // pred_check
    _
  $region3: #{unet_forward.109} parent=0 // pred_check_branch
    %10 = sbr.rel (0) target = $region5
  $region4: #{unet_forward.109} parent=0 // pred_region
    _
  $region5: #{unet_forward.109} parent=0 // pred_fallthru
    _
  // Predicated region
  $region6: #{unet_forward.109} parent=0 // pred_check
    _
  $region7: #{unet_forward.109} parent=0 // pred_check_branch
    %12 = sbr.rel (0) target = $region9
  $region8: #{unet_forward.109} parent=0 // pred_region
    _
  $region9: #{unet_forward.109} parent=0 // pred_fallthru
    _
  %p14 = scmp.eq.s32.totalorder 0, 0
  // Predicated region
  $region10: #{unet_forward.109} parent=0 // pred_check
    %p15 = pneg %p14
  $region11: #{unet_forward.109} parent=0 // pred_check_branch
    %17 = sbr.rel (%p15) target = $region13
  $region12: #{unet_forward.109} parent=0 // pred_region
    %18 = vst [vmem:[#allocation2] sm:$0xff] 0.0
    %19 = vst [vmem:[#allocation2 + $0x8] sm:$0xff] 0.0
    %20 = vst [vmem:[#allocation2 + $0x10] sm:$0xff] 0.0
    %21 = vst [vmem:[#allocation2 + $0x18] sm:$0xff] 0.0
  $region13: #{unet_forward.109} parent=0 // pred_fallthru
    _
  %v22 = vld [vmem:[#allocation2] sm:$0xff]
  %v23 = vld [vmem:[#allocation2 + $0x8] sm:$0xff]
  %v24 = vld [vmem:[#allocation2 + $0x10] sm:$0xff]
  %v25 = vld [vmem:[#allocation2 + $0x18] sm:$0xff]
  %v26 = vld [vmem:[%s0] sm:$0xff]
  %v27 = vld [vmem:[%s0 + $0x8] sm:$0xff]
  %v28 = vld [vmem:[%s0 + $0x10] sm:$0xff]
  %v29 = vld [vmem:[%s0 + $0x18] sm:$0xff]
  %v30 = vld [vmem:[%s0 + $0x20] sm:$0xff]
  %v31 = vld [vmem:[%s0 + $0x28] sm:$0xff]
  %v32 = vld [vmem:[%s0 + $0x30] sm:$0xff]
  %v33 = vld [vmem:[%s0 + $0x38] sm:$0xff]
  %v34 = vld [vmem:[%s1] sm:$0xf]
  %v35 = vld [vmem:[%s1 + $0x4] sm:$0xf]
  %v36 = vld [vmem:[%s1 + $0x8] sm:$0xf]
  %v37 = vld [vmem:[%s1 + $0xc] sm:$0xf]
  %v38 = vld [vmem:[%s1 + $0x10] sm:$0xf]
  %v39 = vld [vmem:[%s1 + $0x14] sm:$0xf]
  %v40 = vld [vmem:[%s1 + $0x18] sm:$0xf]
  %v41 = vld [vmem:[%s1 + $0x1c] sm:$0xf]
  %v42 = vld [vmem:[%s1 + $0x20] sm:$0xf]
  %v43 = vld [vmem:[%s1 + $0x24] sm:$0xf]
  %v44 = vld [vmem:[%s1 + $0x28] sm:$0xf]
  %v45 = vld [vmem:[%s1 + $0x2c] sm:$0xf]
  %v46 = vld [vmem:[%s1 + $0x30] sm:$0xf]
  %v47 = vld [vmem:[%s1 + $0x34] sm:$0xf]
  %v48 = vld [vmem:[%s1 + $0x38] sm:$0xf]
  %v49 = vld [vmem:[%s1 + $0x3c] sm:$0xf]
  %v50 = vld [vmem:[%s1 + $0x40] sm:$0xf]
  %v51 = vld [vmem:[%s1 + $0x44] sm:$0xf]
  %v52 = vld [vmem:[%s1 + $0x48] sm:$0xf]
  %v53 = vld [vmem:[%s1 + $0x4c] sm:$0xf]
  %v54 = vld [vmem:[%s1 + $0x50] sm:$0xf]
  %v55 = vld [vmem:[%s1 + $0x54] sm:$0xf]
  %v56 = vld [vmem:[%s1 + $0x58] sm:$0xf]
  %v57 = vld [vmem:[%s1 + $0x5c] sm:$0xf]
  %v58 = vld [vmem:[%s1 + $0x60] sm:$0xf]
  %v59 = vld [vmem:[%s1 + $0x64] sm:$0xf]
  %v60 = vld [vmem:[%s1 + $0x68] sm:$0xf]
  %v61 = vld [vmem:[%s1 + $0x6c] sm:$0xf]
  %v62 = vld [vmem:[%s1 + $0x70] sm:$0xf]
  %v63 = vld [vmem:[%s1 + $0x74] sm:$0xf]
  %v64 = vld [vmem:[%s1 + $0x78] sm:$0xf]
  %v65 = vld [vmem:[%s1 + $0x7c] sm:$0xf]
  %v66 = vld [vmem:[%s1 + $0x80] sm:$0xf]
  %v67 = vld [vmem:[%s1 + $0x84] sm:$0xf]
  %v68 = vld [vmem:[%s1 + $0x88] sm:$0xf]
  %v69 = vld [vmem:[%s1 + $0x8c] sm:$0xf]
  %v70 = vld [vmem:[%s1 + $0x90] sm:$0xf]
  %v71 = vld [vmem:[%s1 + $0x94] sm:$0xf]
  %v72 = vld [vmem:[%s1 + $0x98] sm:$0xf]
  %v73 = vld [vmem:[%s1 + $0x9c] sm:$0xf]
  %v74 = vld [vmem:[%s1 + $0xa0] sm:$0xf]
  %v75 = vld [vmem:[%s1 + $0xa4] sm:$0xf]
  %v76 = vld [vmem:[%s1 + $0xa8] sm:$0xf]
  %v77 = vld [vmem:[%s1 + $0xac] sm:$0xf]
  %v78 = vld [vmem:[%s1 + $0xb0] sm:$0xf]
  %v79 = vld [vmem:[%s1 + $0xb4] sm:$0xf]
  %v80 = vld [vmem:[%s1 + $0xb8] sm:$0xf]
  %v81 = vld [vmem:[%s1 + $0xbc] sm:$0xf]
  %v82 = vld [vmem:[%s1 + $0xc0] sm:$0xf]
  %v83 = vld [vmem:[%s1 + $0xc4] sm:$0xf]
  %v84 = vld [vmem:[%s1 + $0xc8] sm:$0xf]
  %v85 = vld [vmem:[%s1 + $0xcc] sm:$0xf]
  %v86 = vld [vmem:[%s1 + $0xd0] sm:$0xf]
  %v87 = vld [vmem:[%s1 + $0xd4] sm:$0xf]
  %v88 = vld [vmem:[%s1 + $0xd8] sm:$0xf]
  %v89 = vld [vmem:[%s1 + $0xdc] sm:$0xf]
  %v90 = vld [vmem:[%s1 + $0xe0] sm:$0xf]
  %v91 = vld [vmem:[%s1 + $0xe4] sm:$0xf]
  %v92 = vld [vmem:[%s1 + $0xe8] sm:$0xf]
  %v93 = vld [vmem:[%s1 + $0xec] sm:$0xf]
  %v94 = vld [vmem:[%s1 + $0xf0] sm:$0xf]
  %v95 = vld [vmem:[%s1 + $0xf4] sm:$0xf]
  %v96 = vld [vmem:[%s1 + $0xf8] sm:$0xf]
  %v97 = vld [vmem:[%s1 + $0xfc] sm:$0xf]
  %v106 = vunpack.c.l.b16 %v26
  %v107 = vunpack.c.h.b16 %v26
  %v108 = vunpack.c.l.b16 %v27
  %v109 = vunpack.c.h.b16 %v27
  %v110 = vunpack.c.l.b16 %v28
  %v111 = vunpack.c.h.b16 %v28
  %v112 = vunpack.c.l.b16 %v29
  %v113 = vunpack.c.h.b16 %v29
  %v114 = vunpack.c.l.b16 %v30
  %v115 = vunpack.c.h.b16 %v30
  %v116 = vunpack.c.l.b16 %v31
  %v117 = vunpack.c.h.b16 %v31
  %v118 = vunpack.c.l.b16 %v32
  %v119 = vunpack.c.h.b16 %v32
  %v120 = vunpack.c.l.b16 %v33
  %v121 = vunpack.c.h.b16 %v33
  %v122 = vpack.c.b16 %v110, %v106
  %v123 = vpack.c.b16 %v111, %v107
  %v124 = vpack.c.b16 %v112, %v108
  %v125 = vpack.c.b16 %v113, %v109
  %v126 = vpack.c.b16 %v118, %v114
  %v127 = vpack.c.b16 %v119, %v115
  %v128 = vpack.c.b16 %v120, %v116
  %v129 = vpack.c.b16 %v121, %v117
  %v202 = vunpack.c.l.b16 %v34
  %v203 = vunpack.c.l.b16 %v35
  %v204 = vunpack.c.l.b16 %v36
  %v205 = vunpack.c.l.b16 %v37
  %v206 = vunpack.c.l.b16 %v38
  %v207 = vunpack.c.l.b16 %v39
  %v208 = vunpack.c.l.b16 %v40
  %v209 = vunpack.c.l.b16 %v41
  %v210 = vunpack.c.l.b16 %v42
  %v211 = vunpack.c.l.b16 %v43
  %v212 = vunpack.c.l.b16 %v44
  %v213 = vunpack.c.l.b16 %v45
  %v214 = vunpack.c.l.b16 %v46
  %v215 = vunpack.c.l.b16 %v47
  %v216 = vunpack.c.l.b16 %v48
  %v217 = vunpack.c.l.b16 %v49
  %v218 = vunpack.c.l.b16 %v50
  %v219 = vunpack.c.l.b16 %v51
  %v220 = vunpack.c.l.b16 %v52
  %v221 = vunpack.c.l.b16 %v53
  %v222 = vunpack.c.l.b16 %v54
  %v223 = vunpack.c.l.b16 %v55
  %v224 = vunpack.c.l.b16 %v56
  %v225 = vunpack.c.l.b16 %v57
  %v226 = vunpack.c.l.b16 %v58
  %v227 = vunpack.c.l.b16 %v59
  %v228 = vunpack.c.l.b16 %v60
  %v229 = vunpack.c.l.b16 %v61
  %v230 = vunpack.c.l.b16 %v62
  %v231 = vunpack.c.l.b16 %v63
  %v232 = vunpack.c.l.b16 %v64
  %v233 = vunpack.c.l.b16 %v65
  %v234 = vunpack.c.l.b16 %v66
  %v235 = vunpack.c.l.b16 %v67
  %v236 = vunpack.c.l.b16 %v68
  %v237 = vunpack.c.l.b16 %v69
  %v238 = vunpack.c.l.b16 %v70
  %v239 = vunpack.c.l.b16 %v71
  %v240 = vunpack.c.l.b16 %v72
  %v241 = vunpack.c.l.b16 %v73
  %v242 = vunpack.c.l.b16 %v74
  %v243 = vunpack.c.l.b16 %v75
  %v244 = vunpack.c.l.b16 %v76
  %v245 = vunpack.c.l.b16 %v77
  %v246 = vunpack.c.l.b16 %v78
  %v247 = vunpack.c.l.b16 %v79
  %v248 = vunpack.c.l.b16 %v80
  %v249 = vunpack.c.l.b16 %v81
  %v250 = vunpack.c.l.b16 %v82
  %v251 = vunpack.c.l.b16 %v83
  %v252 = vunpack.c.l.b16 %v84
  %v253 = vunpack.c.l.b16 %v85
  %v254 = vunpack.c.l.b16 %v86
  %v255 = vunpack.c.l.b16 %v87
  %v256 = vunpack.c.l.b16 %v88
  %v257 = vunpack.c.l.b16 %v89
  %v258 = vunpack.c.l.b16 %v90
  %v259 = vunpack.c.l.b16 %v91
  %v260 = vunpack.c.l.b16 %v92
  %v261 = vunpack.c.l.b16 %v93
  %v262 = vunpack.c.l.b16 %v94
  %v263 = vunpack.c.l.b16 %v95
  %v264 = vunpack.c.l.b16 %v96
  %v265 = vunpack.c.l.b16 %v97
  %v266 = vpack.c.b16 %v203, %v202
  %v267 = vpack.c.b16 %v205, %v204
  %v268 = vpack.c.b16 %v207, %v206
  %v269 = vpack.c.b16 %v209, %v208
  %v270 = vpack.c.b16 %v211, %v210
  %v271 = vpack.c.b16 %v213, %v212
  %v272 = vpack.c.b16 %v215, %v214
  %v273 = vpack.c.b16 %v217, %v216
  %v274 = vpack.c.b16 %v219, %v218
  %v275 = vpack.c.b16 %v221, %v220
  %v276 = vpack.c.b16 %v223, %v222
  %v277 = vpack.c.b16 %v225, %v224
  %v278 = vpack.c.b16 %v227, %v226
  %v279 = vpack.c.b16 %v229, %v228
  %v280 = vpack.c.b16 %v231, %v230
  %v281 = vpack.c.b16 %v233, %v232
  %v282 = vpack.c.b16 %v235, %v234
  %v283 = vpack.c.b16 %v237, %v236
  %v284 = vpack.c.b16 %v239, %v238
  %v285 = vpack.c.b16 %v241, %v240
  %v286 = vpack.c.b16 %v243, %v242
  %v287 = vpack.c.b16 %v245, %v244
  %v288 = vpack.c.b16 %v247, %v246
  %v289 = vpack.c.b16 %v249, %v248
  %v290 = vpack.c.b16 %v251, %v250
  %v291 = vpack.c.b16 %v253, %v252
  %v292 = vpack.c.b16 %v255, %v254
  %v293 = vpack.c.b16 %v257, %v256
  %v294 = vpack.c.b16 %v259, %v258
  %v295 = vpack.c.b16 %v261, %v260
  %v296 = vpack.c.b16 %v263, %v262
  %v297 = vpack.c.b16 %v265, %v264
  %330 = vmatprep.subr.bf16.mxu0 0
  %331 = vmatpush1.bf16.msra.mxu0 %v273
  %332 = vmatprep.subr.bf16.mxu0 0
  %333 = vmatpush1.bf16.msra.mxu0 %v272
  %334 = vmatprep.subr.bf16.mxu0 0
  %335 = vmatpush1.bf16.msra.mxu0 %v271
  %336 = vmatprep.subr.bf16.mxu0 0
  %337 = vmatpush1.bf16.msra.mxu0 %v270
  %338 = vmatprep.subr.bf16.mxu0 0
  %339 = vmatpush1.bf16.msra.mxu0 %v269
  %340 = vmatprep.subr.bf16.mxu0 0
  %341 = vmatpush1.bf16.msra.mxu0 %v268
  %342 = vmatprep.subr.bf16.mxu0 0
  %343 = vmatpush1.bf16.msra.mxu0 %v267
  %344 = vmatprep.subr.bf16.mxu0 0
  %345 = vmatpush1.bf16.msra.mxu0 %v266
  %346 = vmatprep.subr.bf16.mxu0 0
  %347 = vmatpush2.bf16.msra.mxu0 %v281
  %348 = vmatprep.subr.bf16.mxu0 0
  %349 = vmatpush2.bf16.msra.mxu0 %v280
  %350 = vmatprep.subr.bf16.mxu0 0
  %351 = vmatpush2.bf16.msra.mxu0 %v279
  %352 = vmatprep.subr.bf16.mxu0 0
  %353 = vmatpush2.bf16.msra.mxu0 %v278
  %354 = vmatprep.subr.bf16.mxu0 0
  %355 = vmatpush2.bf16.msra.mxu0 %v277
  %356 = vmatprep.subr.bf16.mxu0 0
  %357 = vmatpush2.bf16.msra.mxu0 %v276
  %358 = vmatprep.subr.bf16.mxu0 0
  %359 = vmatpush2.bf16.msra.mxu0 %v275
  %360 = vmatprep.subr.bf16.mxu0 0
  %361 = vmatpush2.bf16.msra.mxu0 %v274
  %362 = vmatprep.mubr.bf16.mxu0 %v123
  %363 = vmatmul.mubr.bf16.gmra.mxu0 %v122
  %v364 = vpop.f32.mrf.mxu0
  %v365 = vadd.f32 0.0, %v364
  %v366 = vpop.f32.mrf.mxu0
  %v367 = vpop.f32.mrf.mxu0
  %v368 = vadd.f32 0.0, %v367
  %v369 = vpop.f32.mrf.mxu0
  %370 = vmatprep.mubr.bf16.mxu0 %v127
  %371 = vmatmul.mubr.bf16.gmra.mxu0 %v126
  %v372 = vpop.f32.mrf.mxu0
  %v373 = vadd.f32 0.0, %v372
  %v374 = vpop.f32.mrf.mxu0
  %v375 = vpop.f32.mrf.mxu0
  %v376 = vadd.f32 0.0, %v375
  %v377 = vpop.f32.mrf.mxu0
  %378 = vdwg.mxu0
  %379 = vmatprep.subr.bf16.mxu0 0
  %380 = vmatpush1.bf16.msra.mxu0 %v289
  %381 = vmatprep.subr.bf16.mxu0 0
  %382 = vmatpush1.bf16.msra.mxu0 %v288
  %383 = vmatprep.subr.bf16.mxu0 0
  %384 = vmatpush1.bf16.msra.mxu0 %v287
  %385 = vmatprep.subr.bf16.mxu0 0
  %386 = vmatpush1.bf16.msra.mxu0 %v286
  %387 = vmatprep.subr.bf16.mxu0 0
  %388 = vmatpush1.bf16.msra.mxu0 %v285
  %389 = vmatprep.subr.bf16.mxu0 0
  %390 = vmatpush1.bf16.msra.mxu0 %v284
  %391 = vmatprep.subr.bf16.mxu0 0
  %392 = vmatpush1.bf16.msra.mxu0 %v283
  %393 = vmatprep.subr.bf16.mxu0 0
  %394 = vmatpush1.bf16.msra.mxu0 %v282
  %395 = vmatprep.subr.bf16.mxu0 0
  %396 = vmatpush2.bf16.msra.mxu0 %v297
  %397 = vmatprep.subr.bf16.mxu0 0
  %398 = vmatpush2.bf16.msra.mxu0 %v296
  %399 = vmatprep.subr.bf16.mxu0 0
  %400 = vmatpush2.bf16.msra.mxu0 %v295
  %401 = vmatprep.subr.bf16.mxu0 0
  %402 = vmatpush2.bf16.msra.mxu0 %v294
  %403 = vmatprep.subr.bf16.mxu0 0
  %404 = vmatpush2.bf16.msra.mxu0 %v293
  %405 = vmatprep.subr.bf16.mxu0 0
  %406 = vmatpush2.bf16.msra.mxu0 %v292
  %407 = vmatprep.subr.bf16.mxu0 0
  %408 = vmatpush2.bf16.msra.mxu0 %v291
  %409 = vmatprep.subr.bf16.mxu0 0
  %410 = vmatpush2.bf16.msra.mxu0 %v290
  %411 = vmatprep.mubr.bf16.mxu0 %v125
  %412 = vmatmul.mubr.bf16.gmra.mxu0 %v124
  %v413 = vpop.f32.mrf.mxu0
  %v414 = vadd.f32 %v365, %v413
  %v415 = vpop.f32.mrf.mxu0
  %v416 = vpop.f32.mrf.mxu0
  %v417 = vadd.f32 %v368, %v416
  %v418 = vpop.f32.mrf.mxu0
  %419 = vmatprep.mubr.bf16.mxu0 %v129
  %420 = vmatmul.mubr.bf16.gmra.mxu0 %v128
  %v421 = vpop.f32.mrf.mxu0
  %v422 = vadd.f32 %v373, %v421
  %v423 = vpop.f32.mrf.mxu0
  %v424 = vpop.f32.mrf.mxu0
  %v425 = vadd.f32 %v376, %v424
  %v426 = vpop.f32.mrf.mxu0
  %427 = vdwg.mxu0
  %v428 = vadd.f32 %v22, %v414
  %v429 = vadd.f32 %v23, %v417
  %v430 = vadd.f32 %v24, %v422
  %v431 = vadd.f32 %v25, %v425
  %432 = vst [vmem:[#allocation2] sm:$0xff] %v428
  %433 = vst [vmem:[#allocation2 + $0x8] sm:$0xff] %v429
  %434 = vst [vmem:[#allocation2 + $0x10] sm:$0xff] %v430
  %435 = vst [vmem:[#allocation2 + $0x18] sm:$0xff] %v431
  // Predicated region
  $region14: #{unet_forward.109} parent=0 // pred_check
    %p436 = pneg %p14
  $region15: #{unet_forward.109} parent=0 // pred_check_branch
    %438 = sbr.rel (%p436) target = $region17
  $region16: #{unet_forward.109} parent=0 // pred_region
    %v439 = vld [vmem:[#allocation2] sm:$0xff]
    %v440 = vld [vmem:[#allocation2 + $0x8] sm:$0xff]
    %v441 = vld [vmem:[#allocation2 + $0x10] sm:$0xff]
    %v442 = vld [vmem:[#allocation2 + $0x18] sm:$0xff]
    %v443 = vpack.c.bf16 %v440, %v439
    %v444 = vpack.c.bf16 %v442, %v441
    %v447 = vunpack.c.l.b16 %v443
    %v448 = vunpack.c.h.b16 %v443
    %v449 = vunpack.c.l.b16 %v444
    %v450 = vunpack.c.h.b16 %v444
    %v451 = vpack.c.b16 %v447, %v447
    %v452 = vpack.c.b16 %v448, %v448
    %v453 = vpack.c.b16 %v449, %v449
    %v454 = vpack.c.b16 %v450, %v450
    %459 = vst [vmem:[%s2] sm:$0xf] %v451
    %460 = vst [vmem:[%s2 + $0x4] sm:$0xf] %v452
    %461 = vst [vmem:[%s2 + $0x8] sm:$0xf] %v453
    %462 = vst [vmem:[%s2 + $0xc] sm:$0xf] %v454
    %v463 = vadd.f32 %v439, %v440
    %v464 = vadd.f32 %v463, %v441
    %v465 = vadd.f32 %v464, %v442
    %v466 = vrot.slane %v465, 4
    %v467 = vadd.f32 %v465, %v466
    %v468 = vrot.slane %v467, 2
    %v469 = vadd.f32 %v467, %v468
    %v470 = vrot.slane %v469, 1
    %v471 = vadd.f32 %v469, %v470
    %v472 = vmul.f32 %v439, %v439
    %v473 = vmul.f32 %v440, %v440
    %v474 = vmul.f32 %v441, %v441
    %v475 = vmul.f32 %v442, %v442
    %v476 = vadd.f32 %v472, %v473
    %v477 = vadd.f32 %v476, %v474
    %v478 = vadd.f32 %v477, %v475
    %v479 = vrot.slane %v478, 4
    %v480 = vadd.f32 %v478, %v479
    %v481 = vrot.slane %v480, 2
    %v482 = vadd.f32 %v480, %v481
    %v483 = vrot.slane %v482, 1
    %v484 = vadd.f32 %v482, %v483
    %vm485 = vcmask 1040384
    %v486 = vsel %vm485, %v471, %v484
    %487 = vst [vmem:[%s3] sm:$0x3] %v486
  $region17: #{unet_forward.109} parent=0 // pred_fallthru
    _
  // Predicated region
  $region18: #{unet_forward.109} parent=0 // pred_check
    _
  $region19: #{unet_forward.109} parent=0 // pred_check_branch
    %489 = sbr.rel (0) target = $region21
  $region20: #{unet_forward.109} parent=0 // pred_region
    _
  $region21: #{unet_forward.109} parent=0 // pred_fallthru
    _
  // Predicated region
  $region22: #{unet_forward.109} parent=0 // pred_check
    _
  $region23: #{unet_forward.109} parent=0 // pred_check_branch
    %491 = sbr.rel (0) target = $region25
  $region24: #{unet_forward.109} parent=0 // pred_region
    _
  $region25: #{unet_forward.109} parent=0 // pred_fallthru
    _
  // Predicated region
  $region26: #{unet_forward.109} parent=0 // pred_check
    _
  $region27: #{unet_forward.109} parent=0 // pred_check_branch
    %493 = sbr.rel (0) target = $region29
  $region28: #{unet_forward.109} parent=0 // pred_region
    _
  $region29: #{unet_forward.109} parent=0 // pred_fallthru
    _
  // Predicated region
  $region30: #{unet_forward.109} parent=0 // pred_check
    _
  $region31: #{unet_forward.109} parent=0 // pred_check_branch
    %495 = sbr.rel (0) target = $region33
  $region32: #{unet_forward.109} parent=0 // pred_region
    _
  $region33: #{unet_forward.109} parent=0 // pred_fallthru
    _

// kernel: unet_forward.117
$region0: #{unet_forward.117}
  #allocation0 [shape = 'u32[]', space=smem, size = 0x4, offset = 0x4, fixed_abs, tag = 'smem constant byte address 0x4 - core index']
  #allocation1 [shape = 'u32[144,128]{1,0:T(1,128)}', space=vmem, size = 0x12000, scoped, tag = 'internal scratch']
  #allocation2 [shape = 'f32[128,128]{1,0:T(8,128)}', space=vmem, size = 0x10000, scoped, tag = 'scratch operand']
  %s0 = inlined_call_operand.vmem [shape: bf16[128,256], index: 0, kind: input, shape index: {}]
  %s1 = inlined_call_operand.vmem [shape: bf16[256,128], index: 1, kind: input, shape index: {}]
  %s2 = inlined_call_operand.vmem [shape: bf16[128,128], index: 2, kind: output, shape index: {0}]
  %s3 = inlined_call_operand.vmem [shape: f32[1,2,128], index: 3, kind: output, shape index: {1}]
  %4 = xla_tuple %s2, %s3
  %s5 = sld [smem:[#allocation0]]
  $region34: #{unet_forward.117} parent=0
    _
  %s7 = ssub.s32 1, %s5
  %s8 = scalar_select 0, %s7, %s5
  // Predicated region
  $region2: #{unet_forward.117} parent=0 // pred_check
    _
  $region3: #{unet_forward.117} parent=0 // pred_check_branch
    %10 = sbr.rel (0) target = $region5
  $region4: #{unet_forward.117} parent=0 // pred_region
    _
  $region5: #{unet_forward.117} parent=0 // pred_fallthru
    _
  // Predicated region
  $region6: #{unet_forward.117} parent=0 // pred_check
    _
  $region7: #{unet_forward.117} parent=0 // pred_check_branch
    %12 = sbr.rel (0) target = $region9
  $region8: #{unet_forward.117} parent=0 // pred_region
    _
  $region9: #{unet_forward.117} parent=0 // pred_fallthru
    _
  %p14 = scmp.eq.s32.totalorder 0, 0
  // Predicated region
  $region10: #{unet_forward.117} parent=0 // pred_check
    %p15 = pneg %p14
  $region11: #{unet_forward.117} parent=0 // pred_check_branch
    %17 = sbr.rel (%p15) target = $region13
  $region12: #{unet_forward.117} parent=0 // pred_region
    %18 = vst [vmem:[#allocation2] sm:$0xff] 0.0
    %19 = vst [vmem:[#allocation2 + $0x8] sm:$0xff] 0.0
    %20 = vst [vmem:[#allocation2 + $0x10] sm:$0xff] 0.0
    %21 = vst [vmem:[#allocation2 + $0x18] sm:$0xff] 0.0
    %22 = vst [vmem:[#allocation2 + $0x20] sm:$0xff] 0.0
    %23 = vst [vmem:[#allocation2 + $0x28] sm:$0xff] 0.0
    %24 = vst [vmem:[#allocation2 + $0x30] sm:$0xff] 0.0
    %25 = vst [vmem:[#allocation2 + $0x38] sm:$0xff] 0.0
    %26 = vst [vmem:[#allocation2 + $0x40] sm:$0xff] 0.0
    %27 = vst [vmem:[#allocation2 + $0x48] sm:$0xff] 0.0
    %28 = vst [vmem:[#allocation2 + $0x50] sm:$0xff] 0.0
    %29 = vst [vmem:[#allocation2 + $0x58] sm:$0xff] 0.0
    %30 = vst [vmem:[#allocation2 + $0x60] sm:$0xff] 0.0
    %31 = vst [vmem:[#allocation2 + $0x68] sm:$0xff] 0.0
    %32 = vst [vmem:[#allocation2 + $0x70] sm:$0xff] 0.0
    %33 = vst [vmem:[#allocation2 + $0x78] sm:$0xff] 0.0
  $region13: #{unet_forward.117} parent=0 // pred_fallthru
    _
  %v34 = vld [vmem:[#allocation2] sm:$0xff]
  %v35 = vld [vmem:[#allocation2 + $0x8] sm:$0xff]
  %v36 = vld [vmem:[#allocation2 + $0x10] sm:$0xff]
  %v37 = vld [vmem:[#allocation2 + $0x18] sm:$0xff]
  %v38 = vld [vmem:[#allocation2 + $0x20] sm:$0xff]
  %v39 = vld [vmem:[#allocation2 + $0x28] sm:$0xff]
  %v40 = vld [vmem:[#allocation2 + $0x30] sm:$0xff]
  %v41 = vld [vmem:[#allocation2 + $0x38] sm:$0xff]
  %v42 = vld [vmem:[#allocation2 + $0x40] sm:$0xff]
  %v43 = vld [vmem:[#allocation2 + $0x48] sm:$0xff]
  %v44 = vld [vmem:[#allocation2 + $0x50] sm:$0xff]
  %v45 = vld [vmem:[#allocation2 + $0x58] sm:$0xff]
  %v46 = vld [vmem:[#allocation2 + $0x60] sm:$0xff]
  %v47 = vld [vmem:[#allocation2 + $0x68] sm:$0xff]
  %v48 = vld [vmem:[#allocation2 + $0x70] sm:$0xff]
  %v49 = vld [vmem:[#allocation2 + $0x78] sm:$0xff]
  %v50 = vld [vmem:[%s0] sm:$0xff]
  %v51 = vld [vmem:[%s0 + $0x8] sm:$0xff]
  %v52 = vld [vmem:[%s0 + $0x10] sm:$0xff]
  %v53 = vld [vmem:[%s0 + $0x18] sm:$0xff]
  %v54 = vld [vmem:[%s0 + $0x20] sm:$0xff]
  %v55 = vld [vmem:[%s0 + $0x28] sm:$0xff]
  %v56 = vld [vmem:[%s0 + $0x30] sm:$0xff]
  %v57 = vld [vmem:[%s0 + $0x38] sm:$0xff]
  %v58 = vld [vmem:[%s0 + $0x40] sm:$0xff]
  %v59 = vld [vmem:[%s0 + $0x48] sm:$0xff]
  %v60 = vld [vmem:[%s0 + $0x50] sm:$0xff]
  %v61 = vld [vmem:[%s0 + $0x58] sm:$0xff]
  %v62 = vld [vmem:[%s0 + $0x60] sm:$0xff]
  %v63 = vld [vmem:[%s0 + $0x68] sm:$0xff]
  %v64 = vld [vmem:[%s0 + $0x70] sm:$0xff]
  %v65 = vld [vmem:[%s0 + $0x78] sm:$0xff]
  %v66 = vld [vmem:[%s1] sm:$0xf]
  %v67 = vld [vmem:[%s1 + $0x4] sm:$0xf]
  %v68 = vld [vmem:[%s1 + $0x8] sm:$0xf]
  %v69 = vld [vmem:[%s1 + $0xc] sm:$0xf]
  %v70 = vld [vmem:[%s1 + $0x10] sm:$0xf]
  %v71 = vld [vmem:[%s1 + $0x14] sm:$0xf]
  %v72 = vld [vmem:[%s1 + $0x18] sm:$0xf]
  %v73 = vld [vmem:[%s1 + $0x1c] sm:$0xf]
  %v74 = vld [vmem:[%s1 + $0x20] sm:$0xf]
  %v75 = vld [vmem:[%s1 + $0x24] sm:$0xf]
  %v76 = vld [vmem:[%s1 + $0x28] sm:$0xf]
  %v77 = vld [vmem:[%s1 + $0x2c] sm:$0xf]
  %v78 = vld [vmem:[%s1 + $0x30] sm:$0xf]
  %v79 = vld [vmem:[%s1 + $0x34] sm:$0xf]
  %v80 = vld [vmem:[%s1 + $0x38] sm:$0xf]
  %v81 = vld [vmem:[%s1 + $0x3c] sm:$0xf]
  %v82 = vld [vmem:[%s1 + $0x40] sm:$0xf]
  %v83 = vld [vmem:[%s1 + $0x44] sm:$0xf]
  %v84 = vld [vmem:[%s1 + $0x48] sm:$0xf]
  %v85 = vld [vmem:[%s1 + $0x4c] sm:$0xf]
  %v86 = vld [vmem:[%s1 + $0x50] sm:$0xf]
  %v87 = vld [vmem:[%s1 + $0x54] sm:$0xf]
  %v88 = vld [vmem:[%s1 + $0x58] sm:$0xf]
  %v89 = vld [vmem:[%s1 + $0x5c] sm:$0xf]
  %v90 = vld [vmem:[%s1 + $0x60] sm:$0xf]
  %v91 = vld [vmem:[%s1 + $0x64] sm:$0xf]
  %v92 = vld [vmem:[%s1 + $0x68] sm:$0xf]
  %v93 = vld [vmem:[%s1 + $0x6c] sm:$0xf]
  %v94 = vld [vmem:[%s1 + $0x70] sm:$0xf]
  %v95 = vld [vmem:[%s1 + $0x74] sm:$0xf]
  %v96 = vld [vmem:[%s1 + $0x78] sm:$0xf]
  %v97 = vld [vmem:[%s1 + $0x7c] sm:$0xf]
  %v114 = vunpack.c.l.b16 %v50
  %v115 = vunpack.c.h.b16 %v50
  %v116 = vunpack.c.l.b16 %v51
  %v117 = vunpack.c.h.b16 %v51
  %v118 = vunpack.c.l.b16 %v52
  %v119 = vunpack.c.h.b16 %v52
  %v120 = vunpack.c.l.b16 %v53
  %v121 = vunpack.c.h.b16 %v53
  %v122 = vunpack.c.l.b16 %v54
  %v123 = vunpack.c.h.b16 %v54
  %v124 = vunpack.c.l.b16 %v55
  %v125 = vunpack.c.h.b16 %v55
  %v126 = vunpack.c.l.b16 %v56
  %v127 = vunpack.c.h.b16 %v56
  %v128 = vunpack.c.l.b16 %v57
  %v129 = vunpack.c.h.b16 %v57
  %v130 = vunpack.c.l.b16 %v58
  %v131 = vunpack.c.h.b16 %v58
  %v132 = vunpack.c.l.b16 %v59
  %v133 = vunpack.c.h.b16 %v59
  %v134 = vunpack.c.l.b16 %v60
  %v135 = vunpack.c.h.b16 %v60
  %v136 = vunpack.c.l.b16 %v61
  %v137 = vunpack.c.h.b16 %v61
  %v138 = vunpack.c.l.b16 %v62
  %v139 = vunpack.c.h.b16 %v62
  %v140 = vunpack.c.l.b16 %v63
  %v141 = vunpack.c.h.b16 %v63
  %v142 = vunpack.c.l.b16 %v64
  %v143 = vunpack.c.h.b16 %v64
  %v144 = vunpack.c.l.b16 %v65
  %v145 = vunpack.c.h.b16 %v65
  %v146 = vpack.c.b16 %v116, %v114
  %v147 = vpack.c.b16 %v117, %v115
  %v148 = vpack.c.b16 %v120, %v118
  %v149 = vpack.c.b16 %v121, %v119
  %v150 = vpack.c.b16 %v124, %v122
  %v151 = vpack.c.b16 %v125, %v123
  %v152 = vpack.c.b16 %v128, %v126
  %v153 = vpack.c.b16 %v129, %v127
  %v154 = vpack.c.b16 %v132, %v130
  %v155 = vpack.c.b16 %v133, %v131
  %v156 = vpack.c.b16 %v136, %v134
  %v157 = vpack.c.b16 %v137, %v135
  %v158 = vpack.c.b16 %v140, %v138
  %v159 = vpack.c.b16 %v141, %v139
  %v160 = vpack.c.b16 %v144, %v142
  %v161 = vpack.c.b16 %v145, %v143
  %v210 = vunpack.c.l.b16 %v66
  %v211 = vunpack.c.l.b16 %v67
  %v212 = vunpack.c.l.b16 %v68
  %v213 = vunpack.c.l.b16 %v69
  %v214 = vunpack.c.l.b16 %v70
  %v215 = vunpack.c.l.b16 %v71
  %v216 = vunpack.c.l.b16 %v72
  %v217 = vunpack.c.l.b16 %v73
  %v218 = vunpack.c.l.b16 %v74
  %v219 = vunpack.c.l.b16 %v75
  %v220 = vunpack.c.l.b16 %v76
  %v221 = vunpack.c.l.b16 %v77
  %v222 = vunpack.c.l.b16 %v78
  %v223 = vunpack.c.l.b16 %v79
  %v224 = vunpack.c.l.b16 %v80
  %v225 = vunpack.c.l.b16 %v81
  %v226 = vunpack.c.l.b16 %v82
  %v227 = vunpack.c.l.b16 %v83
  %v228 = vunpack.c.l.b16 %v84
  %v229 = vunpack.c.l.b16 %v85
  %v230 = vunpack.c.l.b16 %v86
  %v231 = vunpack.c.l.b16 %v87
  %v232 = vunpack.c.l.b16 %v88
  %v233 = vunpack.c.l.b16 %v89
  %v234 = vunpack.c.l.b16 %v90
  %v235 = vunpack.c.l.b16 %v91
  %v236 = vunpack.c.l.b16 %v92
  %v237 = vunpack.c.l.b16 %v93
  %v238 = vunpack.c.l.b16 %v94
  %v239 = vunpack.c.l.b16 %v95
  %v240 = vunpack.c.l.b16 %v96
  %v241 = vunpack.c.l.b16 %v97
  %v242 = vpack.c.b16 %v211, %v210
  %v243 = vpack.c.b16 %v213, %v212
  %v244 = vpack.c.b16 %v215, %v214
  %v245 = vpack.c.b16 %v217, %v216
  %v246 = vpack.c.b16 %v219, %v218
  %v247 = vpack.c.b16 %v221, %v220
  %v248 = vpack.c.b16 %v223, %v222
  %v249 = vpack.c.b16 %v225, %v224
  %v250 = vpack.c.b16 %v227, %v226
  %v251 = vpack.c.b16 %v229, %v228
  %v252 = vpack.c.b16 %v231, %v230
  %v253 = vpack.c.b16 %v233, %v232
  %v254 = vpack.c.b16 %v235, %v234
  %v255 = vpack.c.b16 %v237, %v236
  %v256 = vpack.c.b16 %v239, %v238
  %v257 = vpack.c.b16 %v241, %v240
  %274 = vmatprep.subr.bf16.mxu0 0
  %275 = vmatpush1.bf16.msra.mxu0 %v249
  %276 = vmatprep.subr.bf16.mxu0 0
  %277 = vmatpush1.bf16.msra.mxu0 %v248
  %278 = vmatprep.subr.bf16.mxu0 0
  %279 = vmatpush1.bf16.msra.mxu0 %v247
  %280 = vmatprep.subr.bf16.mxu0 0
  %281 = vmatpush1.bf16.msra.mxu0 %v246
  %282 = vmatprep.subr.bf16.mxu0 0
  %283 = vmatpush1.bf16.msra.mxu0 %v245
  %284 = vmatprep.subr.bf16.mxu0 0
  %285 = vmatpush1.bf16.msra.mxu0 %v244
  %286 = vmatprep.subr.bf16.mxu0 0
  %287 = vmatpush1.bf16.msra.mxu0 %v243
  %288 = vmatprep.subr.bf16.mxu0 0
  %289 = vmatpush1.bf16.msra.mxu0 %v242
  %290 = vmatprep.subr.bf16.mxu0 0
  %291 = vmatpush2.bf16.msra.mxu0 %v257
  %292 = vmatprep.subr.bf16.mxu0 0
  %293 = vmatpush2.bf16.msra.mxu0 %v256
  %294 = vmatprep.subr.bf16.mxu0 0
  %295 = vmatpush2.bf16.msra.mxu0 %v255
  %296 = vmatprep.subr.bf16.mxu0 0
  %297 = vmatpush2.bf16.msra.mxu0 %v254
  %298 = vmatprep.subr.bf16.mxu0 0
  %299 = vmatpush2.bf16.msra.mxu0 %v253
  %300 = vmatprep.subr.bf16.mxu0 0
  %301 = vmatpush2.bf16.msra.mxu0 %v252
  %302 = vmatprep.subr.bf16.mxu0 0
  %303 = vmatpush2.bf16.msra.mxu0 %v251
  %304 = vmatprep.subr.bf16.mxu0 0
  %305 = vmatpush2.bf16.msra.mxu0 %v250
  %306 = vmatprep.mubr.bf16.mxu0 %v147
  %307 = vmatmul.mubr.bf16.gmra.mxu0 %v146
  %v308 = vpop.f32.mrf.mxu0
  %v309 = vadd.f32 0.0, %v308
  %v310 = vpop.f32.mrf.mxu0
  %v311 = vpop.f32.mrf.mxu0
  %v312 = vadd.f32 0.0, %v311
  %v313 = vpop.f32.mrf.mxu0
  %314 = vmatprep.mubr.bf16.mxu0 %v149
  %315 = vmatmul.mubr.bf16.gmra.mxu0 %v148
  %v316 = vpop.f32.mrf.mxu0
  %v317 = vadd.f32 0.0, %v316
  %v318 = vpop.f32.mrf.mxu0
  %v319 = vpop.f32.mrf.mxu0
  %v320 = vadd.f32 0.0, %v319
  %v321 = vpop.f32.mrf.mxu0
  %322 = vmatprep.mubr.bf16.mxu0 %v151
  %323 = vmatmul.mubr.bf16.gmra.mxu0 %v150
  %v324 = vpop.f32.mrf.mxu0
  %v325 = vadd.f32 0.0, %v324
  %v326 = vpop.f32.mrf.mxu0
  %v327 = vpop.f32.mrf.mxu0
  %v328 = vadd.f32 0.0, %v327
  %v329 = vpop.f32.mrf.mxu0
  %330 = vmatprep.mubr.bf16.mxu0 %v153
  %331 = vmatmul.mubr.bf16.gmra.mxu0 %v152
  %v332 = vpop.f32.mrf.mxu0
  %v333 = vadd.f32 0.0, %v332
  %v334 = vpop.f32.mrf.mxu0
  %v335 = vpop.f32.mrf.mxu0
  %v336 = vadd.f32 0.0, %v335
  %v337 = vpop.f32.mrf.mxu0
  %338 = vmatprep.mubr.bf16.mxu0 %v155
  %339 = vmatmul.mubr.bf16.gmra.mxu0 %v154
  %v340 = vpop.f32.mrf.mxu0
  %v341 = vadd.f32 0.0, %v340
  %v342 = vpop.f32.mrf.mxu0
  %v343 = vpop.f32.mrf.mxu0
  %v344 = vadd.f32 0.0, %v343
  %v345 = vpop.f32.mrf.mxu0
  %346 = vmatprep.mubr.bf16.mxu0 %v157
  %347 = vmatmul.mubr.bf16.gmra.mxu0 %v156
  %v348 = vpop.f32.mrf.mxu0
  %v349 = vadd.f32 0.0, %v348
  %v350 = vpop.f32.mrf.mxu0
  %v351 = vpop.f32.mrf.mxu0
  %v352 = vadd.f32 0.0, %v351
  %v353 = vpop.f32.mrf.mxu0
  %354 = vmatprep.mubr.bf16.mxu0 %v159
  %355 = vmatmul.mubr.bf16.gmra.mxu0 %v158
  %v356 = vpop.f32.mrf.mxu0
  %v357 = vadd.f32 0.0, %v356
  %v358 = vpop.f32.mrf.mxu0
  %v359 = vpop.f32.mrf.mxu0
  %v360 = vadd.f32 0.0, %v359
  %v361 = vpop.f32.mrf.mxu0
  %362 = vmatprep.mubr.bf16.mxu0 %v161
  %363 = vmatmul.mubr.bf16.gmra.mxu0 %v160
  %v364 = vpop.f32.mrf.mxu0
  %v365 = vadd.f32 0.0, %v364
  %v366 = vpop.f32.mrf.mxu0
  %v367 = vpop.f32.mrf.mxu0
  %v368 = vadd.f32 0.0, %v367
  %v369 = vpop.f32.mrf.mxu0
  %370 = vdwg.mxu0
  %v371 = vadd.f32 %v34, %v309
  %v372 = vadd.f32 %v35, %v312
  %v373 = vadd.f32 %v36, %v317
  %v374 = vadd.f32 %v37, %v320
  %v375 = vadd.f32 %v38, %v325
  %v376 = vadd.f32 %v39, %v328
  %v377 = vadd.f32 %v40, %v333
  %v378 = vadd.f32 %v41, %v336
  %v379 = vadd.f32 %v42, %v341
  %v380 = vadd.f32 %v43, %v344
  %v381 = vadd.f32 %v44, %v349
  %v382 = vadd.f32 %v45, %v352
  %v383 = vadd.f32 %v46, %v357
  %v384 = vadd.f32 %v47, %v360
  %v385 = vadd.f32 %v48, %v365
  %v386 = vadd.f32 %v49, %v368
  %387 = vst [vmem:[#allocation2] sm:$0xff] %v371
  %388 = vst [vmem:[#allocation2 + $0x8] sm:$0xff] %v372
  %389 = vst [vmem:[#allocation2 + $0x10] sm:$0xff] %v373
  %390 = vst [vmem:[#allocation2 + $0x18] sm:$0xff] %v374
  %391 = vst [vmem:[#allocation2 + $0x20] sm:$0xff] %v375
  %392 = vst [vmem:[#allocation2 + $0x28] sm:$0xff] %v376
  %393 = vst [vmem:[#allocation2 + $0x30] sm:$0xff] %v377
  %394 = vst [vmem:[#allocation2 + $0x38] sm:$0xff] %v378
  %395 = vst [vmem:[#allocation2 + $0x40] sm:$0xff] %v379
  %396 = vst [vmem:[#allocation2 + $0x48] sm:$0xff] %v380
  %397 = vst [vmem:[#allocation2 + $0x50] sm:$0xff] %v381
  %398 = vst [vmem:[#allocation2 + $0x58] sm:$0xff] %v382
  %399 = vst [vmem:[#allocation2 + $0x60] sm:$0xff] %v383
  %400 = vst [vmem:[#allocation2 + $0x68] sm:$0xff] %v384
  %401 = vst [vmem:[#allocation2 + $0x70] sm:$0xff] %v385
  %402 = vst [vmem:[#allocation2 + $0x78] sm:$0xff] %v386
  // Predicated region
  $region14: #{unet_forward.117} parent=0 // pred_check
    %p403 = pneg %p14
  $region15: #{unet_forward.117} parent=0 // pred_check_branch
    %405 = sbr.rel (%p403) target = $region17
  $region16: #{unet_forward.117} parent=0 // pred_region
    %v406 = vld [vmem:[#allocation2] sm:$0xff]
    %v407 = vld [vmem:[#allocation2 + $0x8] sm:$0xff]
    %v408 = vld [vmem:[#allocation2 + $0x10] sm:$0xff]
    %v409 = vld [vmem:[#allocation2 + $0x18] sm:$0xff]
    %v410 = vld [vmem:[#allocation2 + $0x20] sm:$0xff]
    %v411 = vld [vmem:[#allocation2 + $0x28] sm:$0xff]
    %v412 = vld [vmem:[#allocation2 + $0x30] sm:$0xff]
    %v413 = vld [vmem:[#allocation2 + $0x38] sm:$0xff]
    %v414 = vld [vmem:[#allocation2 + $0x40] sm:$0xff]
    %v415 = vld [vmem:[#allocation2 + $0x48] sm:$0xff]
    %v416 = vld [vmem:[#allocation2 + $0x50] sm:$0xff]
    %v417 = vld [vmem:[#allocation2 + $0x58] sm:$0xff]
    %v418 = vld [vmem:[#allocation2 + $0x60] sm:$0xff]
    %v419 = vld [vmem:[#allocation2 + $0x68] sm:$0xff]
    %v420 = vld [vmem:[#allocation2 + $0x70] sm:$0xff]
    %v421 = vld [vmem:[#allocation2 + $0x78] sm:$0xff]
    %v422 = vpack.c.bf16 %v407, %v406
    %v423 = vpack.c.bf16 %v409, %v408
    %v424 = vpack.c.bf16 %v411, %v410
    %v425 = vpack.c.bf16 %v413, %v412
    %v426 = vpack.c.bf16 %v415, %v414
    %v427 = vpack.c.bf16 %v417, %v416
    %v428 = vpack.c.bf16 %v419, %v418
    %v429 = vpack.c.bf16 %v421, %v420
    %v438 = vunpack.c.l.b16 %v422
    %v439 = vunpack.c.h.b16 %v422
    %v440 = vunpack.c.l.b16 %v423
    %v441 = vunpack.c.h.b16 %v423
    %v442 = vunpack.c.l.b16 %v424
    %v443 = vunpack.c.h.b16 %v424
    %v444 = vunpack.c.l.b16 %v425
    %v445 = vunpack.c.h.b16 %v425
    %v446 = vunpack.c.l.b16 %v426
    %v447 = vunpack.c.h.b16 %v426
    %v448 = vunpack.c.l.b16 %v427
    %v449 = vunpack.c.h.b16 %v427
    %v450 = vunpack.c.l.b16 %v428
    %v451 = vunpack.c.h.b16 %v428
    %v452 = vunpack.c.l.b16 %v429
    %v453 = vunpack.c.h.b16 %v429
    %v454 = vpack.c.b16 %v438, %v438
    %v455 = vpack.c.b16 %v439, %v439
    %v456 = vpack.c.b16 %v440, %v440
    %v457 = vpack.c.b16 %v441, %v441
    %v458 = vpack.c.b16 %v442, %v442
    %v459 = vpack.c.b16 %v443, %v443
    %v460 = vpack.c.b16 %v444, %v444
    %v461 = vpack.c.b16 %v445, %v445
    %v462 = vpack.c.b16 %v446, %v446
    %v463 = vpack.c.b16 %v447, %v447
    %v464 = vpack.c.b16 %v448, %v448
    %v465 = vpack.c.b16 %v449, %v449
    %v466 = vpack.c.b16 %v450, %v450
    %v467 = vpack.c.b16 %v451, %v451
    %v468 = vpack.c.b16 %v452, %v452
    %v469 = vpack.c.b16 %v453, %v453
    %486 = vst [vmem:[%s2] sm:$0xf] %v454
    %487 = vst [vmem:[%s2 + $0x4] sm:$0xf] %v455
    %488 = vst [vmem:[%s2 + $0x8] sm:$0xf] %v456
    %489 = vst [vmem:[%s2 + $0xc] sm:$0xf] %v457
    %490 = vst [vmem:[%s2 + $0x10] sm:$0xf] %v458
    %491 = vst [vmem:[%s2 + $0x14] sm:$0xf] %v459
    %492 = vst [vmem:[%s2 + $0x18] sm:$0xf] %v460
    %493 = vst [vmem:[%s2 + $0x1c] sm:$0xf] %v461
    %494 = vst [vmem:[%s2 + $0x20] sm:$0xf] %v462
    %495 = vst [vmem:[%s2 + $0x24] sm:$0xf] %v463
    %496 = vst [vmem:[%s2 + $0x28] sm:$0xf] %v464
    %497 = vst [vmem:[%s2 + $0x2c] sm:$0xf] %v465
    %498 = vst [vmem:[%s2 + $0x30] sm:$0xf] %v466
    %499 = vst [vmem:[%s2 + $0x34] sm:$0xf] %v467
    %500 = vst [vmem:[%s2 + $0x38] sm:$0xf] %v468
    %501 = vst [vmem:[%s2 + $0x3c] sm:$0xf] %v469
    %v502 = vadd.f32 %v406, %v407
    %v503 = vadd.f32 %v502, %v408
    %v504 = vadd.f32 %v503, %v409
    %v505 = vadd.f32 %v504, %v410
    %v506 = vadd.f32 %v505, %v411
    %v507 = vadd.f32 %v506, %v412
    %v508 = vadd.f32 %v507, %v413
    %v509 = vadd.f32 %v508, %v414
    %v510 = vadd.f32 %v509, %v415
    %v511 = vadd.f32 %v510, %v416
    %v512 = vadd.f32 %v511, %v417
    %v513 = vadd.f32 %v512, %v418
    %v514 = vadd.f32 %v513, %v419
    %v515 = vadd.f32 %v514, %v420
    %v516 = vadd.f32 %v515, %v421
    %v517 = vrot.slane %v516, 4
    %v518 = vadd.f32 %v516, %v517
    %v519 = vrot.slane %v518, 2
    %v520 = vadd.f32 %v518, %v519
    %v521 = vrot.slane %v520, 1
    %v522 = vadd.f32 %v520, %v521
    %v523 = vmul.f32 %v406, %v406
    %v524 = vmul.f32 %v407, %v407
    %v525 = vmul.f32 %v408, %v408
    %v526 = vmul.f32 %v409, %v409
    %v527 = vmul.f32 %v410, %v410
    %v528 = vmul.f32 %v411, %v411
    %v529 = vmul.f32 %v412, %v412
    %v530 = vmul.f32 %v413, %v413
    %v531 = vmul.f32 %v414, %v414
    %v532 = vmul.f32 %v415, %v415
    %v533 = vmul.f32 %v416, %v416
    %v534 = vmul.f32 %v417, %v417
    %v535 = vmul.f32 %v418, %v418
    %v536 = vmul.f32 %v419, %v419
    %v537 = vmul.f32 %v420, %v420
    %v538 = vmul.f32 %v421, %v421
    %v539 = vadd.f32 %v523, %v524
    %v540 = vadd.f32 %v539, %v525
    %v541 = vadd.f32 %v540, %v526
    %v542 = vadd.f32 %v541, %v527
    %v543 = vadd.f32 %v542, %v528
    %v544 = vadd.f32 %v543, %v529
    %v545 = vadd.f32 %v544, %v530
    %v546 = vadd.f32 %v545, %v531
    %v547 = vadd.f32 %v546, %v532
    %v548 = vadd.f32 %v547, %v533
    %v549 = vadd.f32 %v548, %v534
    %v550 = vadd.f32 %v549, %v535
    %v551 = vadd.f32 %v550, %v536
    %v552 = vadd.f32 %v551, %v537
    %v553 = vadd.f32 %v552, %v538
    %v554 = vrot.slane %v553, 4
    %v555 = vadd.f32 %v553, %v554
    %v556 = vrot.slane %v555, 2
    %v557 = vadd.f32 %v555, %v556
    %v558 = vrot.slane %v557, 1
    %v559 = vadd.f32 %v557, %v558
    %vm560 = vcmask 1040384
    %v561 = vsel %vm560, %v522, %v559
    %562 = vst [vmem:[%s3] sm:$0x3] %v561
  $region17: #{unet_forward.117} parent=0 // pred_fallthru
    _
  // Predicated region
  $region18: #{unet_forward.117} parent=0 // pred_check
    _
  $region19: #{unet_forward.117} parent=0 // pred_check_branch
    %564 = sbr.rel (0) target = $region21
  $region20: #{unet_forward.117} parent=0 // pred_region
    _
  $region21: #{unet_forward.117} parent=0 // pred_fallthru
    _
  // Predicated region
  $region22: #{unet_forward.117} parent=0 // pred_check
    _
  $region23: #{unet_forward.117} parent=0 // pred_check_branch
    %566 = sbr.rel (0) target = $region25
  $region24: #{unet_forward.117} parent=0 // pred_region
    _
  $region25: #{unet_forward.117} parent=0 // pred_fallthru
    _
  // Predicated region
  $region26: #{unet_forward.117} parent=0 // pred_check
    _
  $region27: #{unet_forward.117} parent=0 // pred_check_branch
    %568 = sbr.rel (0) target = $region29
  $region28: #{unet_forward.117} parent=0 // pred_region
    _
  $region29: #{unet_forward.117} parent=0 // pred_fallthru
    _
  // Predicated region
  $region30: #{unet_forward.117} parent=0 // pred_check
    _
  $region31: #{unet_forward.117} parent=0 // pred_check_branch
    %570 = sbr.rel (0) target = $region33
  $region32: #{unet_forward.117} parent=0 // pred_region
    _
  $region33: #{unet_forward.117} parent=0 // pred_fallthru
    _

// kernel: unet_forward.129
$region0: #{unet_forward.129}
  #allocation0 [shape = 'u32[]', space=smem, size = 0x4, offset = 0x4, fixed_abs, tag = 'smem constant byte address 0x4 - core index']
  #allocation1 [shape = 'u32[144,128]{1,0:T(1,128)}', space=vmem, size = 0x12000, scoped, tag = 'internal scratch']
  %s0 = inlined_call_operand.vmem [shape: bf16[512,4], index: 0, kind: input, shape index: {}]
  %s1 = inlined_call_operand.vmem [shape: bf16[4,128], index: 1, kind: input, shape index: {}]
  %s2 = inlined_call_operand.vmem [shape: f32[1,128], index: 2, kind: input, shape index: {}]
  %s3 = inlined_call_operand.vmem [shape: bf16[512,128], index: 3, kind: output, shape index: {}]
  %s4 = sld [smem:[#allocation0]]
  $region45: #{unet_forward.129} parent=0
    _
  %s6 = ssub.s32 1, %s4
  %s7 = scalar_select 0, %s6, %s4
  loop: start=0, step=1, limit=4
  $region2: #{unet_forward.129} parent=0 // loop_pre_header
    _
  $region3: #{unet_forward.129} parent=0 // loop_header
    %s9 = sphi 0, %s13
    %p10 = scmp.ge.s32.totalorder %s9, 4
    %s19 = sphi 0, %s21
    %s22 = sphi 0, %s19
    %s23 = sphi 0, %s22
    %s39 = sphi 0, %s23
    %s43 = sphi 0, %s43
    %s45 = sphi 0, %s43
    %s46 = sphi 0, %s45
    %s60 = sphi 0, %s46
    %s64 = sphi 0, %s64
    %s66 = sphi 0, %s64
    %s67 = sphi 0, %s66
    %s81 = sphi 0, %s67
    %s87 = sphi 0, %s89
    %s90 = sphi 0, %s87
    %s91 = sphi 0, %s90
    %s107 = sphi 0, %s91
  $region4: #{unet_forward.129} parent=0 // loop_header_branch
    %12 = sbr.rel (%p10) target = $region8
  $region5: #{unet_forward.129} parent=0 // loop_body
    %s14 = ssub.s32 %s9, 1
    %s15 = ssub.s32 %s9, 2
    %s16 = sadd.s32 %s9, 1
    %s17 = ssub.s32 %s9, %s16
    %p18 = scmp.eq.s32.totalorder %s17, 0
    %s20 = sadd.s32 %s19, 1
    %s21 = scalar_select %p18, %s19, %s20
    %p24 = pneg %p18
    %p25 = scmp.eq.s32.totalorder %s9, 1
    %p26 = por %p24, %p25
    %p27 = scmp.ne.s32.totalorder %s19, %s22
    %p28 = scmp.eq.s32.totalorder %s9, 0
    %p29 = por %p27, %p28
    %p30 = scmp.ne.s32.totalorder %s19, %s22
    %p31 = scmp.eq.s32.totalorder %s14, 1
    %p32 = por %p30, %p31
    %p33 = scmp.ne.s32.totalorder %s22, %s23
    %p34 = scmp.eq.s32.totalorder %s14, 0
    %p35 = por %p33, %p34
    %p36 = scmp.ne.s32.totalorder %s22, %s23
    %p37 = scmp.eq.s32.totalorder %s15, 1
    %p38 = por %p36, %p37
    %p40 = scmp.ne.s32.totalorder %s23, %s39
    %p41 = scmp.eq.s32.totalorder %s15, 0
    %p42 = por %p40, %p41
    %s44 = sadd.s32 %s43, 1
    %p47 = scmp.eq.s32.totalorder %s9, 1
    %p48 = scmp.ne.s32.totalorder %s43, %s45
    %p49 = scmp.eq.s32.totalorder %s9, 0
    %p50 = por %p48, %p49
    %p51 = scmp.ne.s32.totalorder %s43, %s45
    %p52 = scmp.eq.s32.totalorder %s14, 1
    %p53 = por %p51, %p52
    %p54 = scmp.ne.s32.totalorder %s45, %s46
    %p55 = scmp.eq.s32.totalorder %s14, 0
    %p56 = por %p54, %p55
    %p57 = scmp.ne.s32.totalorder %s45, %s46
    %p58 = scmp.eq.s32.totalorder %s15, 1
    %p59 = por %p57, %p58
    %p61 = scmp.ne.s32.totalorder %s46, %s60
    %p62 = scmp.eq.s32.totalorder %s15, 0
    %p63 = por %p61, %p62
    %s65 = sadd.s32 %s64, 1
    %p68 = scmp.eq.s32.totalorder %s9, 1
    %p69 = scmp.ne.s32.totalorder %s64, %s66
    %p70 = scmp.eq.s32.totalorder %s9, 0
    %p71 = por %p69, %p70
    %p72 = scmp.ne.s32.totalorder %s64, %s66
    %p73 = scmp.eq.s32.totalorder %s14, 1
    %p74 = por %p72, %p73
    %p75 = scmp.ne.s32.totalorder %s66, %s67
    %p76 = scmp.eq.s32.totalorder %s14, 0
    %p77 = por %p75, %p76
    %p78 = scmp.ne.s32.totalorder %s66, %s67
    %p79 = scmp.eq.s32.totalorder %s15, 1
    %p80 = por %p78, %p79
    %p82 = scmp.ne.s32.totalorder %s67, %s81
    %p83 = scmp.eq.s32.totalorder %s15, 0
    %p84 = por %p82, %p83
    %s85 = ssub.s32 %s9, %s16
    %p86 = scmp.eq.s32.totalorder %s85, 0
    %s88 = sadd.s32 %s87, 1
    %s89 = scalar_select %p86, %s87, %s88
    %p92 = pneg %p86
    %p93 = scmp.eq.s32.totalorder %s9, 1
    %p94 = por %p92, %p93
    %p95 = scmp.ne.s32.totalorder %s87, %s90
    %p96 = scmp.eq.s32.totalorder %s9, 0
    %p97 = por %p95, %p96
    %p98 = scmp.ne.s32.totalorder %s87, %s90
    %p99 = scmp.eq.s32.totalorder %s14, 1
    %p100 = por %p98, %p99
    %p101 = scmp.ne.s32.totalorder %s90, %s91
    %p102 = scmp.eq.s32.totalorder %s14, 0
    %p103 = por %p101, %p102
    %p104 = scmp.ne.s32.totalorder %s90, %s91
    %p105 = scmp.eq.s32.totalorder %s15, 1
    %p106 = por %p104, %p105
    %p108 = scmp.ne.s32.totalorder %s91, %s107
    %p109 = scmp.eq.s32.totalorder %s15, 0
    %p110 = por %p108, %p109
    %p111 = scmp.le.s32.totalorder 1, %s9
    %p112 = scmp.lt.s32.totalorder %s9, 3
    %p113 = pnand %p111, %p112
    %p114 = pneg %p113
    // Predicated region
    $region9: #{unet_forward.129} parent=5 // pred_check
      _
    $region10: #{unet_forward.129} parent=5 // pred_check_branch
      %116 = sbr.rel (%p113) target = $region12
    $region11: #{unet_forward.129} parent=5 // pred_region
      %s117 = ssub.s32 %s9, 1
      // Predicated region
      $region13: #{unet_forward.129} parent=11 // pred_check
        %p118 = pneg %p56
      $region14: #{unet_forward.129} parent=11 // pred_check_branch
        %120 = sbr.rel (%p118) target = $region16
      $region15: #{unet_forward.129} parent=11 // pred_region
        _
      $region16: #{unet_forward.129} parent=11 // pred_fallthru
        _
      // Predicated region
      $region17: #{unet_forward.129} parent=11 // pred_check
        %p121 = pneg %p77
      $region18: #{unet_forward.129} parent=11 // pred_check_branch
        %123 = sbr.rel (%p121) target = $region20
      $region19: #{unet_forward.129} parent=11 // pred_region
        _
      $region20: #{unet_forward.129} parent=11 // pred_fallthru
        _
    $region12: #{unet_forward.129} parent=5 // pred_fallthru
      _
    %p124 = scmp.lt.s32.totalorder %s9, 2
    // Predicated region
    $region21: #{unet_forward.129} parent=5 // pred_check
      %p125 = pneg %p124
    $region22: #{unet_forward.129} parent=5 // pred_check_branch
      %127 = sbr.rel (%p125) target = $region24
    $region23: #{unet_forward.129} parent=5 // pred_region
      // Predicated region
      $region25: #{unet_forward.129} parent=23 // pred_check
        %p128 = pneg %p29
      $region26: #{unet_forward.129} parent=23 // pred_check_branch
        %130 = sbr.rel (%p128) target = $region28
      $region27: #{unet_forward.129} parent=23 // pred_region
        %s131 = smul.u32 32, %s9
        %p132 = scmp.lt.s32.totalorder %s131, 63
        %s133 = scalar_select %p132, %s131, 63
        %s134 = smul.addr %s133, 4
        %s135 = scalar_lea.vmem %s0, %s134
        %s136 = smul.u32 32, %s9
      $region28: #{unet_forward.129} parent=23 // pred_fallthru
        _
    $region24: #{unet_forward.129} parent=5 // pred_fallthru
      _
    %p137 = scmp.le.s32.totalorder 1, %s9
    %p138 = scmp.lt.s32.totalorder %s9, 3
    %p139 = pnand %p137, %p138
    %p140 = pneg %p139
    // Predicated region
    $region29: #{unet_forward.129} parent=5 // pred_check
      _
    $region30: #{unet_forward.129} parent=5 // pred_check_branch
      %142 = sbr.rel (%p139) target = $region32
    $region31: #{unet_forward.129} parent=5 // pred_region
      %s143 = ssub.s32 %s9, 1
      %s144 = smul.u32 32, %s14
      %p145 = scmp.lt.s32.totalorder %s144, 63
      %s146 = scalar_select %p145, %s144, 63
      %s147 = smul.addr %s146, 4
      %s148 = scalar_lea.vmem %s0, %s147
      %p149 = pneg %p35
      %p150 = pneg %p32
      %p151 = pneg %p56
      %p152 = pneg %p53
      %p153 = pneg %p77
      %p154 = pneg %p74
      %p155 = pneg %p103
      %p156 = pneg %p100
      %s157 = smul.u32 32, %s14
      %p158 = scmp.lt.s32.totalorder %s157, 63
      %s159 = scalar_select %p158, %s157, 63
      %s160 = smul.addr %s159, 4
      %s161 = scalar_lea.vmem %s3, %s160
      %s162 = smul.u32 32, %s14
      %p163 = scmp.lt.s32.totalorder %s162, 63
      %s164 = scalar_select %p163, %s162, 63
      %s165 = smul.addr %s164, 4
      %s166 = scalar_lea.vmem %s0, %s165
      %s167 = smul.u32 32, %s14
      %s168 = smul.u32 32, %s14
      %p169 = scmp.lt.s32.totalorder %s168, 63
      %s170 = scalar_select %p169, %s168, 63
      %s171 = smul.addr %s170, 4
      %s172 = scalar_lea.vmem %s3, %s171
      %s173 = smul.u32 32, %s14
      %v175 = vld [vmem:[%s166] sm:$0xf]
      %v176 = vld [vmem:[%s166 + $0x4] sm:$0xf]
      %v177 = vld [vmem:[%s166 + $0x8] sm:$0xf]
      %v178 = vld [vmem:[%s166 + $0xc] sm:$0xf]
      %v179 = vld [vmem:[%s166 + $0x10] sm:$0xf]
      %v180 = vld [vmem:[%s166 + $0x14] sm:$0xf]
      %v181 = vld [vmem:[%s166 + $0x18] sm:$0xf]
      %v182 = vld [vmem:[%s166 + $0x1c] sm:$0xf]
      %v183 = vld [vmem:[%s166 + $0x20] sm:$0xf]
      %v184 = vld [vmem:[%s166 + $0x24] sm:$0xf]
      %v185 = vld [vmem:[%s166 + $0x28] sm:$0xf]
      %v186 = vld [vmem:[%s166 + $0x2c] sm:$0xf]
      %v187 = vld [vmem:[%s166 + $0x30] sm:$0xf]
      %v188 = vld [vmem:[%s166 + $0x34] sm:$0xf]
      %v189 = vld [vmem:[%s166 + $0x38] sm:$0xf]
      %v190 = vld [vmem:[%s166 + $0x3c] sm:$0xf]
      %v191 = vld [vmem:[%s166 + $0x40] sm:$0xf]
      %v192 = vld [vmem:[%s166 + $0x44] sm:$0xf]
      %v193 = vld [vmem:[%s166 + $0x48] sm:$0xf]
      %v194 = vld [vmem:[%s166 + $0x4c] sm:$0xf]
      %v195 = vld [vmem:[%s166 + $0x50] sm:$0xf]
      %v196 = vld [vmem:[%s166 + $0x54] sm:$0xf]
      %v197 = vld [vmem:[%s166 + $0x58] sm:$0xf]
      %v198 = vld [vmem:[%s166 + $0x5c] sm:$0xf]
      %v199 = vld [vmem:[%s166 + $0x60] sm:$0xf]
      %v200 = vld [vmem:[%s166 + $0x64] sm:$0xf]
      %v201 = vld [vmem:[%s166 + $0x68] sm:$0xf]
      %v202 = vld [vmem:[%s166 + $0x6c] sm:$0xf]
      %v203 = vld [vmem:[%s166 + $0x70] sm:$0xf]
      %v204 = vld [vmem:[%s166 + $0x74] sm:$0xf]
      %v205 = vld [vmem:[%s166 + $0x78] sm:$0xf]
      %v206 = vld [vmem:[%s166 + $0x7c] sm:$0xf]
      %v207 = vld [vmem:[%s1] sm:$0x3]
      %v208 = vld [vmem:[%s2] sm:$0x1]
      %v210 = vlaneseq
      %v211 = vshrl.u32 %v210, 7
      %v212 = vsub.s32 0, %v211
      %v213 = vrot.slane %v208, %v212
      %v247 = vunpack.c.l.b16 %v175
      %v248 = vunpack.c.l.b16 %v176
      %v249 = vunpack.c.l.b16 %v177
      %v250 = vunpack.c.l.b16 %v178
      %v251 = vunpack.c.l.b16 %v179
      %v252 = vunpack.c.l.b16 %v180
      %v253 = vunpack.c.l.b16 %v181
      %v254 = vunpack.c.l.b16 %v182
      %v255 = vunpack.c.l.b16 %v183
      %v256 = vunpack.c.l.b16 %v184
      %v257 = vunpack.c.l.b16 %v185
      %v258 = vunpack.c.l.b16 %v186
      %v259 = vunpack.c.l.b16 %v187
      %v260 = vunpack.c.l.b16 %v188
      %v261 = vunpack.c.l.b16 %v189
      %v262 = vunpack.c.l.b16 %v190
      %v263 = vunpack.c.l.b16 %v191
      %v264 = vunpack.c.l.b16 %v192
      %v265 = vunpack.c.l.b16 %v193
      %v266 = vunpack.c.l.b16 %v194
      %v267 = vunpack.c.l.b16 %v195
      %v268 = vunpack.c.l.b16 %v196
      %v269 = vunpack.c.l.b16 %v197
      %v270 = vunpack.c.l.b16 %v198
      %v271 = vunpack.c.l.b16 %v199
      %v272 = vunpack.c.l.b16 %v200
      %v273 = vunpack.c.l.b16 %v201
      %v274 = vunpack.c.l.b16 %v202
      %v275 = vunpack.c.l.b16 %v203
      %v276 = vunpack.c.l.b16 %v204
      %v277 = vunpack.c.l.b16 %v205
      %v278 = vunpack.c.l.b16 %v206
      %v279 = vpack.c.b16 %v248, %v247
      %v280 = vpack.c.b16 %v250, %v249
      %v281 = vpack.c.b16 %v252, %v251
      %v282 = vpack.c.b16 %v254, %v253
      %v283 = vpack.c.b16 %v256, %v255
      %v284 = vpack.c.b16 %v258, %v257
      %v285 = vpack.c.b16 %v260, %v259
      %v286 = vpack.c.b16 %v262, %v261
      %v287 = vpack.c.b16 %v264, %v263
      %v288 = vpack.c.b16 %v266, %v265
      %v289 = vpack.c.b16 %v268, %v267
      %v290 = vpack.c.b16 %v270, %v269
      %v291 = vpack.c.b16 %v272, %v271
      %v292 = vpack.c.b16 %v274, %v273
      %v293 = vpack.c.b16 %v276, %v275
      %v294 = vpack.c.b16 %v278, %v277
      %vm295 = vcmask 31744
      %v297 = vsel %vm295, %v279, 0
      %v300 = vsel %vm295, %v280, 0
      %v303 = vsel %vm295, %v281, 0
      %v306 = vsel %vm295, %v282, 0
      %v309 = vsel %vm295, %v283, 0
      %v312 = vsel %vm295, %v284, 0
      %v315 = vsel %vm295, %v285, 0
      %v318 = vsel %vm295, %v286, 0
      %v321 = vsel %vm295, %v287, 0
      %v324 = vsel %vm295, %v288, 0
      %v327 = vsel %vm295, %v289, 0
      %v330 = vsel %vm295, %v290, 0
      %v333 = vsel %vm295, %v291, 0
      %v336 = vsel %vm295, %v292, 0
      %v339 = vsel %vm295, %v293, 0
      %v342 = vsel %vm295, %v294, 0
      %vm344 = vcmask 1041408
      %v346 = vsel %vm344, %v207, 0
      %348 = vmatprep.subr.bf16.mxu0 0
      %349 = vmatpush1.bf16.msra.mxu0 0
      %350 = vmatprep.subr.bf16.mxu0 0
      %351 = vmatpush1.bf16.msra.mxu0 0
      %352 = vmatprep.subr.bf16.mxu0 0
      %353 = vmatpush1.bf16.msra.mxu0 0
      %354 = vmatprep.subr.bf16.mxu0 0
      %355 = vmatpush1.bf16.msra.mxu0 0
      %356 = vmatprep.subr.bf16.mxu0 0
      %357 = vmatpush1.bf16.msra.mxu0 0
      %358 = vmatprep.subr.bf16.mxu0 0
      %359 = vmatpush1.bf16.msra.mxu0 0
      %360 = vmatprep.subr.bf16.mxu0 0
      %361 = vmatpush1.bf16.msra.mxu0 0
      %362 = vmatprep.subr.bf16.mxu0 0
      %363 = vmatpush1.bf16.msra.mxu0 %v346
      %364 = vmatprep.subr.bf16.mxu0 0
      %365 = vmatpush2.bf16.msra.mxu0 0
      %366 = vmatprep.subr.bf16.mxu0 0
      %367 = vmatpush2.bf16.msra.mxu0 0
      %368 = vmatprep.subr.bf16.mxu0 0
      %369 = vmatpush2.bf16.msra.mxu0 0
      %370 = vmatprep.subr.bf16.mxu0 0
      %371 = vmatpush2.bf16.msra.mxu0 0
      %372 = vmatprep.subr.bf16.mxu0 0
      %373 = vmatpush2.bf16.msra.mxu0 0
      %374 = vmatprep.subr.bf16.mxu0 0
      %375 = vmatpush2.bf16.msra.mxu0 0
      %376 = vmatprep.subr.bf16.mxu0 0
      %377 = vmatpush2.bf16.msra.mxu0 0
      %378 = vmatprep.subr.bf16.mxu0 0
      %379 = vmatpush2.bf16.msra.mxu0 0
      %380 = vmatprep.mubr.bf16.mxu0 0
      %381 = vmatmul.mubr.bf16.gmra.mxu0 %v297
      %v382 = vpop.f32.mrf.mxu0
      %v383 = vadd.f32 %v213, %v382
      %v384 = vpop.f32.mrf.mxu0
      %v385 = vpop.f32.mrf.mxu0
      %v386 = vadd.f32 %v213, %v385
      %v387 = vpop.f32.mrf.mxu0
      %388 = vmatprep.mubr.bf16.mxu0 0
      %389 = vmatmul.mubr.bf16.gmra.mxu0 %v300
      %v390 = vpop.f32.mrf.mxu0
      %v391 = vadd.f32 %v213, %v390
      %v392 = vpop.f32.mrf.mxu0
      %v393 = vpop.f32.mrf.mxu0
      %v394 = vadd.f32 %v213, %v393
      %v395 = vpop.f32.mrf.mxu0
      %396 = vmatprep.mubr.bf16.mxu0 0
      %397 = vmatmul.mubr.bf16.gmra.mxu0 %v303
      %v398 = vpop.f32.mrf.mxu0
      %v399 = vadd.f32 %v213, %v398
      %v400 = vpop.f32.mrf.mxu0
      %v401 = vpop.f32.mrf.mxu0
      %v402 = vadd.f32 %v213, %v401
      %v403 = vpop.f32.mrf.mxu0
      %404 = vmatprep.mubr.bf16.mxu0 0
      %405 = vmatmul.mubr.bf16.gmra.mxu0 %v306
      %v406 = vpop.f32.mrf.mxu0
      %v407 = vadd.f32 %v213, %v406
      %v408 = vpop.f32.mrf.mxu0
      %v409 = vpop.f32.mrf.mxu0
      %v410 = vadd.f32 %v213, %v409
      %v411 = vpop.f32.mrf.mxu0
      %412 = vmatprep.mubr.bf16.mxu0 0
      %413 = vmatmul.mubr.bf16.gmra.mxu0 %v309
      %v414 = vpop.f32.mrf.mxu0
      %v415 = vadd.f32 %v213, %v414
      %v416 = vpop.f32.mrf.mxu0
      %v417 = vpop.f32.mrf.mxu0
      %v418 = vadd.f32 %v213, %v417
      %v419 = vpop.f32.mrf.mxu0
      %420 = vmatprep.mubr.bf16.mxu0 0
      %421 = vmatmul.mubr.bf16.gmra.mxu0 %v312
      %v422 = vpop.f32.mrf.mxu0
      %v423 = vadd.f32 %v213, %v422
      %v424 = vpop.f32.mrf.mxu0
      %v425 = vpop.f32.mrf.mxu0
      %v426 = vadd.f32 %v213, %v425
      %v427 = vpop.f32.mrf.mxu0
      %428 = vmatprep.mubr.bf16.mxu0 0
      %429 = vmatmul.mubr.bf16.gmra.mxu0 %v315
      %v430 = vpop.f32.mrf.mxu0
      %v431 = vadd.f32 %v213, %v430
      %v432 = vpop.f32.mrf.mxu0
      %v433 = vpop.f32.mrf.mxu0
      %v434 = vadd.f32 %v213, %v433
      %v435 = vpop.f32.mrf.mxu0
      %436 = vmatprep.mubr.bf16.mxu0 0
      %437 = vmatmul.mubr.bf16.gmra.mxu0 %v318
      %v438 = vpop.f32.mrf.mxu0
      %v439 = vadd.f32 %v213, %v438
      %v440 = vpop.f32.mrf.mxu0
      %v441 = vpop.f32.mrf.mxu0
      %v442 = vadd.f32 %v213, %v441
      %v443 = vpop.f32.mrf.mxu0
      %444 = vmatprep.mubr.bf16.mxu0 0
      %445 = vmatmul.mubr.bf16.gmra.mxu0 %v321
      %v446 = vpop.f32.mrf.mxu0
      %v447 = vadd.f32 %v213, %v446
      %v448 = vpop.f32.mrf.mxu0
      %v449 = vpop.f32.mrf.mxu0
      %v450 = vadd.f32 %v213, %v449
      %v451 = vpop.f32.mrf.mxu0
      %452 = vmatprep.mubr.bf16.mxu0 0
      %453 = vmatmul.mubr.bf16.gmra.mxu0 %v324
      %v454 = vpop.f32.mrf.mxu0
      %v455 = vadd.f32 %v213, %v454
      %v456 = vpop.f32.mrf.mxu0
      %v457 = vpop.f32.mrf.mxu0
      %v458 = vadd.f32 %v213, %v457
      %v459 = vpop.f32.mrf.mxu0
      %460 = vmatprep.mubr.bf16.mxu0 0
      %461 = vmatmul.mubr.bf16.gmra.mxu0 %v327
      %v462 = vpop.f32.mrf.mxu0
      %v463 = vadd.f32 %v213, %v462
      %v464 = vpop.f32.mrf.mxu0
      %v465 = vpop.f32.mrf.mxu0
      %v466 = vadd.f32 %v213, %v465
      %v467 = vpop.f32.mrf.mxu0
      %468 = vmatprep.mubr.bf16.mxu0 0
      %469 = vmatmul.mubr.bf16.gmra.mxu0 %v330
      %v470 = vpop.f32.mrf.mxu0
      %v471 = vadd.f32 %v213, %v470
      %v472 = vpop.f32.mrf.mxu0
      %v473 = vpop.f32.mrf.mxu0
      %v474 = vadd.f32 %v213, %v473
      %v475 = vpop.f32.mrf.mxu0
      %476 = vmatprep.mubr.bf16.mxu0 0
      %477 = vmatmul.mubr.bf16.gmra.mxu0 %v333
      %v478 = vpop.f32.mrf.mxu0
      %v479 = vadd.f32 %v213, %v478
      %v480 = vpop.f32.mrf.mxu0
      %v481 = vpop.f32.mrf.mxu0
      %v482 = vadd.f32 %v213, %v481
      %v483 = vpop.f32.mrf.mxu0
      %484 = vmatprep.mubr.bf16.mxu0 0
      %485 = vmatmul.mubr.bf16.gmra.mxu0 %v336
      %v486 = vpop.f32.mrf.mxu0
      %v487 = vadd.f32 %v213, %v486
      %v488 = vpop.f32.mrf.mxu0
      %v489 = vpop.f32.mrf.mxu0
      %v490 = vadd.f32 %v213, %v489
      %v491 = vpop.f32.mrf.mxu0
      %492 = vmatprep.mubr.bf16.mxu0 0
      %493 = vmatmul.mubr.bf16.gmra.mxu0 %v339
      %v494 = vpop.f32.mrf.mxu0
      %v495 = vadd.f32 %v213, %v494
      %v496 = vpop.f32.mrf.mxu0
      %v497 = vpop.f32.mrf.mxu0
      %v498 = vadd.f32 %v213, %v497
      %v499 = vpop.f32.mrf.mxu0
      %500 = vmatprep.mubr.bf16.mxu0 0
      %501 = vmatmul.mubr.bf16.gmra.mxu0 %v342
      %v502 = vpop.f32.mrf.mxu0
      %v503 = vadd.f32 %v213, %v502
      %v504 = vpop.f32.mrf.mxu0
      %v505 = vpop.f32.mrf.mxu0
      %v506 = vadd.f32 %v213, %v505
      %v507 = vpop.f32.mrf.mxu0
      %508 = vdwg.mxu0
      %v509 = vpack.c.bf16 %v386, %v383
      %v510 = vpack.c.bf16 %v394, %v391
      %v511 = vpack.c.bf16 %v402, %v399
      %v512 = vpack.c.bf16 %v410, %v407
      %v513 = vpack.c.bf16 %v418, %v415
      %v514 = vpack.c.bf16 %v426, %v423
      %v515 = vpack.c.bf16 %v434, %v431
      %v516 = vpack.c.bf16 %v442, %v439
      %v517 = vpack.c.bf16 %v450, %v447
      %v518 = vpack.c.bf16 %v458, %v455
      %v519 = vpack.c.bf16 %v466, %v463
      %v520 = vpack.c.bf16 %v474, %v471
      %v521 = vpack.c.bf16 %v482, %v479
      %v522 = vpack.c.bf16 %v490, %v487
      %v523 = vpack.c.bf16 %v498, %v495
      %v524 = vpack.c.bf16 %v506, %v503
      %v541 = vunpack.c.l.b16 %v509
      %v542 = vunpack.c.h.b16 %v509
      %v543 = vunpack.c.l.b16 %v510
      %v544 = vunpack.c.h.b16 %v510
      %v545 = vunpack.c.l.b16 %v511
      %v546 = vunpack.c.h.b16 %v511
      %v547 = vunpack.c.l.b16 %v512
      %v548 = vunpack.c.h.b16 %v512
      %v549 = vunpack.c.l.b16 %v513
      %v550 = vunpack.c.h.b16 %v513
      %v551 = vunpack.c.l.b16 %v514
      %v552 = vunpack.c.h.b16 %v514
      %v553 = vunpack.c.l.b16 %v515
      %v554 = vunpack.c.h.b16 %v515
      %v555 = vunpack.c.l.b16 %v516
      %v556 = vunpack.c.h.b16 %v516
      %v557 = vunpack.c.l.b16 %v517
      %v558 = vunpack.c.h.b16 %v517
      %v559 = vunpack.c.l.b16 %v518
      %v560 = vunpack.c.h.b16 %v518
      %v561 = vunpack.c.l.b16 %v519
      %v562 = vunpack.c.h.b16 %v519
      %v563 = vunpack.c.l.b16 %v520
      %v564 = vunpack.c.h.b16 %v520
      %v565 = vunpack.c.l.b16 %v521
      %v566 = vunpack.c.h.b16 %v521
      %v567 = vunpack.c.l.b16 %v522
      %v568 = vunpack.c.h.b16 %v522
      %v569 = vunpack.c.l.b16 %v523
      %v570 = vunpack.c.h.b16 %v523
      %v571 = vunpack.c.l.b16 %v524
      %v572 = vunpack.c.h.b16 %v524
      %v573 = vpack.c.b16 %v541, %v541
      %v574 = vpack.c.b16 %v542, %v542
      %v575 = vpack.c.b16 %v543, %v543
      %v576 = vpack.c.b16 %v544, %v544
      %v577 = vpack.c.b16 %v545, %v545
      %v578 = vpack.c.b16 %v546, %v546
      %v579 = vpack.c.b16 %v547, %v547
      %v580 = vpack.c.b16 %v548, %v548
      %v581 = vpack.c.b16 %v549, %v549
      %v582 = vpack.c.b16 %v550, %v550
      %v583 = vpack.c.b16 %v551, %v551
      %v584 = vpack.c.b16 %v552, %v552
      %v585 = vpack.c.b16 %v553, %v553
      %v586 = vpack.c.b16 %v554, %v554
      %v587 = vpack.c.b16 %v555, %v555
      %v588 = vpack.c.b16 %v556, %v556
      %v589 = vpack.c.b16 %v557, %v557
      %v590 = vpack.c.b16 %v558, %v558
      %v591 = vpack.c.b16 %v559, %v559
      %v592 = vpack.c.b16 %v560, %v560
      %v593 = vpack.c.b16 %v561, %v561
      %v594 = vpack.c.b16 %v562, %v562
      %v595 = vpack.c.b16 %v563, %v563
      %v596 = vpack.c.b16 %v564, %v564
      %v597 = vpack.c.b16 %v565, %v565
      %v598 = vpack.c.b16 %v566, %v566
      %v599 = vpack.c.b16 %v567, %v567
      %v600 = vpack.c.b16 %v568, %v568
      %v601 = vpack.c.b16 %v569, %v569
      %v602 = vpack.c.b16 %v570, %v570
      %v603 = vpack.c.b16 %v571, %v571
      %v604 = vpack.c.b16 %v572, %v572
      %637 = vst [vmem:[%s172] sm:$0xf] %v573
      %638 = vst [vmem:[%s172 + $0x4] sm:$0xf] %v574
      %639 = vst [vmem:[%s172 + $0x8] sm:$0xf] %v575
      %640 = vst [vmem:[%s172 + $0xc] sm:$0xf] %v576
      %641 = vst [vmem:[%s172 + $0x10] sm:$0xf] %v577
      %642 = vst [vmem:[%s172 + $0x14] sm:$0xf] %v578
      %643 = vst [vmem:[%s172 + $0x18] sm:$0xf] %v579
      %644 = vst [vmem:[%s172 + $0x1c] sm:$0xf] %v580
      %645 = vst [vmem:[%s172 + $0x20] sm:$0xf] %v581
      %646 = vst [vmem:[%s172 + $0x24] sm:$0xf] %v582
      %647 = vst [vmem:[%s172 + $0x28] sm:$0xf] %v583
      %648 = vst [vmem:[%s172 + $0x2c] sm:$0xf] %v584
      %649 = vst [vmem:[%s172 + $0x30] sm:$0xf] %v585
      %650 = vst [vmem:[%s172 + $0x34] sm:$0xf] %v586
      %651 = vst [vmem:[%s172 + $0x38] sm:$0xf] %v587
      %652 = vst [vmem:[%s172 + $0x3c] sm:$0xf] %v588
      %653 = vst [vmem:[%s172 + $0x40] sm:$0xf] %v589
      %654 = vst [vmem:[%s172 + $0x44] sm:$0xf] %v590
      %655 = vst [vmem:[%s172 + $0x48] sm:$0xf] %v591
      %656 = vst [vmem:[%s172 + $0x4c] sm:$0xf] %v592
      %657 = vst [vmem:[%s172 + $0x50] sm:$0xf] %v593
      %658 = vst [vmem:[%s172 + $0x54] sm:$0xf] %v594
      %659 = vst [vmem:[%s172 + $0x58] sm:$0xf] %v595
      %660 = vst [vmem:[%s172 + $0x5c] sm:$0xf] %v596
      %661 = vst [vmem:[%s172 + $0x60] sm:$0xf] %v597
      %662 = vst [vmem:[%s172 + $0x64] sm:$0xf] %v598
      %663 = vst [vmem:[%s172 + $0x68] sm:$0xf] %v599
      %664 = vst [vmem:[%s172 + $0x6c] sm:$0xf] %v600
      %665 = vst [vmem:[%s172 + $0x70] sm:$0xf] %v601
      %666 = vst [vmem:[%s172 + $0x74] sm:$0xf] %v602
      %667 = vst [vmem:[%s172 + $0x78] sm:$0xf] %v603
      %668 = vst [vmem:[%s172 + $0x7c] sm:$0xf] %v604
      %s669 = smul.u32 32, %s14
      %p670 = scmp.lt.s32.totalorder %s669, 63
      %s671 = scalar_select %p670, %s669, 63
      %s672 = smul.addr %s671, 4
      %s673 = scalar_lea.vmem %s3, %s672
      // Predicated region
      $region33: #{unet_forward.129} parent=31 // pred_check
        %p674 = pneg %p100
      $region34: #{unet_forward.129} parent=31 // pred_check_branch
        %676 = sbr.rel (%p674) target = $region36
      $region35: #{unet_forward.129} parent=31 // pred_region
        %s677 = smul.u32 32, %s14
      $region36: #{unet_forward.129} parent=31 // pred_fallthru
        _
    $region32: #{unet_forward.129} parent=5 // pred_fallthru
      _
    %p678 = scmp.le.s32.totalorder 2, %s9
    // Predicated region
    $region37: #{unet_forward.129} parent=5 // pred_check
      %p679 = pneg %p678
    $region38: #{unet_forward.129} parent=5 // pred_check_branch
      %681 = sbr.rel (%p679) target = $region40
    $region39: #{unet_forward.129} parent=5 // pred_region
      %s682 = ssub.s32 %s9, 2
      // Predicated region
      $region41: #{unet_forward.129} parent=39 // pred_check
        %p683 = pneg %p106
      $region42: #{unet_forward.129} parent=39 // pred_check_branch
        %685 = sbr.rel (%p683) target = $region44
      $region43: #{unet_forward.129} parent=39 // pred_region
        %s686 = smul.u32 32, %s15
        %p687 = scmp.lt.s32.totalorder %s686, 63
        %s688 = scalar_select %p687, %s686, 63
        %s689 = smul.addr %s688, 4
        %s690 = scalar_lea.vmem %s3, %s689
      $region44: #{unet_forward.129} parent=39 // pred_fallthru
        _
    $region40: #{unet_forward.129} parent=5 // pred_fallthru
      _
  $region6: #{unet_forward.129} parent=0 // loop_footer
    %s13 = sadd.s32 1, %s9
  $region7: #{unet_forward.129} parent=0 // loop_footer_branch
    %8 = sbr.rel target = $region3
  $region8: #{unet_forward.129} parent=0 // loop_exit
    _

</llo_original>
